<compile_context>
chip_gen: v7x
topology: tpu7x:2x2x1
jax: 0.10.0
libtpu: 0.0.40
codegen_flags: <defaults>
</compile_context>

<pallas_src>
import functools
import math

import jax
import jax.numpy as jnp
from jax.experimental import pallas as pl
from jax.experimental.pallas import tpu as pltpu

_BN_EPS = 1e-5
_BN_SCALE = float(1.0 / (1.0 + _BN_EPS) ** 0.5)  # eval-mode BatchNorm1d, default stats
_NUM_CLASSES = 10
_HEAD_PAD = 128          # pad the 10-class logits out to one full 128-lane register
_MAX_NEIGHBORS = 64      # PyG radius(..., max_num_neighbors=64)


# ----------------------------- Pallas kernels ------------------------------

def _sa_kernel(has_x, *refs):
    """PointNetConv message-MLP (Lin+BN+ReLU, Lin+BN+ReLU, Lin) fused with max
    aggregation over the neighbor axis, for Gb center groups per grid step."""
    if has_x:
        (x_ref, rel_ref, w1x_ref, w1r_ref, b1_ref,
         w2_ref, b2_ref, w3_ref, b3_ref, out_ref) = refs
    else:
        (rel_ref, w1r_ref, b1_ref,
         w2_ref, b2_ref, w3_ref, b3_ref, out_ref) = refs

    gb, k, _ = rel_ref.shape
    rows = gb * k

    rel = rel_ref[...].reshape(rows, 3).astype(jnp.bfloat16)
    h = jnp.dot(rel, w1r_ref[...], preferred_element_type=jnp.float32)
    if has_x:
        x = x_ref[...].reshape(rows, x_ref.shape[-1])              # already bf16
        h = h + jnp.dot(x, w1x_ref[...], preferred_element_type=jnp.float32)
    h = h + b1_ref[...]
    h = jnp.maximum(h * _BN_SCALE, 0.0).astype(jnp.bfloat16)       # Lin+BN+ReLU
    h = jnp.dot(h, w2_ref[...], preferred_element_type=jnp.float32) + b2_ref[...]
    h = jnp.maximum(h * _BN_SCALE, 0.0).astype(jnp.bfloat16)       # Lin+BN+ReLU
    h = jnp.dot(h, w3_ref[...], preferred_element_type=jnp.float32) + b3_ref[...]
    h = h.reshape(gb, k, h.shape[-1])
    out_ref[...] = jnp.max(h, axis=1).astype(out_ref.dtype)        # max aggregation


def _pick_group_block(num_groups, k, target_rows=512):
    """How many center groups (Gb) to batch per grid step.

    Gb must divide num_groups and keep the (Gb, Cout) bf16 output block layout
    friendly (Gb % 16 == 0 or Gb == num_groups).  Aim for ~target_rows rows per
    MXU call (~128 rows already fills a v5e MXU pass) and prefer an even number
    of grid steps so the two v7x TensorCores get balanced work."""
    cands = [d for d in range(1, num_groups + 1)
             if num_groups % d == 0 and (d % 16 == 0 or d == num_groups)]
    fit = [d for d in cands if d * k <= target_rows]
    pool = fit if fit else [min(cands)]
    even = [d for d in pool if (num_groups // d) % 2 == 0]
    pool = even or pool
    return max(pool)


def sa_mlp_max(xfeat, rel, p, out_dtype=jnp.bfloat16):
    """feat = [xfeat | rel] per neighbor -> 3-layer MLP -> max over neighbors.

    xfeat: (G, K, Cx) bf16 or None; rel: (G, K, 3) f32.  Returns (G, Cout)."""
    G, K, _ = rel.shape
    Cout = p["w3"].shape[1]
    has_x = xfeat is not None
    Gb = _pick_group_block(G, K)

    def _full(a):
        return pl.BlockSpec(a.shape, lambda g: (0,) * a.ndim)

    in_arrays, in_specs = [], []
    if has_x:
        in_arrays.append(xfeat)
        in_specs.append(pl.BlockSpec((Gb, K, xfeat.shape[-1]), lambda g: (g, 0, 0)))
    in_arrays.append(rel)
    in_specs.append(pl.BlockSpec((Gb, K, 3), lambda g: (g, 0, 0)))

    weights = ([p["w1x"]] if has_x else []) + [p["w1r"], p["b1"],
                                               p["w2"], p["b2"], p["w3"], p["b3"]]
    in_arrays += weights
    # Constant index maps: the pipeline re-fetches nothing across steps, and the
    # per-layer weights here are small (<= 256x256 bf16) so buffering is cheap.
    in_specs += [_full(a) for a in weights]

    return pl.pallas_call(
        functools.partial(_sa_kernel, has_x),
        out_shape=jax.ShapeDtypeStruct((G, Cout), out_dtype),
        grid=(G // Gb,),
        in_specs=in_specs,
        out_specs=pl.BlockSpec((Gb, Cout), lambda g: (g, 0)),
        compiler_params=pltpu.CompilerParams(dimension_semantics=("parallel",)),
    )(*in_arrays)


def _global_head_kernel(x_ref, pos_ref, w1x_ref, w1r_ref, b1_ref, w2_ref, b2_ref,
                        w3_ref, b3_ref, hw1_ref, hb1_ref, hw2_ref, hb2_ref,
                        hw3_ref, hb3_ref, out_ref):
    """GlobalSAModule (MLP([256+3,256,512,1024]) + global max pool) fused with the
    classifier MLP([1024,512,256,10], norm=None, dropout eval) and log_softmax.
    Padded logit lanes carry bias -1e9 so they vanish under the softmax."""
    b, m, cx = x_ref.shape
    rows = b * m
    x = x_ref[...].reshape(rows, cx)                               # bf16
    pz = pos_ref[...].reshape(rows, 3).astype(jnp.bfloat16)
    h = jnp.dot(x, w1x_ref[...], preferred_element_type=jnp.float32)
    h = h + jnp.dot(pz, w1r_ref[...], preferred_element_type=jnp.float32) + b1_ref[...]
    h = jnp.maximum(h * _BN_SCALE, 0.0).astype(jnp.bfloat16)
    h = jnp.dot(h, w2_ref[...], preferred_element_type=jnp.float32) + b2_ref[...]
    h = jnp.maximum(h * _BN_SCALE, 0.0).astype(jnp.bfloat16)
    h = jnp.dot(h, w3_ref[...], preferred_element_type=jnp.float32) + b3_ref[...]
    g = jnp.max(h.reshape(b, m, h.shape[-1]), axis=1)              # global_max_pool
    g = g.astype(jnp.bfloat16)
    t = jnp.maximum(jnp.dot(g, hw1_ref[...], preferred_element_type=jnp.float32)
                    + hb1_ref[...], 0.0).astype(jnp.bfloat16)
    t = jnp.maximum(jnp.dot(t, hw2_ref[...], preferred_element_type=jnp.float32)
                    + hb2_ref[...], 0.0).astype(jnp.bfloat16)
    logits = jnp.dot(t, hw3_ref[...], preferred_element_type=jnp.float32) + hb3_ref[...]
    mx = jnp.max(logits, axis=-1, keepdims=True)
    lse = jnp.log(jnp.sum(jnp.exp(logits - mx), axis=-1, keepdims=True)) + mx
    out_ref[...] = logits - lse


def global_head(xg, posg, sa3_p, head_p):
    """xg: (B, Mg, 256) bf16, posg: (B, Mg, 3) f32 -> (B, _HEAD_PAD) f32 log-probs."""
    B = xg.shape[0]
    args = [xg, posg,
            sa3_p["w1x"], sa3_p["w1r"], sa3_p["b1"],
            sa3_p["w2"], sa3_p["b2"], sa3_p["w3"], sa3_p["b3"],
            head_p["w1"], head_p["b1"], head_p["w2"], head_p["b2"],
            head_p["w3"], head_p["b3"]]
    # Grid-free call: ~2.8 MB of bf16 weights + per-graph point blocks fit in VMEM
    # on v5e/v6e/v7x and nothing is double-buffered.
    return pl.pallas_call(
        _global_head_kernel,
        out_shape=jax.ShapeDtypeStruct((B, _HEAD_PAD), jnp.float32),
    )(*args)


# ------------------------------ JAX glue ops --------------------------------

def fps_indices(pos, num_graphs, ratio):
    """Farthest point sampling per graph (graphs contiguous, equal-sized)."""
    N, _ = pos.shape
    n = N // num_graphs
    ns = int(math.ceil(ratio * n))
    pos_r = pos.reshape(num_graphs, n, 3)

    def one_graph(p):
        def body(carry, _):
            mind, last = carry
            d = jnp.sum((p - p[last]) ** 2, axis=-1)
            mind = jnp.minimum(mind, d)
            nxt = jnp.argmax(mind).astype(jnp.int32)
            return (mind, nxt), last

        init = (jnp.full((n,), jnp.inf, dtype=jnp.float32), jnp.int32(0))
        _, sel = jax.lax.scan(body, init, None, length=ns)
        return sel

    sel = jax.vmap(one_graph)(pos_r)                              # (B, ns) local idx
    offs = (jnp.arange(num_graphs, dtype=jnp.int32) * n)[:, None]
    return (sel + offs).reshape(-1)


def radius_gather(pos, batch, center_idx, r, K):
    """For each center, indices of up to K points within radius r in the same
    graph.  Pad slots use the center itself (a real distance-0 neighbor), so the
    subsequent max aggregation is unaffected."""
    N = pos.shape[0]
    cp, cb = pos[center_idx], batch[center_idx]
    d2 = jnp.sum((cp[:, None, :] - pos[None, :, :]) ** 2, axis=-1)   # (M, N)
    valid = (d2 <= r * r) & (cb[:, None] == batch[None, :])
    idx_row = jnp.arange(N, dtype=jnp.int32)[None, :]
    key = jnp.where(valid, idx_row, idx_row + N)
    order = jnp.argsort(key, axis=1)[:, :K].astype(jnp.int32)        # valid first
    nvalid = jnp.sum(valid, axis=1)
    kk = jnp.arange(K, dtype=jnp.int32)[None, :]
    return jnp.where(kk < nvalid[:, None], order,
                     center_idx[:, None].astype(jnp.int32))


@functools.partial(jax.jit, static_argnames=("num_graphs",))
def net_forward(pos, batch, params, *, num_graphs):
    B = num_graphs
    N = pos.shape[0]
    n0 = N // B

    # --- sa1_module: SAModule(0.5, 0.2, MLP([3, 64, 64, 128])); data.x is None ---
    idx1 = fps_indices(pos, B, 0.5)
    K1 = min(n0, _MAX_NEIGHBORS)
    neigh1 = radius_gather(pos, batch, idx1, 0.2, K1)
    rel1 = pos[neigh1] - pos[idx1][:, None, :]                     # (M1, K1, 3)
    x1 = sa_mlp_max(None, rel1, params["sa1"])                     # (M1, 128) bf16
    pos1, batch1 = pos[idx1], batch[idx1]

    # --- sa2_module: SAModule(0.25, 0.4, MLP([128+3, 128, 128, 256])) ---
    idx2 = fps_indices(pos1, B, 0.25)
    n1 = pos1.shape[0] // B
    K2 = min(n1, _MAX_NEIGHBORS)
    neigh2 = radius_gather(pos1, batch1, idx2, 0.4, K2)
    rel2 = pos1[neigh2] - pos1[idx2][:, None, :]                   # (M2, K2, 3)
    x2 = sa_mlp_max(x1[neigh2], rel2, params["sa2"])               # (M2, 256) bf16
    pos2 = pos1[idx2]

    # --- sa3_module (GlobalSAModule) fused with self.mlp + log_softmax ---
    M2 = x2.shape[0]
    xg = x2.reshape(B, M2 // B, -1)                                # per-graph groups
    posg = pos2.reshape(B, M2 // B, 3)
    logp = global_head(xg, posg, params["sa3"], params["head"])    # (B, 128)
    return logp[:, :_NUM_CLASSES]


# ------------------------------ parameters ----------------------------------

def init_mlp(key, dims):
    params = []
    for fi, fo in zip(dims[:-1], dims[1:]):
        key, sub = jax.random.split(key)
        w = jax.random.normal(sub, (fi, fo), jnp.float32) * (2.0 / fi) ** 0.5
        b = jnp.zeros((1, fo), jnp.float32)
        params += [w, b]
    return tuple(params)


def _prep_conv(p, cx):
    """Split the first-layer weight into lane-aligned x part + 3-wide rel part;
    weights -> bf16 (MXU native, half the DMA bytes), biases stay f32."""
    w1, b1, w2, b2, w3, b3 = p
    return {
        "w1x": w1[:cx].astype(jnp.bfloat16) if cx else None,
        "w1r": w1[cx:].astype(jnp.bfloat16),
        "b1": b1,
        "w2": w2.astype(jnp.bfloat16), "b2": b2,
        "w3": w3.astype(jnp.bfloat16), "b3": b3,
    }


def _prep_head(p):
    """Pad the 10-class output layer to 128 lanes (dense stores); pad biases are
    -1e9 so the padded logits contribute nothing to the softmax."""
    w1, b1, w2, b2, w3, b3 = p
    ncls = w3.shape[1]
    w3p = jnp.zeros((w3.shape[0], _HEAD_PAD), jnp.float32).at[:, :ncls].set(w3)
    b3p = jnp.full((1, _HEAD_PAD), -1e9, jnp.float32).at[:, :ncls].set(b3)
    return {
        "w1": w1.astype(jnp.bfloat16), "b1": b1,
        "w2": w2.astype(jnp.bfloat16), "b2": b2,
        "w3": w3p.astype(jnp.bfloat16), "b3": b3p,
    }


def prepare_params(raw):
    return {
        "sa1": _prep_conv(raw["sa1"], 0),
        "sa2": _prep_conv(raw["sa2"], 128),
        "sa3": _prep_conv(raw["sa3"], 256),
        "head": _prep_head(raw["head"]),
    }


if __name__ == "__main__":
    key = jax.random.PRNGKey(0)
    k_pos, k_p1, k_p2, k_p3, k_p4 = jax.random.split(key, 5)

    B, n_per = 2, 32
    pos = jax.random.uniform(k_pos, (B * n_per, 3), jnp.float32)   # data.pos
    batch = jnp.repeat(jnp.arange(B, dtype=jnp.int32), n_per)      # data.batch
    # data.x is None for this model (positions only), as in the reference Net.

    raw = {
        "sa1": init_mlp(k_p1, [3, 64, 64, 128]),
        "sa2": init_mlp(k_p2, [128 + 3, 128, 128, 256]),
        "sa3": init_mlp(k_p3, [256 + 3, 256, 512, 1024]),
        "head": init_mlp(k_p4, [1024, 512, 256, _NUM_CLASSES]),
    }
    params = prepare_params(raw)

    out = net_forward(pos, batch, params, num_graphs=B)
    out = jax.block_until_ready(out)

    assert out.shape == (B, _NUM_CLASSES)
    assert bool(jnp.all(jnp.isfinite(out)))
    assert bool(jnp.allclose(jnp.sum(jnp.exp(out), axis=-1), 1.0, atol=1e-3))
    print("KERNEL_OK")
</pallas_src>

<mosaic_0001>
module attributes {stable_mosaic.version = 11 : i64} {
  func.func @_sa_kernel(%arg0: i32, %arg1: memref<16x32x3xf32, #tpu.memory_space<vmem>>, %arg2: memref<3x64xbf16, #tpu.memory_space<vmem>>, %arg3: memref<1x64xf32, #tpu.memory_space<vmem>>, %arg4: memref<64x64xbf16, #tpu.memory_space<vmem>>, %arg5: memref<1x64xf32, #tpu.memory_space<vmem>>, %arg6: memref<64x128xbf16, #tpu.memory_space<vmem>>, %arg7: memref<1x128xf32, #tpu.memory_space<vmem>>, %arg8: memref<16x128xbf16, #tpu.memory_space<vmem>>) attributes {dimension_semantics = [#tpu.dimension_semantics<parallel>], iteration_bounds = array<i64: 2>, scalar_prefetch = 0 : i64, scratch_operands = 0 : i64, tpu.core_type = #tpu.core_type<tc>, window_params = [{transform_indices = @transform_0, window_bounds = array<i64: 16, 32, 3>}, {pipeline_mode = #tpu.pipeline_mode<synchronous>, transform_indices = @transform_1, window_bounds = array<i64: 3, 64>}, {pipeline_mode = #tpu.pipeline_mode<synchronous>, transform_indices = @transform_2, window_bounds = array<i64: 1, 64>}, {pipeline_mode = #tpu.pipeline_mode<synchronous>, transform_indices = @transform_3, window_bounds = array<i64: 64, 64>}, {pipeline_mode = #tpu.pipeline_mode<synchronous>, transform_indices = @transform_4, window_bounds = array<i64: 1, 64>}, {pipeline_mode = #tpu.pipeline_mode<synchronous>, transform_indices = @transform_5, window_bounds = array<i64: 64, 128>}, {pipeline_mode = #tpu.pipeline_mode<synchronous>, transform_indices = @transform_6, window_bounds = array<i64: 1, 128>}, {transform_indices = @transform_7, window_bounds = array<i64: 16, 128>}]} {
    %c0 = arith.constant 0 : index
    %c0_0 = arith.constant 0 : index
    %c0_1 = arith.constant 0 : index
    %0 = vector.load %arg1[%c0, %c0_0, %c0_1] : memref<16x32x3xf32, #tpu.memory_space<vmem>>, vector<16x32x3xf32>
    %1 = vector.shape_cast %0 : vector<16x32x3xf32> to vector<512x3xf32>
    %2 = arith.truncf %1 : vector<512x3xf32> to vector<512x3xbf16>
    %c0_2 = arith.constant 0 : index
    %c0_3 = arith.constant 0 : index
    %3 = vector.load %arg2[%c0_2, %c0_3] : memref<3x64xbf16, #tpu.memory_space<vmem>>, vector<3x64xbf16>
    %cst = arith.constant dense<0.000000e+00> : vector<512x64xf32>
    %4 = tpu.matmul %2, %3, %cst {dimension_numbers = #tpu.dot_dimension_numbers<[1], [0], [0], [1], [0, 0, 1, 1], [], []>} : vector<512x3xbf16>, vector<3x64xbf16>, vector<512x64xf32> -> vector<512x64xf32>
    %c0_4 = arith.constant 0 : index
    %c0_5 = arith.constant 0 : index
    %5 = vector.load %arg3[%c0_4, %c0_5] : memref<1x64xf32, #tpu.memory_space<vmem>>, vector<1x64xf32>
    %6 = vector.broadcast %5 : vector<1x64xf32> to vector<512x64xf32>
    %7 = arith.addf %4, %6 : vector<512x64xf32>
    %cst_6 = arith.constant 0.999994993 : f32
    %8 = vector.broadcast %cst_6 : f32 to vector<512x64xf32>
    %9 = arith.mulf %7, %8 : vector<512x64xf32>
    %cst_7 = arith.constant 0.000000e+00 : f32
    %10 = vector.broadcast %cst_7 : f32 to vector<512x64xf32>
    %11 = arith.maximumf %9, %10 : vector<512x64xf32>
    %12 = arith.truncf %11 : vector<512x64xf32> to vector<512x64xbf16>
    %c0_8 = arith.constant 0 : index
    %c0_9 = arith.constant 0 : index
    %13 = vector.load %arg4[%c0_8, %c0_9] : memref<64x64xbf16, #tpu.memory_space<vmem>>, vector<64x64xbf16>
    %cst_10 = arith.constant dense<0.000000e+00> : vector<512x64xf32>
    %14 = tpu.matmul %12, %13, %cst_10 {dimension_numbers = #tpu.dot_dimension_numbers<[1], [0], [0], [1], [0, 0, 1, 1], [], []>} : vector<512x64xbf16>, vector<64x64xbf16>, vector<512x64xf32> -> vector<512x64xf32>
    %c0_11 = arith.constant 0 : index
    %c0_12 = arith.constant 0 : index
    %15 = vector.load %arg5[%c0_11, %c0_12] : memref<1x64xf32, #tpu.memory_space<vmem>>, vector<1x64xf32>
    %16 = vector.broadcast %15 : vector<1x64xf32> to vector<512x64xf32>
    %17 = arith.addf %14, %16 : vector<512x64xf32>
    %cst_13 = arith.constant 0.999994993 : f32
    %18 = vector.broadcast %cst_13 : f32 to vector<512x64xf32>
    %19 = arith.mulf %17, %18 : vector<512x64xf32>
    %cst_14 = arith.constant 0.000000e+00 : f32
    %20 = vector.broadcast %cst_14 : f32 to vector<512x64xf32>
    %21 = arith.maximumf %19, %20 : vector<512x64xf32>
    %22 = arith.truncf %21 : vector<512x64xf32> to vector<512x64xbf16>
    %c0_15 = arith.constant 0 : index
    %c0_16 = arith.constant 0 : index
    %23 = vector.load %arg6[%c0_15, %c0_16] : memref<64x128xbf16, #tpu.memory_space<vmem>>, vector<64x128xbf16>
    %cst_17 = arith.constant dense<0.000000e+00> : vector<512x128xf32>
    %24 = tpu.matmul %22, %23, %cst_17 {dimension_numbers = #tpu.dot_dimension_numbers<[1], [0], [0], [1], [0, 0, 1, 1], [], []>} : vector<512x64xbf16>, vector<64x128xbf16>, vector<512x128xf32> -> vector<512x128xf32>
    %c0_18 = arith.constant 0 : index
    %c0_19 = arith.constant 0 : index
    %25 = vector.load %arg7[%c0_18, %c0_19] : memref<1x128xf32, #tpu.memory_space<vmem>>, vector<1x128xf32>
    %26 = vector.broadcast %25 : vector<1x128xf32> to vector<512x128xf32>
    %27 = arith.addf %24, %26 : vector<512x128xf32>
    %28 = vector.shape_cast %27 : vector<512x128xf32> to vector<16x32x128xf32>
    %cst_20 = arith.constant dense<0xFF800000> : vector<16x128xf32>
    %29 = vector.multi_reduction <maximumf>, %28, %cst_20 [1] : vector<16x32x128xf32> to vector<16x128xf32>
    %30 = arith.truncf %29 : vector<16x128xf32> to vector<16x128xbf16>
    %c0_21 = arith.constant 0 : index
    %c0_22 = arith.constant 0 : index
    %31 = vector.load %arg8[%c0_21, %c0_22] : memref<16x128xbf16, #tpu.memory_space<vmem>>, vector<16x128xbf16>
    tpu.vector_store %arg8[%c0_21, %c0_22], %30 {strides = array<i32>} : memref<16x128xbf16, #tpu.memory_space<vmem>>, vector<16x128xbf16>,
    return
  }
  func.func @transform_0(%arg0: i32) -> (i32, i32, i32) {
    %c0_i32 = arith.constant 0 : i32
    %c0_i32_0 = arith.constant 0 : i32
    %c0_i32_1 = arith.constant 0 : i32
    return %arg0, %c0_i32, %c0_i32_0 : i32, i32, i32
  }
  func.func @transform_1(%arg0: i32) -> (i32, i32) {
    %c0_i32 = arith.constant 0 : i32
    %c0_i32_0 = arith.constant 0 : i32
    %c0_i32_1 = arith.constant 0 : i32
    return %c0_i32, %c0_i32_0 : i32, i32
  }
  func.func @transform_2(%arg0: i32) -> (i32, i32) {
    %c0_i32 = arith.constant 0 : i32
    %c0_i32_0 = arith.constant 0 : i32
    %c0_i32_1 = arith.constant 0 : i32
    return %c0_i32, %c0_i32_0 : i32, i32
  }
  func.func @transform_3(%arg0: i32) -> (i32, i32) {
    %c0_i32 = arith.constant 0 : i32
    %c0_i32_0 = arith.constant 0 : i32
    %c0_i32_1 = arith.constant 0 : i32
    return %c0_i32, %c0_i32_0 : i32, i32
  }
  func.func @transform_4(%arg0: i32) -> (i32, i32) {
    %c0_i32 = arith.constant 0 : i32
    %c0_i32_0 = arith.constant 0 : i32
    %c0_i32_1 = arith.constant 0 : i32
    return %c0_i32, %c0_i32_0 : i32, i32
  }
  func.func @transform_5(%arg0: i32) -> (i32, i32) {
    %c0_i32 = arith.constant 0 : i32
    %c0_i32_0 = arith.constant 0 : i32
    %c0_i32_1 = arith.constant 0 : i32
    return %c0_i32, %c0_i32_0 : i32, i32
  }
  func.func @transform_6(%arg0: i32) -> (i32, i32) {
    %c0_i32 = arith.constant 0 : i32
    %c0_i32_0 = arith.constant 0 : i32
    %c0_i32_1 = arith.constant 0 : i32
    return %c0_i32, %c0_i32_0 : i32, i32
  }
  func.func @transform_7(%arg0: i32) -> (i32, i32) {
    %c0_i32 = arith.constant 0 : i32
    %c0_i32_0 = arith.constant 0 : i32
    return %arg0, %c0_i32 : i32, i32
  }
}

module attributes {stable_mosaic.version = 11 : i64} {
  func.func @_sa_kernel(%arg0: i32, %arg1: memref<8x16x128xbf16, #tpu.memory_space<vmem>>, %arg2: memref<8x16x3xf32, #tpu.memory_space<vmem>>, %arg3: memref<128x128xbf16, #tpu.memory_space<vmem>>, %arg4: memref<3x128xbf16, #tpu.memory_space<vmem>>, %arg5: memref<1x128xf32, #tpu.memory_space<vmem>>, %arg6: memref<128x128xbf16, #tpu.memory_space<vmem>>, %arg7: memref<1x128xf32, #tpu.memory_space<vmem>>, %arg8: memref<128x256xbf16, #tpu.memory_space<vmem>>, %arg9: memref<1x256xf32, #tpu.memory_space<vmem>>, %arg10: memref<8x256xbf16, #tpu.memory_space<vmem>>) attributes {dimension_semantics = [#tpu.dimension_semantics<parallel>], iteration_bounds = array<i64: 1>, scalar_prefetch = 0 : i64, scratch_operands = 0 : i64, tpu.core_type = #tpu.core_type<tc>, window_params = [{transform_indices = @transform_0, window_bounds = array<i64: 8, 16, 128>}, {transform_indices = @transform_1, window_bounds = array<i64: 8, 16, 3>}, {pipeline_mode = #tpu.pipeline_mode<synchronous>, transform_indices = @transform_2, window_bounds = array<i64: 128, 128>}, {pipeline_mode = #tpu.pipeline_mode<synchronous>, transform_indices = @transform_3, window_bounds = array<i64: 3, 128>}, {pipeline_mode = #tpu.pipeline_mode<synchronous>, transform_indices = @transform_4, window_bounds = array<i64: 1, 128>}, {pipeline_mode = #tpu.pipeline_mode<synchronous>, transform_indices = @transform_5, window_bounds = array<i64: 128, 128>}, {pipeline_mode = #tpu.pipeline_mode<synchronous>, transform_indices = @transform_6, window_bounds = array<i64: 1, 128>}, {pipeline_mode = #tpu.pipeline_mode<synchronous>, transform_indices = @transform_7, window_bounds = array<i64: 128, 256>}, {pipeline_mode = #tpu.pipeline_mode<synchronous>, transform_indices = @transform_8, window_bounds = array<i64: 1, 256>}, {transform_indices = @transform_9, window_bounds = array<i64: 8, 256>}]} {
    %c0 = arith.constant 0 : index
    %c0_0 = arith.constant 0 : index
    %c0_1 = arith.constant 0 : index
    %0 = vector.load %arg2[%c0, %c0_0, %c0_1] : memref<8x16x3xf32, #tpu.memory_space<vmem>>, vector<8x16x3xf32>
    %1 = vector.shape_cast %0 : vector<8x16x3xf32> to vector<128x3xf32>
    %2 = arith.truncf %1 : vector<128x3xf32> to vector<128x3xbf16>
    %c0_2 = arith.constant 0 : index
    %c0_3 = arith.constant 0 : index
    %3 = vector.load %arg4[%c0_2, %c0_3] : memref<3x128xbf16, #tpu.memory_space<vmem>>, vector<3x128xbf16>
    %cst = arith.constant dense<0.000000e+00> : vector<128x128xf32>
    %4 = tpu.matmul %2, %3, %cst {dimension_numbers = #tpu.dot_dimension_numbers<[1], [0], [0], [1], [0, 0, 1, 1], [], []>} : vector<128x3xbf16>, vector<3x128xbf16>, vector<128x128xf32> -> vector<128x128xf32>
    %c0_4 = arith.constant 0 : index
    %c0_5 = arith.constant 0 : index
    %c0_6 = arith.constant 0 : index
    %5 = vector.load %arg1[%c0_4, %c0_5, %c0_6] : memref<8x16x128xbf16, #tpu.memory_space<vmem>>, vector<8x16x128xbf16>
    %6 = vector.shape_cast %5 : vector<8x16x128xbf16> to vector<128x128xbf16>
    %c0_7 = arith.constant 0 : index
    %c0_8 = arith.constant 0 : index
    %7 = vector.load %arg3[%c0_7, %c0_8] : memref<128x128xbf16, #tpu.memory_space<vmem>>, vector<128x128xbf16>
    %cst_9 = arith.constant dense<0.000000e+00> : vector<128x128xf32>
    %8 = tpu.matmul %6, %7, %cst_9 {dimension_numbers = #tpu.dot_dimension_numbers<[1], [0], [0], [1], [0, 0, 1, 1], [], []>} : vector<128x128xbf16>, vector<128x128xbf16>, vector<128x128xf32> -> vector<128x128xf32>
    %9 = arith.addf %4, %8 : vector<128x128xf32>
    %c0_10 = arith.constant 0 : index
    %c0_11 = arith.constant 0 : index
    %10 = vector.load %arg5[%c0_10, %c0_11] : memref<1x128xf32, #tpu.memory_space<vmem>>, vector<1x128xf32>
    %11 = vector.broadcast %10 : vector<1x128xf32> to vector<128x128xf32>
    %12 = arith.addf %9, %11 : vector<128x128xf32>
    %cst_12 = arith.constant 0.999994993 : f32
    %13 = vector.broadcast %cst_12 : f32 to vector<128x128xf32>
    %14 = arith.mulf %12, %13 : vector<128x128xf32>
    %cst_13 = arith.constant 0.000000e+00 : f32
    %15 = vector.broadcast %cst_13 : f32 to vector<128x128xf32>
    %16 = arith.maximumf %14, %15 : vector<128x128xf32>
    %17 = arith.truncf %16 : vector<128x128xf32> to vector<128x128xbf16>
    %c0_14 = arith.constant 0 : index
    %c0_15 = arith.constant 0 : index
    %18 = vector.load %arg6[%c0_14, %c0_15] : memref<128x128xbf16, #tpu.memory_space<vmem>>, vector<128x128xbf16>
    %cst_16 = arith.constant dense<0.000000e+00> : vector<128x128xf32>
    %19 = tpu.matmul %17, %18, %cst_16 {dimension_numbers = #tpu.dot_dimension_numbers<[1], [0], [0], [1], [0, 0, 1, 1], [], []>} : vector<128x128xbf16>, vector<128x128xbf16>, vector<128x128xf32> -> vector<128x128xf32>
    %c0_17 = arith.constant 0 : index
    %c0_18 = arith.constant 0 : index
    %20 = vector.load %arg7[%c0_17, %c0_18] : memref<1x128xf32, #tpu.memory_space<vmem>>, vector<1x128xf32>
    %21 = vector.broadcast %20 : vector<1x128xf32> to vector<128x128xf32>
    %22 = arith.addf %19, %21 : vector<128x128xf32>
    %cst_19 = arith.constant 0.999994993 : f32
    %23 = vector.broadcast %cst_19 : f32 to vector<128x128xf32>
    %24 = arith.mulf %22, %23 : vector<128x128xf32>
    %cst_20 = arith.constant 0.000000e+00 : f32
    %25 = vector.broadcast %cst_20 : f32 to vector<128x128xf32>
    %26 = arith.maximumf %24, %25 : vector<128x128xf32>
    %27 = arith.truncf %26 : vector<128x128xf32> to vector<128x128xbf16>
    %c0_21 = arith.constant 0 : index
    %c0_22 = arith.constant 0 : index
    %28 = vector.load %arg8[%c0_21, %c0_22] : memref<128x256xbf16, #tpu.memory_space<vmem>>, vector<128x256xbf16>
    %cst_23 = arith.constant dense<0.000000e+00> : vector<128x256xf32>
    %29 = tpu.matmul %27, %28, %cst_23 {dimension_numbers = #tpu.dot_dimension_numbers<[1], [0], [0], [1], [0, 0, 1, 1], [], []>} : vector<128x128xbf16>, vector<128x256xbf16>, vector<128x256xf32> -> vector<128x256xf32>
    %c0_24 = arith.constant 0 : index
    %c0_25 = arith.constant 0 : index
    %30 = vector.load %arg9[%c0_24, %c0_25] : memref<1x256xf32, #tpu.memory_space<vmem>>, vector<1x256xf32>
    %31 = vector.broadcast %30 : vector<1x256xf32> to vector<128x256xf32>
    %32 = arith.addf %29, %31 : vector<128x256xf32>
    %33 = vector.shape_cast %32 : vector<128x256xf32> to vector<8x16x256xf32>
    %cst_26 = arith.constant dense<0xFF800000> : vector<8x256xf32>
    %34 = vector.multi_reduction <maximumf>, %33, %cst_26 [1] : vector<8x16x256xf32> to vector<8x256xf32>
    %35 = arith.truncf %34 : vector<8x256xf32> to vector<8x256xbf16>
    %c0_27 = arith.constant 0 : index
    %c0_28 = arith.constant 0 : index
    %36 = vector.load %arg10[%c0_27, %c0_28] : memref<8x256xbf16, #tpu.memory_space<vmem>>, vector<8x256xbf16>
    tpu.vector_store %arg10[%c0_27, %c0_28], %35 {strides = array<i32>} : memref<8x256xbf16, #tpu.memory_space<vmem>>, vector<8x256xbf16>,
    return
  }
  func.func @transform_0(%arg0: i32) -> (i32, i32, i32) {
    %c0_i32 = arith.constant 0 : i32
    %c0_i32_0 = arith.constant 0 : i32
    %c0_i32_1 = arith.constant 0 : i32
    return %arg0, %c0_i32, %c0_i32_0 : i32, i32, i32
  }
  func.func @transform_1(%arg0: i32) -> (i32, i32, i32) {
    %c0_i32 = arith.constant 0 : i32
    %c0_i32_0 = arith.constant 0 : i32
    %c0_i32_1 = arith.constant 0 : i32
    return %arg0, %c0_i32, %c0_i32_0 : i32, i32, i32
  }
  func.func @transform_2(%arg0: i32) -> (i32, i32) {
    %c0_i32 = arith.constant 0 : i32
    %c0_i32_0 = arith.constant 0 : i32
    %c0_i32_1 = arith.constant 0 : i32
    return %c0_i32, %c0_i32_0 : i32, i32
  }
  func.func @transform_3(%arg0: i32) -> (i32, i32) {
    %c0_i32 = arith.constant 0 : i32
    %c0_i32_0 = arith.constant 0 : i32
    %c0_i32_1 = arith.constant 0 : i32
    return %c0_i32, %c0_i32_0 : i32, i32
  }
  func.func @transform_4(%arg0: i32) -> (i32, i32) {
    %c0_i32 = arith.constant 0 : i32
    %c0_i32_0 = arith.constant 0 : i32
    %c0_i32_1 = arith.constant 0 : i32
    return %c0_i32, %c0_i32_0 : i32, i32
  }
  func.func @transform_5(%arg0: i32) -> (i32, i32) {
    %c0_i32 = arith.constant 0 : i32
    %c0_i32_0 = arith.constant 0 : i32
    %c0_i32_1 = arith.constant 0 : i32
    return %c0_i32, %c0_i32_0 : i32, i32
  }
  func.func @transform_6(%arg0: i32) -> (i32, i32) {
    %c0_i32 = arith.constant 0 : i32
    %c0_i32_0 = arith.constant 0 : i32
    %c0_i32_1 = arith.constant 0 : i32
    return %c0_i32, %c0_i32_0 : i32, i32
  }
  func.func @transform_7(%arg0: i32) -> (i32, i32) {
    %c0_i32 = arith.constant 0 : i32
    %c0_i32_0 = arith.constant 0 : i32
    %c0_i32_1 = arith.constant 0 : i32
    return %c0_i32, %c0_i32_0 : i32, i32
  }
  func.func @transform_8(%arg0: i32) -> (i32, i32) {
    %c0_i32 = arith.constant 0 : i32
    %c0_i32_0 = arith.constant 0 : i32
    %c0_i32_1 = arith.constant 0 : i32
    return %c0_i32, %c0_i32_0 : i32, i32
  }
  func.func @transform_9(%arg0: i32) -> (i32, i32) {
    %c0_i32 = arith.constant 0 : i32
    %c0_i32_0 = arith.constant 0 : i32
    return %arg0, %c0_i32 : i32, i32
  }
}

module attributes {stable_mosaic.version = 11 : i64} {
  func.func @_global_head_kernel(%arg0: memref<2x4x256xbf16, #tpu.memory_space<vmem>>, %arg1: memref<2x4x3xf32, #tpu.memory_space<vmem>>, %arg2: memref<256x256xbf16, #tpu.memory_space<vmem>>, %arg3: memref<3x256xbf16, #tpu.memory_space<vmem>>, %arg4: memref<1x256xf32, #tpu.memory_space<vmem>>, %arg5: memref<256x512xbf16, #tpu.memory_space<vmem>>, %arg6: memref<1x512xf32, #tpu.memory_space<vmem>>, %arg7: memref<512x1024xbf16, #tpu.memory_space<vmem>>, %arg8: memref<1x1024xf32, #tpu.memory_space<vmem>>, %arg9: memref<1024x512xbf16, #tpu.memory_space<vmem>>, %arg10: memref<1x512xf32, #tpu.memory_space<vmem>>, %arg11: memref<512x256xbf16, #tpu.memory_space<vmem>>, %arg12: memref<1x256xf32, #tpu.memory_space<vmem>>, %arg13: memref<256x128xbf16, #tpu.memory_space<vmem>>, %arg14: memref<1x128xf32, #tpu.memory_space<vmem>>, %arg15: memref<2x128xf32, #tpu.memory_space<vmem>>) attributes {dimension_semantics = [], scalar_prefetch = 0 : i64, scratch_operands = 0 : i64, tpu.core_type = #tpu.core_type<tc>} {
    %c0 = arith.constant 0 : index
    %c0_0 = arith.constant 0 : index
    %c0_1 = arith.constant 0 : index
    %0 = vector.load %arg0[%c0, %c0_0, %c0_1] : memref<2x4x256xbf16, #tpu.memory_space<vmem>>, vector<2x4x256xbf16>
    %1 = vector.shape_cast %0 : vector<2x4x256xbf16> to vector<8x256xbf16>
    %c0_2 = arith.constant 0 : index
    %c0_3 = arith.constant 0 : index
    %c0_4 = arith.constant 0 : index
    %2 = vector.load %arg1[%c0_2, %c0_3, %c0_4] : memref<2x4x3xf32, #tpu.memory_space<vmem>>, vector<2x4x3xf32>
    %3 = vector.shape_cast %2 : vector<2x4x3xf32> to vector<8x3xf32>
    %4 = arith.truncf %3 : vector<8x3xf32> to vector<8x3xbf16>
    %c0_5 = arith.constant 0 : index
    %c0_6 = arith.constant 0 : index
    %5 = vector.load %arg2[%c0_5, %c0_6] : memref<256x256xbf16, #tpu.memory_space<vmem>>, vector<256x256xbf16>
    %cst = arith.constant dense<0.000000e+00> : vector<8x256xf32>
    %6 = tpu.matmul %1, %5, %cst {dimension_numbers = #tpu.dot_dimension_numbers<[1], [0], [0], [1], [0, 0, 1, 1], [], []>} : vector<8x256xbf16>, vector<256x256xbf16>, vector<8x256xf32> -> vector<8x256xf32>
    %c0_7 = arith.constant 0 : index
    %c0_8 = arith.constant 0 : index
    %7 = vector.load %arg3[%c0_7, %c0_8] : memref<3x256xbf16, #tpu.memory_space<vmem>>, vector<3x256xbf16>
    %cst_9 = arith.constant dense<0.000000e+00> : vector<8x256xf32>
    %8 = tpu.matmul %4, %7, %cst_9 {dimension_numbers = #tpu.dot_dimension_numbers<[1], [0], [0], [1], [0, 0, 1, 1], [], []>} : vector<8x3xbf16>, vector<3x256xbf16>, vector<8x256xf32> -> vector<8x256xf32>
    %9 = arith.addf %6, %8 : vector<8x256xf32>
    %c0_10 = arith.constant 0 : index
    %c0_11 = arith.constant 0 : index
    %10 = vector.load %arg4[%c0_10, %c0_11] : memref<1x256xf32, #tpu.memory_space<vmem>>, vector<1x256xf32>
    %11 = vector.broadcast %10 : vector<1x256xf32> to vector<8x256xf32>
    %12 = arith.addf %9, %11 : vector<8x256xf32>
    %cst_12 = arith.constant 0.999994993 : f32
    %13 = vector.broadcast %cst_12 : f32 to vector<8x256xf32>
    %14 = arith.mulf %12, %13 : vector<8x256xf32>
    %cst_13 = arith.constant 0.000000e+00 : f32
    %15 = vector.broadcast %cst_13 : f32 to vector<8x256xf32>
    %16 = arith.maximumf %14, %15 : vector<8x256xf32>
    %17 = arith.truncf %16 : vector<8x256xf32> to vector<8x256xbf16>
    %c0_14 = arith.constant 0 : index
    %c0_15 = arith.constant 0 : index
    %18 = vector.load %arg5[%c0_14, %c0_15] : memref<256x512xbf16, #tpu.memory_space<vmem>>, vector<256x512xbf16>
    %cst_16 = arith.constant dense<0.000000e+00> : vector<8x512xf32>
    %19 = tpu.matmul %17, %18, %cst_16 {dimension_numbers = #tpu.dot_dimension_numbers<[1], [0], [0], [1], [0, 0, 1, 1], [], []>} : vector<8x256xbf16>, vector<256x512xbf16>, vector<8x512xf32> -> vector<8x512xf32>
    %c0_17 = arith.constant 0 : index
    %c0_18 = arith.constant 0 : index
    %20 = vector.load %arg6[%c0_17, %c0_18] : memref<1x512xf32, #tpu.memory_space<vmem>>, vector<1x512xf32>
    %21 = vector.broadcast %20 : vector<1x512xf32> to vector<8x512xf32>
    %22 = arith.addf %19, %21 : vector<8x512xf32>
    %cst_19 = arith.constant 0.999994993 : f32
    %23 = vector.broadcast %cst_19 : f32 to vector<8x512xf32>
    %24 = arith.mulf %22, %23 : vector<8x512xf32>
    %cst_20 = arith.constant 0.000000e+00 : f32
    %25 = vector.broadcast %cst_20 : f32 to vector<8x512xf32>
    %26 = arith.maximumf %24, %25 : vector<8x512xf32>
    %27 = arith.truncf %26 : vector<8x512xf32> to vector<8x512xbf16>
    %c0_21 = arith.constant 0 : index
    %c0_22 = arith.constant 0 : index
    %28 = vector.load %arg7[%c0_21, %c0_22] : memref<512x1024xbf16, #tpu.memory_space<vmem>>, vector<512x1024xbf16>
    %cst_23 = arith.constant dense<0.000000e+00> : vector<8x1024xf32>
    %29 = tpu.matmul %27, %28, %cst_23 {dimension_numbers = #tpu.dot_dimension_numbers<[1], [0], [0], [1], [0, 0, 1, 1], [], []>} : vector<8x512xbf16>, vector<512x1024xbf16>, vector<8x1024xf32> -> vector<8x1024xf32>
    %c0_24 = arith.constant 0 : index
    %c0_25 = arith.constant 0 : index
    %30 = vector.load %arg8[%c0_24, %c0_25] : memref<1x1024xf32, #tpu.memory_space<vmem>>, vector<1x1024xf32>
    %31 = vector.broadcast %30 : vector<1x1024xf32> to vector<8x1024xf32>
    %32 = arith.addf %29, %31 : vector<8x1024xf32>
    %33 = vector.shape_cast %32 : vector<8x1024xf32> to vector<2x4x1024xf32>
    %cst_26 = arith.constant dense<0xFF800000> : vector<2x1024xf32>
    %34 = vector.multi_reduction <maximumf>, %33, %cst_26 [1] : vector<2x4x1024xf32> to vector<2x1024xf32>
    %35 = arith.truncf %34 : vector<2x1024xf32> to vector<2x1024xbf16>
    %c0_27 = arith.constant 0 : index
    %c0_28 = arith.constant 0 : index
    %36 = vector.load %arg9[%c0_27, %c0_28] : memref<1024x512xbf16, #tpu.memory_space<vmem>>, vector<1024x512xbf16>
    %cst_29 = arith.constant dense<0.000000e+00> : vector<2x512xf32>
    %37 = tpu.matmul %35, %36, %cst_29 {dimension_numbers = #tpu.dot_dimension_numbers<[1], [0], [0], [1], [0, 0, 1, 1], [], []>} : vector<2x1024xbf16>, vector<1024x512xbf16>, vector<2x512xf32> -> vector<2x512xf32>
    %c0_30 = arith.constant 0 : index
    %c0_31 = arith.constant 0 : index
    %38 = vector.load %arg10[%c0_30, %c0_31] : memref<1x512xf32, #tpu.memory_space<vmem>>, vector<1x512xf32>
    %39 = vector.broadcast %38 : vector<1x512xf32> to vector<2x512xf32>
    %40 = arith.addf %37, %39 : vector<2x512xf32>
    %cst_32 = arith.constant 0.000000e+00 : f32
    %41 = vector.broadcast %cst_32 : f32 to vector<2x512xf32>
    %42 = arith.maximumf %40, %41 : vector<2x512xf32>
    %43 = arith.truncf %42 : vector<2x512xf32> to vector<2x512xbf16>
    %c0_33 = arith.constant 0 : index
    %c0_34 = arith.constant 0 : index
    %44 = vector.load %arg11[%c0_33, %c0_34] : memref<512x256xbf16, #tpu.memory_space<vmem>>, vector<512x256xbf16>
    %cst_35 = arith.constant dense<0.000000e+00> : vector<2x256xf32>
    %45 = tpu.matmul %43, %44, %cst_35 {dimension_numbers = #tpu.dot_dimension_numbers<[1], [0], [0], [1], [0, 0, 1, 1], [], []>} : vector<2x512xbf16>, vector<512x256xbf16>, vector<2x256xf32> -> vector<2x256xf32>
    %c0_36 = arith.constant 0 : index
    %c0_37 = arith.constant 0 : index
    %46 = vector.load %arg12[%c0_36, %c0_37] : memref<1x256xf32, #tpu.memory_space<vmem>>, vector<1x256xf32>
    %47 = vector.broadcast %46 : vector<1x256xf32> to vector<2x256xf32>
    %48 = arith.addf %45, %47 : vector<2x256xf32>
    %cst_38 = arith.constant 0.000000e+00 : f32
    %49 = vector.broadcast %cst_38 : f32 to vector<2x256xf32>
    %50 = arith.maximumf %48, %49 : vector<2x256xf32>
    %51 = arith.truncf %50 : vector<2x256xf32> to vector<2x256xbf16>
    %c0_39 = arith.constant 0 : index
    %c0_40 = arith.constant 0 : index
    %52 = vector.load %arg13[%c0_39, %c0_40] : memref<256x128xbf16, #tpu.memory_space<vmem>>, vector<256x128xbf16>
    %cst_41 = arith.constant dense<0.000000e+00> : vector<2x128xf32>
    %53 = tpu.matmul %51, %52, %cst_41 {dimension_numbers = #tpu.dot_dimension_numbers<[1], [0], [0], [1], [0, 0, 1, 1], [], []>} : vector<2x256xbf16>, vector<256x128xbf16>, vector<2x128xf32> -> vector<2x128xf32>
    %c0_42 = arith.constant 0 : index
    %c0_43 = arith.constant 0 : index
    %54 = vector.load %arg14[%c0_42, %c0_43] : memref<1x128xf32, #tpu.memory_space<vmem>>, vector<1x128xf32>
    %55 = vector.broadcast %54 : vector<1x128xf32> to vector<2x128xf32>
    %56 = arith.addf %53, %55 : vector<2x128xf32>
    %cst_44 = arith.constant dense<0xFF800000> : vector<2xf32>
    %57 = vector.multi_reduction <maximumf>, %56, %cst_44 [1] : vector<2x128xf32> to vector<2xf32>
    %58 = vector.shape_cast %57 : vector<2xf32> to vector<2x1xf32>
    %59 = vector.broadcast %58 : vector<2x1xf32> to vector<2x128xf32>
    %60 = arith.subf %56, %59 : vector<2x128xf32>
    %61 = math.exp %60 : vector<2x128xf32>
    %cst_45 = arith.constant dense<0.000000e+00> : vector<2xf32>
    %62 = vector.multi_reduction <add>, %61, %cst_45 [1] : vector<2x128xf32> to vector<2xf32>
    %63 = vector.shape_cast %62 : vector<2xf32> to vector<2x1xf32>
    %64 = math.log %63 : vector<2x1xf32>
    %65 = arith.addf %64, %58 : vector<2x1xf32>
    %66 = vector.broadcast %65 : vector<2x1xf32> to vector<2x128xf32>
    %67 = arith.subf %56, %66 : vector<2x128xf32>
    %c0_46 = arith.constant 0 : index
    %c0_47 = arith.constant 0 : index
    %68 = vector.load %arg15[%c0_46, %c0_47] : memref<2x128xf32, #tpu.memory_space<vmem>>, vector<2x128xf32>
    tpu.vector_store %arg15[%c0_46, %c0_47], %67 {strides = array<i32>} : memref<2x128xf32, #tpu.memory_space<vmem>>, vector<2x128xf32>,
    return
  }
}

</mosaic_0001>

<llo_original>
// kernel: custom-call.4
$region0: #{custom-call.4}
  %s0 = inlined_call_operand.vmem [shape: f32[2,32], index: 0, kind: output, shape index: {}]

// kernel: custom-call.22
$region0: #{custom-call.22}
  %s0 = inlined_call_operand.vmem [shape: s32[16,2], index: 0, kind: output, shape index: {}]

// kernel: custom-call.5
$region0: #{custom-call.5}
  %s0 = inlined_call_operand.vmem [shape: f32[2,16], index: 0, kind: output, shape index: {}]

// kernel: custom-call.23
$region0: #{custom-call.23}
  %s0 = inlined_call_operand.vmem [shape: s32[4,2], index: 0, kind: output, shape index: {}]

// kernel: net_forward.3
$region0: #{net_forward.3}
  #allocation0 [shape = 'u32[]', space=smem, size = 0x4, offset = 0x4, fixed_abs, tag = 'smem constant byte address 0x4 - core index']
  #allocation1 [shape = 'u32[144,128]{1,0:T(1,128)}', space=vmem, size = 0x12000, scoped, tag = 'internal scratch']
  %s0 = inlined_call_operand.vmem [shape: f32[32,32,3], index: 0, kind: input, shape index: {}]
  %s1 = inlined_call_operand.vmem [shape: bf16[3,64], index: 1, kind: input, shape index: {}]
  %s2 = inlined_call_operand.vmem [shape: f32[1,64], index: 2, kind: input, shape index: {}]
  %s3 = inlined_call_operand.vmem [shape: bf16[64,64], index: 3, kind: input, shape index: {}]
  %s4 = inlined_call_operand.vmem [shape: f32[1,64], index: 4, kind: input, shape index: {}]
  %s5 = inlined_call_operand.vmem [shape: bf16[64,128], index: 5, kind: input, shape index: {}]
  %s6 = inlined_call_operand.vmem [shape: f32[1,128], index: 6, kind: input, shape index: {}]
  %s7 = inlined_call_operand.vmem [shape: bf16[32,128], index: 7, kind: output, shape index: {}]
  %s8 = sld [smem:[#allocation0]]
  $region61: #{net_forward.3} parent=0
    _
  %s10 = ssub.s32 1, %s8
  %s11 = scalar_select 0, %s10, %s8
  loop: start=0, step=1, limit=4
  $region2: #{net_forward.3} parent=0 // loop_pre_header
    _
  $region3: #{net_forward.3} parent=0 // loop_header
    %s13 = sphi 0, %s17
    %p14 = scmp.ge.s32.totalorder %s13, 4
    %s23 = sphi 0, %s25
    %s26 = sphi 0, %s23
    %s27 = sphi 0, %s26
    %s43 = sphi 0, %s27
    %s47 = sphi 0, %s47
    %s49 = sphi 0, %s47
    %s50 = sphi 0, %s49
    %s64 = sphi 0, %s50
    %s68 = sphi 0, %s68
    %s70 = sphi 0, %s68
    %s71 = sphi 0, %s70
    %s85 = sphi 0, %s71
    %s89 = sphi 0, %s89
    %s91 = sphi 0, %s89
    %s92 = sphi 0, %s91
    %s106 = sphi 0, %s92
    %s110 = sphi 0, %s110
    %s112 = sphi 0, %s110
    %s113 = sphi 0, %s112
    %s127 = sphi 0, %s113
    %s131 = sphi 0, %s131
    %s133 = sphi 0, %s131
    %s134 = sphi 0, %s133
    %s148 = sphi 0, %s134
    %s152 = sphi 0, %s152
    %s154 = sphi 0, %s152
    %s155 = sphi 0, %s154
    %s169 = sphi 0, %s155
    %s175 = sphi 0, %s177
    %s178 = sphi 0, %s175
    %s179 = sphi 0, %s178
    %s195 = sphi 0, %s179
  $region4: #{net_forward.3} parent=0 // loop_header_branch
    %16 = sbr.rel (%p14) target = $region8
  $region5: #{net_forward.3} parent=0 // loop_body
    %s18 = ssub.s32 %s13, 1
    %s19 = ssub.s32 %s13, 2
    %s20 = sadd.s32 %s13, 1
    %s21 = ssub.s32 %s13, %s20
    %p22 = scmp.eq.s32.totalorder %s21, 0
    %s24 = sadd.s32 %s23, 1
    %s25 = scalar_select %p22, %s23, %s24
    %p28 = pneg %p22
    %p29 = scmp.eq.s32.totalorder %s13, 1
    %p30 = por %p28, %p29
    %p31 = scmp.ne.s32.totalorder %s23, %s26
    %p32 = scmp.eq.s32.totalorder %s13, 0
    %p33 = por %p31, %p32
    %p34 = scmp.ne.s32.totalorder %s23, %s26
    %p35 = scmp.eq.s32.totalorder %s18, 1
    %p36 = por %p34, %p35
    %p37 = scmp.ne.s32.totalorder %s26, %s27
    %p38 = scmp.eq.s32.totalorder %s18, 0
    %p39 = por %p37, %p38
    %p40 = scmp.ne.s32.totalorder %s26, %s27
    %p41 = scmp.eq.s32.totalorder %s19, 1
    %p42 = por %p40, %p41
    %p44 = scmp.ne.s32.totalorder %s27, %s43
    %p45 = scmp.eq.s32.totalorder %s19, 0
    %p46 = por %p44, %p45
    %s48 = sadd.s32 %s47, 1
    %p51 = scmp.eq.s32.totalorder %s13, 1
    %p52 = scmp.ne.s32.totalorder %s47, %s49
    %p53 = scmp.eq.s32.totalorder %s13, 0
    %p54 = por %p52, %p53
    %p55 = scmp.ne.s32.totalorder %s47, %s49
    %p56 = scmp.eq.s32.totalorder %s18, 1
    %p57 = por %p55, %p56
    %p58 = scmp.ne.s32.totalorder %s49, %s50
    %p59 = scmp.eq.s32.totalorder %s18, 0
    %p60 = por %p58, %p59
    %p61 = scmp.ne.s32.totalorder %s49, %s50
    %p62 = scmp.eq.s32.totalorder %s19, 1
    %p63 = por %p61, %p62
    %p65 = scmp.ne.s32.totalorder %s50, %s64
    %p66 = scmp.eq.s32.totalorder %s19, 0
    %p67 = por %p65, %p66
    %s69 = sadd.s32 %s68, 1
    %p72 = scmp.eq.s32.totalorder %s13, 1
    %p73 = scmp.ne.s32.totalorder %s68, %s70
    %p74 = scmp.eq.s32.totalorder %s13, 0
    %p75 = por %p73, %p74
    %p76 = scmp.ne.s32.totalorder %s68, %s70
    %p77 = scmp.eq.s32.totalorder %s18, 1
    %p78 = por %p76, %p77
    %p79 = scmp.ne.s32.totalorder %s70, %s71
    %p80 = scmp.eq.s32.totalorder %s18, 0
    %p81 = por %p79, %p80
    %p82 = scmp.ne.s32.totalorder %s70, %s71
    %p83 = scmp.eq.s32.totalorder %s19, 1
    %p84 = por %p82, %p83
    %p86 = scmp.ne.s32.totalorder %s71, %s85
    %p87 = scmp.eq.s32.totalorder %s19, 0
    %p88 = por %p86, %p87
    %s90 = sadd.s32 %s89, 1
    %p93 = scmp.eq.s32.totalorder %s13, 1
    %p94 = scmp.ne.s32.totalorder %s89, %s91
    %p95 = scmp.eq.s32.totalorder %s13, 0
    %p96 = por %p94, %p95
    %p97 = scmp.ne.s32.totalorder %s89, %s91
    %p98 = scmp.eq.s32.totalorder %s18, 1
    %p99 = por %p97, %p98
    %p100 = scmp.ne.s32.totalorder %s91, %s92
    %p101 = scmp.eq.s32.totalorder %s18, 0
    %p102 = por %p100, %p101
    %p103 = scmp.ne.s32.totalorder %s91, %s92
    %p104 = scmp.eq.s32.totalorder %s19, 1
    %p105 = por %p103, %p104
    %p107 = scmp.ne.s32.totalorder %s92, %s106
    %p108 = scmp.eq.s32.totalorder %s19, 0
    %p109 = por %p107, %p108
    %s111 = sadd.s32 %s110, 1
    %p114 = scmp.eq.s32.totalorder %s13, 1
    %p115 = scmp.ne.s32.totalorder %s110, %s112
    %p116 = scmp.eq.s32.totalorder %s13, 0
    %p117 = por %p115, %p116
    %p118 = scmp.ne.s32.totalorder %s110, %s112
    %p119 = scmp.eq.s32.totalorder %s18, 1
    %p120 = por %p118, %p119
    %p121 = scmp.ne.s32.totalorder %s112, %s113
    %p122 = scmp.eq.s32.totalorder %s18, 0
    %p123 = por %p121, %p122
    %p124 = scmp.ne.s32.totalorder %s112, %s113
    %p125 = scmp.eq.s32.totalorder %s19, 1
    %p126 = por %p124, %p125
    %p128 = scmp.ne.s32.totalorder %s113, %s127
    %p129 = scmp.eq.s32.totalorder %s19, 0
    %p130 = por %p128, %p129
    %s132 = sadd.s32 %s131, 1
    %p135 = scmp.eq.s32.totalorder %s13, 1
    %p136 = scmp.ne.s32.totalorder %s131, %s133
    %p137 = scmp.eq.s32.totalorder %s13, 0
    %p138 = por %p136, %p137
    %p139 = scmp.ne.s32.totalorder %s131, %s133
    %p140 = scmp.eq.s32.totalorder %s18, 1
    %p141 = por %p139, %p140
    %p142 = scmp.ne.s32.totalorder %s133, %s134
    %p143 = scmp.eq.s32.totalorder %s18, 0
    %p144 = por %p142, %p143
    %p145 = scmp.ne.s32.totalorder %s133, %s134
    %p146 = scmp.eq.s32.totalorder %s19, 1
    %p147 = por %p145, %p146
    %p149 = scmp.ne.s32.totalorder %s134, %s148
    %p150 = scmp.eq.s32.totalorder %s19, 0
    %p151 = por %p149, %p150
    %s153 = sadd.s32 %s152, 1
    %p156 = scmp.eq.s32.totalorder %s13, 1
    %p157 = scmp.ne.s32.totalorder %s152, %s154
    %p158 = scmp.eq.s32.totalorder %s13, 0
    %p159 = por %p157, %p158
    %p160 = scmp.ne.s32.totalorder %s152, %s154
    %p161 = scmp.eq.s32.totalorder %s18, 1
    %p162 = por %p160, %p161
    %p163 = scmp.ne.s32.totalorder %s154, %s155
    %p164 = scmp.eq.s32.totalorder %s18, 0
    %p165 = por %p163, %p164
    %p166 = scmp.ne.s32.totalorder %s154, %s155
    %p167 = scmp.eq.s32.totalorder %s19, 1
    %p168 = por %p166, %p167
    %p170 = scmp.ne.s32.totalorder %s155, %s169
    %p171 = scmp.eq.s32.totalorder %s19, 0
    %p172 = por %p170, %p171
    %s173 = ssub.s32 %s13, %s20
    %p174 = scmp.eq.s32.totalorder %s173, 0
    %s176 = sadd.s32 %s175, 1
    %s177 = scalar_select %p174, %s175, %s176
    %p180 = pneg %p174
    %p181 = scmp.eq.s32.totalorder %s13, 1
    %p182 = por %p180, %p181
    %p183 = scmp.ne.s32.totalorder %s175, %s178
    %p184 = scmp.eq.s32.totalorder %s13, 0
    %p185 = por %p183, %p184
    %p186 = scmp.ne.s32.totalorder %s175, %s178
    %p187 = scmp.eq.s32.totalorder %s18, 1
    %p188 = por %p186, %p187
    %p189 = scmp.ne.s32.totalorder %s178, %s179
    %p190 = scmp.eq.s32.totalorder %s18, 0
    %p191 = por %p189, %p190
    %p192 = scmp.ne.s32.totalorder %s178, %s179
    %p193 = scmp.eq.s32.totalorder %s19, 1
    %p194 = por %p192, %p193
    %p196 = scmp.ne.s32.totalorder %s179, %s195
    %p197 = scmp.eq.s32.totalorder %s19, 0
    %p198 = por %p196, %p197
    %p199 = scmp.le.s32.totalorder 1, %s13
    %p200 = scmp.lt.s32.totalorder %s13, 3
    %p201 = pnand %p199, %p200
    %p202 = pneg %p201
    // Predicated region
    $region9: #{net_forward.3} parent=5 // pred_check
      _
    $region10: #{net_forward.3} parent=5 // pred_check_branch
      %204 = sbr.rel (%p201) target = $region12
    $region11: #{net_forward.3} parent=5 // pred_region
      %s205 = ssub.s32 %s13, 1
      // Predicated region
      $region13: #{net_forward.3} parent=11 // pred_check
        %p206 = pneg %p60
      $region14: #{net_forward.3} parent=11 // pred_check_branch
        %208 = sbr.rel (%p206) target = $region16
      $region15: #{net_forward.3} parent=11 // pred_region
        _
      $region16: #{net_forward.3} parent=11 // pred_fallthru
        _
      // Predicated region
      $region17: #{net_forward.3} parent=11 // pred_check
        %p209 = pneg %p81
      $region18: #{net_forward.3} parent=11 // pred_check_branch
        %211 = sbr.rel (%p209) target = $region20
      $region19: #{net_forward.3} parent=11 // pred_region
        _
      $region20: #{net_forward.3} parent=11 // pred_fallthru
        _
      // Predicated region
      $region21: #{net_forward.3} parent=11 // pred_check
        %p212 = pneg %p102
      $region22: #{net_forward.3} parent=11 // pred_check_branch
        %214 = sbr.rel (%p212) target = $region24
      $region23: #{net_forward.3} parent=11 // pred_region
        _
      $region24: #{net_forward.3} parent=11 // pred_fallthru
        _
      // Predicated region
      $region25: #{net_forward.3} parent=11 // pred_check
        %p215 = pneg %p123
      $region26: #{net_forward.3} parent=11 // pred_check_branch
        %217 = sbr.rel (%p215) target = $region28
      $region27: #{net_forward.3} parent=11 // pred_region
        _
      $region28: #{net_forward.3} parent=11 // pred_fallthru
        _
      // Predicated region
      $region29: #{net_forward.3} parent=11 // pred_check
        %p218 = pneg %p144
      $region30: #{net_forward.3} parent=11 // pred_check_branch
        %220 = sbr.rel (%p218) target = $region32
      $region31: #{net_forward.3} parent=11 // pred_region
        _
      $region32: #{net_forward.3} parent=11 // pred_fallthru
        _
      // Predicated region
      $region33: #{net_forward.3} parent=11 // pred_check
        %p221 = pneg %p165
      $region34: #{net_forward.3} parent=11 // pred_check_branch
        %223 = sbr.rel (%p221) target = $region36
      $region35: #{net_forward.3} parent=11 // pred_region
        _
      $region36: #{net_forward.3} parent=11 // pred_fallthru
        _
    $region12: #{net_forward.3} parent=5 // pred_fallthru
      _
    %p224 = scmp.lt.s32.totalorder %s13, 2
    // Predicated region
    $region37: #{net_forward.3} parent=5 // pred_check
      %p225 = pneg %p224
    $region38: #{net_forward.3} parent=5 // pred_check_branch
      %227 = sbr.rel (%p225) target = $region40
    $region39: #{net_forward.3} parent=5 // pred_region
      // Predicated region
      $region41: #{net_forward.3} parent=39 // pred_check
        %p228 = pneg %p33
      $region42: #{net_forward.3} parent=39 // pred_check_branch
        %230 = sbr.rel (%p228) target = $region44
      $region43: #{net_forward.3} parent=39 // pred_region
        %s231 = smul.u32 16, %s13
        %p232 = scmp.lt.s32.totalorder %s231, 31
        %s233 = scalar_select %p232, %s231, 31
        %s234 = smul.addr %s233, 4
        %s235 = smul.addr %s234, 8
        %s236 = scalar_lea.vmem %s0, %s235
        %s237 = smul.u32 16, %s13
      $region44: #{net_forward.3} parent=39 // pred_fallthru
        _
    $region40: #{net_forward.3} parent=5 // pred_fallthru
      _
    %p238 = scmp.le.s32.totalorder 1, %s13
    %p239 = scmp.lt.s32.totalorder %s13, 3
    %p240 = pnand %p238, %p239
    %p241 = pneg %p240
    // Predicated region
    $region45: #{net_forward.3} parent=5 // pred_check
      _
    $region46: #{net_forward.3} parent=5 // pred_check_branch
      %243 = sbr.rel (%p240) target = $region48
    $region47: #{net_forward.3} parent=5 // pred_region
      %s244 = ssub.s32 %s13, 1
      %s245 = smul.u32 16, %s18
      %p246 = scmp.lt.s32.totalorder %s245, 31
      %s247 = scalar_select %p246, %s245, 31
      %s248 = smul.addr %s247, 4
      %s249 = smul.addr %s248, 8
      %s250 = scalar_lea.vmem %s0, %s249
      %p251 = pneg %p39
      %p252 = pneg %p36
      %p253 = pneg %p60
      %p254 = pneg %p57
      %p255 = pneg %p81
      %p256 = pneg %p78
      %p257 = pneg %p102
      %p258 = pneg %p99
      %p259 = pneg %p123
      %p260 = pneg %p120
      %p261 = pneg %p144
      %p262 = pneg %p141
      %p263 = pneg %p165
      %p264 = pneg %p162
      %p265 = pneg %p191
      %p266 = pneg %p188
      %s267 = smul.u32 2, %s18
      %p268 = scmp.lt.s32.totalorder %s267, 3
      %s269 = scalar_select %p268, %s267, 3
      %s270 = smul.addr %s269, 4
      %s271 = scalar_lea.vmem %s7, %s270
      %s272 = smul.u32 16, %s18
      %p273 = scmp.lt.s32.totalorder %s272, 31
      %s274 = scalar_select %p273, %s272, 31
      %s275 = smul.addr %s274, 4
      %s276 = smul.addr %s275, 8
      %s277 = scalar_lea.vmem %s0, %s276
      %s278 = smul.u32 16, %s18
      %s279 = smul.u32 2, %s18
      %p280 = scmp.lt.s32.totalorder %s279, 3
      %s281 = scalar_select %p280, %s279, 3
      %s282 = smul.addr %s281, 4
      %s283 = scalar_lea.vmem %s7, %s282
      %s284 = smul.u32 2, %s18
      %v286 = vld [vmem:[%s277] sm:$0xff]
      %v287 = vld [vmem:[%s277 + $0x8] sm:$0xff]
      %v288 = vld [vmem:[%s277 + $0x10] sm:$0xff]
      %v289 = vld [vmem:[%s277 + $0x18] sm:$0xff]
      %v290 = vld [vmem:[%s277 + $0x20] sm:$0xff]
      %v291 = vld [vmem:[%s277 + $0x28] sm:$0xff]
      %v292 = vld [vmem:[%s277 + $0x30] sm:$0xff]
      %v293 = vld [vmem:[%s277 + $0x38] sm:$0xff]
      %v294 = vld [vmem:[%s277 + $0x40] sm:$0xff]
      %v295 = vld [vmem:[%s277 + $0x48] sm:$0xff]
      %v296 = vld [vmem:[%s277 + $0x50] sm:$0xff]
      %v297 = vld [vmem:[%s277 + $0x58] sm:$0xff]
      %v298 = vld [vmem:[%s277 + $0x60] sm:$0xff]
      %v299 = vld [vmem:[%s277 + $0x68] sm:$0xff]
      %v300 = vld [vmem:[%s277 + $0x70] sm:$0xff]
      %v301 = vld [vmem:[%s277 + $0x78] sm:$0xff]
      %v302 = vld [vmem:[%s277 + $0x80] sm:$0xff]
      %v303 = vld [vmem:[%s277 + $0x88] sm:$0xff]
      %v304 = vld [vmem:[%s277 + $0x90] sm:$0xff]
      %v305 = vld [vmem:[%s277 + $0x98] sm:$0xff]
      %v306 = vld [vmem:[%s277 + $0xa0] sm:$0xff]
      %v307 = vld [vmem:[%s277 + $0xa8] sm:$0xff]
      %v308 = vld [vmem:[%s277 + $0xb0] sm:$0xff]
      %v309 = vld [vmem:[%s277 + $0xb8] sm:$0xff]
      %v310 = vld [vmem:[%s277 + $0xc0] sm:$0xff]
      %v311 = vld [vmem:[%s277 + $0xc8] sm:$0xff]
      %v312 = vld [vmem:[%s277 + $0xd0] sm:$0xff]
      %v313 = vld [vmem:[%s277 + $0xd8] sm:$0xff]
      %v314 = vld [vmem:[%s277 + $0xe0] sm:$0xff]
      %v315 = vld [vmem:[%s277 + $0xe8] sm:$0xff]
      %v316 = vld [vmem:[%s277 + $0xf0] sm:$0xff]
      %v317 = vld [vmem:[%s277 + $0xf8] sm:$0xff]
      %v318 = vld [vmem:[%s277 + $0x100] sm:$0xff]
      %v319 = vld [vmem:[%s277 + $0x108] sm:$0xff]
      %v320 = vld [vmem:[%s277 + $0x110] sm:$0xff]
      %v321 = vld [vmem:[%s277 + $0x118] sm:$0xff]
      %v322 = vld [vmem:[%s277 + $0x120] sm:$0xff]
      %v323 = vld [vmem:[%s277 + $0x128] sm:$0xff]
      %v324 = vld [vmem:[%s277 + $0x130] sm:$0xff]
      %v325 = vld [vmem:[%s277 + $0x138] sm:$0xff]
      %v326 = vld [vmem:[%s277 + $0x140] sm:$0xff]
      %v327 = vld [vmem:[%s277 + $0x148] sm:$0xff]
      %v328 = vld [vmem:[%s277 + $0x150] sm:$0xff]
      %v329 = vld [vmem:[%s277 + $0x158] sm:$0xff]
      %v330 = vld [vmem:[%s277 + $0x160] sm:$0xff]
      %v331 = vld [vmem:[%s277 + $0x168] sm:$0xff]
      %v332 = vld [vmem:[%s277 + $0x170] sm:$0xff]
      %v333 = vld [vmem:[%s277 + $0x178] sm:$0xff]
      %v334 = vld [vmem:[%s277 + $0x180] sm:$0xff]
      %v335 = vld [vmem:[%s277 + $0x188] sm:$0xff]
      %v336 = vld [vmem:[%s277 + $0x190] sm:$0xff]
      %v337 = vld [vmem:[%s277 + $0x198] sm:$0xff]
      %v338 = vld [vmem:[%s277 + $0x1a0] sm:$0xff]
      %v339 = vld [vmem:[%s277 + $0x1a8] sm:$0xff]
      %v340 = vld [vmem:[%s277 + $0x1b0] sm:$0xff]
      %v341 = vld [vmem:[%s277 + $0x1b8] sm:$0xff]
      %v342 = vld [vmem:[%s277 + $0x1c0] sm:$0xff]
      %v343 = vld [vmem:[%s277 + $0x1c8] sm:$0xff]
      %v344 = vld [vmem:[%s277 + $0x1d0] sm:$0xff]
      %v345 = vld [vmem:[%s277 + $0x1d8] sm:$0xff]
      %v346 = vld [vmem:[%s277 + $0x1e0] sm:$0xff]
      %v347 = vld [vmem:[%s277 + $0x1e8] sm:$0xff]
      %v348 = vld [vmem:[%s277 + $0x1f0] sm:$0xff]
      %v349 = vld [vmem:[%s277 + $0x1f8] sm:$0xff]
      %v350 = vpack.c.bf16 %v287, %v286
      %v351 = vpack.c.bf16 %v289, %v288
      %v352 = vpack.c.bf16 %v291, %v290
      %v353 = vpack.c.bf16 %v293, %v292
      %v354 = vpack.c.bf16 %v295, %v294
      %v355 = vpack.c.bf16 %v297, %v296
      %v356 = vpack.c.bf16 %v299, %v298
      %v357 = vpack.c.bf16 %v301, %v300
      %v358 = vpack.c.bf16 %v303, %v302
      %v359 = vpack.c.bf16 %v305, %v304
      %v360 = vpack.c.bf16 %v307, %v306
      %v361 = vpack.c.bf16 %v309, %v308
      %v362 = vpack.c.bf16 %v311, %v310
      %v363 = vpack.c.bf16 %v313, %v312
      %v364 = vpack.c.bf16 %v315, %v314
      %v365 = vpack.c.bf16 %v317, %v316
      %v366 = vpack.c.bf16 %v319, %v318
      %v367 = vpack.c.bf16 %v321, %v320
      %v368 = vpack.c.bf16 %v323, %v322
      %v369 = vpack.c.bf16 %v325, %v324
      %v370 = vpack.c.bf16 %v327, %v326
      %v371 = vpack.c.bf16 %v329, %v328
      %v372 = vpack.c.bf16 %v331, %v330
      %v373 = vpack.c.bf16 %v333, %v332
      %v374 = vpack.c.bf16 %v335, %v334
      %v375 = vpack.c.bf16 %v337, %v336
      %v376 = vpack.c.bf16 %v339, %v338
      %v377 = vpack.c.bf16 %v341, %v340
      %v378 = vpack.c.bf16 %v343, %v342
      %v379 = vpack.c.bf16 %v345, %v344
      %v380 = vpack.c.bf16 %v347, %v346
      %v381 = vpack.c.bf16 %v349, %v348
      %v382 = vld [vmem:[%s1] sm:$0x3]
      %v383 = vld [vmem:[%s2] sm:$0x1]
      %v385 = vlaneseq
      %v386 = vshrl.u32 %v385, 7
      %v387 = vsub.s32 0, %v386
      %v388 = vrot.slane %v383, %v387
      %vm390 = vcmask 23552
      %v392 = vsel %vm390, %v350, 0
      %v395 = vsel %vm390, %v351, 0
      %v398 = vsel %vm390, %v352, 0
      %v401 = vsel %vm390, %v353, 0
      %v404 = vsel %vm390, %v354, 0
      %v407 = vsel %vm390, %v355, 0
      %v410 = vsel %vm390, %v356, 0
      %v413 = vsel %vm390, %v357, 0
      %v416 = vsel %vm390, %v358, 0
      %v419 = vsel %vm390, %v359, 0
      %v422 = vsel %vm390, %v360, 0
      %v425 = vsel %vm390, %v361, 0
      %v428 = vsel %vm390, %v362, 0
      %v431 = vsel %vm390, %v363, 0
      %v434 = vsel %vm390, %v364, 0
      %v437 = vsel %vm390, %v365, 0
      %v440 = vsel %vm390, %v366, 0
      %v443 = vsel %vm390, %v367, 0
      %v446 = vsel %vm390, %v368, 0
      %v449 = vsel %vm390, %v369, 0
      %v452 = vsel %vm390, %v370, 0
      %v455 = vsel %vm390, %v371, 0
      %v458 = vsel %vm390, %v372, 0
      %v461 = vsel %vm390, %v373, 0
      %v464 = vsel %vm390, %v374, 0
      %v467 = vsel %vm390, %v375, 0
      %v470 = vsel %vm390, %v376, 0
      %v473 = vsel %vm390, %v377, 0
      %v476 = vsel %vm390, %v378, 0
      %v479 = vsel %vm390, %v379, 0
      %v482 = vsel %vm390, %v380, 0
      %v485 = vsel %vm390, %v381, 0
      %vm487 = vcmask 1040384
      %vm488 = vcmask 1041408
      %v489 = vsel %vm487, 4294967295, 65535
      %v490 = vsel %vm488, %v489, 0
      %v492 = vand.u32 %v382, %v490
      %494 = vmatprep.subr.bf16.mxu0 0
      %495 = vmatpush1.bf16.msra.mxu0 %v492
      %496 = vmatprep.subr.bf16.mxu0 0
      %497 = vmatpush1.bf16.msra.mxu0 0
      %498 = vmatprep.subr.bf16.mxu0 0
      %499 = vmatpush1.bf16.msra.mxu0 0
      %500 = vmatprep.subr.bf16.mxu0 0
      %501 = vmatpush1.bf16.msra.mxu0 0
      %502 = vmatprep.subr.bf16.mxu0 0
      %503 = vmatpush1.bf16.msra.mxu0 0
      %504 = vmatprep.subr.bf16.mxu0 0
      %505 = vmatpush1.bf16.msra.mxu0 0
      %506 = vmatprep.subr.bf16.mxu0 0
      %507 = vmatpush1.bf16.msra.mxu0 0
      %508 = vmatprep.subr.bf16.mxu0 0
      %509 = vmatpush1.bf16.msra.mxu0 0
      %510 = vmatprep.subr.bf16.mxu0 0
      %511 = vmatpush1.bf16.msra.mxu0 0
      %512 = vmatprep.subr.bf16.mxu0 0
      %513 = vmatpush1.bf16.msra.mxu0 0
      %514 = vmatprep.subr.bf16.mxu0 0
      %515 = vmatpush1.bf16.msra.mxu0 0
      %516 = vmatprep.subr.bf16.mxu0 0
      %517 = vmatpush1.bf16.msra.mxu0 0
      %518 = vmatprep.subr.bf16.mxu0 0
      %519 = vmatpush1.bf16.msra.mxu0 0
      %520 = vmatprep.subr.bf16.mxu0 0
      %521 = vmatpush1.bf16.msra.mxu0 0
      %522 = vmatprep.subr.bf16.mxu0 0
      %523 = vmatpush1.bf16.msra.mxu0 0
      %524 = vmatprep.subr.bf16.mxu0 0
      %525 = vmatpush1.bf16.msra.mxu0 0
      %526 = vmatprep.mubr.bf16.mxu0 0
      %527 = vmatmul.mubr.bf16.gmra.mrb[0].mxu0 %v392
      %v528 = vpop.f32.mrb[0].mxu0
      %v529 = vadd.f32 %v388, %v528
      %v530 = vpop.f32.mrb[0].mxu0
      %v531 = vpop.f32.mrb[0].mxu0
      %v532 = vadd.f32 %v388, %v531
      %v533 = vpop.f32.mrb[0].mxu0
      %534 = vmatprep.mubr.bf16.mxu0 0
      %535 = vmatmul.mubr.bf16.gmra.mrb[0].mxu0 %v395
      %v536 = vpop.f32.mrb[0].mxu0
      %v537 = vadd.f32 %v388, %v536
      %v538 = vpop.f32.mrb[0].mxu0
      %v539 = vpop.f32.mrb[0].mxu0
      %v540 = vadd.f32 %v388, %v539
      %v541 = vpop.f32.mrb[0].mxu0
      %542 = vmatprep.mubr.bf16.mxu0 0
      %543 = vmatmul.mubr.bf16.gmra.mrb[0].mxu0 %v398
      %v544 = vpop.f32.mrb[0].mxu0
      %v545 = vadd.f32 %v388, %v544
      %v546 = vpop.f32.mrb[0].mxu0
      %v547 = vpop.f32.mrb[0].mxu0
      %v548 = vadd.f32 %v388, %v547
      %v549 = vpop.f32.mrb[0].mxu0
      %550 = vmatprep.mubr.bf16.mxu0 0
      %551 = vmatmul.mubr.bf16.gmra.mrb[0].mxu0 %v401
      %v552 = vpop.f32.mrb[0].mxu0
      %v553 = vadd.f32 %v388, %v552
      %v554 = vpop.f32.mrb[0].mxu0
      %v555 = vpop.f32.mrb[0].mxu0
      %v556 = vadd.f32 %v388, %v555
      %v557 = vpop.f32.mrb[0].mxu0
      %558 = vmatprep.mubr.bf16.mxu0 0
      %559 = vmatmul.mubr.bf16.gmra.mrb[0].mxu0 %v404
      %v560 = vpop.f32.mrb[0].mxu0
      %v561 = vadd.f32 %v388, %v560
      %v562 = vpop.f32.mrb[0].mxu0
      %v563 = vpop.f32.mrb[0].mxu0
      %v564 = vadd.f32 %v388, %v563
      %v565 = vpop.f32.mrb[0].mxu0
      %566 = vmatprep.mubr.bf16.mxu0 0
      %567 = vmatmul.mubr.bf16.gmra.mrb[0].mxu0 %v407
      %v568 = vpop.f32.mrb[0].mxu0
      %v569 = vadd.f32 %v388, %v568
      %v570 = vpop.f32.mrb[0].mxu0
      %v571 = vpop.f32.mrb[0].mxu0
      %v572 = vadd.f32 %v388, %v571
      %v573 = vpop.f32.mrb[0].mxu0
      %574 = vmatprep.mubr.bf16.mxu0 0
      %575 = vmatmul.mubr.bf16.gmra.mrb[0].mxu0 %v410
      %v576 = vpop.f32.mrb[0].mxu0
      %v577 = vadd.f32 %v388, %v576
      %v578 = vpop.f32.mrb[0].mxu0
      %v579 = vpop.f32.mrb[0].mxu0
      %v580 = vadd.f32 %v388, %v579
      %v581 = vpop.f32.mrb[0].mxu0
      %582 = vmatprep.mubr.bf16.mxu0 0
      %583 = vmatmul.mubr.bf16.gmra.mrb[0].mxu0 %v413
      %v584 = vpop.f32.mrb[0].mxu0
      %v585 = vadd.f32 %v388, %v584
      %v586 = vpop.f32.mrb[0].mxu0
      %v587 = vpop.f32.mrb[0].mxu0
      %v588 = vadd.f32 %v388, %v587
      %v589 = vpop.f32.mrb[0].mxu0
      %590 = vmatprep.mubr.bf16.mxu0 0
      %591 = vmatmul.mubr.bf16.gmra.mrb[0].mxu0 %v416
      %v592 = vpop.f32.mrb[0].mxu0
      %v593 = vadd.f32 %v388, %v592
      %v594 = vpop.f32.mrb[0].mxu0
      %v595 = vpop.f32.mrb[0].mxu0
      %v596 = vadd.f32 %v388, %v595
      %v597 = vpop.f32.mrb[0].mxu0
      %598 = vmatprep.mubr.bf16.mxu0 0
      %599 = vmatmul.mubr.bf16.gmra.mrb[0].mxu0 %v419
      %v600 = vpop.f32.mrb[0].mxu0
      %v601 = vadd.f32 %v388, %v600
      %v602 = vpop.f32.mrb[0].mxu0
      %v603 = vpop.f32.mrb[0].mxu0
      %v604 = vadd.f32 %v388, %v603
      %v605 = vpop.f32.mrb[0].mxu0
      %606 = vmatprep.mubr.bf16.mxu0 0
      %607 = vmatmul.mubr.bf16.gmra.mrb[0].mxu0 %v422
      %v608 = vpop.f32.mrb[0].mxu0
      %v609 = vadd.f32 %v388, %v608
      %v610 = vpop.f32.mrb[0].mxu0
      %v611 = vpop.f32.mrb[0].mxu0
      %v612 = vadd.f32 %v388, %v611
      %v613 = vpop.f32.mrb[0].mxu0
      %614 = vmatprep.mubr.bf16.mxu0 0
      %615 = vmatmul.mubr.bf16.gmra.mrb[0].mxu0 %v425
      %v616 = vpop.f32.mrb[0].mxu0
      %v617 = vadd.f32 %v388, %v616
      %v618 = vpop.f32.mrb[0].mxu0
      %v619 = vpop.f32.mrb[0].mxu0
      %v620 = vadd.f32 %v388, %v619
      %v621 = vpop.f32.mrb[0].mxu0
      %622 = vmatprep.mubr.bf16.mxu0 0
      %623 = vmatmul.mubr.bf16.gmra.mrb[0].mxu0 %v428
      %v624 = vpop.f32.mrb[0].mxu0
      %v625 = vadd.f32 %v388, %v624
      %v626 = vpop.f32.mrb[0].mxu0
      %v627 = vpop.f32.mrb[0].mxu0
      %v628 = vadd.f32 %v388, %v627
      %v629 = vpop.f32.mrb[0].mxu0
      %630 = vmatprep.mubr.bf16.mxu0 0
      %631 = vmatmul.mubr.bf16.gmra.mrb[0].mxu0 %v431
      %v632 = vpop.f32.mrb[0].mxu0
      %v633 = vadd.f32 %v388, %v632
      %v634 = vpop.f32.mrb[0].mxu0
      %v635 = vpop.f32.mrb[0].mxu0
      %v636 = vadd.f32 %v388, %v635
      %v637 = vpop.f32.mrb[0].mxu0
      %638 = vmatprep.mubr.bf16.mxu0 0
      %639 = vmatmul.mubr.bf16.gmra.mrb[0].mxu0 %v434
      %v640 = vpop.f32.mrb[0].mxu0
      %v641 = vadd.f32 %v388, %v640
      %v642 = vpop.f32.mrb[0].mxu0
      %v643 = vpop.f32.mrb[0].mxu0
      %v644 = vadd.f32 %v388, %v643
      %v645 = vpop.f32.mrb[0].mxu0
      %646 = vmatprep.mubr.bf16.mxu0 0
      %647 = vmatmul.mubr.bf16.gmra.mrb[0].mxu0 %v437
      %v648 = vpop.f32.mrb[0].mxu0
      %v649 = vadd.f32 %v388, %v648
      %v650 = vpop.f32.mrb[0].mxu0
      %v651 = vpop.f32.mrb[0].mxu0
      %v652 = vadd.f32 %v388, %v651
      %v653 = vpop.f32.mrb[0].mxu0
      %654 = vmatprep.mubr.bf16.mxu0 0
      %655 = vmatmul.mubr.bf16.gmra.mrb[0].mxu0 %v440
      %v656 = vpop.f32.mrb[0].mxu0
      %v657 = vadd.f32 %v388, %v656
      %v658 = vpop.f32.mrb[0].mxu0
      %v659 = vpop.f32.mrb[0].mxu0
      %v660 = vadd.f32 %v388, %v659
      %v661 = vpop.f32.mrb[0].mxu0
      %662 = vmatprep.mubr.bf16.mxu0 0
      %663 = vmatmul.mubr.bf16.gmra.mrb[0].mxu0 %v443
      %v664 = vpop.f32.mrb[0].mxu0
      %v665 = vadd.f32 %v388, %v664
      %v666 = vpop.f32.mrb[0].mxu0
      %v667 = vpop.f32.mrb[0].mxu0
      %v668 = vadd.f32 %v388, %v667
      %v669 = vpop.f32.mrb[0].mxu0
      %670 = vmatprep.mubr.bf16.mxu0 0
      %671 = vmatmul.mubr.bf16.gmra.mrb[0].mxu0 %v446
      %v672 = vpop.f32.mrb[0].mxu0
      %v673 = vadd.f32 %v388, %v672
      %v674 = vpop.f32.mrb[0].mxu0
      %v675 = vpop.f32.mrb[0].mxu0
      %v676 = vadd.f32 %v388, %v675
      %v677 = vpop.f32.mrb[0].mxu0
      %678 = vmatprep.mubr.bf16.mxu0 0
      %679 = vmatmul.mubr.bf16.gmra.mrb[0].mxu0 %v449
      %v680 = vpop.f32.mrb[0].mxu0
      %v681 = vadd.f32 %v388, %v680
      %v682 = vpop.f32.mrb[0].mxu0
      %v683 = vpop.f32.mrb[0].mxu0
      %v684 = vadd.f32 %v388, %v683
      %v685 = vpop.f32.mrb[0].mxu0
      %686 = vmatprep.mubr.bf16.mxu0 0
      %687 = vmatmul.mubr.bf16.gmra.mrb[0].mxu0 %v452
      %v688 = vpop.f32.mrb[0].mxu0
      %v689 = vadd.f32 %v388, %v688
      %v690 = vpop.f32.mrb[0].mxu0
      %v691 = vpop.f32.mrb[0].mxu0
      %v692 = vadd.f32 %v388, %v691
      %v693 = vpop.f32.mrb[0].mxu0
      %694 = vmatprep.mubr.bf16.mxu0 0
      %695 = vmatmul.mubr.bf16.gmra.mrb[0].mxu0 %v455
      %v696 = vpop.f32.mrb[0].mxu0
      %v697 = vadd.f32 %v388, %v696
      %v698 = vpop.f32.mrb[0].mxu0
      %v699 = vpop.f32.mrb[0].mxu0
      %v700 = vadd.f32 %v388, %v699
      %v701 = vpop.f32.mrb[0].mxu0
      %702 = vmatprep.mubr.bf16.mxu0 0
      %703 = vmatmul.mubr.bf16.gmra.mrb[0].mxu0 %v458
      %v704 = vpop.f32.mrb[0].mxu0
      %v705 = vadd.f32 %v388, %v704
      %v706 = vpop.f32.mrb[0].mxu0
      %v707 = vpop.f32.mrb[0].mxu0
      %v708 = vadd.f32 %v388, %v707
      %v709 = vpop.f32.mrb[0].mxu0
      %710 = vmatprep.mubr.bf16.mxu0 0
      %711 = vmatmul.mubr.bf16.gmra.mrb[0].mxu0 %v461
      %v712 = vpop.f32.mrb[0].mxu0
      %v713 = vadd.f32 %v388, %v712
      %v714 = vpop.f32.mrb[0].mxu0
      %v715 = vpop.f32.mrb[0].mxu0
      %v716 = vadd.f32 %v388, %v715
      %v717 = vpop.f32.mrb[0].mxu0
      %718 = vmatprep.mubr.bf16.mxu0 0
      %719 = vmatmul.mubr.bf16.gmra.mrb[0].mxu0 %v464
      %v720 = vpop.f32.mrb[0].mxu0
      %v721 = vadd.f32 %v388, %v720
      %v722 = vpop.f32.mrb[0].mxu0
      %v723 = vpop.f32.mrb[0].mxu0
      %v724 = vadd.f32 %v388, %v723
      %v725 = vpop.f32.mrb[0].mxu0
      %726 = vmatprep.mubr.bf16.mxu0 0
      %727 = vmatmul.mubr.bf16.gmra.mrb[0].mxu0 %v467
      %v728 = vpop.f32.mrb[0].mxu0
      %v729 = vadd.f32 %v388, %v728
      %v730 = vpop.f32.mrb[0].mxu0
      %v731 = vpop.f32.mrb[0].mxu0
      %v732 = vadd.f32 %v388, %v731
      %v733 = vpop.f32.mrb[0].mxu0
      %734 = vmatprep.mubr.bf16.mxu0 0
      %735 = vmatmul.mubr.bf16.gmra.mrb[0].mxu0 %v470
      %v736 = vpop.f32.mrb[0].mxu0
      %v737 = vadd.f32 %v388, %v736
      %v738 = vpop.f32.mrb[0].mxu0
      %v739 = vpop.f32.mrb[0].mxu0
      %v740 = vadd.f32 %v388, %v739
      %v741 = vpop.f32.mrb[0].mxu0
      %742 = vmatprep.mubr.bf16.mxu0 0
      %743 = vmatmul.mubr.bf16.gmra.mrb[0].mxu0 %v473
      %v744 = vpop.f32.mrb[0].mxu0
      %v745 = vadd.f32 %v388, %v744
      %v746 = vpop.f32.mrb[0].mxu0
      %v747 = vpop.f32.mrb[0].mxu0
      %v748 = vadd.f32 %v388, %v747
      %v749 = vpop.f32.mrb[0].mxu0
      %750 = vmatprep.mubr.bf16.mxu0 0
      %751 = vmatmul.mubr.bf16.gmra.mrb[0].mxu0 %v476
      %v752 = vpop.f32.mrb[0].mxu0
      %v753 = vadd.f32 %v388, %v752
      %v754 = vpop.f32.mrb[0].mxu0
      %v755 = vpop.f32.mrb[0].mxu0
      %v756 = vadd.f32 %v388, %v755
      %v757 = vpop.f32.mrb[0].mxu0
      %758 = vmatprep.mubr.bf16.mxu0 0
      %759 = vmatmul.mubr.bf16.gmra.mrb[0].mxu0 %v479
      %v760 = vpop.f32.mrb[0].mxu0
      %v761 = vadd.f32 %v388, %v760
      %v762 = vpop.f32.mrb[0].mxu0
      %v763 = vpop.f32.mrb[0].mxu0
      %v764 = vadd.f32 %v388, %v763
      %v765 = vpop.f32.mrb[0].mxu0
      %766 = vmatprep.mubr.bf16.mxu0 0
      %767 = vmatmul.mubr.bf16.gmra.mrb[0].mxu0 %v482
      %v768 = vpop.f32.mrb[0].mxu0
      %v769 = vadd.f32 %v388, %v768
      %v770 = vpop.f32.mrb[0].mxu0
      %v771 = vpop.f32.mrb[0].mxu0
      %v772 = vadd.f32 %v388, %v771
      %v773 = vpop.f32.mrb[0].mxu0
      %774 = vmatprep.mubr.bf16.mxu0 0
      %775 = vmatmul.mubr.bf16.gmra.mrb[0].mxu0 %v485
      %v776 = vpop.f32.mrb[0].mxu0
      %v777 = vadd.f32 %v388, %v776
      %v778 = vpop.f32.mrb[0].mxu0
      %v779 = vpop.f32.mrb[0].mxu0
      %v780 = vadd.f32 %v388, %v779
      %v781 = vpop.f32.mrb[0].mxu0
      %782 = vdwg.mxu0
      %v783 = vmul.f32 %v529, 0.999995
      %v784 = vmul.f32 %v532, 0.999995
      %v785 = vmul.f32 %v537, 0.999995
      %v786 = vmul.f32 %v540, 0.999995
      %v787 = vmul.f32 %v545, 0.999995
      %v788 = vmul.f32 %v548, 0.999995
      %v789 = vmul.f32 %v553, 0.999995
      %v790 = vmul.f32 %v556, 0.999995
      %v791 = vmul.f32 %v561, 0.999995
      %v792 = vmul.f32 %v564, 0.999995
      %v793 = vmul.f32 %v569, 0.999995
      %v794 = vmul.f32 %v572, 0.999995
      %v795 = vmul.f32 %v577, 0.999995
      %v796 = vmul.f32 %v580, 0.999995
      %v797 = vmul.f32 %v585, 0.999995
      %v798 = vmul.f32 %v588, 0.999995
      %v799 = vmul.f32 %v593, 0.999995
      %v800 = vmul.f32 %v596, 0.999995
      %v801 = vmul.f32 %v601, 0.999995
      %v802 = vmul.f32 %v604, 0.999995
      %v803 = vmul.f32 %v609, 0.999995
      %v804 = vmul.f32 %v612, 0.999995
      %v805 = vmul.f32 %v617, 0.999995
      %v806 = vmul.f32 %v620, 0.999995
      %v807 = vmul.f32 %v625, 0.999995
      %v808 = vmul.f32 %v628, 0.999995
      %v809 = vmul.f32 %v633, 0.999995
      %v810 = vmul.f32 %v636, 0.999995
      %v811 = vmul.f32 %v641, 0.999995
      %v812 = vmul.f32 %v644, 0.999995
      %v813 = vmul.f32 %v649, 0.999995
      %v814 = vmul.f32 %v652, 0.999995
      %v815 = vmul.f32 %v657, 0.999995
      %v816 = vmul.f32 %v660, 0.999995
      %v817 = vmul.f32 %v665, 0.999995
      %v818 = vmul.f32 %v668, 0.999995
      %v819 = vmul.f32 %v673, 0.999995
      %v820 = vmul.f32 %v676, 0.999995
      %v821 = vmul.f32 %v681, 0.999995
      %v822 = vmul.f32 %v684, 0.999995
      %v823 = vmul.f32 %v689, 0.999995
      %v824 = vmul.f32 %v692, 0.999995
      %v825 = vmul.f32 %v697, 0.999995
      %v826 = vmul.f32 %v700, 0.999995
      %v827 = vmul.f32 %v705, 0.999995
      %v828 = vmul.f32 %v708, 0.999995
      %v829 = vmul.f32 %v713, 0.999995
      %v830 = vmul.f32 %v716, 0.999995
      %v831 = vmul.f32 %v721, 0.999995
      %v832 = vmul.f32 %v724, 0.999995
      %v833 = vmul.f32 %v729, 0.999995
      %v834 = vmul.f32 %v732, 0.999995
      %v835 = vmul.f32 %v737, 0.999995
      %v836 = vmul.f32 %v740, 0.999995
      %v837 = vmul.f32 %v745, 0.999995
      %v838 = vmul.f32 %v748, 0.999995
      %v839 = vmul.f32 %v753, 0.999995
      %v840 = vmul.f32 %v756, 0.999995
      %v841 = vmul.f32 %v761, 0.999995
      %v842 = vmul.f32 %v764, 0.999995
      %v843 = vmul.f32 %v769, 0.999995
      %v844 = vmul.f32 %v772, 0.999995
      %v845 = vmul.f32 %v777, 0.999995
      %v846 = vmul.f32 %v780, 0.999995
      %v847 = vmax.f32 %v783, 0.0
      %v848 = vmax.f32 %v784, 0.0
      %v849 = vmax.f32 %v785, 0.0
      %v850 = vmax.f32 %v786, 0.0
      %v851 = vmax.f32 %v787, 0.0
      %v852 = vmax.f32 %v788, 0.0
      %v853 = vmax.f32 %v789, 0.0
      %v854 = vmax.f32 %v790, 0.0
      %v855 = vmax.f32 %v791, 0.0
      %v856 = vmax.f32 %v792, 0.0
      %v857 = vmax.f32 %v793, 0.0
      %v858 = vmax.f32 %v794, 0.0
      %v859 = vmax.f32 %v795, 0.0
      %v860 = vmax.f32 %v796, 0.0
      %v861 = vmax.f32 %v797, 0.0
      %v862 = vmax.f32 %v798, 0.0
      %v863 = vmax.f32 %v799, 0.0
      %v864 = vmax.f32 %v800, 0.0
      %v865 = vmax.f32 %v801, 0.0
      %v866 = vmax.f32 %v802, 0.0
      %v867 = vmax.f32 %v803, 0.0
      %v868 = vmax.f32 %v804, 0.0
      %v869 = vmax.f32 %v805, 0.0
      %v870 = vmax.f32 %v806, 0.0
      %v871 = vmax.f32 %v807, 0.0
      %v872 = vmax.f32 %v808, 0.0
      %v873 = vmax.f32 %v809, 0.0
      %v874 = vmax.f32 %v810, 0.0
      %v875 = vmax.f32 %v811, 0.0
      %v876 = vmax.f32 %v812, 0.0
      %v877 = vmax.f32 %v813, 0.0
      %v878 = vmax.f32 %v814, 0.0
      %v879 = vmax.f32 %v815, 0.0
      %v880 = vmax.f32 %v816, 0.0
      %v881 = vmax.f32 %v817, 0.0
      %v882 = vmax.f32 %v818, 0.0
      %v883 = vmax.f32 %v819, 0.0
      %v884 = vmax.f32 %v820, 0.0
      %v885 = vmax.f32 %v821, 0.0
      %v886 = vmax.f32 %v822, 0.0
      %v887 = vmax.f32 %v823, 0.0
      %v888 = vmax.f32 %v824, 0.0
      %v889 = vmax.f32 %v825, 0.0
      %v890 = vmax.f32 %v826, 0.0
      %v891 = vmax.f32 %v827, 0.0
      %v892 = vmax.f32 %v828, 0.0
      %v893 = vmax.f32 %v829, 0.0
      %v894 = vmax.f32 %v830, 0.0
      %v895 = vmax.f32 %v831, 0.0
      %v896 = vmax.f32 %v832, 0.0
      %v897 = vmax.f32 %v833, 0.0
      %v898 = vmax.f32 %v834, 0.0
      %v899 = vmax.f32 %v835, 0.0
      %v900 = vmax.f32 %v836, 0.0
      %v901 = vmax.f32 %v837, 0.0
      %v902 = vmax.f32 %v838, 0.0
      %v903 = vmax.f32 %v839, 0.0
      %v904 = vmax.f32 %v840, 0.0
      %v905 = vmax.f32 %v841, 0.0
      %v906 = vmax.f32 %v842, 0.0
      %v907 = vmax.f32 %v843, 0.0
      %v908 = vmax.f32 %v844, 0.0
      %v909 = vmax.f32 %v845, 0.0
      %v910 = vmax.f32 %v846, 0.0
      %v911 = vpack.c.bf16 %v848, %v847
      %v912 = vpack.c.bf16 %v850, %v849
      %v913 = vpack.c.bf16 %v852, %v851
      %v914 = vpack.c.bf16 %v854, %v853
      %v915 = vpack.c.bf16 %v856, %v855
      %v916 = vpack.c.bf16 %v858, %v857
      %v917 = vpack.c.bf16 %v860, %v859
      %v918 = vpack.c.bf16 %v862, %v861
      %v919 = vpack.c.bf16 %v864, %v863
      %v920 = vpack.c.bf16 %v866, %v865
      %v921 = vpack.c.bf16 %v868, %v867
      %v922 = vpack.c.bf16 %v870, %v869
      %v923 = vpack.c.bf16 %v872, %v871
      %v924 = vpack.c.bf16 %v874, %v873
      %v925 = vpack.c.bf16 %v876, %v875
      %v926 = vpack.c.bf16 %v878, %v877
      %v927 = vpack.c.bf16 %v880, %v879
      %v928 = vpack.c.bf16 %v882, %v881
      %v929 = vpack.c.bf16 %v884, %v883
      %v930 = vpack.c.bf16 %v886, %v885
      %v931 = vpack.c.bf16 %v888, %v887
      %v932 = vpack.c.bf16 %v890, %v889
      %v933 = vpack.c.bf16 %v892, %v891
      %v934 = vpack.c.bf16 %v894, %v893
      %v935 = vpack.c.bf16 %v896, %v895
      %v936 = vpack.c.bf16 %v898, %v897
      %v937 = vpack.c.bf16 %v900, %v899
      %v938 = vpack.c.bf16 %v902, %v901
      %v939 = vpack.c.bf16 %v904, %v903
      %v940 = vpack.c.bf16 %v906, %v905
      %v941 = vpack.c.bf16 %v908, %v907
      %v942 = vpack.c.bf16 %v910, %v909
      %v943 = vld [vmem:[%s3] sm:$0xf]
      %v944 = vld [vmem:[%s3 + $0x4] sm:$0xf]
      %v945 = vld [vmem:[%s3 + $0x8] sm:$0xf]
      %v946 = vld [vmem:[%s3 + $0xc] sm:$0xf]
      %v947 = vld [vmem:[%s3 + $0x10] sm:$0xf]
      %v948 = vld [vmem:[%s3 + $0x14] sm:$0xf]
      %v949 = vld [vmem:[%s3 + $0x18] sm:$0xf]
      %v950 = vld [vmem:[%s3 + $0x1c] sm:$0xf]
      %v951 = vld [vmem:[%s4] sm:$0x1]
      %v953 = vlaneseq
      %v954 = vshrl.u32 %v953, 7
      %v955 = vsub.s32 0, %v954
      %v956 = vrot.slane %v951, %v955
      %v966 = vunpack.c.l.b16 %v943
      %v967 = vunpack.c.l.b16 %v944
      %v968 = vunpack.c.l.b16 %v945
      %v969 = vunpack.c.l.b16 %v946
      %v970 = vunpack.c.l.b16 %v947
      %v971 = vunpack.c.l.b16 %v948
      %v972 = vunpack.c.l.b16 %v949
      %v973 = vunpack.c.l.b16 %v950
      %v974 = vpack.c.b16 %v967, %v966
      %v975 = vpack.c.b16 %v969, %v968
      %v976 = vpack.c.b16 %v971, %v970
      %v977 = vpack.c.b16 %v973, %v972
      %vm982 = vcmask 523264
      %v984 = vsel %vm982, %v911, 0
      %v987 = vsel %vm982, %v912, 0
      %v990 = vsel %vm982, %v913, 0
      %v993 = vsel %vm982, %v914, 0
      %v996 = vsel %vm982, %v915, 0
      %v999 = vsel %vm982, %v916, 0
      %v1002 = vsel %vm982, %v917, 0
      %v1005 = vsel %vm982, %v918, 0
      %v1008 = vsel %vm982, %v919, 0
      %v1011 = vsel %vm982, %v920, 0
      %v1014 = vsel %vm982, %v921, 0
      %v1017 = vsel %vm982, %v922, 0
      %v1020 = vsel %vm982, %v923, 0
      %v1023 = vsel %vm982, %v924, 0
      %v1026 = vsel %vm982, %v925, 0
      %v1029 = vsel %vm982, %v926, 0
      %v1032 = vsel %vm982, %v927, 0
      %v1035 = vsel %vm982, %v928, 0
      %v1038 = vsel %vm982, %v929, 0
      %v1041 = vsel %vm982, %v930, 0
      %v1044 = vsel %vm982, %v931, 0
      %v1047 = vsel %vm982, %v932, 0
      %v1050 = vsel %vm982, %v933, 0
      %v1053 = vsel %vm982, %v934, 0
      %v1056 = vsel %vm982, %v935, 0
      %v1059 = vsel %vm982, %v936, 0
      %v1062 = vsel %vm982, %v937, 0
      %v1065 = vsel %vm982, %v938, 0
      %v1068 = vsel %vm982, %v939, 0
      %v1071 = vsel %vm982, %v940, 0
      %v1074 = vsel %vm982, %v941, 0
      %v1077 = vsel %vm982, %v942, 0
      %1079 = vmatprep.subr.bf16.mxu0 0
      %1080 = vmatpush1.bf16.msra.mxu0 %v974
      %1081 = vmatprep.subr.bf16.mxu0 0
      %1082 = vmatpush1.bf16.msra.mxu0 %v975
      %1083 = vmatprep.subr.bf16.mxu0 0
      %1084 = vmatpush1.bf16.msra.mxu0 %v976
      %1085 = vmatprep.subr.bf16.mxu0 0
      %1086 = vmatpush1.bf16.msra.mxu0 %v977
      %1087 = vmatprep.subr.bf16.mxu0 0
      %1088 = vmatpush1.bf16.msra.mxu0 0
      %1089 = vmatprep.subr.bf16.mxu0 0
      %1090 = vmatpush1.bf16.msra.mxu0 0
      %1091 = vmatprep.subr.bf16.mxu0 0
      %1092 = vmatpush1.bf16.msra.mxu0 0
      %1093 = vmatprep.subr.bf16.mxu0 0
      %1094 = vmatpush1.bf16.msra.mxu0 0
      %1095 = vmatprep.subr.bf16.mxu0 0
      %1096 = vmatpush1.bf16.msra.mxu0 0
      %1097 = vmatprep.subr.bf16.mxu0 0
      %1098 = vmatpush1.bf16.msra.mxu0 0
      %1099 = vmatprep.subr.bf16.mxu0 0
      %1100 = vmatpush1.bf16.msra.mxu0 0
      %1101 = vmatprep.subr.bf16.mxu0 0
      %1102 = vmatpush1.bf16.msra.mxu0 0
      %1103 = vmatprep.subr.bf16.mxu0 0
      %1104 = vmatpush1.bf16.msra.mxu0 0
      %1105 = vmatprep.subr.bf16.mxu0 0
      %1106 = vmatpush1.bf16.msra.mxu0 0
      %1107 = vmatprep.subr.bf16.mxu0 0
      %1108 = vmatpush1.bf16.msra.mxu0 0
      %1109 = vmatprep.subr.bf16.mxu0 0
      %1110 = vmatpush1.bf16.msra.mxu0 0
      %1111 = vmatprep.mubr.bf16.mxu0 0
      %1112 = vmatmul.mubr.bf16.gmra.mrb[0].mxu0 %v984
      %v1113 = vpop.f32.mrb[0].mxu0
      %v1114 = vadd.f32 %v956, %v1113
      %v1115 = vpop.f32.mrb[0].mxu0
      %v1116 = vpop.f32.mrb[0].mxu0
      %v1117 = vadd.f32 %v956, %v1116
      %v1118 = vpop.f32.mrb[0].mxu0
      %1119 = vmatprep.mubr.bf16.mxu0 0
      %1120 = vmatmul.mubr.bf16.gmra.mrb[0].mxu0 %v987
      %v1121 = vpop.f32.mrb[0].mxu0
      %v1122 = vadd.f32 %v956, %v1121
      %v1123 = vpop.f32.mrb[0].mxu0
      %v1124 = vpop.f32.mrb[0].mxu0
      %v1125 = vadd.f32 %v956, %v1124
      %v1126 = vpop.f32.mrb[0].mxu0
      %1127 = vmatprep.mubr.bf16.mxu0 0
      %1128 = vmatmul.mubr.bf16.gmra.mrb[0].mxu0 %v990
      %v1129 = vpop.f32.mrb[0].mxu0
      %v1130 = vadd.f32 %v956, %v1129
      %v1131 = vpop.f32.mrb[0].mxu0
      %v1132 = vpop.f32.mrb[0].mxu0
      %v1133 = vadd.f32 %v956, %v1132
      %v1134 = vpop.f32.mrb[0].mxu0
      %1135 = vmatprep.mubr.bf16.mxu0 0
      %1136 = vmatmul.mubr.bf16.gmra.mrb[0].mxu0 %v993
      %v1137 = vpop.f32.mrb[0].mxu0
      %v1138 = vadd.f32 %v956, %v1137
      %v1139 = vpop.f32.mrb[0].mxu0
      %v1140 = vpop.f32.mrb[0].mxu0
      %v1141 = vadd.f32 %v956, %v1140
      %v1142 = vpop.f32.mrb[0].mxu0
      %1143 = vmatprep.mubr.bf16.mxu0 0
      %1144 = vmatmul.mubr.bf16.gmra.mrb[0].mxu0 %v996
      %v1145 = vpop.f32.mrb[0].mxu0
      %v1146 = vadd.f32 %v956, %v1145
      %v1147 = vpop.f32.mrb[0].mxu0
      %v1148 = vpop.f32.mrb[0].mxu0
      %v1149 = vadd.f32 %v956, %v1148
      %v1150 = vpop.f32.mrb[0].mxu0
      %1151 = vmatprep.mubr.bf16.mxu0 0
      %1152 = vmatmul.mubr.bf16.gmra.mrb[0].mxu0 %v999
      %v1153 = vpop.f32.mrb[0].mxu0
      %v1154 = vadd.f32 %v956, %v1153
      %v1155 = vpop.f32.mrb[0].mxu0
      %v1156 = vpop.f32.mrb[0].mxu0
      %v1157 = vadd.f32 %v956, %v1156
      %v1158 = vpop.f32.mrb[0].mxu0
      %1159 = vmatprep.mubr.bf16.mxu0 0
      %1160 = vmatmul.mubr.bf16.gmra.mrb[0].mxu0 %v1002
      %v1161 = vpop.f32.mrb[0].mxu0
      %v1162 = vadd.f32 %v956, %v1161
      %v1163 = vpop.f32.mrb[0].mxu0
      %v1164 = vpop.f32.mrb[0].mxu0
      %v1165 = vadd.f32 %v956, %v1164
      %v1166 = vpop.f32.mrb[0].mxu0
      %1167 = vmatprep.mubr.bf16.mxu0 0
      %1168 = vmatmul.mubr.bf16.gmra.mrb[0].mxu0 %v1005
      %v1169 = vpop.f32.mrb[0].mxu0
      %v1170 = vadd.f32 %v956, %v1169
      %v1171 = vpop.f32.mrb[0].mxu0
      %v1172 = vpop.f32.mrb[0].mxu0
      %v1173 = vadd.f32 %v956, %v1172
      %v1174 = vpop.f32.mrb[0].mxu0
      %1175 = vmatprep.mubr.bf16.mxu0 0
      %1176 = vmatmul.mubr.bf16.gmra.mrb[0].mxu0 %v1008
      %v1177 = vpop.f32.mrb[0].mxu0
      %v1178 = vadd.f32 %v956, %v1177
      %v1179 = vpop.f32.mrb[0].mxu0
      %v1180 = vpop.f32.mrb[0].mxu0
      %v1181 = vadd.f32 %v956, %v1180
      %v1182 = vpop.f32.mrb[0].mxu0
      %1183 = vmatprep.mubr.bf16.mxu0 0
      %1184 = vmatmul.mubr.bf16.gmra.mrb[0].mxu0 %v1011
      %v1185 = vpop.f32.mrb[0].mxu0
      %v1186 = vadd.f32 %v956, %v1185
      %v1187 = vpop.f32.mrb[0].mxu0
      %v1188 = vpop.f32.mrb[0].mxu0
      %v1189 = vadd.f32 %v956, %v1188
      %v1190 = vpop.f32.mrb[0].mxu0
      %1191 = vmatprep.mubr.bf16.mxu0 0
      %1192 = vmatmul.mubr.bf16.gmra.mrb[0].mxu0 %v1014
      %v1193 = vpop.f32.mrb[0].mxu0
      %v1194 = vadd.f32 %v956, %v1193
      %v1195 = vpop.f32.mrb[0].mxu0
      %v1196 = vpop.f32.mrb[0].mxu0
      %v1197 = vadd.f32 %v956, %v1196
      %v1198 = vpop.f32.mrb[0].mxu0
      %1199 = vmatprep.mubr.bf16.mxu0 0
      %1200 = vmatmul.mubr.bf16.gmra.mrb[0].mxu0 %v1017
      %v1201 = vpop.f32.mrb[0].mxu0
      %v1202 = vadd.f32 %v956, %v1201
      %v1203 = vpop.f32.mrb[0].mxu0
      %v1204 = vpop.f32.mrb[0].mxu0
      %v1205 = vadd.f32 %v956, %v1204
      %v1206 = vpop.f32.mrb[0].mxu0
      %1207 = vmatprep.mubr.bf16.mxu0 0
      %1208 = vmatmul.mubr.bf16.gmra.mrb[0].mxu0 %v1020
      %v1209 = vpop.f32.mrb[0].mxu0
      %v1210 = vadd.f32 %v956, %v1209
      %v1211 = vpop.f32.mrb[0].mxu0
      %v1212 = vpop.f32.mrb[0].mxu0
      %v1213 = vadd.f32 %v956, %v1212
      %v1214 = vpop.f32.mrb[0].mxu0
      %1215 = vmatprep.mubr.bf16.mxu0 0
      %1216 = vmatmul.mubr.bf16.gmra.mrb[0].mxu0 %v1023
      %v1217 = vpop.f32.mrb[0].mxu0
      %v1218 = vadd.f32 %v956, %v1217
      %v1219 = vpop.f32.mrb[0].mxu0
      %v1220 = vpop.f32.mrb[0].mxu0
      %v1221 = vadd.f32 %v956, %v1220
      %v1222 = vpop.f32.mrb[0].mxu0
      %1223 = vmatprep.mubr.bf16.mxu0 0
      %1224 = vmatmul.mubr.bf16.gmra.mrb[0].mxu0 %v1026
      %v1225 = vpop.f32.mrb[0].mxu0
      %v1226 = vadd.f32 %v956, %v1225
      %v1227 = vpop.f32.mrb[0].mxu0
      %v1228 = vpop.f32.mrb[0].mxu0
      %v1229 = vadd.f32 %v956, %v1228
      %v1230 = vpop.f32.mrb[0].mxu0
      %1231 = vmatprep.mubr.bf16.mxu0 0
      %1232 = vmatmul.mubr.bf16.gmra.mrb[0].mxu0 %v1029
      %v1233 = vpop.f32.mrb[0].mxu0
      %v1234 = vadd.f32 %v956, %v1233
      %v1235 = vpop.f32.mrb[0].mxu0
      %v1236 = vpop.f32.mrb[0].mxu0
      %v1237 = vadd.f32 %v956, %v1236
      %v1238 = vpop.f32.mrb[0].mxu0
      %1239 = vmatprep.mubr.bf16.mxu0 0
      %1240 = vmatmul.mubr.bf16.gmra.mrb[0].mxu0 %v1032
      %v1241 = vpop.f32.mrb[0].mxu0
      %v1242 = vadd.f32 %v956, %v1241
      %v1243 = vpop.f32.mrb[0].mxu0
      %v1244 = vpop.f32.mrb[0].mxu0
      %v1245 = vadd.f32 %v956, %v1244
      %v1246 = vpop.f32.mrb[0].mxu0
      %1247 = vmatprep.mubr.bf16.mxu0 0
      %1248 = vmatmul.mubr.bf16.gmra.mrb[0].mxu0 %v1035
      %v1249 = vpop.f32.mrb[0].mxu0
      %v1250 = vadd.f32 %v956, %v1249
      %v1251 = vpop.f32.mrb[0].mxu0
      %v1252 = vpop.f32.mrb[0].mxu0
      %v1253 = vadd.f32 %v956, %v1252
      %v1254 = vpop.f32.mrb[0].mxu0
      %1255 = vmatprep.mubr.bf16.mxu0 0
      %1256 = vmatmul.mubr.bf16.gmra.mrb[0].mxu0 %v1038
      %v1257 = vpop.f32.mrb[0].mxu0
      %v1258 = vadd.f32 %v956, %v1257
      %v1259 = vpop.f32.mrb[0].mxu0
      %v1260 = vpop.f32.mrb[0].mxu0
      %v1261 = vadd.f32 %v956, %v1260
      %v1262 = vpop.f32.mrb[0].mxu0
      %1263 = vmatprep.mubr.bf16.mxu0 0
      %1264 = vmatmul.mubr.bf16.gmra.mrb[0].mxu0 %v1041
      %v1265 = vpop.f32.mrb[0].mxu0
      %v1266 = vadd.f32 %v956, %v1265
      %v1267 = vpop.f32.mrb[0].mxu0
      %v1268 = vpop.f32.mrb[0].mxu0
      %v1269 = vadd.f32 %v956, %v1268
      %v1270 = vpop.f32.mrb[0].mxu0
      %1271 = vmatprep.mubr.bf16.mxu0 0
      %1272 = vmatmul.mubr.bf16.gmra.mrb[0].mxu0 %v1044
      %v1273 = vpop.f32.mrb[0].mxu0
      %v1274 = vadd.f32 %v956, %v1273
      %v1275 = vpop.f32.mrb[0].mxu0
      %v1276 = vpop.f32.mrb[0].mxu0
      %v1277 = vadd.f32 %v956, %v1276
      %v1278 = vpop.f32.mrb[0].mxu0
      %1279 = vmatprep.mubr.bf16.mxu0 0
      %1280 = vmatmul.mubr.bf16.gmra.mrb[0].mxu0 %v1047
      %v1281 = vpop.f32.mrb[0].mxu0
      %v1282 = vadd.f32 %v956, %v1281
      %v1283 = vpop.f32.mrb[0].mxu0
      %v1284 = vpop.f32.mrb[0].mxu0
      %v1285 = vadd.f32 %v956, %v1284
      %v1286 = vpop.f32.mrb[0].mxu0
      %1287 = vmatprep.mubr.bf16.mxu0 0
      %1288 = vmatmul.mubr.bf16.gmra.mrb[0].mxu0 %v1050
      %v1289 = vpop.f32.mrb[0].mxu0
      %v1290 = vadd.f32 %v956, %v1289
      %v1291 = vpop.f32.mrb[0].mxu0
      %v1292 = vpop.f32.mrb[0].mxu0
      %v1293 = vadd.f32 %v956, %v1292
      %v1294 = vpop.f32.mrb[0].mxu0
      %1295 = vmatprep.mubr.bf16.mxu0 0
      %1296 = vmatmul.mubr.bf16.gmra.mrb[0].mxu0 %v1053
      %v1297 = vpop.f32.mrb[0].mxu0
      %v1298 = vadd.f32 %v956, %v1297
      %v1299 = vpop.f32.mrb[0].mxu0
      %v1300 = vpop.f32.mrb[0].mxu0
      %v1301 = vadd.f32 %v956, %v1300
      %v1302 = vpop.f32.mrb[0].mxu0
      %1303 = vmatprep.mubr.bf16.mxu0 0
      %1304 = vmatmul.mubr.bf16.gmra.mrb[0].mxu0 %v1056
      %v1305 = vpop.f32.mrb[0].mxu0
      %v1306 = vadd.f32 %v956, %v1305
      %v1307 = vpop.f32.mrb[0].mxu0
      %v1308 = vpop.f32.mrb[0].mxu0
      %v1309 = vadd.f32 %v956, %v1308
      %v1310 = vpop.f32.mrb[0].mxu0
      %1311 = vmatprep.mubr.bf16.mxu0 0
      %1312 = vmatmul.mubr.bf16.gmra.mrb[0].mxu0 %v1059
      %v1313 = vpop.f32.mrb[0].mxu0
      %v1314 = vadd.f32 %v956, %v1313
      %v1315 = vpop.f32.mrb[0].mxu0
      %v1316 = vpop.f32.mrb[0].mxu0
      %v1317 = vadd.f32 %v956, %v1316
      %v1318 = vpop.f32.mrb[0].mxu0
      %1319 = vmatprep.mubr.bf16.mxu0 0
      %1320 = vmatmul.mubr.bf16.gmra.mrb[0].mxu0 %v1062
      %v1321 = vpop.f32.mrb[0].mxu0
      %v1322 = vadd.f32 %v956, %v1321
      %v1323 = vpop.f32.mrb[0].mxu0
      %v1324 = vpop.f32.mrb[0].mxu0
      %v1325 = vadd.f32 %v956, %v1324
      %v1326 = vpop.f32.mrb[0].mxu0
      %1327 = vmatprep.mubr.bf16.mxu0 0
      %1328 = vmatmul.mubr.bf16.gmra.mrb[0].mxu0 %v1065
      %v1329 = vpop.f32.mrb[0].mxu0
      %v1330 = vadd.f32 %v956, %v1329
      %v1331 = vpop.f32.mrb[0].mxu0
      %v1332 = vpop.f32.mrb[0].mxu0
      %v1333 = vadd.f32 %v956, %v1332
      %v1334 = vpop.f32.mrb[0].mxu0
      %1335 = vmatprep.mubr.bf16.mxu0 0
      %1336 = vmatmul.mubr.bf16.gmra.mrb[0].mxu0 %v1068
      %v1337 = vpop.f32.mrb[0].mxu0
      %v1338 = vadd.f32 %v956, %v1337
      %v1339 = vpop.f32.mrb[0].mxu0
      %v1340 = vpop.f32.mrb[0].mxu0
      %v1341 = vadd.f32 %v956, %v1340
      %v1342 = vpop.f32.mrb[0].mxu0
      %1343 = vmatprep.mubr.bf16.mxu0 0
      %1344 = vmatmul.mubr.bf16.gmra.mrb[0].mxu0 %v1071
      %v1345 = vpop.f32.mrb[0].mxu0
      %v1346 = vadd.f32 %v956, %v1345
      %v1347 = vpop.f32.mrb[0].mxu0
      %v1348 = vpop.f32.mrb[0].mxu0
      %v1349 = vadd.f32 %v956, %v1348
      %v1350 = vpop.f32.mrb[0].mxu0
      %1351 = vmatprep.mubr.bf16.mxu0 0
      %1352 = vmatmul.mubr.bf16.gmra.mrb[0].mxu0 %v1074
      %v1353 = vpop.f32.mrb[0].mxu0
      %v1354 = vadd.f32 %v956, %v1353
      %v1355 = vpop.f32.mrb[0].mxu0
      %v1356 = vpop.f32.mrb[0].mxu0
      %v1357 = vadd.f32 %v956, %v1356
      %v1358 = vpop.f32.mrb[0].mxu0
      %1359 = vmatprep.mubr.bf16.mxu0 0
      %1360 = vmatmul.mubr.bf16.gmra.mrb[0].mxu0 %v1077
      %v1361 = vpop.f32.mrb[0].mxu0
      %v1362 = vadd.f32 %v956, %v1361
      %v1363 = vpop.f32.mrb[0].mxu0
      %v1364 = vpop.f32.mrb[0].mxu0
      %v1365 = vadd.f32 %v956, %v1364
      %v1366 = vpop.f32.mrb[0].mxu0
      %1367 = vdwg.mxu0
      %v1368 = vmul.f32 %v1114, 0.999995
      %v1369 = vmul.f32 %v1117, 0.999995
      %v1370 = vmul.f32 %v1122, 0.999995
      %v1371 = vmul.f32 %v1125, 0.999995
      %v1372 = vmul.f32 %v1130, 0.999995
      %v1373 = vmul.f32 %v1133, 0.999995
      %v1374 = vmul.f32 %v1138, 0.999995
      %v1375 = vmul.f32 %v1141, 0.999995
      %v1376 = vmul.f32 %v1146, 0.999995
      %v1377 = vmul.f32 %v1149, 0.999995
      %v1378 = vmul.f32 %v1154, 0.999995
      %v1379 = vmul.f32 %v1157, 0.999995
      %v1380 = vmul.f32 %v1162, 0.999995
      %v1381 = vmul.f32 %v1165, 0.999995
      %v1382 = vmul.f32 %v1170, 0.999995
      %v1383 = vmul.f32 %v1173, 0.999995
      %v1384 = vmul.f32 %v1178, 0.999995
      %v1385 = vmul.f32 %v1181, 0.999995
      %v1386 = vmul.f32 %v1186, 0.999995
      %v1387 = vmul.f32 %v1189, 0.999995
      %v1388 = vmul.f32 %v1194, 0.999995
      %v1389 = vmul.f32 %v1197, 0.999995
      %v1390 = vmul.f32 %v1202, 0.999995
      %v1391 = vmul.f32 %v1205, 0.999995
      %v1392 = vmul.f32 %v1210, 0.999995
      %v1393 = vmul.f32 %v1213, 0.999995
      %v1394 = vmul.f32 %v1218, 0.999995
      %v1395 = vmul.f32 %v1221, 0.999995
      %v1396 = vmul.f32 %v1226, 0.999995
      %v1397 = vmul.f32 %v1229, 0.999995
      %v1398 = vmul.f32 %v1234, 0.999995
      %v1399 = vmul.f32 %v1237, 0.999995
      %v1400 = vmul.f32 %v1242, 0.999995
      %v1401 = vmul.f32 %v1245, 0.999995
      %v1402 = vmul.f32 %v1250, 0.999995
      %v1403 = vmul.f32 %v1253, 0.999995
      %v1404 = vmul.f32 %v1258, 0.999995
      %v1405 = vmul.f32 %v1261, 0.999995
      %v1406 = vmul.f32 %v1266, 0.999995
      %v1407 = vmul.f32 %v1269, 0.999995
      %v1408 = vmul.f32 %v1274, 0.999995
      %v1409 = vmul.f32 %v1277, 0.999995
      %v1410 = vmul.f32 %v1282, 0.999995
      %v1411 = vmul.f32 %v1285, 0.999995
      %v1412 = vmul.f32 %v1290, 0.999995
      %v1413 = vmul.f32 %v1293, 0.999995
      %v1414 = vmul.f32 %v1298, 0.999995
      %v1415 = vmul.f32 %v1301, 0.999995
      %v1416 = vmul.f32 %v1306, 0.999995
      %v1417 = vmul.f32 %v1309, 0.999995
      %v1418 = vmul.f32 %v1314, 0.999995
      %v1419 = vmul.f32 %v1317, 0.999995
      %v1420 = vmul.f32 %v1322, 0.999995
      %v1421 = vmul.f32 %v1325, 0.999995
      %v1422 = vmul.f32 %v1330, 0.999995
      %v1423 = vmul.f32 %v1333, 0.999995
      %v1424 = vmul.f32 %v1338, 0.999995
      %v1425 = vmul.f32 %v1341, 0.999995
      %v1426 = vmul.f32 %v1346, 0.999995
      %v1427 = vmul.f32 %v1349, 0.999995
      %v1428 = vmul.f32 %v1354, 0.999995
      %v1429 = vmul.f32 %v1357, 0.999995
      %v1430 = vmul.f32 %v1362, 0.999995
      %v1431 = vmul.f32 %v1365, 0.999995
      %v1432 = vmax.f32 %v1368, 0.0
      %v1433 = vmax.f32 %v1369, 0.0
      %v1434 = vmax.f32 %v1370, 0.0
      %v1435 = vmax.f32 %v1371, 0.0
      %v1436 = vmax.f32 %v1372, 0.0
      %v1437 = vmax.f32 %v1373, 0.0
      %v1438 = vmax.f32 %v1374, 0.0
      %v1439 = vmax.f32 %v1375, 0.0
      %v1440 = vmax.f32 %v1376, 0.0
      %v1441 = vmax.f32 %v1377, 0.0
      %v1442 = vmax.f32 %v1378, 0.0
      %v1443 = vmax.f32 %v1379, 0.0
      %v1444 = vmax.f32 %v1380, 0.0
      %v1445 = vmax.f32 %v1381, 0.0
      %v1446 = vmax.f32 %v1382, 0.0
      %v1447 = vmax.f32 %v1383, 0.0
      %v1448 = vmax.f32 %v1384, 0.0
      %v1449 = vmax.f32 %v1385, 0.0
      %v1450 = vmax.f32 %v1386, 0.0
      %v1451 = vmax.f32 %v1387, 0.0
      %v1452 = vmax.f32 %v1388, 0.0
      %v1453 = vmax.f32 %v1389, 0.0
      %v1454 = vmax.f32 %v1390, 0.0
      %v1455 = vmax.f32 %v1391, 0.0
      %v1456 = vmax.f32 %v1392, 0.0
      %v1457 = vmax.f32 %v1393, 0.0
      %v1458 = vmax.f32 %v1394, 0.0
      %v1459 = vmax.f32 %v1395, 0.0
      %v1460 = vmax.f32 %v1396, 0.0
      %v1461 = vmax.f32 %v1397, 0.0
      %v1462 = vmax.f32 %v1398, 0.0
      %v1463 = vmax.f32 %v1399, 0.0
      %v1464 = vmax.f32 %v1400, 0.0
      %v1465 = vmax.f32 %v1401, 0.0
      %v1466 = vmax.f32 %v1402, 0.0
      %v1467 = vmax.f32 %v1403, 0.0
      %v1468 = vmax.f32 %v1404, 0.0
      %v1469 = vmax.f32 %v1405, 0.0
      %v1470 = vmax.f32 %v1406, 0.0
      %v1471 = vmax.f32 %v1407, 0.0
      %v1472 = vmax.f32 %v1408, 0.0
      %v1473 = vmax.f32 %v1409, 0.0
      %v1474 = vmax.f32 %v1410, 0.0
      %v1475 = vmax.f32 %v1411, 0.0
      %v1476 = vmax.f32 %v1412, 0.0
      %v1477 = vmax.f32 %v1413, 0.0
      %v1478 = vmax.f32 %v1414, 0.0
      %v1479 = vmax.f32 %v1415, 0.0
      %v1480 = vmax.f32 %v1416, 0.0
      %v1481 = vmax.f32 %v1417, 0.0
      %v1482 = vmax.f32 %v1418, 0.0
      %v1483 = vmax.f32 %v1419, 0.0
      %v1484 = vmax.f32 %v1420, 0.0
      %v1485 = vmax.f32 %v1421, 0.0
      %v1486 = vmax.f32 %v1422, 0.0
      %v1487 = vmax.f32 %v1423, 0.0
      %v1488 = vmax.f32 %v1424, 0.0
      %v1489 = vmax.f32 %v1425, 0.0
      %v1490 = vmax.f32 %v1426, 0.0
      %v1491 = vmax.f32 %v1427, 0.0
      %v1492 = vmax.f32 %v1428, 0.0
      %v1493 = vmax.f32 %v1429, 0.0
      %v1494 = vmax.f32 %v1430, 0.0
      %v1495 = vmax.f32 %v1431, 0.0
      %v1496 = vpack.c.bf16 %v1433, %v1432
      %v1497 = vpack.c.bf16 %v1435, %v1434
      %v1498 = vpack.c.bf16 %v1437, %v1436
      %v1499 = vpack.c.bf16 %v1439, %v1438
      %v1500 = vpack.c.bf16 %v1441, %v1440
      %v1501 = vpack.c.bf16 %v1443, %v1442
      %v1502 = vpack.c.bf16 %v1445, %v1444
      %v1503 = vpack.c.bf16 %v1447, %v1446
      %v1504 = vpack.c.bf16 %v1449, %v1448
      %v1505 = vpack.c.bf16 %v1451, %v1450
      %v1506 = vpack.c.bf16 %v1453, %v1452
      %v1507 = vpack.c.bf16 %v1455, %v1454
      %v1508 = vpack.c.bf16 %v1457, %v1456
      %v1509 = vpack.c.bf16 %v1459, %v1458
      %v1510 = vpack.c.bf16 %v1461, %v1460
      %v1511 = vpack.c.bf16 %v1463, %v1462
      %v1512 = vpack.c.bf16 %v1465, %v1464
      %v1513 = vpack.c.bf16 %v1467, %v1466
      %v1514 = vpack.c.bf16 %v1469, %v1468
      %v1515 = vpack.c.bf16 %v1471, %v1470
      %v1516 = vpack.c.bf16 %v1473, %v1472
      %v1517 = vpack.c.bf16 %v1475, %v1474
      %v1518 = vpack.c.bf16 %v1477, %v1476
      %v1519 = vpack.c.bf16 %v1479, %v1478
      %v1520 = vpack.c.bf16 %v1481, %v1480
      %v1521 = vpack.c.bf16 %v1483, %v1482
      %v1522 = vpack.c.bf16 %v1485, %v1484
      %v1523 = vpack.c.bf16 %v1487, %v1486
      %v1524 = vpack.c.bf16 %v1489, %v1488
      %v1525 = vpack.c.bf16 %v1491, %v1490
      %v1526 = vpack.c.bf16 %v1493, %v1492
      %v1527 = vpack.c.bf16 %v1495, %v1494
      %v1528 = vld [vmem:[%s5] sm:$0xf]
      %v1529 = vld [vmem:[%s5 + $0x4] sm:$0xf]
      %v1530 = vld [vmem:[%s5 + $0x8] sm:$0xf]
      %v1531 = vld [vmem:[%s5 + $0xc] sm:$0xf]
      %v1532 = vld [vmem:[%s5 + $0x10] sm:$0xf]
      %v1533 = vld [vmem:[%s5 + $0x14] sm:$0xf]
      %v1534 = vld [vmem:[%s5 + $0x18] sm:$0xf]
      %v1535 = vld [vmem:[%s5 + $0x1c] sm:$0xf]
      %v1536 = vld [vmem:[%s6] sm:$0x1]
      %v1538 = vlaneseq
      %v1539 = vshrl.u32 %v1538, 7
      %v1540 = vsub.s32 0, %v1539
      %v1541 = vrot.slane %v1536, %v1540
      %v1551 = vunpack.c.l.b16 %v1528
      %v1552 = vunpack.c.l.b16 %v1529
      %v1553 = vunpack.c.l.b16 %v1530
      %v1554 = vunpack.c.l.b16 %v1531
      %v1555 = vunpack.c.l.b16 %v1532
      %v1556 = vunpack.c.l.b16 %v1533
      %v1557 = vunpack.c.l.b16 %v1534
      %v1558 = vunpack.c.l.b16 %v1535
      %v1559 = vpack.c.b16 %v1552, %v1551
      %v1560 = vpack.c.b16 %v1554, %v1553
      %v1561 = vpack.c.b16 %v1556, %v1555
      %v1562 = vpack.c.b16 %v1558, %v1557
      %v1568 = vsel %vm982, %v1496, 0
      %v1571 = vsel %vm982, %v1497, 0
      %v1574 = vsel %vm982, %v1498, 0
      %v1577 = vsel %vm982, %v1499, 0
      %v1580 = vsel %vm982, %v1500, 0
      %v1583 = vsel %vm982, %v1501, 0
      %v1586 = vsel %vm982, %v1502, 0
      %v1589 = vsel %vm982, %v1503, 0
      %v1592 = vsel %vm982, %v1504, 0
      %v1595 = vsel %vm982, %v1505, 0
      %v1598 = vsel %vm982, %v1506, 0
      %v1601 = vsel %vm982, %v1507, 0
      %v1604 = vsel %vm982, %v1508, 0
      %v1607 = vsel %vm982, %v1509, 0
      %v1610 = vsel %vm982, %v1510, 0
      %v1613 = vsel %vm982, %v1511, 0
      %v1616 = vsel %vm982, %v1512, 0
      %v1619 = vsel %vm982, %v1513, 0
      %v1622 = vsel %vm982, %v1514, 0
      %v1625 = vsel %vm982, %v1515, 0
      %v1628 = vsel %vm982, %v1516, 0
      %v1631 = vsel %vm982, %v1517, 0
      %v1634 = vsel %vm982, %v1518, 0
      %v1637 = vsel %vm982, %v1519, 0
      %v1640 = vsel %vm982, %v1520, 0
      %v1643 = vsel %vm982, %v1521, 0
      %v1646 = vsel %vm982, %v1522, 0
      %v1649 = vsel %vm982, %v1523, 0
      %v1652 = vsel %vm982, %v1524, 0
      %v1655 = vsel %vm982, %v1525, 0
      %v1658 = vsel %vm982, %v1526, 0
      %v1661 = vsel %vm982, %v1527, 0
      %1663 = vmatprep.subr.bf16.mxu0 0
      %1664 = vmatpush1.bf16.msra.mxu0 %v1559
      %1665 = vmatprep.subr.bf16.mxu0 0
      %1666 = vmatpush1.bf16.msra.mxu0 %v1560
      %1667 = vmatprep.subr.bf16.mxu0 0
      %1668 = vmatpush1.bf16.msra.mxu0 %v1561
      %1669 = vmatprep.subr.bf16.mxu0 0
      %1670 = vmatpush1.bf16.msra.mxu0 %v1562
      %1671 = vmatprep.subr.bf16.mxu0 0
      %1672 = vmatpush1.bf16.msra.mxu0 0
      %1673 = vmatprep.subr.bf16.mxu0 0
      %1674 = vmatpush1.bf16.msra.mxu0 0
      %1675 = vmatprep.subr.bf16.mxu0 0
      %1676 = vmatpush1.bf16.msra.mxu0 0
      %1677 = vmatprep.subr.bf16.mxu0 0
      %1678 = vmatpush1.bf16.msra.mxu0 0
      %1679 = vmatprep.subr.bf16.mxu0 0
      %1680 = vmatpush1.bf16.msra.mxu0 0
      %1681 = vmatprep.subr.bf16.mxu0 0
      %1682 = vmatpush1.bf16.msra.mxu0 0
      %1683 = vmatprep.subr.bf16.mxu0 0
      %1684 = vmatpush1.bf16.msra.mxu0 0
      %1685 = vmatprep.subr.bf16.mxu0 0
      %1686 = vmatpush1.bf16.msra.mxu0 0
      %1687 = vmatprep.subr.bf16.mxu0 0
      %1688 = vmatpush1.bf16.msra.mxu0 0
      %1689 = vmatprep.subr.bf16.mxu0 0
      %1690 = vmatpush1.bf16.msra.mxu0 0
      %1691 = vmatprep.subr.bf16.mxu0 0
      %1692 = vmatpush1.bf16.msra.mxu0 0
      %1693 = vmatprep.subr.bf16.mxu0 0
      %1694 = vmatpush1.bf16.msra.mxu0 0
      %1695 = vmatprep.mubr.bf16.mxu0 0
      %1696 = vmatmul.mubr.bf16.gmra.mrb[0].mxu0 %v1568
      %v1697 = vpop.f32.mrb[0].mxu0
      %v1698 = vadd.f32 %v1541, %v1697
      %v1699 = vpop.f32.mrb[0].mxu0
      %v1700 = vpop.f32.mrb[0].mxu0
      %v1701 = vadd.f32 %v1541, %v1700
      %v1702 = vpop.f32.mrb[0].mxu0
      %1703 = vmatprep.mubr.bf16.mxu0 0
      %1704 = vmatmul.mubr.bf16.gmra.mrb[0].mxu0 %v1571
      %v1705 = vpop.f32.mrb[0].mxu0
      %v1706 = vadd.f32 %v1541, %v1705
      %v1707 = vpop.f32.mrb[0].mxu0
      %v1708 = vpop.f32.mrb[0].mxu0
      %v1709 = vadd.f32 %v1541, %v1708
      %v1710 = vpop.f32.mrb[0].mxu0
      %1711 = vmatprep.mubr.bf16.mxu0 0
      %1712 = vmatmul.mubr.bf16.gmra.mrb[0].mxu0 %v1574
      %v1713 = vpop.f32.mrb[0].mxu0
      %v1714 = vadd.f32 %v1541, %v1713
      %v1715 = vpop.f32.mrb[0].mxu0
      %v1716 = vpop.f32.mrb[0].mxu0
      %v1717 = vadd.f32 %v1541, %v1716
      %v1718 = vpop.f32.mrb[0].mxu0
      %1719 = vmatprep.mubr.bf16.mxu0 0
      %1720 = vmatmul.mubr.bf16.gmra.mrb[0].mxu0 %v1577
      %v1721 = vpop.f32.mrb[0].mxu0
      %v1722 = vadd.f32 %v1541, %v1721
      %v1723 = vpop.f32.mrb[0].mxu0
      %v1724 = vpop.f32.mrb[0].mxu0
      %v1725 = vadd.f32 %v1541, %v1724
      %v1726 = vpop.f32.mrb[0].mxu0
      %1727 = vmatprep.mubr.bf16.mxu0 0
      %1728 = vmatmul.mubr.bf16.gmra.mrb[0].mxu0 %v1580
      %v1729 = vpop.f32.mrb[0].mxu0
      %v1730 = vadd.f32 %v1541, %v1729
      %v1731 = vpop.f32.mrb[0].mxu0
      %v1732 = vpop.f32.mrb[0].mxu0
      %v1733 = vadd.f32 %v1541, %v1732
      %v1734 = vpop.f32.mrb[0].mxu0
      %1735 = vmatprep.mubr.bf16.mxu0 0
      %1736 = vmatmul.mubr.bf16.gmra.mrb[0].mxu0 %v1583
      %v1737 = vpop.f32.mrb[0].mxu0
      %v1738 = vadd.f32 %v1541, %v1737
      %v1739 = vpop.f32.mrb[0].mxu0
      %v1740 = vpop.f32.mrb[0].mxu0
      %v1741 = vadd.f32 %v1541, %v1740
      %v1742 = vpop.f32.mrb[0].mxu0
      %1743 = vmatprep.mubr.bf16.mxu0 0
      %1744 = vmatmul.mubr.bf16.gmra.mrb[0].mxu0 %v1586
      %v1745 = vpop.f32.mrb[0].mxu0
      %v1746 = vadd.f32 %v1541, %v1745
      %v1747 = vpop.f32.mrb[0].mxu0
      %v1748 = vpop.f32.mrb[0].mxu0
      %v1749 = vadd.f32 %v1541, %v1748
      %v1750 = vpop.f32.mrb[0].mxu0
      %1751 = vmatprep.mubr.bf16.mxu0 0
      %1752 = vmatmul.mubr.bf16.gmra.mrb[0].mxu0 %v1589
      %v1753 = vpop.f32.mrb[0].mxu0
      %v1754 = vadd.f32 %v1541, %v1753
      %v1755 = vpop.f32.mrb[0].mxu0
      %v1756 = vpop.f32.mrb[0].mxu0
      %v1757 = vadd.f32 %v1541, %v1756
      %v1758 = vpop.f32.mrb[0].mxu0
      %1759 = vmatprep.mubr.bf16.mxu0 0
      %1760 = vmatmul.mubr.bf16.gmra.mrb[0].mxu0 %v1592
      %v1761 = vpop.f32.mrb[0].mxu0
      %v1762 = vadd.f32 %v1541, %v1761
      %v1763 = vpop.f32.mrb[0].mxu0
      %v1764 = vpop.f32.mrb[0].mxu0
      %v1765 = vadd.f32 %v1541, %v1764
      %v1766 = vpop.f32.mrb[0].mxu0
      %1767 = vmatprep.mubr.bf16.mxu0 0
      %1768 = vmatmul.mubr.bf16.gmra.mrb[0].mxu0 %v1595
      %v1769 = vpop.f32.mrb[0].mxu0
      %v1770 = vadd.f32 %v1541, %v1769
      %v1771 = vpop.f32.mrb[0].mxu0
      %v1772 = vpop.f32.mrb[0].mxu0
      %v1773 = vadd.f32 %v1541, %v1772
      %v1774 = vpop.f32.mrb[0].mxu0
      %1775 = vmatprep.mubr.bf16.mxu0 0
      %1776 = vmatmul.mubr.bf16.gmra.mrb[0].mxu0 %v1598
      %v1777 = vpop.f32.mrb[0].mxu0
      %v1778 = vadd.f32 %v1541, %v1777
      %v1779 = vpop.f32.mrb[0].mxu0
      %v1780 = vpop.f32.mrb[0].mxu0
      %v1781 = vadd.f32 %v1541, %v1780
      %v1782 = vpop.f32.mrb[0].mxu0
      %1783 = vmatprep.mubr.bf16.mxu0 0
      %1784 = vmatmul.mubr.bf16.gmra.mrb[0].mxu0 %v1601
      %v1785 = vpop.f32.mrb[0].mxu0
      %v1786 = vadd.f32 %v1541, %v1785
      %v1787 = vpop.f32.mrb[0].mxu0
      %v1788 = vpop.f32.mrb[0].mxu0
      %v1789 = vadd.f32 %v1541, %v1788
      %v1790 = vpop.f32.mrb[0].mxu0
      %1791 = vmatprep.mubr.bf16.mxu0 0
      %1792 = vmatmul.mubr.bf16.gmra.mrb[0].mxu0 %v1604
      %v1793 = vpop.f32.mrb[0].mxu0
      %v1794 = vadd.f32 %v1541, %v1793
      %v1795 = vpop.f32.mrb[0].mxu0
      %v1796 = vpop.f32.mrb[0].mxu0
      %v1797 = vadd.f32 %v1541, %v1796
      %v1798 = vpop.f32.mrb[0].mxu0
      %1799 = vmatprep.mubr.bf16.mxu0 0
      %1800 = vmatmul.mubr.bf16.gmra.mrb[0].mxu0 %v1607
      %v1801 = vpop.f32.mrb[0].mxu0
      %v1802 = vadd.f32 %v1541, %v1801
      %v1803 = vpop.f32.mrb[0].mxu0
      %v1804 = vpop.f32.mrb[0].mxu0
      %v1805 = vadd.f32 %v1541, %v1804
      %v1806 = vpop.f32.mrb[0].mxu0
      %1807 = vmatprep.mubr.bf16.mxu0 0
      %1808 = vmatmul.mubr.bf16.gmra.mrb[0].mxu0 %v1610
      %v1809 = vpop.f32.mrb[0].mxu0
      %v1810 = vadd.f32 %v1541, %v1809
      %v1811 = vpop.f32.mrb[0].mxu0
      %v1812 = vpop.f32.mrb[0].mxu0
      %v1813 = vadd.f32 %v1541, %v1812
      %v1814 = vpop.f32.mrb[0].mxu0
      %1815 = vmatprep.mubr.bf16.mxu0 0
      %1816 = vmatmul.mubr.bf16.gmra.mrb[0].mxu0 %v1613
      %v1817 = vpop.f32.mrb[0].mxu0
      %v1818 = vadd.f32 %v1541, %v1817
      %v1819 = vpop.f32.mrb[0].mxu0
      %v1820 = vpop.f32.mrb[0].mxu0
      %v1821 = vadd.f32 %v1541, %v1820
      %v1822 = vpop.f32.mrb[0].mxu0
      %1823 = vmatprep.mubr.bf16.mxu0 0
      %1824 = vmatmul.mubr.bf16.gmra.mrb[0].mxu0 %v1616
      %v1825 = vpop.f32.mrb[0].mxu0
      %v1826 = vadd.f32 %v1541, %v1825
      %v1827 = vpop.f32.mrb[0].mxu0
      %v1828 = vpop.f32.mrb[0].mxu0
      %v1829 = vadd.f32 %v1541, %v1828
      %v1830 = vpop.f32.mrb[0].mxu0
      %1831 = vmatprep.mubr.bf16.mxu0 0
      %1832 = vmatmul.mubr.bf16.gmra.mrb[0].mxu0 %v1619
      %v1833 = vpop.f32.mrb[0].mxu0
      %v1834 = vadd.f32 %v1541, %v1833
      %v1835 = vpop.f32.mrb[0].mxu0
      %v1836 = vpop.f32.mrb[0].mxu0
      %v1837 = vadd.f32 %v1541, %v1836
      %v1838 = vpop.f32.mrb[0].mxu0
      %1839 = vmatprep.mubr.bf16.mxu0 0
      %1840 = vmatmul.mubr.bf16.gmra.mrb[0].mxu0 %v1622
      %v1841 = vpop.f32.mrb[0].mxu0
      %v1842 = vadd.f32 %v1541, %v1841
      %v1843 = vpop.f32.mrb[0].mxu0
      %v1844 = vpop.f32.mrb[0].mxu0
      %v1845 = vadd.f32 %v1541, %v1844
      %v1846 = vpop.f32.mrb[0].mxu0
      %1847 = vmatprep.mubr.bf16.mxu0 0
      %1848 = vmatmul.mubr.bf16.gmra.mrb[0].mxu0 %v1625
      %v1849 = vpop.f32.mrb[0].mxu0
      %v1850 = vadd.f32 %v1541, %v1849
      %v1851 = vpop.f32.mrb[0].mxu0
      %v1852 = vpop.f32.mrb[0].mxu0
      %v1853 = vadd.f32 %v1541, %v1852
      %v1854 = vpop.f32.mrb[0].mxu0
      %1855 = vmatprep.mubr.bf16.mxu0 0
      %1856 = vmatmul.mubr.bf16.gmra.mrb[0].mxu0 %v1628
      %v1857 = vpop.f32.mrb[0].mxu0
      %v1858 = vadd.f32 %v1541, %v1857
      %v1859 = vpop.f32.mrb[0].mxu0
      %v1860 = vpop.f32.mrb[0].mxu0
      %v1861 = vadd.f32 %v1541, %v1860
      %v1862 = vpop.f32.mrb[0].mxu0
      %1863 = vmatprep.mubr.bf16.mxu0 0
      %1864 = vmatmul.mubr.bf16.gmra.mrb[0].mxu0 %v1631
      %v1865 = vpop.f32.mrb[0].mxu0
      %v1866 = vadd.f32 %v1541, %v1865
      %v1867 = vpop.f32.mrb[0].mxu0
      %v1868 = vpop.f32.mrb[0].mxu0
      %v1869 = vadd.f32 %v1541, %v1868
      %v1870 = vpop.f32.mrb[0].mxu0
      %1871 = vmatprep.mubr.bf16.mxu0 0
      %1872 = vmatmul.mubr.bf16.gmra.mrb[0].mxu0 %v1634
      %v1873 = vpop.f32.mrb[0].mxu0
      %v1874 = vadd.f32 %v1541, %v1873
      %v1875 = vpop.f32.mrb[0].mxu0
      %v1876 = vpop.f32.mrb[0].mxu0
      %v1877 = vadd.f32 %v1541, %v1876
      %v1878 = vpop.f32.mrb[0].mxu0
      %1879 = vmatprep.mubr.bf16.mxu0 0
      %1880 = vmatmul.mubr.bf16.gmra.mrb[0].mxu0 %v1637
      %v1881 = vpop.f32.mrb[0].mxu0
      %v1882 = vadd.f32 %v1541, %v1881
      %v1883 = vpop.f32.mrb[0].mxu0
      %v1884 = vpop.f32.mrb[0].mxu0
      %v1885 = vadd.f32 %v1541, %v1884
      %v1886 = vpop.f32.mrb[0].mxu0
      %1887 = vmatprep.mubr.bf16.mxu0 0
      %1888 = vmatmul.mubr.bf16.gmra.mrb[0].mxu0 %v1640
      %v1889 = vpop.f32.mrb[0].mxu0
      %v1890 = vadd.f32 %v1541, %v1889
      %v1891 = vpop.f32.mrb[0].mxu0
      %v1892 = vpop.f32.mrb[0].mxu0
      %v1893 = vadd.f32 %v1541, %v1892
      %v1894 = vpop.f32.mrb[0].mxu0
      %1895 = vmatprep.mubr.bf16.mxu0 0
      %1896 = vmatmul.mubr.bf16.gmra.mrb[0].mxu0 %v1643
      %v1897 = vpop.f32.mrb[0].mxu0
      %v1898 = vadd.f32 %v1541, %v1897
      %v1899 = vpop.f32.mrb[0].mxu0
      %v1900 = vpop.f32.mrb[0].mxu0
      %v1901 = vadd.f32 %v1541, %v1900
      %v1902 = vpop.f32.mrb[0].mxu0
      %1903 = vmatprep.mubr.bf16.mxu0 0
      %1904 = vmatmul.mubr.bf16.gmra.mrb[0].mxu0 %v1646
      %v1905 = vpop.f32.mrb[0].mxu0
      %v1906 = vadd.f32 %v1541, %v1905
      %v1907 = vpop.f32.mrb[0].mxu0
      %v1908 = vpop.f32.mrb[0].mxu0
      %v1909 = vadd.f32 %v1541, %v1908
      %v1910 = vpop.f32.mrb[0].mxu0
      %1911 = vmatprep.mubr.bf16.mxu0 0
      %1912 = vmatmul.mubr.bf16.gmra.mrb[0].mxu0 %v1649
      %v1913 = vpop.f32.mrb[0].mxu0
      %v1914 = vadd.f32 %v1541, %v1913
      %v1915 = vpop.f32.mrb[0].mxu0
      %v1916 = vpop.f32.mrb[0].mxu0
      %v1917 = vadd.f32 %v1541, %v1916
      %v1918 = vpop.f32.mrb[0].mxu0
      %1919 = vmatprep.mubr.bf16.mxu0 0
      %1920 = vmatmul.mubr.bf16.gmra.mrb[0].mxu0 %v1652
      %v1921 = vpop.f32.mrb[0].mxu0
      %v1922 = vadd.f32 %v1541, %v1921
      %v1923 = vpop.f32.mrb[0].mxu0
      %v1924 = vpop.f32.mrb[0].mxu0
      %v1925 = vadd.f32 %v1541, %v1924
      %v1926 = vpop.f32.mrb[0].mxu0
      %1927 = vmatprep.mubr.bf16.mxu0 0
      %1928 = vmatmul.mubr.bf16.gmra.mrb[0].mxu0 %v1655
      %v1929 = vpop.f32.mrb[0].mxu0
      %v1930 = vadd.f32 %v1541, %v1929
      %v1931 = vpop.f32.mrb[0].mxu0
      %v1932 = vpop.f32.mrb[0].mxu0
      %v1933 = vadd.f32 %v1541, %v1932
      %v1934 = vpop.f32.mrb[0].mxu0
      %1935 = vmatprep.mubr.bf16.mxu0 0
      %1936 = vmatmul.mubr.bf16.gmra.mrb[0].mxu0 %v1658
      %v1937 = vpop.f32.mrb[0].mxu0
      %v1938 = vadd.f32 %v1541, %v1937
      %v1939 = vpop.f32.mrb[0].mxu0
      %v1940 = vpop.f32.mrb[0].mxu0
      %v1941 = vadd.f32 %v1541, %v1940
      %v1942 = vpop.f32.mrb[0].mxu0
      %1943 = vmatprep.mubr.bf16.mxu0 0
      %1944 = vmatmul.mubr.bf16.gmra.mrb[0].mxu0 %v1661
      %v1945 = vpop.f32.mrb[0].mxu0
      %v1946 = vadd.f32 %v1541, %v1945
      %v1947 = vpop.f32.mrb[0].mxu0
      %v1948 = vpop.f32.mrb[0].mxu0
      %v1949 = vadd.f32 %v1541, %v1948
      %v1950 = vpop.f32.mrb[0].mxu0
      %1951 = vdwg.mxu0
      %v1952 = vmax.f32 %v1698, %v1701
      %v1953 = vmax.f32 %v1952, %v1706
      %v1954 = vmax.f32 %v1953, %v1709
      %v1955 = vrot.slane %v1954, 4
      %v1956 = vmax.f32 %v1954, %v1955
      %v1957 = vrot.slane %v1956, 2
      %v1958 = vmax.f32 %v1956, %v1957
      %v1959 = vrot.slane %v1958, 1
      %v1960 = vmax.f32 %v1958, %v1959
      %v1961 = vmax.f32 %v1714, %v1717
      %v1962 = vmax.f32 %v1961, %v1722
      %v1963 = vmax.f32 %v1962, %v1725
      %v1964 = vrot.slane %v1963, 4
      %v1965 = vmax.f32 %v1963, %v1964
      %v1966 = vrot.slane %v1965, 2
      %v1967 = vmax.f32 %v1965, %v1966
      %v1968 = vrot.slane %v1967, 1
      %v1969 = vmax.f32 %v1967, %v1968
      %v1970 = vmax.f32 %v1730, %v1733
      %v1971 = vmax.f32 %v1970, %v1738
      %v1972 = vmax.f32 %v1971, %v1741
      %v1973 = vrot.slane %v1972, 4
      %v1974 = vmax.f32 %v1972, %v1973
      %v1975 = vrot.slane %v1974, 2
      %v1976 = vmax.f32 %v1974, %v1975
      %v1977 = vrot.slane %v1976, 1
      %v1978 = vmax.f32 %v1976, %v1977
      %v1979 = vmax.f32 %v1746, %v1749
      %v1980 = vmax.f32 %v1979, %v1754
      %v1981 = vmax.f32 %v1980, %v1757
      %v1982 = vrot.slane %v1981, 4
      %v1983 = vmax.f32 %v1981, %v1982
      %v1984 = vrot.slane %v1983, 2
      %v1985 = vmax.f32 %v1983, %v1984
      %v1986 = vrot.slane %v1985, 1
      %v1987 = vmax.f32 %v1985, %v1986
      %v1988 = vmax.f32 %v1762, %v1765
      %v1989 = vmax.f32 %v1988, %v1770
      %v1990 = vmax.f32 %v1989, %v1773
      %v1991 = vrot.slane %v1990, 4
      %v1992 = vmax.f32 %v1990, %v1991
      %v1993 = vrot.slane %v1992, 2
      %v1994 = vmax.f32 %v1992, %v1993
      %v1995 = vrot.slane %v1994, 1
      %v1996 = vmax.f32 %v1994, %v1995
      %v1997 = vmax.f32 %v1778, %v1781
      %v1998 = vmax.f32 %v1997, %v1786
      %v1999 = vmax.f32 %v1998, %v1789
      %v2000 = vrot.slane %v1999, 4
      %v2001 = vmax.f32 %v1999, %v2000
      %v2002 = vrot.slane %v2001, 2
      %v2003 = vmax.f32 %v2001, %v2002
      %v2004 = vrot.slane %v2003, 1
      %v2005 = vmax.f32 %v2003, %v2004
      %v2006 = vmax.f32 %v1794, %v1797
      %v2007 = vmax.f32 %v2006, %v1802
      %v2008 = vmax.f32 %v2007, %v1805
      %v2009 = vrot.slane %v2008, 4
      %v2010 = vmax.f32 %v2008, %v2009
      %v2011 = vrot.slane %v2010, 2
      %v2012 = vmax.f32 %v2010, %v2011
      %v2013 = vrot.slane %v2012, 1
      %v2014 = vmax.f32 %v2012, %v2013
      %v2015 = vmax.f32 %v1810, %v1813
      %v2016 = vmax.f32 %v2015, %v1818
      %v2017 = vmax.f32 %v2016, %v1821
      %v2018 = vrot.slane %v2017, 4
      %v2019 = vmax.f32 %v2017, %v2018
      %v2020 = vrot.slane %v2019, 2
      %v2021 = vmax.f32 %v2019, %v2020
      %v2022 = vrot.slane %v2021, 1
      %v2023 = vmax.f32 %v2021, %v2022
      %v2024 = vmax.f32 %v1826, %v1829
      %v2025 = vmax.f32 %v2024, %v1834
      %v2026 = vmax.f32 %v2025, %v1837
      %v2027 = vrot.slane %v2026, 4
      %v2028 = vmax.f32 %v2026, %v2027
      %v2029 = vrot.slane %v2028, 2
      %v2030 = vmax.f32 %v2028, %v2029
      %v2031 = vrot.slane %v2030, 1
      %v2032 = vmax.f32 %v2030, %v2031
      %v2033 = vmax.f32 %v1842, %v1845
      %v2034 = vmax.f32 %v2033, %v1850
      %v2035 = vmax.f32 %v2034, %v1853
      %v2036 = vrot.slane %v2035, 4
      %v2037 = vmax.f32 %v2035, %v2036
      %v2038 = vrot.slane %v2037, 2
      %v2039 = vmax.f32 %v2037, %v2038
      %v2040 = vrot.slane %v2039, 1
      %v2041 = vmax.f32 %v2039, %v2040
      %v2042 = vmax.f32 %v1858, %v1861
      %v2043 = vmax.f32 %v2042, %v1866
      %v2044 = vmax.f32 %v2043, %v1869
      %v2045 = vrot.slane %v2044, 4
      %v2046 = vmax.f32 %v2044, %v2045
      %v2047 = vrot.slane %v2046, 2
      %v2048 = vmax.f32 %v2046, %v2047
      %v2049 = vrot.slane %v2048, 1
      %v2050 = vmax.f32 %v2048, %v2049
      %v2051 = vmax.f32 %v1874, %v1877
      %v2052 = vmax.f32 %v2051, %v1882
      %v2053 = vmax.f32 %v2052, %v1885
      %v2054 = vrot.slane %v2053, 4
      %v2055 = vmax.f32 %v2053, %v2054
      %v2056 = vrot.slane %v2055, 2
      %v2057 = vmax.f32 %v2055, %v2056
      %v2058 = vrot.slane %v2057, 1
      %v2059 = vmax.f32 %v2057, %v2058
      %v2060 = vmax.f32 %v1890, %v1893
      %v2061 = vmax.f32 %v2060, %v1898
      %v2062 = vmax.f32 %v2061, %v1901
      %v2063 = vrot.slane %v2062, 4
      %v2064 = vmax.f32 %v2062, %v2063
      %v2065 = vrot.slane %v2064, 2
      %v2066 = vmax.f32 %v2064, %v2065
      %v2067 = vrot.slane %v2066, 1
      %v2068 = vmax.f32 %v2066, %v2067
      %v2069 = vmax.f32 %v1906, %v1909
      %v2070 = vmax.f32 %v2069, %v1914
      %v2071 = vmax.f32 %v2070, %v1917
      %v2072 = vrot.slane %v2071, 4
      %v2073 = vmax.f32 %v2071, %v2072
      %v2074 = vrot.slane %v2073, 2
      %v2075 = vmax.f32 %v2073, %v2074
      %v2076 = vrot.slane %v2075, 1
      %v2077 = vmax.f32 %v2075, %v2076
      %v2078 = vmax.f32 %v1922, %v1925
      %v2079 = vmax.f32 %v2078, %v1930
      %v2080 = vmax.f32 %v2079, %v1933
      %v2081 = vrot.slane %v2080, 4
      %v2082 = vmax.f32 %v2080, %v2081
      %v2083 = vrot.slane %v2082, 2
      %v2084 = vmax.f32 %v2082, %v2083
      %v2085 = vrot.slane %v2084, 1
      %v2086 = vmax.f32 %v2084, %v2085
      %v2087 = vmax.f32 %v1938, %v1941
      %v2088 = vmax.f32 %v2087, %v1946
      %v2089 = vmax.f32 %v2088, %v1949
      %v2090 = vrot.slane %v2089, 4
      %v2091 = vmax.f32 %v2089, %v2090
      %v2092 = vrot.slane %v2091, 2
      %v2093 = vmax.f32 %v2091, %v2092
      %v2094 = vrot.slane %v2093, 1
      %v2095 = vmax.f32 %v2093, %v2094
      %v2096 = vpack.c.bf16 %v1960, %v1960
      %v2097 = vpack.c.bf16 %v1969, %v1969
      %v2098 = vpack.c.bf16 %v1978, %v1978
      %v2099 = vpack.c.bf16 %v1987, %v1987
      %v2100 = vpack.c.bf16 %v1996, %v1996
      %v2101 = vpack.c.bf16 %v2005, %v2005
      %v2102 = vpack.c.bf16 %v2014, %v2014
      %v2103 = vpack.c.bf16 %v2023, %v2023
      %v2104 = vpack.c.bf16 %v2032, %v2032
      %v2105 = vpack.c.bf16 %v2041, %v2041
      %v2106 = vpack.c.bf16 %v2050, %v2050
      %v2107 = vpack.c.bf16 %v2059, %v2059
      %v2108 = vpack.c.bf16 %v2068, %v2068
      %v2109 = vpack.c.bf16 %v2077, %v2077
      %v2110 = vpack.c.bf16 %v2086, %v2086
      %v2111 = vpack.c.bf16 %v2095, %v2095
      %v2128 = vunpack.c.l.b16 %v2096
      %v2129 = vunpack.c.l.b16 %v2097
      %v2130 = vunpack.c.l.b16 %v2098
      %v2131 = vunpack.c.l.b16 %v2099
      %v2132 = vunpack.c.l.b16 %v2100
      %v2133 = vunpack.c.l.b16 %v2101
      %v2134 = vunpack.c.l.b16 %v2102
      %v2135 = vunpack.c.l.b16 %v2103
      %v2136 = vunpack.c.l.b16 %v2104
      %v2137 = vunpack.c.l.b16 %v2105
      %v2138 = vunpack.c.l.b16 %v2106
      %v2139 = vunpack.c.l.b16 %v2107
      %v2140 = vunpack.c.l.b16 %v2108
      %v2141 = vunpack.c.l.b16 %v2109
      %v2142 = vunpack.c.l.b16 %v2110
      %v2143 = vunpack.c.l.b16 %v2111
      %v2144 = vpack.c.b16 %v2128, %v2128
      %v2145 = vpack.c.b16 %v2129, %v2129
      %v2146 = vpack.c.b16 %v2130, %v2130
      %v2147 = vpack.c.b16 %v2131, %v2131
      %v2148 = vpack.c.b16 %v2132, %v2132
      %v2149 = vpack.c.b16 %v2133, %v2133
      %v2150 = vpack.c.b16 %v2134, %v2134
      %v2151 = vpack.c.b16 %v2135, %v2135
      %v2152 = vpack.c.b16 %v2136, %v2136
      %v2153 = vpack.c.b16 %v2137, %v2137
      %v2154 = vpack.c.b16 %v2138, %v2138
      %v2155 = vpack.c.b16 %v2139, %v2139
      %v2156 = vpack.c.b16 %v2140, %v2140
      %v2157 = vpack.c.b16 %v2141, %v2141
      %v2158 = vpack.c.b16 %v2142, %v2142
      %v2159 = vpack.c.b16 %v2143, %v2143
      %v2160 = vunpack.c.l.b16 %v2144
      %v2161 = vunpack.c.l.b16 %v2145
      %v2162 = vunpack.c.l.b16 %v2146
      %v2163 = vunpack.c.l.b16 %v2147
      %v2164 = vunpack.c.l.b16 %v2148
      %v2165 = vunpack.c.l.b16 %v2149
      %v2166 = vunpack.c.l.b16 %v2150
      %v2167 = vunpack.c.l.b16 %v2151
      %v2168 = vunpack.c.l.b16 %v2152
      %v2169 = vunpack.c.l.b16 %v2153
      %v2170 = vunpack.c.l.b16 %v2154
      %v2171 = vunpack.c.l.b16 %v2155
      %v2172 = vunpack.c.l.b16 %v2156
      %v2173 = vunpack.c.l.b16 %v2157
      %v2174 = vunpack.c.l.b16 %v2158
      %v2175 = vunpack.c.l.b16 %v2159
      %vm2176 = vcmask 1041409
      %v2177 = vsel %vm2176, %v2161, %v2160
      %vm2178 = vcmask 1042434
      %v2179 = vsel %vm2178, %v2162, %v2177
      %vm2180 = vcmask 1043459
      %v2181 = vsel %vm2180, %v2163, %v2179
      %vm2182 = vcmask 1044484
      %v2183 = vsel %vm2182, %v2164, %v2181
      %vm2184 = vcmask 1045509
      %v2185 = vsel %vm2184, %v2165, %v2183
      %vm2186 = vcmask 1046534
      %v2187 = vsel %vm2186, %v2166, %v2185
      %vm2188 = vcmask 1047559
      %v2189 = vsel %vm2188, %v2167, %v2187
      %v2190 = vsel %vm2176, %v2169, %v2168
      %v2191 = vsel %vm2178, %v2170, %v2190
      %v2192 = vsel %vm2180, %v2171, %v2191
      %v2193 = vsel %vm2182, %v2172, %v2192
      %v2194 = vsel %vm2184, %v2173, %v2193
      %v2195 = vsel %vm2186, %v2174, %v2194
      %v2196 = vsel %vm2188, %v2175, %v2195
      %v2197 = vpack.c.b16 %v2189, %v2189
      %v2198 = vpack.c.b16 %v2196, %v2196
      %2201 = vst [vmem:[%s283] sm:$0xf] %v2197
      %2202 = vst [vmem:[%s283 + $0x4] sm:$0xf] %v2198
      %s2203 = smul.u32 2, %s18
      %p2204 = scmp.lt.s32.totalorder %s2203, 3
      %s2205 = scalar_select %p2204, %s2203, 3
      %s2206 = smul.addr %s2205, 4
      %s2207 = scalar_lea.vmem %s7, %s2206
      // Predicated region
      $region49: #{net_forward.3} parent=47 // pred_check
        %p2208 = pneg %p188
      $region50: #{net_forward.3} parent=47 // pred_check_branch
        %2210 = sbr.rel (%p2208) target = $region52
      $region51: #{net_forward.3} parent=47 // pred_region
        %s2211 = smul.u32 2, %s18
      $region52: #{net_forward.3} parent=47 // pred_fallthru
        _
    $region48: #{net_forward.3} parent=5 // pred_fallthru
      _
    %p2212 = scmp.le.s32.totalorder 2, %s13
    // Predicated region
    $region53: #{net_forward.3} parent=5 // pred_check
      %p2213 = pneg %p2212
    $region54: #{net_forward.3} parent=5 // pred_check_branch
      %2215 = sbr.rel (%p2213) target = $region56
    $region55: #{net_forward.3} parent=5 // pred_region
      %s2216 = ssub.s32 %s13, 2
      // Predicated region
      $region57: #{net_forward.3} parent=55 // pred_check
        %p2217 = pneg %p194
      $region58: #{net_forward.3} parent=55 // pred_check_branch
        %2219 = sbr.rel (%p2217) target = $region60
      $region59: #{net_forward.3} parent=55 // pred_region
        %s2220 = smul.u32 2, %s19
        %p2221 = scmp.lt.s32.totalorder %s2220, 3
        %s2222 = scalar_select %p2221, %s2220, 3
        %s2223 = smul.addr %s2222, 4
        %s2224 = scalar_lea.vmem %s7, %s2223
      $region60: #{net_forward.3} parent=55 // pred_fallthru
        _
    $region56: #{net_forward.3} parent=5 // pred_fallthru
      _
  $region6: #{net_forward.3} parent=0 // loop_footer
    %s17 = sadd.s32 1, %s13
  $region7: #{net_forward.3} parent=0 // loop_footer_branch
    %12 = sbr.rel target = $region3
  $region8: #{net_forward.3} parent=0 // loop_exit
    _

// kernel: net_forward.4
$region0: #{net_forward.4}
  #allocation0 [shape = 'u32[]', space=smem, size = 0x4, offset = 0x4, fixed_abs, tag = 'smem constant byte address 0x4 - core index']
  #allocation1 [shape = 'u32[144,128]{1,0:T(1,128)}', space=vmem, size = 0x12000, scoped, tag = 'internal scratch']
  %s0 = inlined_call_operand.vmem [shape: bf16[8,16,128], index: 0, kind: input, shape index: {}]
  %s1 = inlined_call_operand.vmem [shape: f32[8,16,3], index: 1, kind: input, shape index: {}]
  %s2 = inlined_call_operand.vmem [shape: bf16[128,128], index: 2, kind: input, shape index: {}]
  %s3 = inlined_call_operand.vmem [shape: bf16[3,128], index: 3, kind: input, shape index: {}]
  %s4 = inlined_call_operand.vmem [shape: f32[1,128], index: 4, kind: input, shape index: {}]
  %s5 = inlined_call_operand.vmem [shape: bf16[128,128], index: 5, kind: input, shape index: {}]
  %s6 = inlined_call_operand.vmem [shape: f32[1,128], index: 6, kind: input, shape index: {}]
  %s7 = inlined_call_operand.vmem [shape: bf16[128,256], index: 7, kind: input, shape index: {}]
  %s8 = inlined_call_operand.vmem [shape: f32[1,256], index: 8, kind: input, shape index: {}]
  %s9 = inlined_call_operand.vmem [shape: bf16[8,256], index: 9, kind: output, shape index: {}]
  %s10 = sld [smem:[#allocation0]]
  $region46: #{net_forward.4} parent=0
    _
  %s12 = ssub.s32 1, %s10
  %s13 = scalar_select 0, %s12, %s10
  // Predicated region
  $region2: #{net_forward.4} parent=0 // pred_check
    _
  $region3: #{net_forward.4} parent=0 // pred_check_branch
    %15 = sbr.rel (0) target = $region5
  $region4: #{net_forward.4} parent=0 // pred_region
    _
  $region5: #{net_forward.4} parent=0 // pred_fallthru
    _
  // Predicated region
  $region6: #{net_forward.4} parent=0 // pred_check
    _
  $region7: #{net_forward.4} parent=0 // pred_check_branch
    %17 = sbr.rel (0) target = $region9
  $region8: #{net_forward.4} parent=0 // pred_region
    _
  $region9: #{net_forward.4} parent=0 // pred_fallthru
    _
  // Predicated region
  $region10: #{net_forward.4} parent=0 // pred_check
    _
  $region11: #{net_forward.4} parent=0 // pred_check_branch
    %19 = sbr.rel (0) target = $region13
  $region12: #{net_forward.4} parent=0 // pred_region
    _
  $region13: #{net_forward.4} parent=0 // pred_fallthru
    _
  // Predicated region
  $region14: #{net_forward.4} parent=0 // pred_check
    _
  $region15: #{net_forward.4} parent=0 // pred_check_branch
    %21 = sbr.rel (0) target = $region17
  $region16: #{net_forward.4} parent=0 // pred_region
    _
  $region17: #{net_forward.4} parent=0 // pred_fallthru
    _
  // Predicated region
  $region18: #{net_forward.4} parent=0 // pred_check
    _
  $region19: #{net_forward.4} parent=0 // pred_check_branch
    %23 = sbr.rel (0) target = $region21
  $region20: #{net_forward.4} parent=0 // pred_region
    _
  $region21: #{net_forward.4} parent=0 // pred_fallthru
    _
  // Predicated region
  $region22: #{net_forward.4} parent=0 // pred_check
    _
  $region23: #{net_forward.4} parent=0 // pred_check_branch
    %25 = sbr.rel (0) target = $region25
  $region24: #{net_forward.4} parent=0 // pred_region
    _
  $region25: #{net_forward.4} parent=0 // pred_fallthru
    _
  // Predicated region
  $region26: #{net_forward.4} parent=0 // pred_check
    _
  $region27: #{net_forward.4} parent=0 // pred_check_branch
    %27 = sbr.rel (0) target = $region29
  $region28: #{net_forward.4} parent=0 // pred_region
    _
  $region29: #{net_forward.4} parent=0 // pred_fallthru
    _
  // Predicated region
  $region30: #{net_forward.4} parent=0 // pred_check
    _
  $region31: #{net_forward.4} parent=0 // pred_check_branch
    %29 = sbr.rel (0) target = $region33
  $region32: #{net_forward.4} parent=0 // pred_region
    _
  $region33: #{net_forward.4} parent=0 // pred_fallthru
    _
  // Predicated region
  $region34: #{net_forward.4} parent=0 // pred_check
    _
  $region35: #{net_forward.4} parent=0 // pred_check_branch
    %31 = sbr.rel (0) target = $region37
  $region36: #{net_forward.4} parent=0 // pred_region
    _
  $region37: #{net_forward.4} parent=0 // pred_fallthru
    _
  %v33 = vld [vmem:[%s1] sm:$0xff]
  %v34 = vld [vmem:[%s1 + $0x8] sm:$0xff]
  %v35 = vld [vmem:[%s1 + $0x10] sm:$0xff]
  %v36 = vld [vmem:[%s1 + $0x18] sm:$0xff]
  %v37 = vld [vmem:[%s1 + $0x20] sm:$0xff]
  %v38 = vld [vmem:[%s1 + $0x28] sm:$0xff]
  %v39 = vld [vmem:[%s1 + $0x30] sm:$0xff]
  %v40 = vld [vmem:[%s1 + $0x38] sm:$0xff]
  %v41 = vld [vmem:[%s1 + $0x40] sm:$0xff]
  %v42 = vld [vmem:[%s1 + $0x48] sm:$0xff]
  %v43 = vld [vmem:[%s1 + $0x50] sm:$0xff]
  %v44 = vld [vmem:[%s1 + $0x58] sm:$0xff]
  %v45 = vld [vmem:[%s1 + $0x60] sm:$0xff]
  %v46 = vld [vmem:[%s1 + $0x68] sm:$0xff]
  %v47 = vld [vmem:[%s1 + $0x70] sm:$0xff]
  %v48 = vld [vmem:[%s1 + $0x78] sm:$0xff]
  %v49 = vpack.c.bf16 %v34, %v33
  %v50 = vpack.c.bf16 %v36, %v35
  %v51 = vpack.c.bf16 %v38, %v37
  %v52 = vpack.c.bf16 %v40, %v39
  %v53 = vpack.c.bf16 %v42, %v41
  %v54 = vpack.c.bf16 %v44, %v43
  %v55 = vpack.c.bf16 %v46, %v45
  %v56 = vpack.c.bf16 %v48, %v47
  %v57 = vld [vmem:[%s3] sm:$0x3]
  %v58 = vld [vmem:[%s0] sm:$0xf]
  %v59 = vld [vmem:[%s0 + $0x4] sm:$0xf]
  %v60 = vld [vmem:[%s0 + $0x8] sm:$0xf]
  %v61 = vld [vmem:[%s0 + $0xc] sm:$0xf]
  %v62 = vld [vmem:[%s0 + $0x10] sm:$0xf]
  %v63 = vld [vmem:[%s0 + $0x14] sm:$0xf]
  %v64 = vld [vmem:[%s0 + $0x18] sm:$0xf]
  %v65 = vld [vmem:[%s0 + $0x1c] sm:$0xf]
  %v66 = vld [vmem:[%s0 + $0x20] sm:$0xf]
  %v67 = vld [vmem:[%s0 + $0x24] sm:$0xf]
  %v68 = vld [vmem:[%s0 + $0x28] sm:$0xf]
  %v69 = vld [vmem:[%s0 + $0x2c] sm:$0xf]
  %v70 = vld [vmem:[%s0 + $0x30] sm:$0xf]
  %v71 = vld [vmem:[%s0 + $0x34] sm:$0xf]
  %v72 = vld [vmem:[%s0 + $0x38] sm:$0xf]
  %v73 = vld [vmem:[%s0 + $0x3c] sm:$0xf]
  %v74 = vld [vmem:[%s2] sm:$0xf]
  %v75 = vld [vmem:[%s2 + $0x4] sm:$0xf]
  %v76 = vld [vmem:[%s2 + $0x8] sm:$0xf]
  %v77 = vld [vmem:[%s2 + $0xc] sm:$0xf]
  %v78 = vld [vmem:[%s2 + $0x10] sm:$0xf]
  %v79 = vld [vmem:[%s2 + $0x14] sm:$0xf]
  %v80 = vld [vmem:[%s2 + $0x18] sm:$0xf]
  %v81 = vld [vmem:[%s2 + $0x1c] sm:$0xf]
  %v82 = vld [vmem:[%s2 + $0x20] sm:$0xf]
  %v83 = vld [vmem:[%s2 + $0x24] sm:$0xf]
  %v84 = vld [vmem:[%s2 + $0x28] sm:$0xf]
  %v85 = vld [vmem:[%s2 + $0x2c] sm:$0xf]
  %v86 = vld [vmem:[%s2 + $0x30] sm:$0xf]
  %v87 = vld [vmem:[%s2 + $0x34] sm:$0xf]
  %v88 = vld [vmem:[%s2 + $0x38] sm:$0xf]
  %v89 = vld [vmem:[%s2 + $0x3c] sm:$0xf]
  %v106 = vunpack.c.l.b16 %v58
  %v107 = vunpack.c.l.b16 %v59
  %v108 = vunpack.c.l.b16 %v60
  %v109 = vunpack.c.l.b16 %v61
  %v110 = vunpack.c.l.b16 %v62
  %v111 = vunpack.c.l.b16 %v63
  %v112 = vunpack.c.l.b16 %v64
  %v113 = vunpack.c.l.b16 %v65
  %v114 = vunpack.c.l.b16 %v66
  %v115 = vunpack.c.l.b16 %v67
  %v116 = vunpack.c.l.b16 %v68
  %v117 = vunpack.c.l.b16 %v69
  %v118 = vunpack.c.l.b16 %v70
  %v119 = vunpack.c.l.b16 %v71
  %v120 = vunpack.c.l.b16 %v72
  %v121 = vunpack.c.l.b16 %v73
  %v122 = vpack.c.b16 %v107, %v106
  %v123 = vpack.c.b16 %v109, %v108
  %v124 = vpack.c.b16 %v111, %v110
  %v125 = vpack.c.b16 %v113, %v112
  %v126 = vpack.c.b16 %v115, %v114
  %v127 = vpack.c.b16 %v117, %v116
  %v128 = vpack.c.b16 %v119, %v118
  %v129 = vpack.c.b16 %v121, %v120
  %v154 = vunpack.c.l.b16 %v74
  %v155 = vunpack.c.l.b16 %v75
  %v156 = vunpack.c.l.b16 %v76
  %v157 = vunpack.c.l.b16 %v77
  %v158 = vunpack.c.l.b16 %v78
  %v159 = vunpack.c.l.b16 %v79
  %v160 = vunpack.c.l.b16 %v80
  %v161 = vunpack.c.l.b16 %v81
  %v162 = vunpack.c.l.b16 %v82
  %v163 = vunpack.c.l.b16 %v83
  %v164 = vunpack.c.l.b16 %v84
  %v165 = vunpack.c.l.b16 %v85
  %v166 = vunpack.c.l.b16 %v86
  %v167 = vunpack.c.l.b16 %v87
  %v168 = vunpack.c.l.b16 %v88
  %v169 = vunpack.c.l.b16 %v89
  %v170 = vpack.c.b16 %v155, %v154
  %v171 = vpack.c.b16 %v157, %v156
  %v172 = vpack.c.b16 %v159, %v158
  %v173 = vpack.c.b16 %v161, %v160
  %v174 = vpack.c.b16 %v163, %v162
  %v175 = vpack.c.b16 %v165, %v164
  %v176 = vpack.c.b16 %v167, %v166
  %v177 = vpack.c.b16 %v169, %v168
  %186 = vmatprep.subr.bf16.mxu0 0
  %187 = vmatpush1.bf16.msra.mxu0 %v170
  %188 = vmatprep.subr.bf16.mxu0 0
  %189 = vmatpush1.bf16.msra.mxu0 %v171
  %190 = vmatprep.subr.bf16.mxu0 0
  %191 = vmatpush1.bf16.msra.mxu0 %v172
  %192 = vmatprep.subr.bf16.mxu0 0
  %193 = vmatpush1.bf16.msra.mxu0 %v173
  %194 = vmatprep.subr.bf16.mxu0 0
  %195 = vmatpush1.bf16.msra.mxu0 %v174
  %196 = vmatprep.subr.bf16.mxu0 0
  %197 = vmatpush1.bf16.msra.mxu0 %v175
  %198 = vmatprep.subr.bf16.mxu0 0
  %199 = vmatpush1.bf16.msra.mxu0 %v176
  %200 = vmatprep.subr.bf16.mxu0 0
  %201 = vmatpush1.bf16.msra.mxu0 %v177
  %202 = vmatprep.subr.bf16.mxu0 0
  %203 = vmatpush1.bf16.msra.mxu0 0
  %204 = vmatprep.subr.bf16.mxu0 0
  %205 = vmatpush1.bf16.msra.mxu0 0
  %206 = vmatprep.subr.bf16.mxu0 0
  %207 = vmatpush1.bf16.msra.mxu0 0
  %208 = vmatprep.subr.bf16.mxu0 0
  %209 = vmatpush1.bf16.msra.mxu0 0
  %210 = vmatprep.subr.bf16.mxu0 0
  %211 = vmatpush1.bf16.msra.mxu0 0
  %212 = vmatprep.subr.bf16.mxu0 0
  %213 = vmatpush1.bf16.msra.mxu0 0
  %214 = vmatprep.subr.bf16.mxu0 0
  %215 = vmatpush1.bf16.msra.mxu0 0
  %216 = vmatprep.subr.bf16.mxu0 0
  %217 = vmatpush1.bf16.msra.mxu0 0
  %218 = vmatprep.mubr.bf16.mxu0 0
  %219 = vmatmul.mubr.bf16.gmra.mrb[0].mxu0 %v122
  %v220 = vpop.f32.mrb[0].mxu0
  %v221 = vadd.f32 0.0, %v220
  %v222 = vpop.f32.mrb[0].mxu0
  %v223 = vpop.f32.mrb[0].mxu0
  %v224 = vadd.f32 0.0, %v223
  %v225 = vpop.f32.mrb[0].mxu0
  %226 = vmatprep.mubr.bf16.mxu0 0
  %227 = vmatmul.mubr.bf16.gmra.mrb[0].mxu0 %v123
  %v228 = vpop.f32.mrb[0].mxu0
  %v229 = vadd.f32 0.0, %v228
  %v230 = vpop.f32.mrb[0].mxu0
  %v231 = vpop.f32.mrb[0].mxu0
  %v232 = vadd.f32 0.0, %v231
  %v233 = vpop.f32.mrb[0].mxu0
  %234 = vmatprep.mubr.bf16.mxu0 0
  %235 = vmatmul.mubr.bf16.gmra.mrb[0].mxu0 %v124
  %v236 = vpop.f32.mrb[0].mxu0
  %v237 = vadd.f32 0.0, %v236
  %v238 = vpop.f32.mrb[0].mxu0
  %v239 = vpop.f32.mrb[0].mxu0
  %v240 = vadd.f32 0.0, %v239
  %v241 = vpop.f32.mrb[0].mxu0
  %242 = vmatprep.mubr.bf16.mxu0 0
  %243 = vmatmul.mubr.bf16.gmra.mrb[0].mxu0 %v125
  %v244 = vpop.f32.mrb[0].mxu0
  %v245 = vadd.f32 0.0, %v244
  %v246 = vpop.f32.mrb[0].mxu0
  %v247 = vpop.f32.mrb[0].mxu0
  %v248 = vadd.f32 0.0, %v247
  %v249 = vpop.f32.mrb[0].mxu0
  %250 = vmatprep.mubr.bf16.mxu0 0
  %251 = vmatmul.mubr.bf16.gmra.mrb[0].mxu0 %v126
  %v252 = vpop.f32.mrb[0].mxu0
  %v253 = vadd.f32 0.0, %v252
  %v254 = vpop.f32.mrb[0].mxu0
  %v255 = vpop.f32.mrb[0].mxu0
  %v256 = vadd.f32 0.0, %v255
  %v257 = vpop.f32.mrb[0].mxu0
  %258 = vmatprep.mubr.bf16.mxu0 0
  %259 = vmatmul.mubr.bf16.gmra.mrb[0].mxu0 %v127
  %v260 = vpop.f32.mrb[0].mxu0
  %v261 = vadd.f32 0.0, %v260
  %v262 = vpop.f32.mrb[0].mxu0
  %v263 = vpop.f32.mrb[0].mxu0
  %v264 = vadd.f32 0.0, %v263
  %v265 = vpop.f32.mrb[0].mxu0
  %266 = vmatprep.mubr.bf16.mxu0 0
  %267 = vmatmul.mubr.bf16.gmra.mrb[0].mxu0 %v128
  %v268 = vpop.f32.mrb[0].mxu0
  %v269 = vadd.f32 0.0, %v268
  %v270 = vpop.f32.mrb[0].mxu0
  %v271 = vpop.f32.mrb[0].mxu0
  %v272 = vadd.f32 0.0, %v271
  %v273 = vpop.f32.mrb[0].mxu0
  %274 = vmatprep.mubr.bf16.mxu0 0
  %275 = vmatmul.mubr.bf16.gmra.mrb[0].mxu0 %v129
  %v276 = vpop.f32.mrb[0].mxu0
  %v277 = vadd.f32 0.0, %v276
  %v278 = vpop.f32.mrb[0].mxu0
  %v279 = vpop.f32.mrb[0].mxu0
  %v280 = vadd.f32 0.0, %v279
  %v281 = vpop.f32.mrb[0].mxu0
  %282 = vdwg.mxu0
  %vm283 = vcmask 23552
  %v285 = vsel %vm283, %v49, 0
  %v288 = vsel %vm283, %v50, 0
  %v291 = vsel %vm283, %v51, 0
  %v294 = vsel %vm283, %v52, 0
  %v297 = vsel %vm283, %v53, 0
  %v300 = vsel %vm283, %v54, 0
  %v303 = vsel %vm283, %v55, 0
  %v306 = vsel %vm283, %v56, 0
  %vm308 = vcmask 1040384
  %vm309 = vcmask 1041408
  %v310 = vsel %vm308, 4294967295, 65535
  %v311 = vsel %vm309, %v310, 0
  %v313 = vand.u32 %v57, %v311
  %315 = vmatprep.subr.bf16.mxu0 0
  %316 = vmatpush1.bf16.msra.mxu0 %v313
  %317 = vmatprep.subr.bf16.mxu0 0
  %318 = vmatpush1.bf16.msra.mxu0 0
  %319 = vmatprep.subr.bf16.mxu0 0
  %320 = vmatpush1.bf16.msra.mxu0 0
  %321 = vmatprep.subr.bf16.mxu0 0
  %322 = vmatpush1.bf16.msra.mxu0 0
  %323 = vmatprep.subr.bf16.mxu0 0
  %324 = vmatpush1.bf16.msra.mxu0 0
  %325 = vmatprep.subr.bf16.mxu0 0
  %326 = vmatpush1.bf16.msra.mxu0 0
  %327 = vmatprep.subr.bf16.mxu0 0
  %328 = vmatpush1.bf16.msra.mxu0 0
  %329 = vmatprep.subr.bf16.mxu0 0
  %330 = vmatpush1.bf16.msra.mxu0 0
  %331 = vmatprep.subr.bf16.mxu0 0
  %332 = vmatpush1.bf16.msra.mxu0 0
  %333 = vmatprep.subr.bf16.mxu0 0
  %334 = vmatpush1.bf16.msra.mxu0 0
  %335 = vmatprep.subr.bf16.mxu0 0
  %336 = vmatpush1.bf16.msra.mxu0 0
  %337 = vmatprep.subr.bf16.mxu0 0
  %338 = vmatpush1.bf16.msra.mxu0 0
  %339 = vmatprep.subr.bf16.mxu0 0
  %340 = vmatpush1.bf16.msra.mxu0 0
  %341 = vmatprep.subr.bf16.mxu0 0
  %342 = vmatpush1.bf16.msra.mxu0 0
  %343 = vmatprep.subr.bf16.mxu0 0
  %344 = vmatpush1.bf16.msra.mxu0 0
  %345 = vmatprep.subr.bf16.mxu0 0
  %346 = vmatpush1.bf16.msra.mxu0 0
  %347 = vmatprep.mubr.bf16.mxu0 0
  %348 = vmatmul.mubr.bf16.gmra.mrb[0].mxu0 %v285
  %v349 = vpop.f32.mrb[0].mxu0
  %v350 = vadd.f32 %v221, %v349
  %v351 = vpop.f32.mrb[0].mxu0
  %v352 = vpop.f32.mrb[0].mxu0
  %v353 = vadd.f32 %v224, %v352
  %v354 = vpop.f32.mrb[0].mxu0
  %355 = vmatprep.mubr.bf16.mxu0 0
  %356 = vmatmul.mubr.bf16.gmra.mrb[0].mxu0 %v288
  %v357 = vpop.f32.mrb[0].mxu0
  %v358 = vadd.f32 %v229, %v357
  %v359 = vpop.f32.mrb[0].mxu0
  %v360 = vpop.f32.mrb[0].mxu0
  %v361 = vadd.f32 %v232, %v360
  %v362 = vpop.f32.mrb[0].mxu0
  %363 = vmatprep.mubr.bf16.mxu0 0
  %364 = vmatmul.mubr.bf16.gmra.mrb[0].mxu0 %v291
  %v365 = vpop.f32.mrb[0].mxu0
  %v366 = vadd.f32 %v237, %v365
  %v367 = vpop.f32.mrb[0].mxu0
  %v368 = vpop.f32.mrb[0].mxu0
  %v369 = vadd.f32 %v240, %v368
  %v370 = vpop.f32.mrb[0].mxu0
  %371 = vmatprep.mubr.bf16.mxu0 0
  %372 = vmatmul.mubr.bf16.gmra.mrb[0].mxu0 %v294
  %v373 = vpop.f32.mrb[0].mxu0
  %v374 = vadd.f32 %v245, %v373
  %v375 = vpop.f32.mrb[0].mxu0
  %v376 = vpop.f32.mrb[0].mxu0
  %v377 = vadd.f32 %v248, %v376
  %v378 = vpop.f32.mrb[0].mxu0
  %379 = vmatprep.mubr.bf16.mxu0 0
  %380 = vmatmul.mubr.bf16.gmra.mrb[0].mxu0 %v297
  %v381 = vpop.f32.mrb[0].mxu0
  %v382 = vadd.f32 %v253, %v381
  %v383 = vpop.f32.mrb[0].mxu0
  %v384 = vpop.f32.mrb[0].mxu0
  %v385 = vadd.f32 %v256, %v384
  %v386 = vpop.f32.mrb[0].mxu0
  %387 = vmatprep.mubr.bf16.mxu0 0
  %388 = vmatmul.mubr.bf16.gmra.mrb[0].mxu0 %v300
  %v389 = vpop.f32.mrb[0].mxu0
  %v390 = vadd.f32 %v261, %v389
  %v391 = vpop.f32.mrb[0].mxu0
  %v392 = vpop.f32.mrb[0].mxu0
  %v393 = vadd.f32 %v264, %v392
  %v394 = vpop.f32.mrb[0].mxu0
  %395 = vmatprep.mubr.bf16.mxu0 0
  %396 = vmatmul.mubr.bf16.gmra.mrb[0].mxu0 %v303
  %v397 = vpop.f32.mrb[0].mxu0
  %v398 = vadd.f32 %v269, %v397
  %v399 = vpop.f32.mrb[0].mxu0
  %v400 = vpop.f32.mrb[0].mxu0
  %v401 = vadd.f32 %v272, %v400
  %v402 = vpop.f32.mrb[0].mxu0
  %403 = vmatprep.mubr.bf16.mxu0 0
  %404 = vmatmul.mubr.bf16.gmra.mrb[0].mxu0 %v306
  %v405 = vpop.f32.mrb[0].mxu0
  %v406 = vadd.f32 %v277, %v405
  %v407 = vpop.f32.mrb[0].mxu0
  %v408 = vpop.f32.mrb[0].mxu0
  %v409 = vadd.f32 %v280, %v408
  %v410 = vpop.f32.mrb[0].mxu0
  %411 = vdwg.mxu0
  %v412 = vld [vmem:[%s4] sm:$0x1]
  %v414 = vlaneseq
  %v415 = vshrl.u32 %v414, 7
  %v416 = vsub.s32 0, %v415
  %v417 = vrot.slane %v412, %v416
  %v419 = vadd.f32 %v350, %v417
  %v420 = vadd.f32 %v353, %v417
  %v421 = vadd.f32 %v358, %v417
  %v422 = vadd.f32 %v361, %v417
  %v423 = vadd.f32 %v366, %v417
  %v424 = vadd.f32 %v369, %v417
  %v425 = vadd.f32 %v374, %v417
  %v426 = vadd.f32 %v377, %v417
  %v427 = vadd.f32 %v382, %v417
  %v428 = vadd.f32 %v385, %v417
  %v429 = vadd.f32 %v390, %v417
  %v430 = vadd.f32 %v393, %v417
  %v431 = vadd.f32 %v398, %v417
  %v432 = vadd.f32 %v401, %v417
  %v433 = vadd.f32 %v406, %v417
  %v434 = vadd.f32 %v409, %v417
  %v435 = vmul.f32 %v419, 0.999995
  %v436 = vmul.f32 %v420, 0.999995
  %v437 = vmul.f32 %v421, 0.999995
  %v438 = vmul.f32 %v422, 0.999995
  %v439 = vmul.f32 %v423, 0.999995
  %v440 = vmul.f32 %v424, 0.999995
  %v441 = vmul.f32 %v425, 0.999995
  %v442 = vmul.f32 %v426, 0.999995
  %v443 = vmul.f32 %v427, 0.999995
  %v444 = vmul.f32 %v428, 0.999995
  %v445 = vmul.f32 %v429, 0.999995
  %v446 = vmul.f32 %v430, 0.999995
  %v447 = vmul.f32 %v431, 0.999995
  %v448 = vmul.f32 %v432, 0.999995
  %v449 = vmul.f32 %v433, 0.999995
  %v450 = vmul.f32 %v434, 0.999995
  %v451 = vmax.f32 %v435, 0.0
  %v452 = vmax.f32 %v436, 0.0
  %v453 = vmax.f32 %v437, 0.0
  %v454 = vmax.f32 %v438, 0.0
  %v455 = vmax.f32 %v439, 0.0
  %v456 = vmax.f32 %v440, 0.0
  %v457 = vmax.f32 %v441, 0.0
  %v458 = vmax.f32 %v442, 0.0
  %v459 = vmax.f32 %v443, 0.0
  %v460 = vmax.f32 %v444, 0.0
  %v461 = vmax.f32 %v445, 0.0
  %v462 = vmax.f32 %v446, 0.0
  %v463 = vmax.f32 %v447, 0.0
  %v464 = vmax.f32 %v448, 0.0
  %v465 = vmax.f32 %v449, 0.0
  %v466 = vmax.f32 %v450, 0.0
  %v467 = vpack.c.bf16 %v452, %v451
  %v468 = vpack.c.bf16 %v454, %v453
  %v469 = vpack.c.bf16 %v456, %v455
  %v470 = vpack.c.bf16 %v458, %v457
  %v471 = vpack.c.bf16 %v460, %v459
  %v472 = vpack.c.bf16 %v462, %v461
  %v473 = vpack.c.bf16 %v464, %v463
  %v474 = vpack.c.bf16 %v466, %v465
  %v475 = vld [vmem:[%s5] sm:$0xf]
  %v476 = vld [vmem:[%s5 + $0x4] sm:$0xf]
  %v477 = vld [vmem:[%s5 + $0x8] sm:$0xf]
  %v478 = vld [vmem:[%s5 + $0xc] sm:$0xf]
  %v479 = vld [vmem:[%s5 + $0x10] sm:$0xf]
  %v480 = vld [vmem:[%s5 + $0x14] sm:$0xf]
  %v481 = vld [vmem:[%s5 + $0x18] sm:$0xf]
  %v482 = vld [vmem:[%s5 + $0x1c] sm:$0xf]
  %v483 = vld [vmem:[%s5 + $0x20] sm:$0xf]
  %v484 = vld [vmem:[%s5 + $0x24] sm:$0xf]
  %v485 = vld [vmem:[%s5 + $0x28] sm:$0xf]
  %v486 = vld [vmem:[%s5 + $0x2c] sm:$0xf]
  %v487 = vld [vmem:[%s5 + $0x30] sm:$0xf]
  %v488 = vld [vmem:[%s5 + $0x34] sm:$0xf]
  %v489 = vld [vmem:[%s5 + $0x38] sm:$0xf]
  %v490 = vld [vmem:[%s5 + $0x3c] sm:$0xf]
  %v491 = vld [vmem:[%s6] sm:$0x1]
  %v493 = vlaneseq
  %v494 = vshrl.u32 %v493, 7
  %v495 = vsub.s32 0, %v494
  %v496 = vrot.slane %v491, %v495
  %v514 = vunpack.c.l.b16 %v475
  %v515 = vunpack.c.l.b16 %v476
  %v516 = vunpack.c.l.b16 %v477
  %v517 = vunpack.c.l.b16 %v478
  %v518 = vunpack.c.l.b16 %v479
  %v519 = vunpack.c.l.b16 %v480
  %v520 = vunpack.c.l.b16 %v481
  %v521 = vunpack.c.l.b16 %v482
  %v522 = vunpack.c.l.b16 %v483
  %v523 = vunpack.c.l.b16 %v484
  %v524 = vunpack.c.l.b16 %v485
  %v525 = vunpack.c.l.b16 %v486
  %v526 = vunpack.c.l.b16 %v487
  %v527 = vunpack.c.l.b16 %v488
  %v528 = vunpack.c.l.b16 %v489
  %v529 = vunpack.c.l.b16 %v490
  %v530 = vpack.c.b16 %v515, %v514
  %v531 = vpack.c.b16 %v517, %v516
  %v532 = vpack.c.b16 %v519, %v518
  %v533 = vpack.c.b16 %v521, %v520
  %v534 = vpack.c.b16 %v523, %v522
  %v535 = vpack.c.b16 %v525, %v524
  %v536 = vpack.c.b16 %v527, %v526
  %v537 = vpack.c.b16 %v529, %v528
  %546 = vmatprep.subr.bf16.mxu0 0
  %547 = vmatpush1.bf16.msra.mxu0 %v530
  %548 = vmatprep.subr.bf16.mxu0 0
  %549 = vmatpush1.bf16.msra.mxu0 %v531
  %550 = vmatprep.subr.bf16.mxu0 0
  %551 = vmatpush1.bf16.msra.mxu0 %v532
  %552 = vmatprep.subr.bf16.mxu0 0
  %553 = vmatpush1.bf16.msra.mxu0 %v533
  %554 = vmatprep.subr.bf16.mxu0 0
  %555 = vmatpush1.bf16.msra.mxu0 %v534
  %556 = vmatprep.subr.bf16.mxu0 0
  %557 = vmatpush1.bf16.msra.mxu0 %v535
  %558 = vmatprep.subr.bf16.mxu0 0
  %559 = vmatpush1.bf16.msra.mxu0 %v536
  %560 = vmatprep.subr.bf16.mxu0 0
  %561 = vmatpush1.bf16.msra.mxu0 %v537
  %562 = vmatprep.subr.bf16.mxu0 0
  %563 = vmatpush1.bf16.msra.mxu0 0
  %564 = vmatprep.subr.bf16.mxu0 0
  %565 = vmatpush1.bf16.msra.mxu0 0
  %566 = vmatprep.subr.bf16.mxu0 0
  %567 = vmatpush1.bf16.msra.mxu0 0
  %568 = vmatprep.subr.bf16.mxu0 0
  %569 = vmatpush1.bf16.msra.mxu0 0
  %570 = vmatprep.subr.bf16.mxu0 0
  %571 = vmatpush1.bf16.msra.mxu0 0
  %572 = vmatprep.subr.bf16.mxu0 0
  %573 = vmatpush1.bf16.msra.mxu0 0
  %574 = vmatprep.subr.bf16.mxu0 0
  %575 = vmatpush1.bf16.msra.mxu0 0
  %576 = vmatprep.subr.bf16.mxu0 0
  %577 = vmatpush1.bf16.msra.mxu0 0
  %578 = vmatprep.mubr.bf16.mxu0 0
  %579 = vmatmul.mubr.bf16.gmra.mrb[0].mxu0 %v467
  %v580 = vpop.f32.mrb[0].mxu0
  %v581 = vadd.f32 %v496, %v580
  %v582 = vpop.f32.mrb[0].mxu0
  %v583 = vpop.f32.mrb[0].mxu0
  %v584 = vadd.f32 %v496, %v583
  %v585 = vpop.f32.mrb[0].mxu0
  %586 = vmatprep.mubr.bf16.mxu0 0
  %587 = vmatmul.mubr.bf16.gmra.mrb[0].mxu0 %v468
  %v588 = vpop.f32.mrb[0].mxu0
  %v589 = vadd.f32 %v496, %v588
  %v590 = vpop.f32.mrb[0].mxu0
  %v591 = vpop.f32.mrb[0].mxu0
  %v592 = vadd.f32 %v496, %v591
  %v593 = vpop.f32.mrb[0].mxu0
  %594 = vmatprep.mubr.bf16.mxu0 0
  %595 = vmatmul.mubr.bf16.gmra.mrb[0].mxu0 %v469
  %v596 = vpop.f32.mrb[0].mxu0
  %v597 = vadd.f32 %v496, %v596
  %v598 = vpop.f32.mrb[0].mxu0
  %v599 = vpop.f32.mrb[0].mxu0
  %v600 = vadd.f32 %v496, %v599
  %v601 = vpop.f32.mrb[0].mxu0
  %602 = vmatprep.mubr.bf16.mxu0 0
  %603 = vmatmul.mubr.bf16.gmra.mrb[0].mxu0 %v470
  %v604 = vpop.f32.mrb[0].mxu0
  %v605 = vadd.f32 %v496, %v604
  %v606 = vpop.f32.mrb[0].mxu0
  %v607 = vpop.f32.mrb[0].mxu0
  %v608 = vadd.f32 %v496, %v607
  %v609 = vpop.f32.mrb[0].mxu0
  %610 = vmatprep.mubr.bf16.mxu0 0
  %611 = vmatmul.mubr.bf16.gmra.mrb[0].mxu0 %v471
  %v612 = vpop.f32.mrb[0].mxu0
  %v613 = vadd.f32 %v496, %v612
  %v614 = vpop.f32.mrb[0].mxu0
  %v615 = vpop.f32.mrb[0].mxu0
  %v616 = vadd.f32 %v496, %v615
  %v617 = vpop.f32.mrb[0].mxu0
  %618 = vmatprep.mubr.bf16.mxu0 0
  %619 = vmatmul.mubr.bf16.gmra.mrb[0].mxu0 %v472
  %v620 = vpop.f32.mrb[0].mxu0
  %v621 = vadd.f32 %v496, %v620
  %v622 = vpop.f32.mrb[0].mxu0
  %v623 = vpop.f32.mrb[0].mxu0
  %v624 = vadd.f32 %v496, %v623
  %v625 = vpop.f32.mrb[0].mxu0
  %626 = vmatprep.mubr.bf16.mxu0 0
  %627 = vmatmul.mubr.bf16.gmra.mrb[0].mxu0 %v473
  %v628 = vpop.f32.mrb[0].mxu0
  %v629 = vadd.f32 %v496, %v628
  %v630 = vpop.f32.mrb[0].mxu0
  %v631 = vpop.f32.mrb[0].mxu0
  %v632 = vadd.f32 %v496, %v631
  %v633 = vpop.f32.mrb[0].mxu0
  %634 = vmatprep.mubr.bf16.mxu0 0
  %635 = vmatmul.mubr.bf16.gmra.mrb[0].mxu0 %v474
  %v636 = vpop.f32.mrb[0].mxu0
  %v637 = vadd.f32 %v496, %v636
  %v638 = vpop.f32.mrb[0].mxu0
  %v639 = vpop.f32.mrb[0].mxu0
  %v640 = vadd.f32 %v496, %v639
  %v641 = vpop.f32.mrb[0].mxu0
  %642 = vdwg.mxu0
  %v643 = vmul.f32 %v581, 0.999995
  %v644 = vmul.f32 %v584, 0.999995
  %v645 = vmul.f32 %v589, 0.999995
  %v646 = vmul.f32 %v592, 0.999995
  %v647 = vmul.f32 %v597, 0.999995
  %v648 = vmul.f32 %v600, 0.999995
  %v649 = vmul.f32 %v605, 0.999995
  %v650 = vmul.f32 %v608, 0.999995
  %v651 = vmul.f32 %v613, 0.999995
  %v652 = vmul.f32 %v616, 0.999995
  %v653 = vmul.f32 %v621, 0.999995
  %v654 = vmul.f32 %v624, 0.999995
  %v655 = vmul.f32 %v629, 0.999995
  %v656 = vmul.f32 %v632, 0.999995
  %v657 = vmul.f32 %v637, 0.999995
  %v658 = vmul.f32 %v640, 0.999995
  %v659 = vmax.f32 %v643, 0.0
  %v660 = vmax.f32 %v644, 0.0
  %v661 = vmax.f32 %v645, 0.0
  %v662 = vmax.f32 %v646, 0.0
  %v663 = vmax.f32 %v647, 0.0
  %v664 = vmax.f32 %v648, 0.0
  %v665 = vmax.f32 %v649, 0.0
  %v666 = vmax.f32 %v650, 0.0
  %v667 = vmax.f32 %v651, 0.0
  %v668 = vmax.f32 %v652, 0.0
  %v669 = vmax.f32 %v653, 0.0
  %v670 = vmax.f32 %v654, 0.0
  %v671 = vmax.f32 %v655, 0.0
  %v672 = vmax.f32 %v656, 0.0
  %v673 = vmax.f32 %v657, 0.0
  %v674 = vmax.f32 %v658, 0.0
  %v675 = vpack.c.bf16 %v660, %v659
  %v676 = vpack.c.bf16 %v662, %v661
  %v677 = vpack.c.bf16 %v664, %v663
  %v678 = vpack.c.bf16 %v666, %v665
  %v679 = vpack.c.bf16 %v668, %v667
  %v680 = vpack.c.bf16 %v670, %v669
  %v681 = vpack.c.bf16 %v672, %v671
  %v682 = vpack.c.bf16 %v674, %v673
  %v683 = vld [vmem:[%s7] sm:$0xff]
  %v684 = vld [vmem:[%s7 + $0x8] sm:$0xff]
  %v685 = vld [vmem:[%s7 + $0x10] sm:$0xff]
  %v686 = vld [vmem:[%s7 + $0x18] sm:$0xff]
  %v687 = vld [vmem:[%s7 + $0x20] sm:$0xff]
  %v688 = vld [vmem:[%s7 + $0x28] sm:$0xff]
  %v689 = vld [vmem:[%s7 + $0x30] sm:$0xff]
  %v690 = vld [vmem:[%s7 + $0x38] sm:$0xff]
  %v691 = vld [vmem:[%s7 + $0x40] sm:$0xff]
  %v692 = vld [vmem:[%s7 + $0x48] sm:$0xff]
  %v693 = vld [vmem:[%s7 + $0x50] sm:$0xff]
  %v694 = vld [vmem:[%s7 + $0x58] sm:$0xff]
  %v695 = vld [vmem:[%s7 + $0x60] sm:$0xff]
  %v696 = vld [vmem:[%s7 + $0x68] sm:$0xff]
  %v697 = vld [vmem:[%s7 + $0x70] sm:$0xff]
  %v698 = vld [vmem:[%s7 + $0x78] sm:$0xff]
  %v699 = vld [vmem:[%s8] sm:$0x3]
  %v701 = vlaneseq
  %v702 = vshrl.u32 %v701, 7
  %v703 = vsub.s32 0, %v702
  %v704 = vrot.slane %v699, %v703
  %v705 = vlaneseq
  %v706 = vshrl.u32 %v705, 7
  %v707 = vsub.s32 1, %v706
  %v708 = vrot.slane %v699, %v707
  %v727 = vunpack.c.l.b16 %v683
  %v728 = vunpack.c.h.b16 %v683
  %v729 = vunpack.c.l.b16 %v684
  %v730 = vunpack.c.h.b16 %v684
  %v731 = vunpack.c.l.b16 %v685
  %v732 = vunpack.c.h.b16 %v685
  %v733 = vunpack.c.l.b16 %v686
  %v734 = vunpack.c.h.b16 %v686
  %v735 = vunpack.c.l.b16 %v687
  %v736 = vunpack.c.h.b16 %v687
  %v737 = vunpack.c.l.b16 %v688
  %v738 = vunpack.c.h.b16 %v688
  %v739 = vunpack.c.l.b16 %v689
  %v740 = vunpack.c.h.b16 %v689
  %v741 = vunpack.c.l.b16 %v690
  %v742 = vunpack.c.h.b16 %v690
  %v743 = vunpack.c.l.b16 %v691
  %v744 = vunpack.c.h.b16 %v691
  %v745 = vunpack.c.l.b16 %v692
  %v746 = vunpack.c.h.b16 %v692
  %v747 = vunpack.c.l.b16 %v693
  %v748 = vunpack.c.h.b16 %v693
  %v749 = vunpack.c.l.b16 %v694
  %v750 = vunpack.c.h.b16 %v694
  %v751 = vunpack.c.l.b16 %v695
  %v752 = vunpack.c.h.b16 %v695
  %v753 = vunpack.c.l.b16 %v696
  %v754 = vunpack.c.h.b16 %v696
  %v755 = vunpack.c.l.b16 %v697
  %v756 = vunpack.c.h.b16 %v697
  %v757 = vunpack.c.l.b16 %v698
  %v758 = vunpack.c.h.b16 %v698
  %v759 = vpack.c.b16 %v729, %v727
  %v760 = vpack.c.b16 %v730, %v728
  %v761 = vpack.c.b16 %v733, %v731
  %v762 = vpack.c.b16 %v734, %v732
  %v763 = vpack.c.b16 %v737, %v735
  %v764 = vpack.c.b16 %v738, %v736
  %v765 = vpack.c.b16 %v741, %v739
  %v766 = vpack.c.b16 %v742, %v740
  %v767 = vpack.c.b16 %v745, %v743
  %v768 = vpack.c.b16 %v746, %v744
  %v769 = vpack.c.b16 %v749, %v747
  %v770 = vpack.c.b16 %v750, %v748
  %v771 = vpack.c.b16 %v753, %v751
  %v772 = vpack.c.b16 %v754, %v752
  %v773 = vpack.c.b16 %v757, %v755
  %v774 = vpack.c.b16 %v758, %v756
  %791 = vmatprep.subr.bf16.mxu0 %v760
  %792 = vmatpush1.bf16.msra.mxu0 %v759
  %793 = vmatprep.subr.bf16.mxu0 %v762
  %794 = vmatpush1.bf16.msra.mxu0 %v761
  %795 = vmatprep.subr.bf16.mxu0 %v764
  %796 = vmatpush1.bf16.msra.mxu0 %v763
  %797 = vmatprep.subr.bf16.mxu0 %v766
  %798 = vmatpush1.bf16.msra.mxu0 %v765
  %799 = vmatprep.subr.bf16.mxu0 %v768
  %800 = vmatpush1.bf16.msra.mxu0 %v767
  %801 = vmatprep.subr.bf16.mxu0 %v770
  %802 = vmatpush1.bf16.msra.mxu0 %v769
  %803 = vmatprep.subr.bf16.mxu0 %v772
  %804 = vmatpush1.bf16.msra.mxu0 %v771
  %805 = vmatprep.subr.bf16.mxu0 %v774
  %806 = vmatpush1.bf16.msra.mxu0 %v773
  %807 = vmatprep.subr.bf16.mxu0 0
  %808 = vmatpush1.bf16.msra.mxu0 0
  %809 = vmatprep.subr.bf16.mxu0 0
  %810 = vmatpush1.bf16.msra.mxu0 0
  %811 = vmatprep.subr.bf16.mxu0 0
  %812 = vmatpush1.bf16.msra.mxu0 0
  %813 = vmatprep.subr.bf16.mxu0 0
  %814 = vmatpush1.bf16.msra.mxu0 0
  %815 = vmatprep.subr.bf16.mxu0 0
  %816 = vmatpush1.bf16.msra.mxu0 0
  %817 = vmatprep.subr.bf16.mxu0 0
  %818 = vmatpush1.bf16.msra.mxu0 0
  %819 = vmatprep.subr.bf16.mxu0 0
  %820 = vmatpush1.bf16.msra.mxu0 0
  %821 = vmatprep.subr.bf16.mxu0 0
  %822 = vmatpush1.bf16.msra.mxu0 0
  %823 = vmatprep.mubr.bf16.mxu0 0
  %824 = vmatmul.mubr.bf16.gmra.mrb[0].mxu0 %v675
  %v825 = vpop.f32.mrb[0].mxu0
  %v826 = vadd.f32 %v704, %v825
  %v827 = vpop.f32.mrb[0].mxu0
  %v828 = vadd.f32 %v708, %v827
  %v829 = vpop.f32.mrb[0].mxu0
  %v830 = vadd.f32 %v704, %v829
  %v831 = vpop.f32.mrb[0].mxu0
  %v832 = vadd.f32 %v708, %v831
  %833 = vmatprep.mubr.bf16.mxu0 0
  %834 = vmatmul.mubr.bf16.gmra.mrb[0].mxu0 %v676
  %v835 = vpop.f32.mrb[0].mxu0
  %v836 = vadd.f32 %v704, %v835
  %v837 = vpop.f32.mrb[0].mxu0
  %v838 = vadd.f32 %v708, %v837
  %v839 = vpop.f32.mrb[0].mxu0
  %v840 = vadd.f32 %v704, %v839
  %v841 = vpop.f32.mrb[0].mxu0
  %v842 = vadd.f32 %v708, %v841
  %843 = vmatprep.mubr.bf16.mxu0 0
  %844 = vmatmul.mubr.bf16.gmra.mrb[0].mxu0 %v677
  %v845 = vpop.f32.mrb[0].mxu0
  %v846 = vadd.f32 %v704, %v845
  %v847 = vpop.f32.mrb[0].mxu0
  %v848 = vadd.f32 %v708, %v847
  %v849 = vpop.f32.mrb[0].mxu0
  %v850 = vadd.f32 %v704, %v849
  %v851 = vpop.f32.mrb[0].mxu0
  %v852 = vadd.f32 %v708, %v851
  %853 = vmatprep.mubr.bf16.mxu0 0
  %854 = vmatmul.mubr.bf16.gmra.mrb[0].mxu0 %v678
  %v855 = vpop.f32.mrb[0].mxu0
  %v856 = vadd.f32 %v704, %v855
  %v857 = vpop.f32.mrb[0].mxu0
  %v858 = vadd.f32 %v708, %v857
  %v859 = vpop.f32.mrb[0].mxu0
  %v860 = vadd.f32 %v704, %v859
  %v861 = vpop.f32.mrb[0].mxu0
  %v862 = vadd.f32 %v708, %v861
  %863 = vmatprep.mubr.bf16.mxu0 0
  %864 = vmatmul.mubr.bf16.gmra.mrb[0].mxu0 %v679
  %v865 = vpop.f32.mrb[0].mxu0
  %v866 = vadd.f32 %v704, %v865
  %v867 = vpop.f32.mrb[0].mxu0
  %v868 = vadd.f32 %v708, %v867
  %v869 = vpop.f32.mrb[0].mxu0
  %v870 = vadd.f32 %v704, %v869
  %v871 = vpop.f32.mrb[0].mxu0
  %v872 = vadd.f32 %v708, %v871
  %873 = vmatprep.mubr.bf16.mxu0 0
  %874 = vmatmul.mubr.bf16.gmra.mrb[0].mxu0 %v680
  %v875 = vpop.f32.mrb[0].mxu0
  %v876 = vadd.f32 %v704, %v875
  %v877 = vpop.f32.mrb[0].mxu0
  %v878 = vadd.f32 %v708, %v877
  %v879 = vpop.f32.mrb[0].mxu0
  %v880 = vadd.f32 %v704, %v879
  %v881 = vpop.f32.mrb[0].mxu0
  %v882 = vadd.f32 %v708, %v881
  %883 = vmatprep.mubr.bf16.mxu0 0
  %884 = vmatmul.mubr.bf16.gmra.mrb[0].mxu0 %v681
  %v885 = vpop.f32.mrb[0].mxu0
  %v886 = vadd.f32 %v704, %v885
  %v887 = vpop.f32.mrb[0].mxu0
  %v888 = vadd.f32 %v708, %v887
  %v889 = vpop.f32.mrb[0].mxu0
  %v890 = vadd.f32 %v704, %v889
  %v891 = vpop.f32.mrb[0].mxu0
  %v892 = vadd.f32 %v708, %v891
  %893 = vmatprep.mubr.bf16.mxu0 0
  %894 = vmatmul.mubr.bf16.gmra.mrb[0].mxu0 %v682
  %v895 = vpop.f32.mrb[0].mxu0
  %v896 = vadd.f32 %v704, %v895
  %v897 = vpop.f32.mrb[0].mxu0
  %v898 = vadd.f32 %v708, %v897
  %v899 = vpop.f32.mrb[0].mxu0
  %v900 = vadd.f32 %v704, %v899
  %v901 = vpop.f32.mrb[0].mxu0
  %v902 = vadd.f32 %v708, %v901
  %903 = vdwg.mxu0
  %v904 = vmax.f32 %v826, %v830
  %v905 = vrot.slane %v904, 4
  %v906 = vmax.f32 %v904, %v905
  %v907 = vrot.slane %v906, 2
  %v908 = vmax.f32 %v906, %v907
  %v909 = vrot.slane %v908, 1
  %v910 = vmax.f32 %v908, %v909
  %v911 = vmax.f32 %v828, %v832
  %v912 = vrot.slane %v911, 4
  %v913 = vmax.f32 %v911, %v912
  %v914 = vrot.slane %v913, 2
  %v915 = vmax.f32 %v913, %v914
  %v916 = vrot.slane %v915, 1
  %v917 = vmax.f32 %v915, %v916
  %v918 = vmax.f32 %v836, %v840
  %v919 = vrot.slane %v918, 4
  %v920 = vmax.f32 %v918, %v919
  %v921 = vrot.slane %v920, 2
  %v922 = vmax.f32 %v920, %v921
  %v923 = vrot.slane %v922, 1
  %v924 = vmax.f32 %v922, %v923
  %v925 = vmax.f32 %v838, %v842
  %v926 = vrot.slane %v925, 4
  %v927 = vmax.f32 %v925, %v926
  %v928 = vrot.slane %v927, 2
  %v929 = vmax.f32 %v927, %v928
  %v930 = vrot.slane %v929, 1
  %v931 = vmax.f32 %v929, %v930
  %v932 = vmax.f32 %v846, %v850
  %v933 = vrot.slane %v932, 4
  %v934 = vmax.f32 %v932, %v933
  %v935 = vrot.slane %v934, 2
  %v936 = vmax.f32 %v934, %v935
  %v937 = vrot.slane %v936, 1
  %v938 = vmax.f32 %v936, %v937
  %v939 = vmax.f32 %v848, %v852
  %v940 = vrot.slane %v939, 4
  %v941 = vmax.f32 %v939, %v940
  %v942 = vrot.slane %v941, 2
  %v943 = vmax.f32 %v941, %v942
  %v944 = vrot.slane %v943, 1
  %v945 = vmax.f32 %v943, %v944
  %v946 = vmax.f32 %v856, %v860
  %v947 = vrot.slane %v946, 4
  %v948 = vmax.f32 %v946, %v947
  %v949 = vrot.slane %v948, 2
  %v950 = vmax.f32 %v948, %v949
  %v951 = vrot.slane %v950, 1
  %v952 = vmax.f32 %v950, %v951
  %v953 = vmax.f32 %v858, %v862
  %v954 = vrot.slane %v953, 4
  %v955 = vmax.f32 %v953, %v954
  %v956 = vrot.slane %v955, 2
  %v957 = vmax.f32 %v955, %v956
  %v958 = vrot.slane %v957, 1
  %v959 = vmax.f32 %v957, %v958
  %v960 = vmax.f32 %v866, %v870
  %v961 = vrot.slane %v960, 4
  %v962 = vmax.f32 %v960, %v961
  %v963 = vrot.slane %v962, 2
  %v964 = vmax.f32 %v962, %v963
  %v965 = vrot.slane %v964, 1
  %v966 = vmax.f32 %v964, %v965
  %v967 = vmax.f32 %v868, %v872
  %v968 = vrot.slane %v967, 4
  %v969 = vmax.f32 %v967, %v968
  %v970 = vrot.slane %v969, 2
  %v971 = vmax.f32 %v969, %v970
  %v972 = vrot.slane %v971, 1
  %v973 = vmax.f32 %v971, %v972
  %v974 = vmax.f32 %v876, %v880
  %v975 = vrot.slane %v974, 4
  %v976 = vmax.f32 %v974, %v975
  %v977 = vrot.slane %v976, 2
  %v978 = vmax.f32 %v976, %v977
  %v979 = vrot.slane %v978, 1
  %v980 = vmax.f32 %v978, %v979
  %v981 = vmax.f32 %v878, %v882
  %v982 = vrot.slane %v981, 4
  %v983 = vmax.f32 %v981, %v982
  %v984 = vrot.slane %v983, 2
  %v985 = vmax.f32 %v983, %v984
  %v986 = vrot.slane %v985, 1
  %v987 = vmax.f32 %v985, %v986
  %v988 = vmax.f32 %v886, %v890
  %v989 = vrot.slane %v988, 4
  %v990 = vmax.f32 %v988, %v989
  %v991 = vrot.slane %v990, 2
  %v992 = vmax.f32 %v990, %v991
  %v993 = vrot.slane %v992, 1
  %v994 = vmax.f32 %v992, %v993
  %v995 = vmax.f32 %v888, %v892
  %v996 = vrot.slane %v995, 4
  %v997 = vmax.f32 %v995, %v996
  %v998 = vrot.slane %v997, 2
  %v999 = vmax.f32 %v997, %v998
  %v1000 = vrot.slane %v999, 1
  %v1001 = vmax.f32 %v999, %v1000
  %v1002 = vmax.f32 %v896, %v900
  %v1003 = vrot.slane %v1002, 4
  %v1004 = vmax.f32 %v1002, %v1003
  %v1005 = vrot.slane %v1004, 2
  %v1006 = vmax.f32 %v1004, %v1005
  %v1007 = vrot.slane %v1006, 1
  %v1008 = vmax.f32 %v1006, %v1007
  %v1009 = vmax.f32 %v898, %v902
  %v1010 = vrot.slane %v1009, 4
  %v1011 = vmax.f32 %v1009, %v1010
  %v1012 = vrot.slane %v1011, 2
  %v1013 = vmax.f32 %v1011, %v1012
  %v1014 = vrot.slane %v1013, 1
  %v1015 = vmax.f32 %v1013, %v1014
  %v1016 = vpack.c.bf16 %v910, %v910
  %v1017 = vpack.c.bf16 %v917, %v917
  %v1018 = vpack.c.bf16 %v924, %v924
  %v1019 = vpack.c.bf16 %v931, %v931
  %v1020 = vpack.c.bf16 %v938, %v938
  %v1021 = vpack.c.bf16 %v945, %v945
  %v1022 = vpack.c.bf16 %v952, %v952
  %v1023 = vpack.c.bf16 %v959, %v959
  %v1024 = vpack.c.bf16 %v966, %v966
  %v1025 = vpack.c.bf16 %v973, %v973
  %v1026 = vpack.c.bf16 %v980, %v980
  %v1027 = vpack.c.bf16 %v987, %v987
  %v1028 = vpack.c.bf16 %v994, %v994
  %v1029 = vpack.c.bf16 %v1001, %v1001
  %v1030 = vpack.c.bf16 %v1008, %v1008
  %v1031 = vpack.c.bf16 %v1015, %v1015
  %v1048 = vunpack.c.l.b16 %v1016
  %v1049 = vunpack.c.l.b16 %v1017
  %v1050 = vunpack.c.l.b16 %v1018
  %v1051 = vunpack.c.l.b16 %v1019
  %v1052 = vunpack.c.l.b16 %v1020
  %v1053 = vunpack.c.l.b16 %v1021
  %v1054 = vunpack.c.l.b16 %v1022
  %v1055 = vunpack.c.l.b16 %v1023
  %v1056 = vunpack.c.l.b16 %v1024
  %v1057 = vunpack.c.l.b16 %v1025
  %v1058 = vunpack.c.l.b16 %v1026
  %v1059 = vunpack.c.l.b16 %v1027
  %v1060 = vunpack.c.l.b16 %v1028
  %v1061 = vunpack.c.l.b16 %v1029
  %v1062 = vunpack.c.l.b16 %v1030
  %v1063 = vunpack.c.l.b16 %v1031
  %v1064 = vpack.c.b16 %v1049, %v1048
  %v1065 = vpack.c.b16 %v1051, %v1050
  %v1066 = vpack.c.b16 %v1053, %v1052
  %v1067 = vpack.c.b16 %v1055, %v1054
  %v1068 = vpack.c.b16 %v1057, %v1056
  %v1069 = vpack.c.b16 %v1059, %v1058
  %v1070 = vpack.c.b16 %v1061, %v1060
  %v1071 = vpack.c.b16 %v1063, %v1062
  %v1072 = vunpack.c.l.b16 %v1064
  %v1073 = vunpack.c.h.b16 %v1064
  %v1074 = vunpack.c.l.b16 %v1065
  %v1075 = vunpack.c.h.b16 %v1065
  %v1076 = vunpack.c.l.b16 %v1066
  %v1077 = vunpack.c.h.b16 %v1066
  %v1078 = vunpack.c.l.b16 %v1067
  %v1079 = vunpack.c.h.b16 %v1067
  %v1080 = vunpack.c.l.b16 %v1068
  %v1081 = vunpack.c.h.b16 %v1068
  %v1082 = vunpack.c.l.b16 %v1069
  %v1083 = vunpack.c.h.b16 %v1069
  %v1084 = vunpack.c.l.b16 %v1070
  %v1085 = vunpack.c.h.b16 %v1070
  %v1086 = vunpack.c.l.b16 %v1071
  %v1087 = vunpack.c.h.b16 %v1071
  %vm1088 = vcmask 1041409
  %v1089 = vsel %vm1088, %v1074, %v1072
  %vm1090 = vcmask 1042434
  %v1091 = vsel %vm1090, %v1076, %v1089
  %vm1092 = vcmask 1043459
  %v1093 = vsel %vm1092, %v1078, %v1091
  %vm1094 = vcmask 1044484
  %v1095 = vsel %vm1094, %v1080, %v1093
  %vm1096 = vcmask 1045509
  %v1097 = vsel %vm1096, %v1082, %v1095
  %vm1098 = vcmask 1046534
  %v1099 = vsel %vm1098, %v1084, %v1097
  %vm1100 = vcmask 1047559
  %v1101 = vsel %vm1100, %v1086, %v1099
  %v1102 = vsel %vm1088, %v1075, %v1073
  %v1103 = vsel %vm1090, %v1077, %v1102
  %v1104 = vsel %vm1092, %v1079, %v1103
  %v1105 = vsel %vm1094, %v1081, %v1104
  %v1106 = vsel %vm1096, %v1083, %v1105
  %v1107 = vsel %vm1098, %v1085, %v1106
  %v1108 = vsel %vm1100, %v1087, %v1107
  %v1109 = vpack.c.b16 %v1108, %v1101
  %1111 = vst [vmem:[%s9] sm:$0xff] %v1109
  // Predicated region
  $region38: #{net_forward.4} parent=0 // pred_check
    _
  $region39: #{net_forward.4} parent=0 // pred_check_branch
    %1113 = sbr.rel (0) target = $region41
  $region40: #{net_forward.4} parent=0 // pred_region
    _
  $region41: #{net_forward.4} parent=0 // pred_fallthru
    _
  // Predicated region
  $region42: #{net_forward.4} parent=0 // pred_check
    _
  $region43: #{net_forward.4} parent=0 // pred_check_branch
    %1115 = sbr.rel (0) target = $region45
  $region44: #{net_forward.4} parent=0 // pred_region
    _
  $region45: #{net_forward.4} parent=0 // pred_fallthru
    _

// kernel: net_forward.5
$region0: #{net_forward.5}
  #allocation0 [shape = 'u32[]', space=smem, size = 0x4, offset = 0x4, fixed_abs, tag = 'smem constant byte address 0x4 - core index']
  #allocation1 [shape = 'u32[144,128]{1,0:T(1,128)}', space=vmem, size = 0x12000, scoped, tag = 'internal scratch']
  %s0 = inlined_call_operand.vmem [shape: bf16[2,4,256], index: 0, kind: input, shape index: {}]
  %s1 = inlined_call_operand.vmem [shape: f32[2,4,3], index: 1, kind: input, shape index: {}]
  %s2 = inlined_call_operand.vmem [shape: bf16[256,256], index: 2, kind: input, shape index: {}]
  %s3 = inlined_call_operand.vmem [shape: bf16[3,256], index: 3, kind: input, shape index: {}]
  %s4 = inlined_call_operand.vmem [shape: f32[1,256], index: 4, kind: input, shape index: {}]
  %s5 = inlined_call_operand.vmem [shape: bf16[256,512], index: 5, kind: input, shape index: {}]
  %s6 = inlined_call_operand.vmem [shape: f32[1,512], index: 6, kind: input, shape index: {}]
  %s7 = inlined_call_operand.vmem [shape: bf16[512,1024], index: 7, kind: input, shape index: {}]
  %s8 = inlined_call_operand.vmem [shape: f32[1,1024], index: 8, kind: input, shape index: {}]
  %s9 = inlined_call_operand.vmem [shape: bf16[1024,512], index: 9, kind: input, shape index: {}]
  %s10 = inlined_call_operand.vmem [shape: f32[1,512], index: 10, kind: input, shape index: {}]
  %s11 = inlined_call_operand.vmem [shape: bf16[512,256], index: 11, kind: input, shape index: {}]
  %s12 = inlined_call_operand.vmem [shape: f32[1,256], index: 12, kind: input, shape index: {}]
  %s13 = inlined_call_operand.vmem [shape: bf16[256,128], index: 13, kind: input, shape index: {}]
  %s14 = inlined_call_operand.vmem [shape: f32[1,128], index: 14, kind: input, shape index: {}]
  %s15 = inlined_call_operand.hbm [shape: f32[2,128], index: 15, kind: output, shape index: {}]
  %s16 = sld [smem:[#allocation0]]
  $region70: #{net_forward.5} parent=0
    _
  %s18 = ssub.s32 1, %s16
  %s19 = scalar_select 0, %s18, %s16
  $region1: #{net_forward.5} parent=0
    #allocation2 [shape = 'u8[1024]{0}', space=vmem, size = 0x400, scoped, tag = 'output window, operand 0, single buffered']
    #allocation3 [shape = 's32[1]{0}', space=sflag, size = 0x4, scoped, tag = 'scoped memory for net_forward.5']
    %20 = vsyncpa [#allocation3], 0
    // Predicated region
    $region2: #{net_forward.5} parent=1 // pred_check
      _
    $region3: #{net_forward.5} parent=1 // pred_check_branch
      %22 = sbr.rel (0) target = $region5
    $region4: #{net_forward.5} parent=1 // pred_region
      _
    $region5: #{net_forward.5} parent=1 // pred_fallthru
      _
    // Predicated region
    $region6: #{net_forward.5} parent=1 // pred_check
      _
    $region7: #{net_forward.5} parent=1 // pred_check_branch
      %24 = sbr.rel (0) target = $region9
    $region8: #{net_forward.5} parent=1 // pred_region
      _
    $region9: #{net_forward.5} parent=1 // pred_fallthru
      _
    // Predicated region
    $region10: #{net_forward.5} parent=1 // pred_check
      _
    $region11: #{net_forward.5} parent=1 // pred_check_branch
      %26 = sbr.rel (0) target = $region13
    $region12: #{net_forward.5} parent=1 // pred_region
      _
    $region13: #{net_forward.5} parent=1 // pred_fallthru
      _
    // Predicated region
    $region14: #{net_forward.5} parent=1 // pred_check
      _
    $region15: #{net_forward.5} parent=1 // pred_check_branch
      %28 = sbr.rel (0) target = $region17
    $region16: #{net_forward.5} parent=1 // pred_region
      _
    $region17: #{net_forward.5} parent=1 // pred_fallthru
      _
    // Predicated region
    $region18: #{net_forward.5} parent=1 // pred_check
      _
    $region19: #{net_forward.5} parent=1 // pred_check_branch
      %30 = sbr.rel (0) target = $region21
    $region20: #{net_forward.5} parent=1 // pred_region
      _
    $region21: #{net_forward.5} parent=1 // pred_fallthru
      _
    // Predicated region
    $region22: #{net_forward.5} parent=1 // pred_check
      _
    $region23: #{net_forward.5} parent=1 // pred_check_branch
      %32 = sbr.rel (0) target = $region25
    $region24: #{net_forward.5} parent=1 // pred_region
      _
    $region25: #{net_forward.5} parent=1 // pred_fallthru
      _
    // Predicated region
    $region26: #{net_forward.5} parent=1 // pred_check
      _
    $region27: #{net_forward.5} parent=1 // pred_check_branch
      %34 = sbr.rel (0) target = $region29
    $region28: #{net_forward.5} parent=1 // pred_region
      _
    $region29: #{net_forward.5} parent=1 // pred_fallthru
      _
    // Predicated region
    $region30: #{net_forward.5} parent=1 // pred_check
      _
    $region31: #{net_forward.5} parent=1 // pred_check_branch
      %36 = sbr.rel (0) target = $region33
    $region32: #{net_forward.5} parent=1 // pred_region
      _
    $region33: #{net_forward.5} parent=1 // pred_fallthru
      _
    // Predicated region
    $region34: #{net_forward.5} parent=1 // pred_check
      _
    $region35: #{net_forward.5} parent=1 // pred_check_branch
      %38 = sbr.rel (0) target = $region37
    $region36: #{net_forward.5} parent=1 // pred_region
      _
    $region37: #{net_forward.5} parent=1 // pred_fallthru
      _
    // Predicated region
    $region38: #{net_forward.5} parent=1 // pred_check
      _
    $region39: #{net_forward.5} parent=1 // pred_check_branch
      %40 = sbr.rel (0) target = $region41
    $region40: #{net_forward.5} parent=1 // pred_region
      _
    $region41: #{net_forward.5} parent=1 // pred_fallthru
      _
    // Predicated region
    $region42: #{net_forward.5} parent=1 // pred_check
      _
    $region43: #{net_forward.5} parent=1 // pred_check_branch
      %42 = sbr.rel (0) target = $region45
    $region44: #{net_forward.5} parent=1 // pred_region
      _
    $region45: #{net_forward.5} parent=1 // pred_fallthru
      _
    // Predicated region
    $region46: #{net_forward.5} parent=1 // pred_check
      _
    $region47: #{net_forward.5} parent=1 // pred_check_branch
      %44 = sbr.rel (0) target = $region49
    $region48: #{net_forward.5} parent=1 // pred_region
      _
    $region49: #{net_forward.5} parent=1 // pred_fallthru
      _
    // Predicated region
    $region50: #{net_forward.5} parent=1 // pred_check
      _
    $region51: #{net_forward.5} parent=1 // pred_check_branch
      %46 = sbr.rel (0) target = $region53
    $region52: #{net_forward.5} parent=1 // pred_region
      _
    $region53: #{net_forward.5} parent=1 // pred_fallthru
      _
    // Predicated region
    $region54: #{net_forward.5} parent=1 // pred_check
      _
    $region55: #{net_forward.5} parent=1 // pred_check_branch
      %48 = sbr.rel (0) target = $region57
    $region56: #{net_forward.5} parent=1 // pred_region
      _
    $region57: #{net_forward.5} parent=1 // pred_fallthru
      _
    // Predicated region
    $region58: #{net_forward.5} parent=1 // pred_check
      _
    $region59: #{net_forward.5} parent=1 // pred_check_branch
      %50 = sbr.rel (0) target = $region61
    $region60: #{net_forward.5} parent=1 // pred_region
      _
    $region61: #{net_forward.5} parent=1 // pred_fallthru
      _
    %v52 = vld [vmem:[%s0] sm:$0xf]
    %v53 = vld [vmem:[%s0 + $0x4] sm:$0xf]
    %v54 = vld [vmem:[%s1] sm:$0xf]
    %v55 = vld [vmem:[%s1 + $0x4] sm:$0xf]
    %v58 = vcombine.low %v54, %v55
    %v60 = vpack.c.bf16 %v58, %v58
    %v61 = vld [vmem:[%s2] sm:$0xff]
    %v62 = vld [vmem:[%s2 + $0x8] sm:$0xff]
    %v63 = vld [vmem:[%s2 + $0x10] sm:$0xff]
    %v64 = vld [vmem:[%s2 + $0x18] sm:$0xff]
    %v65 = vld [vmem:[%s2 + $0x20] sm:$0xff]
    %v66 = vld [vmem:[%s2 + $0x28] sm:$0xff]
    %v67 = vld [vmem:[%s2 + $0x30] sm:$0xff]
    %v68 = vld [vmem:[%s2 + $0x38] sm:$0xff]
    %v69 = vld [vmem:[%s2 + $0x40] sm:$0xff]
    %v70 = vld [vmem:[%s2 + $0x48] sm:$0xff]
    %v71 = vld [vmem:[%s2 + $0x50] sm:$0xff]
    %v72 = vld [vmem:[%s2 + $0x58] sm:$0xff]
    %v73 = vld [vmem:[%s2 + $0x60] sm:$0xff]
    %v74 = vld [vmem:[%s2 + $0x68] sm:$0xff]
    %v75 = vld [vmem:[%s2 + $0x70] sm:$0xff]
    %v76 = vld [vmem:[%s2 + $0x78] sm:$0xff]
    %v77 = vld [vmem:[%s2 + $0x80] sm:$0xff]
    %v78 = vld [vmem:[%s2 + $0x88] sm:$0xff]
    %v79 = vld [vmem:[%s2 + $0x90] sm:$0xff]
    %v80 = vld [vmem:[%s2 + $0x98] sm:$0xff]
    %v81 = vld [vmem:[%s2 + $0xa0] sm:$0xff]
    %v82 = vld [vmem:[%s2 + $0xa8] sm:$0xff]
    %v83 = vld [vmem:[%s2 + $0xb0] sm:$0xff]
    %v84 = vld [vmem:[%s2 + $0xb8] sm:$0xff]
    %v85 = vld [vmem:[%s2 + $0xc0] sm:$0xff]
    %v86 = vld [vmem:[%s2 + $0xc8] sm:$0xff]
    %v87 = vld [vmem:[%s2 + $0xd0] sm:$0xff]
    %v88 = vld [vmem:[%s2 + $0xd8] sm:$0xff]
    %v89 = vld [vmem:[%s2 + $0xe0] sm:$0xff]
    %v90 = vld [vmem:[%s2 + $0xe8] sm:$0xff]
    %v91 = vld [vmem:[%s2 + $0xf0] sm:$0xff]
    %v92 = vld [vmem:[%s2 + $0xf8] sm:$0xff]
    %v93 = vld [vmem:[%s3] sm:$0xf]
    %v96 = vunpack.c.l.s4 1983009808
    %v97 = vunpack.c.0.s8 %v96
    %v98 = vlaneseq
    %v99 = vshrl.u32 %v98, 7
    %v100 = vsub.s32 %v97, %v99
    %v101 = vrot.slane %v93, %v100
    %v102 = vcombine.high %v101, %v101
    %vm103 = vcmask 23552
    %v105 = vsel %vm103, %v60, 0
    %vm107 = vcmask 1040384
    %vm108 = vcmask 1041408
    %v109 = vsel %vm107, 4294967295, 65535
    %v110 = vsel %vm108, %v109, 0
    %v112 = vand.u32 %v101, %v110
    %v115 = vand.u32 %v102, %v110
    %117 = vmatprep.subr.bf16.mxu0 %v115
    %118 = vmatpush1.bf16.msra.mxu0 %v112
    %119 = vmatprep.subr.bf16.mxu0 0
    %120 = vmatpush1.bf16.msra.mxu0 0
    %121 = vmatprep.subr.bf16.mxu0 0
    %122 = vmatpush1.bf16.msra.mxu0 0
    %123 = vmatprep.subr.bf16.mxu0 0
    %124 = vmatpush1.bf16.msra.mxu0 0
    %125 = vmatprep.subr.bf16.mxu0 0
    %126 = vmatpush1.bf16.msra.mxu0 0
    %127 = vmatprep.subr.bf16.mxu0 0
    %128 = vmatpush1.bf16.msra.mxu0 0
    %129 = vmatprep.subr.bf16.mxu0 0
    %130 = vmatpush1.bf16.msra.mxu0 0
    %131 = vmatprep.subr.bf16.mxu0 0
    %132 = vmatpush1.bf16.msra.mxu0 0
    %133 = vmatprep.subr.bf16.mxu0 0
    %134 = vmatpush1.bf16.msra.mxu0 0
    %135 = vmatprep.subr.bf16.mxu0 0
    %136 = vmatpush1.bf16.msra.mxu0 0
    %137 = vmatprep.subr.bf16.mxu0 0
    %138 = vmatpush1.bf16.msra.mxu0 0
    %139 = vmatprep.subr.bf16.mxu0 0
    %140 = vmatpush1.bf16.msra.mxu0 0
    %141 = vmatprep.subr.bf16.mxu0 0
    %142 = vmatpush1.bf16.msra.mxu0 0
    %143 = vmatprep.subr.bf16.mxu0 0
    %144 = vmatpush1.bf16.msra.mxu0 0
    %145 = vmatprep.subr.bf16.mxu0 0
    %146 = vmatpush1.bf16.msra.mxu0 0
    %147 = vmatprep.subr.bf16.mxu0 0
    %148 = vmatpush1.bf16.msra.mxu0 0
    %149 = vmatprep.mubr.bf16.mxu0 0
    %150 = vmatmul.mubr.bf16.gmra.mrb[0].mxu0 %v105
    %v151 = vpop.f32.mrb[0].mxu0
    %v152 = vadd.f32 0.0, %v151
    %v153 = vpop.f32.mrb[0].mxu0
    %v154 = vadd.f32 0.0, %v153
    %v155 = vpop.f32.mrb[0].mxu0
    %v156 = vpop.f32.mrb[0].mxu0
    %157 = vdwg.mxu0
    %v160 = vcombine.low %v52, %v53
    %v162 = vunpack.c.l.s4 1983009808
    %v163 = vunpack.c.0.s8 %v162
    %v164 = vlaneseq
    %v165 = vshrl.u32 %v164, 7
    %v166 = vsub.s32 %v163, %v165
    %v167 = vrot.slane %v160, %v166
    %v168 = vcombine.high %v167, %v167
    %v203 = vunpack.c.l.b16 %v61
    %v204 = vunpack.c.h.b16 %v61
    %v205 = vunpack.c.l.b16 %v62
    %v206 = vunpack.c.h.b16 %v62
    %v207 = vunpack.c.l.b16 %v63
    %v208 = vunpack.c.h.b16 %v63
    %v209 = vunpack.c.l.b16 %v64
    %v210 = vunpack.c.h.b16 %v64
    %v211 = vunpack.c.l.b16 %v65
    %v212 = vunpack.c.h.b16 %v65
    %v213 = vunpack.c.l.b16 %v66
    %v214 = vunpack.c.h.b16 %v66
    %v215 = vunpack.c.l.b16 %v67
    %v216 = vunpack.c.h.b16 %v67
    %v217 = vunpack.c.l.b16 %v68
    %v218 = vunpack.c.h.b16 %v68
    %v219 = vunpack.c.l.b16 %v69
    %v220 = vunpack.c.h.b16 %v69
    %v221 = vunpack.c.l.b16 %v70
    %v222 = vunpack.c.h.b16 %v70
    %v223 = vunpack.c.l.b16 %v71
    %v224 = vunpack.c.h.b16 %v71
    %v225 = vunpack.c.l.b16 %v72
    %v226 = vunpack.c.h.b16 %v72
    %v227 = vunpack.c.l.b16 %v73
    %v228 = vunpack.c.h.b16 %v73
    %v229 = vunpack.c.l.b16 %v74
    %v230 = vunpack.c.h.b16 %v74
    %v231 = vunpack.c.l.b16 %v75
    %v232 = vunpack.c.h.b16 %v75
    %v233 = vunpack.c.l.b16 %v76
    %v234 = vunpack.c.h.b16 %v76
    %v235 = vunpack.c.l.b16 %v77
    %v236 = vunpack.c.h.b16 %v77
    %v237 = vunpack.c.l.b16 %v78
    %v238 = vunpack.c.h.b16 %v78
    %v239 = vunpack.c.l.b16 %v79
    %v240 = vunpack.c.h.b16 %v79
    %v241 = vunpack.c.l.b16 %v80
    %v242 = vunpack.c.h.b16 %v80
    %v243 = vunpack.c.l.b16 %v81
    %v244 = vunpack.c.h.b16 %v81
    %v245 = vunpack.c.l.b16 %v82
    %v246 = vunpack.c.h.b16 %v82
    %v247 = vunpack.c.l.b16 %v83
    %v248 = vunpack.c.h.b16 %v83
    %v249 = vunpack.c.l.b16 %v84
    %v250 = vunpack.c.h.b16 %v84
    %v251 = vunpack.c.l.b16 %v85
    %v252 = vunpack.c.h.b16 %v85
    %v253 = vunpack.c.l.b16 %v86
    %v254 = vunpack.c.h.b16 %v86
    %v255 = vunpack.c.l.b16 %v87
    %v256 = vunpack.c.h.b16 %v87
    %v257 = vunpack.c.l.b16 %v88
    %v258 = vunpack.c.h.b16 %v88
    %v259 = vunpack.c.l.b16 %v89
    %v260 = vunpack.c.h.b16 %v89
    %v261 = vunpack.c.l.b16 %v90
    %v262 = vunpack.c.h.b16 %v90
    %v263 = vunpack.c.l.b16 %v91
    %v264 = vunpack.c.h.b16 %v91
    %v265 = vunpack.c.l.b16 %v92
    %v266 = vunpack.c.h.b16 %v92
    %v267 = vpack.c.b16 %v205, %v203
    %v268 = vpack.c.b16 %v206, %v204
    %v269 = vpack.c.b16 %v209, %v207
    %v270 = vpack.c.b16 %v210, %v208
    %v271 = vpack.c.b16 %v213, %v211
    %v272 = vpack.c.b16 %v214, %v212
    %v273 = vpack.c.b16 %v217, %v215
    %v274 = vpack.c.b16 %v218, %v216
    %v275 = vpack.c.b16 %v221, %v219
    %v276 = vpack.c.b16 %v222, %v220
    %v277 = vpack.c.b16 %v225, %v223
    %v278 = vpack.c.b16 %v226, %v224
    %v279 = vpack.c.b16 %v229, %v227
    %v280 = vpack.c.b16 %v230, %v228
    %v281 = vpack.c.b16 %v233, %v231
    %v282 = vpack.c.b16 %v234, %v232
    %v283 = vpack.c.b16 %v237, %v235
    %v284 = vpack.c.b16 %v238, %v236
    %v285 = vpack.c.b16 %v241, %v239
    %v286 = vpack.c.b16 %v242, %v240
    %v287 = vpack.c.b16 %v245, %v243
    %v288 = vpack.c.b16 %v246, %v244
    %v289 = vpack.c.b16 %v249, %v247
    %v290 = vpack.c.b16 %v250, %v248
    %v291 = vpack.c.b16 %v253, %v251
    %v292 = vpack.c.b16 %v254, %v252
    %v293 = vpack.c.b16 %v257, %v255
    %v294 = vpack.c.b16 %v258, %v256
    %v295 = vpack.c.b16 %v261, %v259
    %v296 = vpack.c.b16 %v262, %v260
    %v297 = vpack.c.b16 %v265, %v263
    %v298 = vpack.c.b16 %v266, %v264
    %331 = vmatprep.subr.bf16.mxu0 %v268
    %332 = vmatpush1.bf16.msra.mxu0 %v267
    %333 = vmatprep.subr.bf16.mxu0 %v270
    %334 = vmatpush1.bf16.msra.mxu0 %v269
    %335 = vmatprep.subr.bf16.mxu0 %v272
    %336 = vmatpush1.bf16.msra.mxu0 %v271
    %337 = vmatprep.subr.bf16.mxu0 %v274
    %338 = vmatpush1.bf16.msra.mxu0 %v273
    %339 = vmatprep.subr.bf16.mxu0 %v276
    %340 = vmatpush1.bf16.msra.mxu0 %v275
    %341 = vmatprep.subr.bf16.mxu0 %v278
    %342 = vmatpush1.bf16.msra.mxu0 %v277
    %343 = vmatprep.subr.bf16.mxu0 %v280
    %344 = vmatpush1.bf16.msra.mxu0 %v279
    %345 = vmatprep.subr.bf16.mxu0 %v282
    %346 = vmatpush1.bf16.msra.mxu0 %v281
    %347 = vmatprep.subr.bf16.mxu0 %v284
    %348 = vmatpush1.bf16.msra.mxu0 %v283
    %349 = vmatprep.subr.bf16.mxu0 %v286
    %350 = vmatpush1.bf16.msra.mxu0 %v285
    %351 = vmatprep.subr.bf16.mxu0 %v288
    %352 = vmatpush1.bf16.msra.mxu0 %v287
    %353 = vmatprep.subr.bf16.mxu0 %v290
    %354 = vmatpush1.bf16.msra.mxu0 %v289
    %355 = vmatprep.subr.bf16.mxu0 %v292
    %356 = vmatpush1.bf16.msra.mxu0 %v291
    %357 = vmatprep.subr.bf16.mxu0 %v294
    %358 = vmatpush1.bf16.msra.mxu0 %v293
    %359 = vmatprep.subr.bf16.mxu0 %v296
    %360 = vmatpush1.bf16.msra.mxu0 %v295
    %361 = vmatprep.subr.bf16.mxu0 %v298
    %362 = vmatpush1.bf16.msra.mxu0 %v297
    %363 = vmatprep.mubr.bf16.mxu0 %v168
    %364 = vmatmul.mubr.bf16.gmra.mrb[0].mxu0 %v167
    %v365 = vpop.f32.mrb[0].mxu0
    %v366 = vadd.f32 %v152, %v365
    %v367 = vpop.f32.mrb[0].mxu0
    %v368 = vadd.f32 %v154, %v367
    %v369 = vpop.f32.mrb[0].mxu0
    %v370 = vpop.f32.mrb[0].mxu0
    %371 = vdwg.mxu0
    %v372 = vld [vmem:[%s4] sm:$0x3]
    %v374 = vlaneseq
    %v375 = vshrl.u32 %v374, 7
    %v376 = vsub.s32 0, %v375
    %v377 = vrot.slane %v372, %v376
    %v378 = vlaneseq
    %v379 = vshrl.u32 %v378, 7
    %v380 = vsub.s32 1, %v379
    %v381 = vrot.slane %v372, %v380
    %v384 = vadd.f32 %v366, %v377
    %v385 = vadd.f32 %v368, %v381
    %v386 = vmul.f32 %v384, 0.999995
    %v387 = vmul.f32 %v385, 0.999995
    %v388 = vmax.f32 %v386, 0.0
    %v389 = vmax.f32 %v387, 0.0
    %v390 = vpack.c.bf16 %v388, %v388
    %v391 = vpack.c.bf16 %v389, %v389
    %v392 = vld [vmem:[%s5] sm:$0xff]
    %v393 = vld [vmem:[%s5 + $0x8] sm:$0xff]
    %v394 = vld [vmem:[%s5 + $0x10] sm:$0xff]
    %v395 = vld [vmem:[%s5 + $0x18] sm:$0xff]
    %v396 = vld [vmem:[%s5 + $0x20] sm:$0xff]
    %v397 = vld [vmem:[%s5 + $0x28] sm:$0xff]
    %v398 = vld [vmem:[%s5 + $0x30] sm:$0xff]
    %v399 = vld [vmem:[%s5 + $0x38] sm:$0xff]
    %v400 = vld [vmem:[%s5 + $0x40] sm:$0xff]
    %v401 = vld [vmem:[%s5 + $0x48] sm:$0xff]
    %v402 = vld [vmem:[%s5 + $0x50] sm:$0xff]
    %v403 = vld [vmem:[%s5 + $0x58] sm:$0xff]
    %v404 = vld [vmem:[%s5 + $0x60] sm:$0xff]
    %v405 = vld [vmem:[%s5 + $0x68] sm:$0xff]
    %v406 = vld [vmem:[%s5 + $0x70] sm:$0xff]
    %v407 = vld [vmem:[%s5 + $0x78] sm:$0xff]
    %v408 = vld [vmem:[%s5 + $0x80] sm:$0xff]
    %v409 = vld [vmem:[%s5 + $0x88] sm:$0xff]
    %v410 = vld [vmem:[%s5 + $0x90] sm:$0xff]
    %v411 = vld [vmem:[%s5 + $0x98] sm:$0xff]
    %v412 = vld [vmem:[%s5 + $0xa0] sm:$0xff]
    %v413 = vld [vmem:[%s5 + $0xa8] sm:$0xff]
    %v414 = vld [vmem:[%s5 + $0xb0] sm:$0xff]
    %v415 = vld [vmem:[%s5 + $0xb8] sm:$0xff]
    %v416 = vld [vmem:[%s5 + $0xc0] sm:$0xff]
    %v417 = vld [vmem:[%s5 + $0xc8] sm:$0xff]
    %v418 = vld [vmem:[%s5 + $0xd0] sm:$0xff]
    %v419 = vld [vmem:[%s5 + $0xd8] sm:$0xff]
    %v420 = vld [vmem:[%s5 + $0xe0] sm:$0xff]
    %v421 = vld [vmem:[%s5 + $0xe8] sm:$0xff]
    %v422 = vld [vmem:[%s5 + $0xf0] sm:$0xff]
    %v423 = vld [vmem:[%s5 + $0xf8] sm:$0xff]
    %v424 = vld [vmem:[%s5 + $0x100] sm:$0xff]
    %v425 = vld [vmem:[%s5 + $0x108] sm:$0xff]
    %v426 = vld [vmem:[%s5 + $0x110] sm:$0xff]
    %v427 = vld [vmem:[%s5 + $0x118] sm:$0xff]
    %v428 = vld [vmem:[%s5 + $0x120] sm:$0xff]
    %v429 = vld [vmem:[%s5 + $0x128] sm:$0xff]
    %v430 = vld [vmem:[%s5 + $0x130] sm:$0xff]
    %v431 = vld [vmem:[%s5 + $0x138] sm:$0xff]
    %v432 = vld [vmem:[%s5 + $0x140] sm:$0xff]
    %v433 = vld [vmem:[%s5 + $0x148] sm:$0xff]
    %v434 = vld [vmem:[%s5 + $0x150] sm:$0xff]
    %v435 = vld [vmem:[%s5 + $0x158] sm:$0xff]
    %v436 = vld [vmem:[%s5 + $0x160] sm:$0xff]
    %v437 = vld [vmem:[%s5 + $0x168] sm:$0xff]
    %v438 = vld [vmem:[%s5 + $0x170] sm:$0xff]
    %v439 = vld [vmem:[%s5 + $0x178] sm:$0xff]
    %v440 = vld [vmem:[%s5 + $0x180] sm:$0xff]
    %v441 = vld [vmem:[%s5 + $0x188] sm:$0xff]
    %v442 = vld [vmem:[%s5 + $0x190] sm:$0xff]
    %v443 = vld [vmem:[%s5 + $0x198] sm:$0xff]
    %v444 = vld [vmem:[%s5 + $0x1a0] sm:$0xff]
    %v445 = vld [vmem:[%s5 + $0x1a8] sm:$0xff]
    %v446 = vld [vmem:[%s5 + $0x1b0] sm:$0xff]
    %v447 = vld [vmem:[%s5 + $0x1b8] sm:$0xff]
    %v448 = vld [vmem:[%s5 + $0x1c0] sm:$0xff]
    %v449 = vld [vmem:[%s5 + $0x1c8] sm:$0xff]
    %v450 = vld [vmem:[%s5 + $0x1d0] sm:$0xff]
    %v451 = vld [vmem:[%s5 + $0x1d8] sm:$0xff]
    %v452 = vld [vmem:[%s5 + $0x1e0] sm:$0xff]
    %v453 = vld [vmem:[%s5 + $0x1e8] sm:$0xff]
    %v454 = vld [vmem:[%s5 + $0x1f0] sm:$0xff]
    %v455 = vld [vmem:[%s5 + $0x1f8] sm:$0xff]
    %v456 = vld [vmem:[%s6] sm:$0xf]
    %v458 = vlaneseq
    %v459 = vshrl.u32 %v458, 7
    %v460 = vsub.s32 0, %v459
    %v461 = vrot.slane %v456, %v460
    %v462 = vlaneseq
    %v463 = vshrl.u32 %v462, 7
    %v464 = vsub.s32 1, %v463
    %v465 = vrot.slane %v456, %v464
    %v466 = vlaneseq
    %v467 = vshrl.u32 %v466, 7
    %v468 = vsub.s32 2, %v467
    %v469 = vrot.slane %v456, %v468
    %v470 = vlaneseq
    %v471 = vshrl.u32 %v470, 7
    %v472 = vsub.s32 3, %v471
    %v473 = vrot.slane %v456, %v472
    %v542 = vunpack.c.l.b16 %v392
    %v543 = vunpack.c.h.b16 %v392
    %v544 = vunpack.c.l.b16 %v393
    %v545 = vunpack.c.h.b16 %v393
    %v546 = vunpack.c.l.b16 %v394
    %v547 = vunpack.c.h.b16 %v394
    %v548 = vunpack.c.l.b16 %v395
    %v549 = vunpack.c.h.b16 %v395
    %v550 = vunpack.c.l.b16 %v396
    %v551 = vunpack.c.h.b16 %v396
    %v552 = vunpack.c.l.b16 %v397
    %v553 = vunpack.c.h.b16 %v397
    %v554 = vunpack.c.l.b16 %v398
    %v555 = vunpack.c.h.b16 %v398
    %v556 = vunpack.c.l.b16 %v399
    %v557 = vunpack.c.h.b16 %v399
    %v558 = vunpack.c.l.b16 %v400
    %v559 = vunpack.c.h.b16 %v400
    %v560 = vunpack.c.l.b16 %v401
    %v561 = vunpack.c.h.b16 %v401
    %v562 = vunpack.c.l.b16 %v402
    %v563 = vunpack.c.h.b16 %v402
    %v564 = vunpack.c.l.b16 %v403
    %v565 = vunpack.c.h.b16 %v403
    %v566 = vunpack.c.l.b16 %v404
    %v567 = vunpack.c.h.b16 %v404
    %v568 = vunpack.c.l.b16 %v405
    %v569 = vunpack.c.h.b16 %v405
    %v570 = vunpack.c.l.b16 %v406
    %v571 = vunpack.c.h.b16 %v406
    %v572 = vunpack.c.l.b16 %v407
    %v573 = vunpack.c.h.b16 %v407
    %v574 = vunpack.c.l.b16 %v408
    %v575 = vunpack.c.h.b16 %v408
    %v576 = vunpack.c.l.b16 %v409
    %v577 = vunpack.c.h.b16 %v409
    %v578 = vunpack.c.l.b16 %v410
    %v579 = vunpack.c.h.b16 %v410
    %v580 = vunpack.c.l.b16 %v411
    %v581 = vunpack.c.h.b16 %v411
    %v582 = vunpack.c.l.b16 %v412
    %v583 = vunpack.c.h.b16 %v412
    %v584 = vunpack.c.l.b16 %v413
    %v585 = vunpack.c.h.b16 %v413
    %v586 = vunpack.c.l.b16 %v414
    %v587 = vunpack.c.h.b16 %v414
    %v588 = vunpack.c.l.b16 %v415
    %v589 = vunpack.c.h.b16 %v415
    %v590 = vunpack.c.l.b16 %v416
    %v591 = vunpack.c.h.b16 %v416
    %v592 = vunpack.c.l.b16 %v417
    %v593 = vunpack.c.h.b16 %v417
    %v594 = vunpack.c.l.b16 %v418
    %v595 = vunpack.c.h.b16 %v418
    %v596 = vunpack.c.l.b16 %v419
    %v597 = vunpack.c.h.b16 %v419
    %v598 = vunpack.c.l.b16 %v420
    %v599 = vunpack.c.h.b16 %v420
    %v600 = vunpack.c.l.b16 %v421
    %v601 = vunpack.c.h.b16 %v421
    %v602 = vunpack.c.l.b16 %v422
    %v603 = vunpack.c.h.b16 %v422
    %v604 = vunpack.c.l.b16 %v423
    %v605 = vunpack.c.h.b16 %v423
    %v606 = vunpack.c.l.b16 %v424
    %v607 = vunpack.c.h.b16 %v424
    %v608 = vunpack.c.l.b16 %v425
    %v609 = vunpack.c.h.b16 %v425
    %v610 = vunpack.c.l.b16 %v426
    %v611 = vunpack.c.h.b16 %v426
    %v612 = vunpack.c.l.b16 %v427
    %v613 = vunpack.c.h.b16 %v427
    %v614 = vunpack.c.l.b16 %v428
    %v615 = vunpack.c.h.b16 %v428
    %v616 = vunpack.c.l.b16 %v429
    %v617 = vunpack.c.h.b16 %v429
    %v618 = vunpack.c.l.b16 %v430
    %v619 = vunpack.c.h.b16 %v430
    %v620 = vunpack.c.l.b16 %v431
    %v621 = vunpack.c.h.b16 %v431
    %v622 = vunpack.c.l.b16 %v432
    %v623 = vunpack.c.h.b16 %v432
    %v624 = vunpack.c.l.b16 %v433
    %v625 = vunpack.c.h.b16 %v433
    %v626 = vunpack.c.l.b16 %v434
    %v627 = vunpack.c.h.b16 %v434
    %v628 = vunpack.c.l.b16 %v435
    %v629 = vunpack.c.h.b16 %v435
    %v630 = vunpack.c.l.b16 %v436
    %v631 = vunpack.c.h.b16 %v436
    %v632 = vunpack.c.l.b16 %v437
    %v633 = vunpack.c.h.b16 %v437
    %v634 = vunpack.c.l.b16 %v438
    %v635 = vunpack.c.h.b16 %v438
    %v636 = vunpack.c.l.b16 %v439
    %v637 = vunpack.c.h.b16 %v439
    %v638 = vunpack.c.l.b16 %v440
    %v639 = vunpack.c.h.b16 %v440
    %v640 = vunpack.c.l.b16 %v441
    %v641 = vunpack.c.h.b16 %v441
    %v642 = vunpack.c.l.b16 %v442
    %v643 = vunpack.c.h.b16 %v442
    %v644 = vunpack.c.l.b16 %v443
    %v645 = vunpack.c.h.b16 %v443
    %v646 = vunpack.c.l.b16 %v444
    %v647 = vunpack.c.h.b16 %v444
    %v648 = vunpack.c.l.b16 %v445
    %v649 = vunpack.c.h.b16 %v445
    %v650 = vunpack.c.l.b16 %v446
    %v651 = vunpack.c.h.b16 %v446
    %v652 = vunpack.c.l.b16 %v447
    %v653 = vunpack.c.h.b16 %v447
    %v654 = vunpack.c.l.b16 %v448
    %v655 = vunpack.c.h.b16 %v448
    %v656 = vunpack.c.l.b16 %v449
    %v657 = vunpack.c.h.b16 %v449
    %v658 = vunpack.c.l.b16 %v450
    %v659 = vunpack.c.h.b16 %v450
    %v660 = vunpack.c.l.b16 %v451
    %v661 = vunpack.c.h.b16 %v451
    %v662 = vunpack.c.l.b16 %v452
    %v663 = vunpack.c.h.b16 %v452
    %v664 = vunpack.c.l.b16 %v453
    %v665 = vunpack.c.h.b16 %v453
    %v666 = vunpack.c.l.b16 %v454
    %v667 = vunpack.c.h.b16 %v454
    %v668 = vunpack.c.l.b16 %v455
    %v669 = vunpack.c.h.b16 %v455
    %v670 = vpack.c.b16 %v546, %v542
    %v671 = vpack.c.b16 %v547, %v543
    %v672 = vpack.c.b16 %v548, %v544
    %v673 = vpack.c.b16 %v549, %v545
    %v674 = vpack.c.b16 %v554, %v550
    %v675 = vpack.c.b16 %v555, %v551
    %v676 = vpack.c.b16 %v556, %v552
    %v677 = vpack.c.b16 %v557, %v553
    %v678 = vpack.c.b16 %v562, %v558
    %v679 = vpack.c.b16 %v563, %v559
    %v680 = vpack.c.b16 %v564, %v560
    %v681 = vpack.c.b16 %v565, %v561
    %v682 = vpack.c.b16 %v570, %v566
    %v683 = vpack.c.b16 %v571, %v567
    %v684 = vpack.c.b16 %v572, %v568
    %v685 = vpack.c.b16 %v573, %v569
    %v686 = vpack.c.b16 %v578, %v574
    %v687 = vpack.c.b16 %v579, %v575
    %v688 = vpack.c.b16 %v580, %v576
    %v689 = vpack.c.b16 %v581, %v577
    %v690 = vpack.c.b16 %v586, %v582
    %v691 = vpack.c.b16 %v587, %v583
    %v692 = vpack.c.b16 %v588, %v584
    %v693 = vpack.c.b16 %v589, %v585
    %v694 = vpack.c.b16 %v594, %v590
    %v695 = vpack.c.b16 %v595, %v591
    %v696 = vpack.c.b16 %v596, %v592
    %v697 = vpack.c.b16 %v597, %v593
    %v698 = vpack.c.b16 %v602, %v598
    %v699 = vpack.c.b16 %v603, %v599
    %v700 = vpack.c.b16 %v604, %v600
    %v701 = vpack.c.b16 %v605, %v601
    %v702 = vpack.c.b16 %v610, %v606
    %v703 = vpack.c.b16 %v611, %v607
    %v704 = vpack.c.b16 %v612, %v608
    %v705 = vpack.c.b16 %v613, %v609
    %v706 = vpack.c.b16 %v618, %v614
    %v707 = vpack.c.b16 %v619, %v615
    %v708 = vpack.c.b16 %v620, %v616
    %v709 = vpack.c.b16 %v621, %v617
    %v710 = vpack.c.b16 %v626, %v622
    %v711 = vpack.c.b16 %v627, %v623
    %v712 = vpack.c.b16 %v628, %v624
    %v713 = vpack.c.b16 %v629, %v625
    %v714 = vpack.c.b16 %v634, %v630
    %v715 = vpack.c.b16 %v635, %v631
    %v716 = vpack.c.b16 %v636, %v632
    %v717 = vpack.c.b16 %v637, %v633
    %v718 = vpack.c.b16 %v642, %v638
    %v719 = vpack.c.b16 %v643, %v639
    %v720 = vpack.c.b16 %v644, %v640
    %v721 = vpack.c.b16 %v645, %v641
    %v722 = vpack.c.b16 %v650, %v646
    %v723 = vpack.c.b16 %v651, %v647
    %v724 = vpack.c.b16 %v652, %v648
    %v725 = vpack.c.b16 %v653, %v649
    %v726 = vpack.c.b16 %v658, %v654
    %v727 = vpack.c.b16 %v659, %v655
    %v728 = vpack.c.b16 %v660, %v656
    %v729 = vpack.c.b16 %v661, %v657
    %v730 = vpack.c.b16 %v666, %v662
    %v731 = vpack.c.b16 %v667, %v663
    %v732 = vpack.c.b16 %v668, %v664
    %v733 = vpack.c.b16 %v669, %v665
    %798 = vmatprep.subr.bf16.mxu0 %v671
    %799 = vmatpush1.bf16.msra.mxu0 %v670
    %800 = vmatprep.subr.bf16.mxu0 %v675
    %801 = vmatpush1.bf16.msra.mxu0 %v674
    %802 = vmatprep.subr.bf16.mxu0 %v679
    %803 = vmatpush1.bf16.msra.mxu0 %v678
    %804 = vmatprep.subr.bf16.mxu0 %v683
    %805 = vmatpush1.bf16.msra.mxu0 %v682
    %806 = vmatprep.subr.bf16.mxu0 %v687
    %807 = vmatpush1.bf16.msra.mxu0 %v686
    %808 = vmatprep.subr.bf16.mxu0 %v691
    %809 = vmatpush1.bf16.msra.mxu0 %v690
    %810 = vmatprep.subr.bf16.mxu0 %v695
    %811 = vmatpush1.bf16.msra.mxu0 %v694
    %812 = vmatprep.subr.bf16.mxu0 %v699
    %813 = vmatpush1.bf16.msra.mxu0 %v698
    %814 = vmatprep.subr.bf16.mxu0 %v703
    %815 = vmatpush1.bf16.msra.mxu0 %v702
    %816 = vmatprep.subr.bf16.mxu0 %v707
    %817 = vmatpush1.bf16.msra.mxu0 %v706
    %818 = vmatprep.subr.bf16.mxu0 %v711
    %819 = vmatpush1.bf16.msra.mxu0 %v710
    %820 = vmatprep.subr.bf16.mxu0 %v715
    %821 = vmatpush1.bf16.msra.mxu0 %v714
    %822 = vmatprep.subr.bf16.mxu0 %v719
    %823 = vmatpush1.bf16.msra.mxu0 %v718
    %824 = vmatprep.subr.bf16.mxu0 %v723
    %825 = vmatpush1.bf16.msra.mxu0 %v722
    %826 = vmatprep.subr.bf16.mxu0 %v727
    %827 = vmatpush1.bf16.msra.mxu0 %v726
    %828 = vmatprep.subr.bf16.mxu0 %v731
    %829 = vmatpush1.bf16.msra.mxu0 %v730
    %830 = vmatprep.mubr.bf16.mxu0 %v391
    %831 = vmatmul.mubr.bf16.gmra.mrb[0].mxu0 %v390
    %v832 = vpop.f32.mrb[0].mxu0
    %v833 = vadd.f32 %v461, %v832
    %v834 = vpop.f32.mrb[0].mxu0
    %v835 = vadd.f32 %v465, %v834
    %v836 = vpop.f32.mrb[0].mxu0
    %v837 = vpop.f32.mrb[0].mxu0
    %838 = vdwg.mxu0
    %839 = vmatprep.subr.bf16.mxu0 %v673
    %840 = vmatpush1.bf16.msra.mxu0 %v672
    %841 = vmatprep.subr.bf16.mxu0 %v677
    %842 = vmatpush1.bf16.msra.mxu0 %v676
    %843 = vmatprep.subr.bf16.mxu0 %v681
    %844 = vmatpush1.bf16.msra.mxu0 %v680
    %845 = vmatprep.subr.bf16.mxu0 %v685
    %846 = vmatpush1.bf16.msra.mxu0 %v684
    %847 = vmatprep.subr.bf16.mxu0 %v689
    %848 = vmatpush1.bf16.msra.mxu0 %v688
    %849 = vmatprep.subr.bf16.mxu0 %v693
    %850 = vmatpush1.bf16.msra.mxu0 %v692
    %851 = vmatprep.subr.bf16.mxu0 %v697
    %852 = vmatpush1.bf16.msra.mxu0 %v696
    %853 = vmatprep.subr.bf16.mxu0 %v701
    %854 = vmatpush1.bf16.msra.mxu0 %v700
    %855 = vmatprep.subr.bf16.mxu0 %v705
    %856 = vmatpush1.bf16.msra.mxu0 %v704
    %857 = vmatprep.subr.bf16.mxu0 %v709
    %858 = vmatpush1.bf16.msra.mxu0 %v708
    %859 = vmatprep.subr.bf16.mxu0 %v713
    %860 = vmatpush1.bf16.msra.mxu0 %v712
    %861 = vmatprep.subr.bf16.mxu0 %v717
    %862 = vmatpush1.bf16.msra.mxu0 %v716
    %863 = vmatprep.subr.bf16.mxu0 %v721
    %864 = vmatpush1.bf16.msra.mxu0 %v720
    %865 = vmatprep.subr.bf16.mxu0 %v725
    %866 = vmatpush1.bf16.msra.mxu0 %v724
    %867 = vmatprep.subr.bf16.mxu0 %v729
    %868 = vmatpush1.bf16.msra.mxu0 %v728
    %869 = vmatprep.subr.bf16.mxu0 %v733
    %870 = vmatpush1.bf16.msra.mxu0 %v732
    %871 = vmatprep.mubr.bf16.mxu0 %v391
    %872 = vmatmul.mubr.bf16.gmra.mrb[0].mxu0 %v390
    %v873 = vpop.f32.mrb[0].mxu0
    %v874 = vadd.f32 %v469, %v873
    %v875 = vpop.f32.mrb[0].mxu0
    %v876 = vadd.f32 %v473, %v875
    %v877 = vpop.f32.mrb[0].mxu0
    %v878 = vpop.f32.mrb[0].mxu0
    %879 = vdwg.mxu0
    %v880 = vmul.f32 %v833, 0.999995
    %v881 = vmul.f32 %v835, 0.999995
    %v882 = vmul.f32 %v874, 0.999995
    %v883 = vmul.f32 %v876, 0.999995
    %v884 = vmax.f32 %v880, 0.0
    %v885 = vmax.f32 %v881, 0.0
    %v886 = vmax.f32 %v882, 0.0
    %v887 = vmax.f32 %v883, 0.0
    %v888 = vpack.c.bf16 %v884, %v884
    %v889 = vpack.c.bf16 %v885, %v885
    %v890 = vpack.c.bf16 %v886, %v886
    %v891 = vpack.c.bf16 %v887, %v887
    %v892 = vld [vmem:[%s7] sm:$0xff]
    %v893 = vld [vmem:[%s7 + $0x8] sm:$0xff]
    %v894 = vld [vmem:[%s7 + $0x10] sm:$0xff]
    %v895 = vld [vmem:[%s7 + $0x18] sm:$0xff]
    %v896 = vld [vmem:[%s7 + $0x20] sm:$0xff]
    %v897 = vld [vmem:[%s7 + $0x28] sm:$0xff]
    %v898 = vld [vmem:[%s7 + $0x30] sm:$0xff]
    %v899 = vld [vmem:[%s7 + $0x38] sm:$0xff]
    %v900 = vld [vmem:[%s7 + $0x40] sm:$0xff]
    %v901 = vld [vmem:[%s7 + $0x48] sm:$0xff]
    %v902 = vld [vmem:[%s7 + $0x50] sm:$0xff]
    %v903 = vld [vmem:[%s7 + $0x58] sm:$0xff]
    %v904 = vld [vmem:[%s7 + $0x60] sm:$0xff]
    %v905 = vld [vmem:[%s7 + $0x68] sm:$0xff]
    %v906 = vld [vmem:[%s7 + $0x70] sm:$0xff]
    %v907 = vld [vmem:[%s7 + $0x78] sm:$0xff]
    %v908 = vld [vmem:[%s7 + $0x80] sm:$0xff]
    %v909 = vld [vmem:[%s7 + $0x88] sm:$0xff]
    %v910 = vld [vmem:[%s7 + $0x90] sm:$0xff]
    %v911 = vld [vmem:[%s7 + $0x98] sm:$0xff]
    %v912 = vld [vmem:[%s7 + $0xa0] sm:$0xff]
    %v913 = vld [vmem:[%s7 + $0xa8] sm:$0xff]
    %v914 = vld [vmem:[%s7 + $0xb0] sm:$0xff]
    %v915 = vld [vmem:[%s7 + $0xb8] sm:$0xff]
    %v916 = vld [vmem:[%s7 + $0xc0] sm:$0xff]
    %v917 = vld [vmem:[%s7 + $0xc8] sm:$0xff]
    %v918 = vld [vmem:[%s7 + $0xd0] sm:$0xff]
    %v919 = vld [vmem:[%s7 + $0xd8] sm:$0xff]
    %v920 = vld [vmem:[%s7 + $0xe0] sm:$0xff]
    %v921 = vld [vmem:[%s7 + $0xe8] sm:$0xff]
    %v922 = vld [vmem:[%s7 + $0xf0] sm:$0xff]
    %v923 = vld [vmem:[%s7 + $0xf8] sm:$0xff]
    %v924 = vld [vmem:[%s7 + $0x100] sm:$0xff]
    %v925 = vld [vmem:[%s7 + $0x108] sm:$0xff]
    %v926 = vld [vmem:[%s7 + $0x110] sm:$0xff]
    %v927 = vld [vmem:[%s7 + $0x118] sm:$0xff]
    %v928 = vld [vmem:[%s7 + $0x120] sm:$0xff]
    %v929 = vld [vmem:[%s7 + $0x128] sm:$0xff]
    %v930 = vld [vmem:[%s7 + $0x130] sm:$0xff]
    %v931 = vld [vmem:[%s7 + $0x138] sm:$0xff]
    %v932 = vld [vmem:[%s7 + $0x140] sm:$0xff]
    %v933 = vld [vmem:[%s7 + $0x148] sm:$0xff]
    %v934 = vld [vmem:[%s7 + $0x150] sm:$0xff]
    %v935 = vld [vmem:[%s7 + $0x158] sm:$0xff]
    %v936 = vld [vmem:[%s7 + $0x160] sm:$0xff]
    %v937 = vld [vmem:[%s7 + $0x168] sm:$0xff]
    %v938 = vld [vmem:[%s7 + $0x170] sm:$0xff]
    %v939 = vld [vmem:[%s7 + $0x178] sm:$0xff]
    %v940 = vld [vmem:[%s7 + $0x180] sm:$0xff]
    %v941 = vld [vmem:[%s7 + $0x188] sm:$0xff]
    %v942 = vld [vmem:[%s7 + $0x190] sm:$0xff]
    %v943 = vld [vmem:[%s7 + $0x198] sm:$0xff]
    %v944 = vld [vmem:[%s7 + $0x1a0] sm:$0xff]
    %v945 = vld [vmem:[%s7 + $0x1a8] sm:$0xff]
    %v946 = vld [vmem:[%s7 + $0x1b0] sm:$0xff]
    %v947 = vld [vmem:[%s7 + $0x1b8] sm:$0xff]
    %v948 = vld [vmem:[%s7 + $0x1c0] sm:$0xff]
    %v949 = vld [vmem:[%s7 + $0x1c8] sm:$0xff]
    %v950 = vld [vmem:[%s7 + $0x1d0] sm:$0xff]
    %v951 = vld [vmem:[%s7 + $0x1d8] sm:$0xff]
    %v952 = vld [vmem:[%s7 + $0x1e0] sm:$0xff]
    %v953 = vld [vmem:[%s7 + $0x1e8] sm:$0xff]
    %v954 = vld [vmem:[%s7 + $0x1f0] sm:$0xff]
    %v955 = vld [vmem:[%s7 + $0x1f8] sm:$0xff]
    %v956 = vld [vmem:[%s7 + $0x200] sm:$0xff]
    %v957 = vld [vmem:[%s7 + $0x208] sm:$0xff]
    %v958 = vld [vmem:[%s7 + $0x210] sm:$0xff]
    %v959 = vld [vmem:[%s7 + $0x218] sm:$0xff]
    %v960 = vld [vmem:[%s7 + $0x220] sm:$0xff]
    %v961 = vld [vmem:[%s7 + $0x228] sm:$0xff]
    %v962 = vld [vmem:[%s7 + $0x230] sm:$0xff]
    %v963 = vld [vmem:[%s7 + $0x238] sm:$0xff]
    %v964 = vld [vmem:[%s7 + $0x240] sm:$0xff]
    %v965 = vld [vmem:[%s7 + $0x248] sm:$0xff]
    %v966 = vld [vmem:[%s7 + $0x250] sm:$0xff]
    %v967 = vld [vmem:[%s7 + $0x258] sm:$0xff]
    %v968 = vld [vmem:[%s7 + $0x260] sm:$0xff]
    %v969 = vld [vmem:[%s7 + $0x268] sm:$0xff]
    %v970 = vld [vmem:[%s7 + $0x270] sm:$0xff]
    %v971 = vld [vmem:[%s7 + $0x278] sm:$0xff]
    %v972 = vld [vmem:[%s7 + $0x280] sm:$0xff]
    %v973 = vld [vmem:[%s7 + $0x288] sm:$0xff]
    %v974 = vld [vmem:[%s7 + $0x290] sm:$0xff]
    %v975 = vld [vmem:[%s7 + $0x298] sm:$0xff]
    %v976 = vld [vmem:[%s7 + $0x2a0] sm:$0xff]
    %v977 = vld [vmem:[%s7 + $0x2a8] sm:$0xff]
    %v978 = vld [vmem:[%s7 + $0x2b0] sm:$0xff]
    %v979 = vld [vmem:[%s7 + $0x2b8] sm:$0xff]
    %v980 = vld [vmem:[%s7 + $0x2c0] sm:$0xff]
    %v981 = vld [vmem:[%s7 + $0x2c8] sm:$0xff]
    %v982 = vld [vmem:[%s7 + $0x2d0] sm:$0xff]
    %v983 = vld [vmem:[%s7 + $0x2d8] sm:$0xff]
    %v984 = vld [vmem:[%s7 + $0x2e0] sm:$0xff]
    %v985 = vld [vmem:[%s7 + $0x2e8] sm:$0xff]
    %v986 = vld [vmem:[%s7 + $0x2f0] sm:$0xff]
    %v987 = vld [vmem:[%s7 + $0x2f8] sm:$0xff]
    %v988 = vld [vmem:[%s7 + $0x300] sm:$0xff]
    %v989 = vld [vmem:[%s7 + $0x308] sm:$0xff]
    %v990 = vld [vmem:[%s7 + $0x310] sm:$0xff]
    %v991 = vld [vmem:[%s7 + $0x318] sm:$0xff]
    %v992 = vld [vmem:[%s7 + $0x320] sm:$0xff]
    %v993 = vld [vmem:[%s7 + $0x328] sm:$0xff]
    %v994 = vld [vmem:[%s7 + $0x330] sm:$0xff]
    %v995 = vld [vmem:[%s7 + $0x338] sm:$0xff]
    %v996 = vld [vmem:[%s7 + $0x340] sm:$0xff]
    %v997 = vld [vmem:[%s7 + $0x348] sm:$0xff]
    %v998 = vld [vmem:[%s7 + $0x350] sm:$0xff]
    %v999 = vld [vmem:[%s7 + $0x358] sm:$0xff]
    %v1000 = vld [vmem:[%s7 + $0x360] sm:$0xff]
    %v1001 = vld [vmem:[%s7 + $0x368] sm:$0xff]
    %v1002 = vld [vmem:[%s7 + $0x370] sm:$0xff]
    %v1003 = vld [vmem:[%s7 + $0x378] sm:$0xff]
    %v1004 = vld [vmem:[%s7 + $0x380] sm:$0xff]
    %v1005 = vld [vmem:[%s7 + $0x388] sm:$0xff]
    %v1006 = vld [vmem:[%s7 + $0x390] sm:$0xff]
    %v1007 = vld [vmem:[%s7 + $0x398] sm:$0xff]
    %v1008 = vld [vmem:[%s7 + $0x3a0] sm:$0xff]
    %v1009 = vld [vmem:[%s7 + $0x3a8] sm:$0xff]
    %v1010 = vld [vmem:[%s7 + $0x3b0] sm:$0xff]
    %v1011 = vld [vmem:[%s7 + $0x3b8] sm:$0xff]
    %v1012 = vld [vmem:[%s7 + $0x3c0] sm:$0xff]
    %v1013 = vld [vmem:[%s7 + $0x3c8] sm:$0xff]
    %v1014 = vld [vmem:[%s7 + $0x3d0] sm:$0xff]
    %v1015 = vld [vmem:[%s7 + $0x3d8] sm:$0xff]
    %v1016 = vld [vmem:[%s7 + $0x3e0] sm:$0xff]
    %v1017 = vld [vmem:[%s7 + $0x3e8] sm:$0xff]
    %v1018 = vld [vmem:[%s7 + $0x3f0] sm:$0xff]
    %v1019 = vld [vmem:[%s7 + $0x3f8] sm:$0xff]
    %v1020 = vld [vmem:[%s7 + $0x400] sm:$0xff]
    %v1021 = vld [vmem:[%s7 + $0x408] sm:$0xff]
    %v1022 = vld [vmem:[%s7 + $0x410] sm:$0xff]
    %v1023 = vld [vmem:[%s7 + $0x418] sm:$0xff]
    %v1024 = vld [vmem:[%s7 + $0x420] sm:$0xff]
    %v1025 = vld [vmem:[%s7 + $0x428] sm:$0xff]
    %v1026 = vld [vmem:[%s7 + $0x430] sm:$0xff]
    %v1027 = vld [vmem:[%s7 + $0x438] sm:$0xff]
    %v1028 = vld [vmem:[%s7 + $0x440] sm:$0xff]
    %v1029 = vld [vmem:[%s7 + $0x448] sm:$0xff]
    %v1030 = vld [vmem:[%s7 + $0x450] sm:$0xff]
    %v1031 = vld [vmem:[%s7 + $0x458] sm:$0xff]
    %v1032 = vld [vmem:[%s7 + $0x460] sm:$0xff]
    %v1033 = vld [vmem:[%s7 + $0x468] sm:$0xff]
    %v1034 = vld [vmem:[%s7 + $0x470] sm:$0xff]
    %v1035 = vld [vmem:[%s7 + $0x478] sm:$0xff]
    %v1036 = vld [vmem:[%s7 + $0x480] sm:$0xff]
    %v1037 = vld [vmem:[%s7 + $0x488] sm:$0xff]
    %v1038 = vld [vmem:[%s7 + $0x490] sm:$0xff]
    %v1039 = vld [vmem:[%s7 + $0x498] sm:$0xff]
    %v1040 = vld [vmem:[%s7 + $0x4a0] sm:$0xff]
    %v1041 = vld [vmem:[%s7 + $0x4a8] sm:$0xff]
    %v1042 = vld [vmem:[%s7 + $0x4b0] sm:$0xff]
    %v1043 = vld [vmem:[%s7 + $0x4b8] sm:$0xff]
    %v1044 = vld [vmem:[%s7 + $0x4c0] sm:$0xff]
    %v1045 = vld [vmem:[%s7 + $0x4c8] sm:$0xff]
    %v1046 = vld [vmem:[%s7 + $0x4d0] sm:$0xff]
    %v1047 = vld [vmem:[%s7 + $0x4d8] sm:$0xff]
    %v1048 = vld [vmem:[%s7 + $0x4e0] sm:$0xff]
    %v1049 = vld [vmem:[%s7 + $0x4e8] sm:$0xff]
    %v1050 = vld [vmem:[%s7 + $0x4f0] sm:$0xff]
    %v1051 = vld [vmem:[%s7 + $0x4f8] sm:$0xff]
    %v1052 = vld [vmem:[%s7 + $0x500] sm:$0xff]
    %v1053 = vld [vmem:[%s7 + $0x508] sm:$0xff]
    %v1054 = vld [vmem:[%s7 + $0x510] sm:$0xff]
    %v1055 = vld [vmem:[%s7 + $0x518] sm:$0xff]
    %v1056 = vld [vmem:[%s7 + $0x520] sm:$0xff]
    %v1057 = vld [vmem:[%s7 + $0x528] sm:$0xff]
    %v1058 = vld [vmem:[%s7 + $0x530] sm:$0xff]
    %v1059 = vld [vmem:[%s7 + $0x538] sm:$0xff]
    %v1060 = vld [vmem:[%s7 + $0x540] sm:$0xff]
    %v1061 = vld [vmem:[%s7 + $0x548] sm:$0xff]
    %v1062 = vld [vmem:[%s7 + $0x550] sm:$0xff]
    %v1063 = vld [vmem:[%s7 + $0x558] sm:$0xff]
    %v1064 = vld [vmem:[%s7 + $0x560] sm:$0xff]
    %v1065 = vld [vmem:[%s7 + $0x568] sm:$0xff]
    %v1066 = vld [vmem:[%s7 + $0x570] sm:$0xff]
    %v1067 = vld [vmem:[%s7 + $0x578] sm:$0xff]
    %v1068 = vld [vmem:[%s7 + $0x580] sm:$0xff]
    %v1069 = vld [vmem:[%s7 + $0x588] sm:$0xff]
    %v1070 = vld [vmem:[%s7 + $0x590] sm:$0xff]
    %v1071 = vld [vmem:[%s7 + $0x598] sm:$0xff]
    %v1072 = vld [vmem:[%s7 + $0x5a0] sm:$0xff]
    %v1073 = vld [vmem:[%s7 + $0x5a8] sm:$0xff]
    %v1074 = vld [vmem:[%s7 + $0x5b0] sm:$0xff]
    %v1075 = vld [vmem:[%s7 + $0x5b8] sm:$0xff]
    %v1076 = vld [vmem:[%s7 + $0x5c0] sm:$0xff]
    %v1077 = vld [vmem:[%s7 + $0x5c8] sm:$0xff]
    %v1078 = vld [vmem:[%s7 + $0x5d0] sm:$0xff]
    %v1079 = vld [vmem:[%s7 + $0x5d8] sm:$0xff]
    %v1080 = vld [vmem:[%s7 + $0x5e0] sm:$0xff]
    %v1081 = vld [vmem:[%s7 + $0x5e8] sm:$0xff]
    %v1082 = vld [vmem:[%s7 + $0x5f0] sm:$0xff]
    %v1083 = vld [vmem:[%s7 + $0x5f8] sm:$0xff]
    %v1084 = vld [vmem:[%s7 + $0x600] sm:$0xff]
    %v1085 = vld [vmem:[%s7 + $0x608] sm:$0xff]
    %v1086 = vld [vmem:[%s7 + $0x610] sm:$0xff]
    %v1087 = vld [vmem:[%s7 + $0x618] sm:$0xff]
    %v1088 = vld [vmem:[%s7 + $0x620] sm:$0xff]
    %v1089 = vld [vmem:[%s7 + $0x628] sm:$0xff]
    %v1090 = vld [vmem:[%s7 + $0x630] sm:$0xff]
    %v1091 = vld [vmem:[%s7 + $0x638] sm:$0xff]
    %v1092 = vld [vmem:[%s7 + $0x640] sm:$0xff]
    %v1093 = vld [vmem:[%s7 + $0x648] sm:$0xff]
    %v1094 = vld [vmem:[%s7 + $0x650] sm:$0xff]
    %v1095 = vld [vmem:[%s7 + $0x658] sm:$0xff]
    %v1096 = vld [vmem:[%s7 + $0x660] sm:$0xff]
    %v1097 = vld [vmem:[%s7 + $0x668] sm:$0xff]
    %v1098 = vld [vmem:[%s7 + $0x670] sm:$0xff]
    %v1099 = vld [vmem:[%s7 + $0x678] sm:$0xff]
    %v1100 = vld [vmem:[%s7 + $0x680] sm:$0xff]
    %v1101 = vld [vmem:[%s7 + $0x688] sm:$0xff]
    %v1102 = vld [vmem:[%s7 + $0x690] sm:$0xff]
    %v1103 = vld [vmem:[%s7 + $0x698] sm:$0xff]
    %v1104 = vld [vmem:[%s7 + $0x6a0] sm:$0xff]
    %v1105 = vld [vmem:[%s7 + $0x6a8] sm:$0xff]
    %v1106 = vld [vmem:[%s7 + $0x6b0] sm:$0xff]
    %v1107 = vld [vmem:[%s7 + $0x6b8] sm:$0xff]
    %v1108 = vld [vmem:[%s7 + $0x6c0] sm:$0xff]
    %v1109 = vld [vmem:[%s7 + $0x6c8] sm:$0xff]
    %v1110 = vld [vmem:[%s7 + $0x6d0] sm:$0xff]
    %v1111 = vld [vmem:[%s7 + $0x6d8] sm:$0xff]
    %v1112 = vld [vmem:[%s7 + $0x6e0] sm:$0xff]
    %v1113 = vld [vmem:[%s7 + $0x6e8] sm:$0xff]
    %v1114 = vld [vmem:[%s7 + $0x6f0] sm:$0xff]
    %v1115 = vld [vmem:[%s7 + $0x6f8] sm:$0xff]
    %v1116 = vld [vmem:[%s7 + $0x700] sm:$0xff]
    %v1117 = vld [vmem:[%s7 + $0x708] sm:$0xff]
    %v1118 = vld [vmem:[%s7 + $0x710] sm:$0xff]
    %v1119 = vld [vmem:[%s7 + $0x718] sm:$0xff]
    %v1120 = vld [vmem:[%s7 + $0x720] sm:$0xff]
    %v1121 = vld [vmem:[%s7 + $0x728] sm:$0xff]
    %v1122 = vld [vmem:[%s7 + $0x730] sm:$0xff]
    %v1123 = vld [vmem:[%s7 + $0x738] sm:$0xff]
    %v1124 = vld [vmem:[%s7 + $0x740] sm:$0xff]
    %v1125 = vld [vmem:[%s7 + $0x748] sm:$0xff]
    %v1126 = vld [vmem:[%s7 + $0x750] sm:$0xff]
    %v1127 = vld [vmem:[%s7 + $0x758] sm:$0xff]
    %v1128 = vld [vmem:[%s7 + $0x760] sm:$0xff]
    %v1129 = vld [vmem:[%s7 + $0x768] sm:$0xff]
    %v1130 = vld [vmem:[%s7 + $0x770] sm:$0xff]
    %v1131 = vld [vmem:[%s7 + $0x778] sm:$0xff]
    %v1132 = vld [vmem:[%s7 + $0x780] sm:$0xff]
    %v1133 = vld [vmem:[%s7 + $0x788] sm:$0xff]
    %v1134 = vld [vmem:[%s7 + $0x790] sm:$0xff]
    %v1135 = vld [vmem:[%s7 + $0x798] sm:$0xff]
    %v1136 = vld [vmem:[%s7 + $0x7a0] sm:$0xff]
    %v1137 = vld [vmem:[%s7 + $0x7a8] sm:$0xff]
    %v1138 = vld [vmem:[%s7 + $0x7b0] sm:$0xff]
    %v1139 = vld [vmem:[%s7 + $0x7b8] sm:$0xff]
    %v1140 = vld [vmem:[%s7 + $0x7c0] sm:$0xff]
    %v1141 = vld [vmem:[%s7 + $0x7c8] sm:$0xff]
    %v1142 = vld [vmem:[%s7 + $0x7d0] sm:$0xff]
    %v1143 = vld [vmem:[%s7 + $0x7d8] sm:$0xff]
    %v1144 = vld [vmem:[%s7 + $0x7e0] sm:$0xff]
    %v1145 = vld [vmem:[%s7 + $0x7e8] sm:$0xff]
    %v1146 = vld [vmem:[%s7 + $0x7f0] sm:$0xff]
    %v1147 = vld [vmem:[%s7 + $0x7f8] sm:$0xff]
    %v1148 = vld [vmem:[%s8] sm:$0xff]
    %v1150 = vlaneseq
    %v1151 = vshrl.u32 %v1150, 7
    %v1152 = vsub.s32 0, %v1151
    %v1153 = vrot.slane %v1148, %v1152
    %v1154 = vlaneseq
    %v1155 = vshrl.u32 %v1154, 7
    %v1156 = vsub.s32 1, %v1155
    %v1157 = vrot.slane %v1148, %v1156
    %v1158 = vlaneseq
    %v1159 = vshrl.u32 %v1158, 7
    %v1160 = vsub.s32 2, %v1159
    %v1161 = vrot.slane %v1148, %v1160
    %v1162 = vlaneseq
    %v1163 = vshrl.u32 %v1162, 7
    %v1164 = vsub.s32 3, %v1163
    %v1165 = vrot.slane %v1148, %v1164
    %v1166 = vlaneseq
    %v1167 = vshrl.u32 %v1166, 7
    %v1168 = vsub.s32 4, %v1167
    %v1169 = vrot.slane %v1148, %v1168
    %v1170 = vlaneseq
    %v1171 = vshrl.u32 %v1170, 7
    %v1172 = vsub.s32 5, %v1171
    %v1173 = vrot.slane %v1148, %v1172
    %v1174 = vlaneseq
    %v1175 = vshrl.u32 %v1174, 7
    %v1176 = vsub.s32 6, %v1175
    %v1177 = vrot.slane %v1148, %v1176
    %v1178 = vlaneseq
    %v1179 = vshrl.u32 %v1178, 7
    %v1180 = vsub.s32 7, %v1179
    %v1181 = vrot.slane %v1148, %v1180
    %v1446 = vunpack.c.l.b16 %v892
    %v1447 = vunpack.c.h.b16 %v892
    %v1448 = vunpack.c.l.b16 %v893
    %v1449 = vunpack.c.h.b16 %v893
    %v1450 = vunpack.c.l.b16 %v894
    %v1451 = vunpack.c.h.b16 %v894
    %v1452 = vunpack.c.l.b16 %v895
    %v1453 = vunpack.c.h.b16 %v895
    %v1454 = vunpack.c.l.b16 %v896
    %v1455 = vunpack.c.h.b16 %v896
    %v1456 = vunpack.c.l.b16 %v897
    %v1457 = vunpack.c.h.b16 %v897
    %v1458 = vunpack.c.l.b16 %v898
    %v1459 = vunpack.c.h.b16 %v898
    %v1460 = vunpack.c.l.b16 %v899
    %v1461 = vunpack.c.h.b16 %v899
    %v1462 = vunpack.c.l.b16 %v900
    %v1463 = vunpack.c.h.b16 %v900
    %v1464 = vunpack.c.l.b16 %v901
    %v1465 = vunpack.c.h.b16 %v901
    %v1466 = vunpack.c.l.b16 %v902
    %v1467 = vunpack.c.h.b16 %v902
    %v1468 = vunpack.c.l.b16 %v903
    %v1469 = vunpack.c.h.b16 %v903
    %v1470 = vunpack.c.l.b16 %v904
    %v1471 = vunpack.c.h.b16 %v904
    %v1472 = vunpack.c.l.b16 %v905
    %v1473 = vunpack.c.h.b16 %v905
    %v1474 = vunpack.c.l.b16 %v906
    %v1475 = vunpack.c.h.b16 %v906
    %v1476 = vunpack.c.l.b16 %v907
    %v1477 = vunpack.c.h.b16 %v907
    %v1478 = vunpack.c.l.b16 %v908
    %v1479 = vunpack.c.h.b16 %v908
    %v1480 = vunpack.c.l.b16 %v909
    %v1481 = vunpack.c.h.b16 %v909
    %v1482 = vunpack.c.l.b16 %v910
    %v1483 = vunpack.c.h.b16 %v910
    %v1484 = vunpack.c.l.b16 %v911
    %v1485 = vunpack.c.h.b16 %v911
    %v1486 = vunpack.c.l.b16 %v912
    %v1487 = vunpack.c.h.b16 %v912
    %v1488 = vunpack.c.l.b16 %v913
    %v1489 = vunpack.c.h.b16 %v913
    %v1490 = vunpack.c.l.b16 %v914
    %v1491 = vunpack.c.h.b16 %v914
    %v1492 = vunpack.c.l.b16 %v915
    %v1493 = vunpack.c.h.b16 %v915
    %v1494 = vunpack.c.l.b16 %v916
    %v1495 = vunpack.c.h.b16 %v916
    %v1496 = vunpack.c.l.b16 %v917
    %v1497 = vunpack.c.h.b16 %v917
    %v1498 = vunpack.c.l.b16 %v918
    %v1499 = vunpack.c.h.b16 %v918
    %v1500 = vunpack.c.l.b16 %v919
    %v1501 = vunpack.c.h.b16 %v919
    %v1502 = vunpack.c.l.b16 %v920
    %v1503 = vunpack.c.h.b16 %v920
    %v1504 = vunpack.c.l.b16 %v921
    %v1505 = vunpack.c.h.b16 %v921
    %v1506 = vunpack.c.l.b16 %v922
    %v1507 = vunpack.c.h.b16 %v922
    %v1508 = vunpack.c.l.b16 %v923
    %v1509 = vunpack.c.h.b16 %v923
    %v1510 = vunpack.c.l.b16 %v924
    %v1511 = vunpack.c.h.b16 %v924
    %v1512 = vunpack.c.l.b16 %v925
    %v1513 = vunpack.c.h.b16 %v925
    %v1514 = vunpack.c.l.b16 %v926
    %v1515 = vunpack.c.h.b16 %v926
    %v1516 = vunpack.c.l.b16 %v927
    %v1517 = vunpack.c.h.b16 %v927
    %v1518 = vunpack.c.l.b16 %v928
    %v1519 = vunpack.c.h.b16 %v928
    %v1520 = vunpack.c.l.b16 %v929
    %v1521 = vunpack.c.h.b16 %v929
    %v1522 = vunpack.c.l.b16 %v930
    %v1523 = vunpack.c.h.b16 %v930
    %v1524 = vunpack.c.l.b16 %v931
    %v1525 = vunpack.c.h.b16 %v931
    %v1526 = vunpack.c.l.b16 %v932
    %v1527 = vunpack.c.h.b16 %v932
    %v1528 = vunpack.c.l.b16 %v933
    %v1529 = vunpack.c.h.b16 %v933
    %v1530 = vunpack.c.l.b16 %v934
    %v1531 = vunpack.c.h.b16 %v934
    %v1532 = vunpack.c.l.b16 %v935
    %v1533 = vunpack.c.h.b16 %v935
    %v1534 = vunpack.c.l.b16 %v936
    %v1535 = vunpack.c.h.b16 %v936
    %v1536 = vunpack.c.l.b16 %v937
    %v1537 = vunpack.c.h.b16 %v937
    %v1538 = vunpack.c.l.b16 %v938
    %v1539 = vunpack.c.h.b16 %v938
    %v1540 = vunpack.c.l.b16 %v939
    %v1541 = vunpack.c.h.b16 %v939
    %v1542 = vunpack.c.l.b16 %v940
    %v1543 = vunpack.c.h.b16 %v940
    %v1544 = vunpack.c.l.b16 %v941
    %v1545 = vunpack.c.h.b16 %v941
    %v1546 = vunpack.c.l.b16 %v942
    %v1547 = vunpack.c.h.b16 %v942
    %v1548 = vunpack.c.l.b16 %v943
    %v1549 = vunpack.c.h.b16 %v943
    %v1550 = vunpack.c.l.b16 %v944
    %v1551 = vunpack.c.h.b16 %v944
    %v1552 = vunpack.c.l.b16 %v945
    %v1553 = vunpack.c.h.b16 %v945
    %v1554 = vunpack.c.l.b16 %v946
    %v1555 = vunpack.c.h.b16 %v946
    %v1556 = vunpack.c.l.b16 %v947
    %v1557 = vunpack.c.h.b16 %v947
    %v1558 = vunpack.c.l.b16 %v948
    %v1559 = vunpack.c.h.b16 %v948
    %v1560 = vunpack.c.l.b16 %v949
    %v1561 = vunpack.c.h.b16 %v949
    %v1562 = vunpack.c.l.b16 %v950
    %v1563 = vunpack.c.h.b16 %v950
    %v1564 = vunpack.c.l.b16 %v951
    %v1565 = vunpack.c.h.b16 %v951
    %v1566 = vunpack.c.l.b16 %v952
    %v1567 = vunpack.c.h.b16 %v952
    %v1568 = vunpack.c.l.b16 %v953
    %v1569 = vunpack.c.h.b16 %v953
    %v1570 = vunpack.c.l.b16 %v954
    %v1571 = vunpack.c.h.b16 %v954
    %v1572 = vunpack.c.l.b16 %v955
    %v1573 = vunpack.c.h.b16 %v955
    %v1574 = vunpack.c.l.b16 %v956
    %v1575 = vunpack.c.h.b16 %v956
    %v1576 = vunpack.c.l.b16 %v957
    %v1577 = vunpack.c.h.b16 %v957
    %v1578 = vunpack.c.l.b16 %v958
    %v1579 = vunpack.c.h.b16 %v958
    %v1580 = vunpack.c.l.b16 %v959
    %v1581 = vunpack.c.h.b16 %v959
    %v1582 = vunpack.c.l.b16 %v960
    %v1583 = vunpack.c.h.b16 %v960
    %v1584 = vunpack.c.l.b16 %v961
    %v1585 = vunpack.c.h.b16 %v961
    %v1586 = vunpack.c.l.b16 %v962
    %v1587 = vunpack.c.h.b16 %v962
    %v1588 = vunpack.c.l.b16 %v963
    %v1589 = vunpack.c.h.b16 %v963
    %v1590 = vunpack.c.l.b16 %v964
    %v1591 = vunpack.c.h.b16 %v964
    %v1592 = vunpack.c.l.b16 %v965
    %v1593 = vunpack.c.h.b16 %v965
    %v1594 = vunpack.c.l.b16 %v966
    %v1595 = vunpack.c.h.b16 %v966
    %v1596 = vunpack.c.l.b16 %v967
    %v1597 = vunpack.c.h.b16 %v967
    %v1598 = vunpack.c.l.b16 %v968
    %v1599 = vunpack.c.h.b16 %v968
    %v1600 = vunpack.c.l.b16 %v969
    %v1601 = vunpack.c.h.b16 %v969
    %v1602 = vunpack.c.l.b16 %v970
    %v1603 = vunpack.c.h.b16 %v970
    %v1604 = vunpack.c.l.b16 %v971
    %v1605 = vunpack.c.h.b16 %v971
    %v1606 = vunpack.c.l.b16 %v972
    %v1607 = vunpack.c.h.b16 %v972
    %v1608 = vunpack.c.l.b16 %v973
    %v1609 = vunpack.c.h.b16 %v973
    %v1610 = vunpack.c.l.b16 %v974
    %v1611 = vunpack.c.h.b16 %v974
    %v1612 = vunpack.c.l.b16 %v975
    %v1613 = vunpack.c.h.b16 %v975
    %v1614 = vunpack.c.l.b16 %v976
    %v1615 = vunpack.c.h.b16 %v976
    %v1616 = vunpack.c.l.b16 %v977
    %v1617 = vunpack.c.h.b16 %v977
    %v1618 = vunpack.c.l.b16 %v978
    %v1619 = vunpack.c.h.b16 %v978
    %v1620 = vunpack.c.l.b16 %v979
    %v1621 = vunpack.c.h.b16 %v979
    %v1622 = vunpack.c.l.b16 %v980
    %v1623 = vunpack.c.h.b16 %v980
    %v1624 = vunpack.c.l.b16 %v981
    %v1625 = vunpack.c.h.b16 %v981
    %v1626 = vunpack.c.l.b16 %v982
    %v1627 = vunpack.c.h.b16 %v982
    %v1628 = vunpack.c.l.b16 %v983
    %v1629 = vunpack.c.h.b16 %v983
    %v1630 = vunpack.c.l.b16 %v984
    %v1631 = vunpack.c.h.b16 %v984
    %v1632 = vunpack.c.l.b16 %v985
    %v1633 = vunpack.c.h.b16 %v985
    %v1634 = vunpack.c.l.b16 %v986
    %v1635 = vunpack.c.h.b16 %v986
    %v1636 = vunpack.c.l.b16 %v987
    %v1637 = vunpack.c.h.b16 %v987
    %v1638 = vunpack.c.l.b16 %v988
    %v1639 = vunpack.c.h.b16 %v988
    %v1640 = vunpack.c.l.b16 %v989
    %v1641 = vunpack.c.h.b16 %v989
    %v1642 = vunpack.c.l.b16 %v990
    %v1643 = vunpack.c.h.b16 %v990
    %v1644 = vunpack.c.l.b16 %v991
    %v1645 = vunpack.c.h.b16 %v991
    %v1646 = vunpack.c.l.b16 %v992
    %v1647 = vunpack.c.h.b16 %v992
    %v1648 = vunpack.c.l.b16 %v993
    %v1649 = vunpack.c.h.b16 %v993
    %v1650 = vunpack.c.l.b16 %v994
    %v1651 = vunpack.c.h.b16 %v994
    %v1652 = vunpack.c.l.b16 %v995
    %v1653 = vunpack.c.h.b16 %v995
    %v1654 = vunpack.c.l.b16 %v996
    %v1655 = vunpack.c.h.b16 %v996
    %v1656 = vunpack.c.l.b16 %v997
    %v1657 = vunpack.c.h.b16 %v997
    %v1658 = vunpack.c.l.b16 %v998
    %v1659 = vunpack.c.h.b16 %v998
    %v1660 = vunpack.c.l.b16 %v999
    %v1661 = vunpack.c.h.b16 %v999
    %v1662 = vunpack.c.l.b16 %v1000
    %v1663 = vunpack.c.h.b16 %v1000
    %v1664 = vunpack.c.l.b16 %v1001
    %v1665 = vunpack.c.h.b16 %v1001
    %v1666 = vunpack.c.l.b16 %v1002
    %v1667 = vunpack.c.h.b16 %v1002
    %v1668 = vunpack.c.l.b16 %v1003
    %v1669 = vunpack.c.h.b16 %v1003
    %v1670 = vunpack.c.l.b16 %v1004
    %v1671 = vunpack.c.h.b16 %v1004
    %v1672 = vunpack.c.l.b16 %v1005
    %v1673 = vunpack.c.h.b16 %v1005
    %v1674 = vunpack.c.l.b16 %v1006
    %v1675 = vunpack.c.h.b16 %v1006
    %v1676 = vunpack.c.l.b16 %v1007
    %v1677 = vunpack.c.h.b16 %v1007
    %v1678 = vunpack.c.l.b16 %v1008
    %v1679 = vunpack.c.h.b16 %v1008
    %v1680 = vunpack.c.l.b16 %v1009
    %v1681 = vunpack.c.h.b16 %v1009
    %v1682 = vunpack.c.l.b16 %v1010
    %v1683 = vunpack.c.h.b16 %v1010
    %v1684 = vunpack.c.l.b16 %v1011
    %v1685 = vunpack.c.h.b16 %v1011
    %v1686 = vunpack.c.l.b16 %v1012
    %v1687 = vunpack.c.h.b16 %v1012
    %v1688 = vunpack.c.l.b16 %v1013
    %v1689 = vunpack.c.h.b16 %v1013
    %v1690 = vunpack.c.l.b16 %v1014
    %v1691 = vunpack.c.h.b16 %v1014
    %v1692 = vunpack.c.l.b16 %v1015
    %v1693 = vunpack.c.h.b16 %v1015
    %v1694 = vunpack.c.l.b16 %v1016
    %v1695 = vunpack.c.h.b16 %v1016
    %v1696 = vunpack.c.l.b16 %v1017
    %v1697 = vunpack.c.h.b16 %v1017
    %v1698 = vunpack.c.l.b16 %v1018
    %v1699 = vunpack.c.h.b16 %v1018
    %v1700 = vunpack.c.l.b16 %v1019
    %v1701 = vunpack.c.h.b16 %v1019
    %v1702 = vunpack.c.l.b16 %v1020
    %v1703 = vunpack.c.h.b16 %v1020
    %v1704 = vunpack.c.l.b16 %v1021
    %v1705 = vunpack.c.h.b16 %v1021
    %v1706 = vunpack.c.l.b16 %v1022
    %v1707 = vunpack.c.h.b16 %v1022
    %v1708 = vunpack.c.l.b16 %v1023
    %v1709 = vunpack.c.h.b16 %v1023
    %v1710 = vunpack.c.l.b16 %v1024
    %v1711 = vunpack.c.h.b16 %v1024
    %v1712 = vunpack.c.l.b16 %v1025
    %v1713 = vunpack.c.h.b16 %v1025
    %v1714 = vunpack.c.l.b16 %v1026
    %v1715 = vunpack.c.h.b16 %v1026
    %v1716 = vunpack.c.l.b16 %v1027
    %v1717 = vunpack.c.h.b16 %v1027
    %v1718 = vunpack.c.l.b16 %v1028
    %v1719 = vunpack.c.h.b16 %v1028
    %v1720 = vunpack.c.l.b16 %v1029
    %v1721 = vunpack.c.h.b16 %v1029
    %v1722 = vunpack.c.l.b16 %v1030
    %v1723 = vunpack.c.h.b16 %v1030
    %v1724 = vunpack.c.l.b16 %v1031
    %v1725 = vunpack.c.h.b16 %v1031
    %v1726 = vunpack.c.l.b16 %v1032
    %v1727 = vunpack.c.h.b16 %v1032
    %v1728 = vunpack.c.l.b16 %v1033
    %v1729 = vunpack.c.h.b16 %v1033
    %v1730 = vunpack.c.l.b16 %v1034
    %v1731 = vunpack.c.h.b16 %v1034
    %v1732 = vunpack.c.l.b16 %v1035
    %v1733 = vunpack.c.h.b16 %v1035
    %v1734 = vunpack.c.l.b16 %v1036
    %v1735 = vunpack.c.h.b16 %v1036
    %v1736 = vunpack.c.l.b16 %v1037
    %v1737 = vunpack.c.h.b16 %v1037
    %v1738 = vunpack.c.l.b16 %v1038
    %v1739 = vunpack.c.h.b16 %v1038
    %v1740 = vunpack.c.l.b16 %v1039
    %v1741 = vunpack.c.h.b16 %v1039
    %v1742 = vunpack.c.l.b16 %v1040
    %v1743 = vunpack.c.h.b16 %v1040
    %v1744 = vunpack.c.l.b16 %v1041
    %v1745 = vunpack.c.h.b16 %v1041
    %v1746 = vunpack.c.l.b16 %v1042
    %v1747 = vunpack.c.h.b16 %v1042
    %v1748 = vunpack.c.l.b16 %v1043
    %v1749 = vunpack.c.h.b16 %v1043
    %v1750 = vunpack.c.l.b16 %v1044
    %v1751 = vunpack.c.h.b16 %v1044
    %v1752 = vunpack.c.l.b16 %v1045
    %v1753 = vunpack.c.h.b16 %v1045
    %v1754 = vunpack.c.l.b16 %v1046
    %v1755 = vunpack.c.h.b16 %v1046
    %v1756 = vunpack.c.l.b16 %v1047
    %v1757 = vunpack.c.h.b16 %v1047
    %v1758 = vunpack.c.l.b16 %v1048
    %v1759 = vunpack.c.h.b16 %v1048
    %v1760 = vunpack.c.l.b16 %v1049
    %v1761 = vunpack.c.h.b16 %v1049
    %v1762 = vunpack.c.l.b16 %v1050
    %v1763 = vunpack.c.h.b16 %v1050
    %v1764 = vunpack.c.l.b16 %v1051
    %v1765 = vunpack.c.h.b16 %v1051
    %v1766 = vunpack.c.l.b16 %v1052
    %v1767 = vunpack.c.h.b16 %v1052
    %v1768 = vunpack.c.l.b16 %v1053
    %v1769 = vunpack.c.h.b16 %v1053
    %v1770 = vunpack.c.l.b16 %v1054
    %v1771 = vunpack.c.h.b16 %v1054
    %v1772 = vunpack.c.l.b16 %v1055
    %v1773 = vunpack.c.h.b16 %v1055
    %v1774 = vunpack.c.l.b16 %v1056
    %v1775 = vunpack.c.h.b16 %v1056
    %v1776 = vunpack.c.l.b16 %v1057
    %v1777 = vunpack.c.h.b16 %v1057
    %v1778 = vunpack.c.l.b16 %v1058
    %v1779 = vunpack.c.h.b16 %v1058
    %v1780 = vunpack.c.l.b16 %v1059
    %v1781 = vunpack.c.h.b16 %v1059
    %v1782 = vunpack.c.l.b16 %v1060
    %v1783 = vunpack.c.h.b16 %v1060
    %v1784 = vunpack.c.l.b16 %v1061
    %v1785 = vunpack.c.h.b16 %v1061
    %v1786 = vunpack.c.l.b16 %v1062
    %v1787 = vunpack.c.h.b16 %v1062
    %v1788 = vunpack.c.l.b16 %v1063
    %v1789 = vunpack.c.h.b16 %v1063
    %v1790 = vunpack.c.l.b16 %v1064
    %v1791 = vunpack.c.h.b16 %v1064
    %v1792 = vunpack.c.l.b16 %v1065
    %v1793 = vunpack.c.h.b16 %v1065
    %v1794 = vunpack.c.l.b16 %v1066
    %v1795 = vunpack.c.h.b16 %v1066
    %v1796 = vunpack.c.l.b16 %v1067
    %v1797 = vunpack.c.h.b16 %v1067
    %v1798 = vunpack.c.l.b16 %v1068
    %v1799 = vunpack.c.h.b16 %v1068
    %v1800 = vunpack.c.l.b16 %v1069
    %v1801 = vunpack.c.h.b16 %v1069
    %v1802 = vunpack.c.l.b16 %v1070
    %v1803 = vunpack.c.h.b16 %v1070
    %v1804 = vunpack.c.l.b16 %v1071
    %v1805 = vunpack.c.h.b16 %v1071
    %v1806 = vunpack.c.l.b16 %v1072
    %v1807 = vunpack.c.h.b16 %v1072
    %v1808 = vunpack.c.l.b16 %v1073
    %v1809 = vunpack.c.h.b16 %v1073
    %v1810 = vunpack.c.l.b16 %v1074
    %v1811 = vunpack.c.h.b16 %v1074
    %v1812 = vunpack.c.l.b16 %v1075
    %v1813 = vunpack.c.h.b16 %v1075
    %v1814 = vunpack.c.l.b16 %v1076
    %v1815 = vunpack.c.h.b16 %v1076
    %v1816 = vunpack.c.l.b16 %v1077
    %v1817 = vunpack.c.h.b16 %v1077
    %v1818 = vunpack.c.l.b16 %v1078
    %v1819 = vunpack.c.h.b16 %v1078
    %v1820 = vunpack.c.l.b16 %v1079
    %v1821 = vunpack.c.h.b16 %v1079
    %v1822 = vunpack.c.l.b16 %v1080
    %v1823 = vunpack.c.h.b16 %v1080
    %v1824 = vunpack.c.l.b16 %v1081
    %v1825 = vunpack.c.h.b16 %v1081
    %v1826 = vunpack.c.l.b16 %v1082
    %v1827 = vunpack.c.h.b16 %v1082
    %v1828 = vunpack.c.l.b16 %v1083
    %v1829 = vunpack.c.h.b16 %v1083
    %v1830 = vunpack.c.l.b16 %v1084
    %v1831 = vunpack.c.h.b16 %v1084
    %v1832 = vunpack.c.l.b16 %v1085
    %v1833 = vunpack.c.h.b16 %v1085
    %v1834 = vunpack.c.l.b16 %v1086
    %v1835 = vunpack.c.h.b16 %v1086
    %v1836 = vunpack.c.l.b16 %v1087
    %v1837 = vunpack.c.h.b16 %v1087
    %v1838 = vunpack.c.l.b16 %v1088
    %v1839 = vunpack.c.h.b16 %v1088
    %v1840 = vunpack.c.l.b16 %v1089
    %v1841 = vunpack.c.h.b16 %v1089
    %v1842 = vunpack.c.l.b16 %v1090
    %v1843 = vunpack.c.h.b16 %v1090
    %v1844 = vunpack.c.l.b16 %v1091
    %v1845 = vunpack.c.h.b16 %v1091
    %v1846 = vunpack.c.l.b16 %v1092
    %v1847 = vunpack.c.h.b16 %v1092
    %v1848 = vunpack.c.l.b16 %v1093
    %v1849 = vunpack.c.h.b16 %v1093
    %v1850 = vunpack.c.l.b16 %v1094
    %v1851 = vunpack.c.h.b16 %v1094
    %v1852 = vunpack.c.l.b16 %v1095
    %v1853 = vunpack.c.h.b16 %v1095
    %v1854 = vunpack.c.l.b16 %v1096
    %v1855 = vunpack.c.h.b16 %v1096
    %v1856 = vunpack.c.l.b16 %v1097
    %v1857 = vunpack.c.h.b16 %v1097
    %v1858 = vunpack.c.l.b16 %v1098
    %v1859 = vunpack.c.h.b16 %v1098
    %v1860 = vunpack.c.l.b16 %v1099
    %v1861 = vunpack.c.h.b16 %v1099
    %v1862 = vunpack.c.l.b16 %v1100
    %v1863 = vunpack.c.h.b16 %v1100
    %v1864 = vunpack.c.l.b16 %v1101
    %v1865 = vunpack.c.h.b16 %v1101
    %v1866 = vunpack.c.l.b16 %v1102
    %v1867 = vunpack.c.h.b16 %v1102
    %v1868 = vunpack.c.l.b16 %v1103
    %v1869 = vunpack.c.h.b16 %v1103
    %v1870 = vunpack.c.l.b16 %v1104
    %v1871 = vunpack.c.h.b16 %v1104
    %v1872 = vunpack.c.l.b16 %v1105
    %v1873 = vunpack.c.h.b16 %v1105
    %v1874 = vunpack.c.l.b16 %v1106
    %v1875 = vunpack.c.h.b16 %v1106
    %v1876 = vunpack.c.l.b16 %v1107
    %v1877 = vunpack.c.h.b16 %v1107
    %v1878 = vunpack.c.l.b16 %v1108
    %v1879 = vunpack.c.h.b16 %v1108
    %v1880 = vunpack.c.l.b16 %v1109
    %v1881 = vunpack.c.h.b16 %v1109
    %v1882 = vunpack.c.l.b16 %v1110
    %v1883 = vunpack.c.h.b16 %v1110
    %v1884 = vunpack.c.l.b16 %v1111
    %v1885 = vunpack.c.h.b16 %v1111
    %v1886 = vunpack.c.l.b16 %v1112
    %v1887 = vunpack.c.h.b16 %v1112
    %v1888 = vunpack.c.l.b16 %v1113
    %v1889 = vunpack.c.h.b16 %v1113
    %v1890 = vunpack.c.l.b16 %v1114
    %v1891 = vunpack.c.h.b16 %v1114
    %v1892 = vunpack.c.l.b16 %v1115
    %v1893 = vunpack.c.h.b16 %v1115
    %v1894 = vunpack.c.l.b16 %v1116
    %v1895 = vunpack.c.h.b16 %v1116
    %v1896 = vunpack.c.l.b16 %v1117
    %v1897 = vunpack.c.h.b16 %v1117
    %v1898 = vunpack.c.l.b16 %v1118
    %v1899 = vunpack.c.h.b16 %v1118
    %v1900 = vunpack.c.l.b16 %v1119
    %v1901 = vunpack.c.h.b16 %v1119
    %v1902 = vunpack.c.l.b16 %v1120
    %v1903 = vunpack.c.h.b16 %v1120
    %v1904 = vunpack.c.l.b16 %v1121
    %v1905 = vunpack.c.h.b16 %v1121
    %v1906 = vunpack.c.l.b16 %v1122
    %v1907 = vunpack.c.h.b16 %v1122
    %v1908 = vunpack.c.l.b16 %v1123
    %v1909 = vunpack.c.h.b16 %v1123
    %v1910 = vunpack.c.l.b16 %v1124
    %v1911 = vunpack.c.h.b16 %v1124
    %v1912 = vunpack.c.l.b16 %v1125
    %v1913 = vunpack.c.h.b16 %v1125
    %v1914 = vunpack.c.l.b16 %v1126
    %v1915 = vunpack.c.h.b16 %v1126
    %v1916 = vunpack.c.l.b16 %v1127
    %v1917 = vunpack.c.h.b16 %v1127
    %v1918 = vunpack.c.l.b16 %v1128
    %v1919 = vunpack.c.h.b16 %v1128
    %v1920 = vunpack.c.l.b16 %v1129
    %v1921 = vunpack.c.h.b16 %v1129
    %v1922 = vunpack.c.l.b16 %v1130
    %v1923 = vunpack.c.h.b16 %v1130
    %v1924 = vunpack.c.l.b16 %v1131
    %v1925 = vunpack.c.h.b16 %v1131
    %v1926 = vunpack.c.l.b16 %v1132
    %v1927 = vunpack.c.h.b16 %v1132
    %v1928 = vunpack.c.l.b16 %v1133
    %v1929 = vunpack.c.h.b16 %v1133
    %v1930 = vunpack.c.l.b16 %v1134
    %v1931 = vunpack.c.h.b16 %v1134
    %v1932 = vunpack.c.l.b16 %v1135
    %v1933 = vunpack.c.h.b16 %v1135
    %v1934 = vunpack.c.l.b16 %v1136
    %v1935 = vunpack.c.h.b16 %v1136
    %v1936 = vunpack.c.l.b16 %v1137
    %v1937 = vunpack.c.h.b16 %v1137
    %v1938 = vunpack.c.l.b16 %v1138
    %v1939 = vunpack.c.h.b16 %v1138
    %v1940 = vunpack.c.l.b16 %v1139
    %v1941 = vunpack.c.h.b16 %v1139
    %v1942 = vunpack.c.l.b16 %v1140
    %v1943 = vunpack.c.h.b16 %v1140
    %v1944 = vunpack.c.l.b16 %v1141
    %v1945 = vunpack.c.h.b16 %v1141
    %v1946 = vunpack.c.l.b16 %v1142
    %v1947 = vunpack.c.h.b16 %v1142
    %v1948 = vunpack.c.l.b16 %v1143
    %v1949 = vunpack.c.h.b16 %v1143
    %v1950 = vunpack.c.l.b16 %v1144
    %v1951 = vunpack.c.h.b16 %v1144
    %v1952 = vunpack.c.l.b16 %v1145
    %v1953 = vunpack.c.h.b16 %v1145
    %v1954 = vunpack.c.l.b16 %v1146
    %v1955 = vunpack.c.h.b16 %v1146
    %v1956 = vunpack.c.l.b16 %v1147
    %v1957 = vunpack.c.h.b16 %v1147
    %v1958 = vpack.c.b16 %v1454, %v1446
    %v1959 = vpack.c.b16 %v1455, %v1447
    %v1960 = vpack.c.b16 %v1456, %v1448
    %v1961 = vpack.c.b16 %v1457, %v1449
    %v1962 = vpack.c.b16 %v1458, %v1450
    %v1963 = vpack.c.b16 %v1459, %v1451
    %v1964 = vpack.c.b16 %v1460, %v1452
    %v1965 = vpack.c.b16 %v1461, %v1453
    %v1966 = vpack.c.b16 %v1470, %v1462
    %v1967 = vpack.c.b16 %v1471, %v1463
    %v1968 = vpack.c.b16 %v1472, %v1464
    %v1969 = vpack.c.b16 %v1473, %v1465
    %v1970 = vpack.c.b16 %v1474, %v1466
    %v1971 = vpack.c.b16 %v1475, %v1467
    %v1972 = vpack.c.b16 %v1476, %v1468
    %v1973 = vpack.c.b16 %v1477, %v1469
    %v1974 = vpack.c.b16 %v1486, %v1478
    %v1975 = vpack.c.b16 %v1487, %v1479
    %v1976 = vpack.c.b16 %v1488, %v1480
    %v1977 = vpack.c.b16 %v1489, %v1481
    %v1978 = vpack.c.b16 %v1490, %v1482
    %v1979 = vpack.c.b16 %v1491, %v1483
    %v1980 = vpack.c.b16 %v1492, %v1484
    %v1981 = vpack.c.b16 %v1493, %v1485
    %v1982 = vpack.c.b16 %v1502, %v1494
    %v1983 = vpack.c.b16 %v1503, %v1495
    %v1984 = vpack.c.b16 %v1504, %v1496
    %v1985 = vpack.c.b16 %v1505, %v1497
    %v1986 = vpack.c.b16 %v1506, %v1498
    %v1987 = vpack.c.b16 %v1507, %v1499
    %v1988 = vpack.c.b16 %v1508, %v1500
    %v1989 = vpack.c.b16 %v1509, %v1501
    %v1990 = vpack.c.b16 %v1518, %v1510
    %v1991 = vpack.c.b16 %v1519, %v1511
    %v1992 = vpack.c.b16 %v1520, %v1512
    %v1993 = vpack.c.b16 %v1521, %v1513
    %v1994 = vpack.c.b16 %v1522, %v1514
    %v1995 = vpack.c.b16 %v1523, %v1515
    %v1996 = vpack.c.b16 %v1524, %v1516
    %v1997 = vpack.c.b16 %v1525, %v1517
    %v1998 = vpack.c.b16 %v1534, %v1526
    %v1999 = vpack.c.b16 %v1535, %v1527
    %v2000 = vpack.c.b16 %v1536, %v1528
    %v2001 = vpack.c.b16 %v1537, %v1529
    %v2002 = vpack.c.b16 %v1538, %v1530
    %v2003 = vpack.c.b16 %v1539, %v1531
    %v2004 = vpack.c.b16 %v1540, %v1532
    %v2005 = vpack.c.b16 %v1541, %v1533
    %v2006 = vpack.c.b16 %v1550, %v1542
    %v2007 = vpack.c.b16 %v1551, %v1543
    %v2008 = vpack.c.b16 %v1552, %v1544
    %v2009 = vpack.c.b16 %v1553, %v1545
    %v2010 = vpack.c.b16 %v1554, %v1546
    %v2011 = vpack.c.b16 %v1555, %v1547
    %v2012 = vpack.c.b16 %v1556, %v1548
    %v2013 = vpack.c.b16 %v1557, %v1549
    %v2014 = vpack.c.b16 %v1566, %v1558
    %v2015 = vpack.c.b16 %v1567, %v1559
    %v2016 = vpack.c.b16 %v1568, %v1560
    %v2017 = vpack.c.b16 %v1569, %v1561
    %v2018 = vpack.c.b16 %v1570, %v1562
    %v2019 = vpack.c.b16 %v1571, %v1563
    %v2020 = vpack.c.b16 %v1572, %v1564
    %v2021 = vpack.c.b16 %v1573, %v1565
    %v2022 = vpack.c.b16 %v1582, %v1574
    %v2023 = vpack.c.b16 %v1583, %v1575
    %v2024 = vpack.c.b16 %v1584, %v1576
    %v2025 = vpack.c.b16 %v1585, %v1577
    %v2026 = vpack.c.b16 %v1586, %v1578
    %v2027 = vpack.c.b16 %v1587, %v1579
    %v2028 = vpack.c.b16 %v1588, %v1580
    %v2029 = vpack.c.b16 %v1589, %v1581
    %v2030 = vpack.c.b16 %v1598, %v1590
    %v2031 = vpack.c.b16 %v1599, %v1591
    %v2032 = vpack.c.b16 %v1600, %v1592
    %v2033 = vpack.c.b16 %v1601, %v1593
    %v2034 = vpack.c.b16 %v1602, %v1594
    %v2035 = vpack.c.b16 %v1603, %v1595
    %v2036 = vpack.c.b16 %v1604, %v1596
    %v2037 = vpack.c.b16 %v1605, %v1597
    %v2038 = vpack.c.b16 %v1614, %v1606
    %v2039 = vpack.c.b16 %v1615, %v1607
    %v2040 = vpack.c.b16 %v1616, %v1608
    %v2041 = vpack.c.b16 %v1617, %v1609
    %v2042 = vpack.c.b16 %v1618, %v1610
    %v2043 = vpack.c.b16 %v1619, %v1611
    %v2044 = vpack.c.b16 %v1620, %v1612
    %v2045 = vpack.c.b16 %v1621, %v1613
    %v2046 = vpack.c.b16 %v1630, %v1622
    %v2047 = vpack.c.b16 %v1631, %v1623
    %v2048 = vpack.c.b16 %v1632, %v1624
    %v2049 = vpack.c.b16 %v1633, %v1625
    %v2050 = vpack.c.b16 %v1634, %v1626
    %v2051 = vpack.c.b16 %v1635, %v1627
    %v2052 = vpack.c.b16 %v1636, %v1628
    %v2053 = vpack.c.b16 %v1637, %v1629
    %v2054 = vpack.c.b16 %v1646, %v1638
    %v2055 = vpack.c.b16 %v1647, %v1639
    %v2056 = vpack.c.b16 %v1648, %v1640
    %v2057 = vpack.c.b16 %v1649, %v1641
    %v2058 = vpack.c.b16 %v1650, %v1642
    %v2059 = vpack.c.b16 %v1651, %v1643
    %v2060 = vpack.c.b16 %v1652, %v1644
    %v2061 = vpack.c.b16 %v1653, %v1645
    %v2062 = vpack.c.b16 %v1662, %v1654
    %v2063 = vpack.c.b16 %v1663, %v1655
    %v2064 = vpack.c.b16 %v1664, %v1656
    %v2065 = vpack.c.b16 %v1665, %v1657
    %v2066 = vpack.c.b16 %v1666, %v1658
    %v2067 = vpack.c.b16 %v1667, %v1659
    %v2068 = vpack.c.b16 %v1668, %v1660
    %v2069 = vpack.c.b16 %v1669, %v1661
    %v2070 = vpack.c.b16 %v1678, %v1670
    %v2071 = vpack.c.b16 %v1679, %v1671
    %v2072 = vpack.c.b16 %v1680, %v1672
    %v2073 = vpack.c.b16 %v1681, %v1673
    %v2074 = vpack.c.b16 %v1682, %v1674
    %v2075 = vpack.c.b16 %v1683, %v1675
    %v2076 = vpack.c.b16 %v1684, %v1676
    %v2077 = vpack.c.b16 %v1685, %v1677
    %v2078 = vpack.c.b16 %v1694, %v1686
    %v2079 = vpack.c.b16 %v1695, %v1687
    %v2080 = vpack.c.b16 %v1696, %v1688
    %v2081 = vpack.c.b16 %v1697, %v1689
    %v2082 = vpack.c.b16 %v1698, %v1690
    %v2083 = vpack.c.b16 %v1699, %v1691
    %v2084 = vpack.c.b16 %v1700, %v1692
    %v2085 = vpack.c.b16 %v1701, %v1693
    %v2086 = vpack.c.b16 %v1710, %v1702
    %v2087 = vpack.c.b16 %v1711, %v1703
    %v2088 = vpack.c.b16 %v1712, %v1704
    %v2089 = vpack.c.b16 %v1713, %v1705
    %v2090 = vpack.c.b16 %v1714, %v1706
    %v2091 = vpack.c.b16 %v1715, %v1707
    %v2092 = vpack.c.b16 %v1716, %v1708
    %v2093 = vpack.c.b16 %v1717, %v1709
    %v2094 = vpack.c.b16 %v1726, %v1718
    %v2095 = vpack.c.b16 %v1727, %v1719
    %v2096 = vpack.c.b16 %v1728, %v1720
    %v2097 = vpack.c.b16 %v1729, %v1721
    %v2098 = vpack.c.b16 %v1730, %v1722
    %v2099 = vpack.c.b16 %v1731, %v1723
    %v2100 = vpack.c.b16 %v1732, %v1724
    %v2101 = vpack.c.b16 %v1733, %v1725
    %v2102 = vpack.c.b16 %v1742, %v1734
    %v2103 = vpack.c.b16 %v1743, %v1735
    %v2104 = vpack.c.b16 %v1744, %v1736
    %v2105 = vpack.c.b16 %v1745, %v1737
    %v2106 = vpack.c.b16 %v1746, %v1738
    %v2107 = vpack.c.b16 %v1747, %v1739
    %v2108 = vpack.c.b16 %v1748, %v1740
    %v2109 = vpack.c.b16 %v1749, %v1741
    %v2110 = vpack.c.b16 %v1758, %v1750
    %v2111 = vpack.c.b16 %v1759, %v1751
    %v2112 = vpack.c.b16 %v1760, %v1752
    %v2113 = vpack.c.b16 %v1761, %v1753
    %v2114 = vpack.c.b16 %v1762, %v1754
    %v2115 = vpack.c.b16 %v1763, %v1755
    %v2116 = vpack.c.b16 %v1764, %v1756
    %v2117 = vpack.c.b16 %v1765, %v1757
    %v2118 = vpack.c.b16 %v1774, %v1766
    %v2119 = vpack.c.b16 %v1775, %v1767
    %v2120 = vpack.c.b16 %v1776, %v1768
    %v2121 = vpack.c.b16 %v1777, %v1769
    %v2122 = vpack.c.b16 %v1778, %v1770
    %v2123 = vpack.c.b16 %v1779, %v1771
    %v2124 = vpack.c.b16 %v1780, %v1772
    %v2125 = vpack.c.b16 %v1781, %v1773
    %v2126 = vpack.c.b16 %v1790, %v1782
    %v2127 = vpack.c.b16 %v1791, %v1783
    %v2128 = vpack.c.b16 %v1792, %v1784
    %v2129 = vpack.c.b16 %v1793, %v1785
    %v2130 = vpack.c.b16 %v1794, %v1786
    %v2131 = vpack.c.b16 %v1795, %v1787
    %v2132 = vpack.c.b16 %v1796, %v1788
    %v2133 = vpack.c.b16 %v1797, %v1789
    %v2134 = vpack.c.b16 %v1806, %v1798
    %v2135 = vpack.c.b16 %v1807, %v1799
    %v2136 = vpack.c.b16 %v1808, %v1800
    %v2137 = vpack.c.b16 %v1809, %v1801
    %v2138 = vpack.c.b16 %v1810, %v1802
    %v2139 = vpack.c.b16 %v1811, %v1803
    %v2140 = vpack.c.b16 %v1812, %v1804
    %v2141 = vpack.c.b16 %v1813, %v1805
    %v2142 = vpack.c.b16 %v1822, %v1814
    %v2143 = vpack.c.b16 %v1823, %v1815
    %v2144 = vpack.c.b16 %v1824, %v1816
    %v2145 = vpack.c.b16 %v1825, %v1817
    %v2146 = vpack.c.b16 %v1826, %v1818
    %v2147 = vpack.c.b16 %v1827, %v1819
    %v2148 = vpack.c.b16 %v1828, %v1820
    %v2149 = vpack.c.b16 %v1829, %v1821
    %v2150 = vpack.c.b16 %v1838, %v1830
    %v2151 = vpack.c.b16 %v1839, %v1831
    %v2152 = vpack.c.b16 %v1840, %v1832
    %v2153 = vpack.c.b16 %v1841, %v1833
    %v2154 = vpack.c.b16 %v1842, %v1834
    %v2155 = vpack.c.b16 %v1843, %v1835
    %v2156 = vpack.c.b16 %v1844, %v1836
    %v2157 = vpack.c.b16 %v1845, %v1837
    %v2158 = vpack.c.b16 %v1854, %v1846
    %v2159 = vpack.c.b16 %v1855, %v1847
    %v2160 = vpack.c.b16 %v1856, %v1848
    %v2161 = vpack.c.b16 %v1857, %v1849
    %v2162 = vpack.c.b16 %v1858, %v1850
    %v2163 = vpack.c.b16 %v1859, %v1851
    %v2164 = vpack.c.b16 %v1860, %v1852
    %v2165 = vpack.c.b16 %v1861, %v1853
    %v2166 = vpack.c.b16 %v1870, %v1862
    %v2167 = vpack.c.b16 %v1871, %v1863
    %v2168 = vpack.c.b16 %v1872, %v1864
    %v2169 = vpack.c.b16 %v1873, %v1865
    %v2170 = vpack.c.b16 %v1874, %v1866
    %v2171 = vpack.c.b16 %v1875, %v1867
    %v2172 = vpack.c.b16 %v1876, %v1868
    %v2173 = vpack.c.b16 %v1877, %v1869
    %v2174 = vpack.c.b16 %v1886, %v1878
    %v2175 = vpack.c.b16 %v1887, %v1879
    %v2176 = vpack.c.b16 %v1888, %v1880
    %v2177 = vpack.c.b16 %v1889, %v1881
    %v2178 = vpack.c.b16 %v1890, %v1882
    %v2179 = vpack.c.b16 %v1891, %v1883
    %v2180 = vpack.c.b16 %v1892, %v1884
    %v2181 = vpack.c.b16 %v1893, %v1885
    %v2182 = vpack.c.b16 %v1902, %v1894
    %v2183 = vpack.c.b16 %v1903, %v1895
    %v2184 = vpack.c.b16 %v1904, %v1896
    %v2185 = vpack.c.b16 %v1905, %v1897
    %v2186 = vpack.c.b16 %v1906, %v1898
    %v2187 = vpack.c.b16 %v1907, %v1899
    %v2188 = vpack.c.b16 %v1908, %v1900
    %v2189 = vpack.c.b16 %v1909, %v1901
    %v2190 = vpack.c.b16 %v1918, %v1910
    %v2191 = vpack.c.b16 %v1919, %v1911
    %v2192 = vpack.c.b16 %v1920, %v1912
    %v2193 = vpack.c.b16 %v1921, %v1913
    %v2194 = vpack.c.b16 %v1922, %v1914
    %v2195 = vpack.c.b16 %v1923, %v1915
    %v2196 = vpack.c.b16 %v1924, %v1916
    %v2197 = vpack.c.b16 %v1925, %v1917
    %v2198 = vpack.c.b16 %v1934, %v1926
    %v2199 = vpack.c.b16 %v1935, %v1927
    %v2200 = vpack.c.b16 %v1936, %v1928
    %v2201 = vpack.c.b16 %v1937, %v1929
    %v2202 = vpack.c.b16 %v1938, %v1930
    %v2203 = vpack.c.b16 %v1939, %v1931
    %v2204 = vpack.c.b16 %v1940, %v1932
    %v2205 = vpack.c.b16 %v1941, %v1933
    %v2206 = vpack.c.b16 %v1950, %v1942
    %v2207 = vpack.c.b16 %v1951, %v1943
    %v2208 = vpack.c.b16 %v1952, %v1944
    %v2209 = vpack.c.b16 %v1953, %v1945
    %v2210 = vpack.c.b16 %v1954, %v1946
    %v2211 = vpack.c.b16 %v1955, %v1947
    %v2212 = vpack.c.b16 %v1956, %v1948
    %v2213 = vpack.c.b16 %v1957, %v1949
    %2470 = vmatprep.subr.bf16.mxu0 %v1959
    %2471 = vmatpush1.bf16.msra.mxu0 %v1958
    %2472 = vmatprep.subr.bf16.mxu0 %v1967
    %2473 = vmatpush1.bf16.msra.mxu0 %v1966
    %2474 = vmatprep.subr.bf16.mxu0 %v1975
    %2475 = vmatpush1.bf16.msra.mxu0 %v1974
    %2476 = vmatprep.subr.bf16.mxu0 %v1983
    %2477 = vmatpush1.bf16.msra.mxu0 %v1982
    %2478 = vmatprep.subr.bf16.mxu0 %v1991
    %2479 = vmatpush1.bf16.msra.mxu0 %v1990
    %2480 = vmatprep.subr.bf16.mxu0 %v1999
    %2481 = vmatpush1.bf16.msra.mxu0 %v1998
    %2482 = vmatprep.subr.bf16.mxu0 %v2007
    %2483 = vmatpush1.bf16.msra.mxu0 %v2006
    %2484 = vmatprep.subr.bf16.mxu0 %v2015
    %2485 = vmatpush1.bf16.msra.mxu0 %v2014
    %2486 = vmatprep.subr.bf16.mxu0 %v2023
    %2487 = vmatpush1.bf16.msra.mxu0 %v2022
    %2488 = vmatprep.subr.bf16.mxu0 %v2031
    %2489 = vmatpush1.bf16.msra.mxu0 %v2030
    %2490 = vmatprep.subr.bf16.mxu0 %v2039
    %2491 = vmatpush1.bf16.msra.mxu0 %v2038
    %2492 = vmatprep.subr.bf16.mxu0 %v2047
    %2493 = vmatpush1.bf16.msra.mxu0 %v2046
    %2494 = vmatprep.subr.bf16.mxu0 %v2055
    %2495 = vmatpush1.bf16.msra.mxu0 %v2054
    %2496 = vmatprep.subr.bf16.mxu0 %v2063
    %2497 = vmatpush1.bf16.msra.mxu0 %v2062
    %2498 = vmatprep.subr.bf16.mxu0 %v2071
    %2499 = vmatpush1.bf16.msra.mxu0 %v2070
    %2500 = vmatprep.subr.bf16.mxu0 %v2079
    %2501 = vmatpush1.bf16.msra.mxu0 %v2078
    %2502 = vmatprep.mubr.bf16.mxu0 %v889
    %2503 = vmatmul.mubr.bf16.gmra.mrb[0].mxu0 %v888
    %v2504 = vpop.f32.mrb[0].mxu0
    %v2505 = vadd.f32 %v1153, %v2504
    %v2506 = vpop.f32.mrb[0].mxu0
    %v2507 = vadd.f32 %v1157, %v2506
    %v2508 = vpop.f32.mrb[0].mxu0
    %v2509 = vpop.f32.mrb[0].mxu0
    %2510 = vdwg.mxu0
    %2511 = vmatprep.subr.bf16.mxu0 %v2087
    %2512 = vmatpush1.bf16.msra.mxu0 %v2086
    %2513 = vmatprep.subr.bf16.mxu0 %v2095
    %2514 = vmatpush1.bf16.msra.mxu0 %v2094
    %2515 = vmatprep.subr.bf16.mxu0 %v2103
    %2516 = vmatpush1.bf16.msra.mxu0 %v2102
    %2517 = vmatprep.subr.bf16.mxu0 %v2111
    %2518 = vmatpush1.bf16.msra.mxu0 %v2110
    %2519 = vmatprep.subr.bf16.mxu0 %v2119
    %2520 = vmatpush1.bf16.msra.mxu0 %v2118
    %2521 = vmatprep.subr.bf16.mxu0 %v2127
    %2522 = vmatpush1.bf16.msra.mxu0 %v2126
    %2523 = vmatprep.subr.bf16.mxu0 %v2135
    %2524 = vmatpush1.bf16.msra.mxu0 %v2134
    %2525 = vmatprep.subr.bf16.mxu0 %v2143
    %2526 = vmatpush1.bf16.msra.mxu0 %v2142
    %2527 = vmatprep.subr.bf16.mxu0 %v2151
    %2528 = vmatpush1.bf16.msra.mxu0 %v2150
    %2529 = vmatprep.subr.bf16.mxu0 %v2159
    %2530 = vmatpush1.bf16.msra.mxu0 %v2158
    %2531 = vmatprep.subr.bf16.mxu0 %v2167
    %2532 = vmatpush1.bf16.msra.mxu0 %v2166
    %2533 = vmatprep.subr.bf16.mxu0 %v2175
    %2534 = vmatpush1.bf16.msra.mxu0 %v2174
    %2535 = vmatprep.subr.bf16.mxu0 %v2183
    %2536 = vmatpush1.bf16.msra.mxu0 %v2182
    %2537 = vmatprep.subr.bf16.mxu0 %v2191
    %2538 = vmatpush1.bf16.msra.mxu0 %v2190
    %2539 = vmatprep.subr.bf16.mxu0 %v2199
    %2540 = vmatpush1.bf16.msra.mxu0 %v2198
    %2541 = vmatprep.subr.bf16.mxu0 %v2207
    %2542 = vmatpush1.bf16.msra.mxu0 %v2206
    %2543 = vmatprep.mubr.bf16.mxu0 %v891
    %2544 = vmatmul.mubr.bf16.gmra.mrb[0].mxu0 %v890
    %v2545 = vpop.f32.mrb[0].mxu0
    %v2546 = vadd.f32 %v2505, %v2545
    %v2547 = vpop.f32.mrb[0].mxu0
    %v2548 = vadd.f32 %v2507, %v2547
    %v2549 = vpop.f32.mrb[0].mxu0
    %v2550 = vpop.f32.mrb[0].mxu0
    %2551 = vdwg.mxu0
    %2552 = vmatprep.subr.bf16.mxu0 %v1961
    %2553 = vmatpush1.bf16.msra.mxu0 %v1960
    %2554 = vmatprep.subr.bf16.mxu0 %v1969
    %2555 = vmatpush1.bf16.msra.mxu0 %v1968
    %2556 = vmatprep.subr.bf16.mxu0 %v1977
    %2557 = vmatpush1.bf16.msra.mxu0 %v1976
    %2558 = vmatprep.subr.bf16.mxu0 %v1985
    %2559 = vmatpush1.bf16.msra.mxu0 %v1984
    %2560 = vmatprep.subr.bf16.mxu0 %v1993
    %2561 = vmatpush1.bf16.msra.mxu0 %v1992
    %2562 = vmatprep.subr.bf16.mxu0 %v2001
    %2563 = vmatpush1.bf16.msra.mxu0 %v2000
    %2564 = vmatprep.subr.bf16.mxu0 %v2009
    %2565 = vmatpush1.bf16.msra.mxu0 %v2008
    %2566 = vmatprep.subr.bf16.mxu0 %v2017
    %2567 = vmatpush1.bf16.msra.mxu0 %v2016
    %2568 = vmatprep.subr.bf16.mxu0 %v2025
    %2569 = vmatpush1.bf16.msra.mxu0 %v2024
    %2570 = vmatprep.subr.bf16.mxu0 %v2033
    %2571 = vmatpush1.bf16.msra.mxu0 %v2032
    %2572 = vmatprep.subr.bf16.mxu0 %v2041
    %2573 = vmatpush1.bf16.msra.mxu0 %v2040
    %2574 = vmatprep.subr.bf16.mxu0 %v2049
    %2575 = vmatpush1.bf16.msra.mxu0 %v2048
    %2576 = vmatprep.subr.bf16.mxu0 %v2057
    %2577 = vmatpush1.bf16.msra.mxu0 %v2056
    %2578 = vmatprep.subr.bf16.mxu0 %v2065
    %2579 = vmatpush1.bf16.msra.mxu0 %v2064
    %2580 = vmatprep.subr.bf16.mxu0 %v2073
    %2581 = vmatpush1.bf16.msra.mxu0 %v2072
    %2582 = vmatprep.subr.bf16.mxu0 %v2081
    %2583 = vmatpush1.bf16.msra.mxu0 %v2080
    %2584 = vmatprep.mubr.bf16.mxu0 %v889
    %2585 = vmatmul.mubr.bf16.gmra.mrb[0].mxu0 %v888
    %v2586 = vpop.f32.mrb[0].mxu0
    %v2587 = vadd.f32 %v1161, %v2586
    %v2588 = vpop.f32.mrb[0].mxu0
    %v2589 = vadd.f32 %v1165, %v2588
    %v2590 = vpop.f32.mrb[0].mxu0
    %v2591 = vpop.f32.mrb[0].mxu0
    %2592 = vdwg.mxu0
    %2593 = vmatprep.subr.bf16.mxu0 %v2089
    %2594 = vmatpush1.bf16.msra.mxu0 %v2088
    %2595 = vmatprep.subr.bf16.mxu0 %v2097
    %2596 = vmatpush1.bf16.msra.mxu0 %v2096
    %2597 = vmatprep.subr.bf16.mxu0 %v2105
    %2598 = vmatpush1.bf16.msra.mxu0 %v2104
    %2599 = vmatprep.subr.bf16.mxu0 %v2113
    %2600 = vmatpush1.bf16.msra.mxu0 %v2112
    %2601 = vmatprep.subr.bf16.mxu0 %v2121
    %2602 = vmatpush1.bf16.msra.mxu0 %v2120
    %2603 = vmatprep.subr.bf16.mxu0 %v2129
    %2604 = vmatpush1.bf16.msra.mxu0 %v2128
    %2605 = vmatprep.subr.bf16.mxu0 %v2137
    %2606 = vmatpush1.bf16.msra.mxu0 %v2136
    %2607 = vmatprep.subr.bf16.mxu0 %v2145
    %2608 = vmatpush1.bf16.msra.mxu0 %v2144
    %2609 = vmatprep.subr.bf16.mxu0 %v2153
    %2610 = vmatpush1.bf16.msra.mxu0 %v2152
    %2611 = vmatprep.subr.bf16.mxu0 %v2161
    %2612 = vmatpush1.bf16.msra.mxu0 %v2160
    %2613 = vmatprep.subr.bf16.mxu0 %v2169
    %2614 = vmatpush1.bf16.msra.mxu0 %v2168
    %2615 = vmatprep.subr.bf16.mxu0 %v2177
    %2616 = vmatpush1.bf16.msra.mxu0 %v2176
    %2617 = vmatprep.subr.bf16.mxu0 %v2185
    %2618 = vmatpush1.bf16.msra.mxu0 %v2184
    %2619 = vmatprep.subr.bf16.mxu0 %v2193
    %2620 = vmatpush1.bf16.msra.mxu0 %v2192
    %2621 = vmatprep.subr.bf16.mxu0 %v2201
    %2622 = vmatpush1.bf16.msra.mxu0 %v2200
    %2623 = vmatprep.subr.bf16.mxu0 %v2209
    %2624 = vmatpush1.bf16.msra.mxu0 %v2208
    %2625 = vmatprep.mubr.bf16.mxu0 %v891
    %2626 = vmatmul.mubr.bf16.gmra.mrb[0].mxu0 %v890
    %v2627 = vpop.f32.mrb[0].mxu0
    %v2628 = vadd.f32 %v2587, %v2627
    %v2629 = vpop.f32.mrb[0].mxu0
    %v2630 = vadd.f32 %v2589, %v2629
    %v2631 = vpop.f32.mrb[0].mxu0
    %v2632 = vpop.f32.mrb[0].mxu0
    %2633 = vdwg.mxu0
    %2634 = vmatprep.subr.bf16.mxu0 %v1963
    %2635 = vmatpush1.bf16.msra.mxu0 %v1962
    %2636 = vmatprep.subr.bf16.mxu0 %v1971
    %2637 = vmatpush1.bf16.msra.mxu0 %v1970
    %2638 = vmatprep.subr.bf16.mxu0 %v1979
    %2639 = vmatpush1.bf16.msra.mxu0 %v1978
    %2640 = vmatprep.subr.bf16.mxu0 %v1987
    %2641 = vmatpush1.bf16.msra.mxu0 %v1986
    %2642 = vmatprep.subr.bf16.mxu0 %v1995
    %2643 = vmatpush1.bf16.msra.mxu0 %v1994
    %2644 = vmatprep.subr.bf16.mxu0 %v2003
    %2645 = vmatpush1.bf16.msra.mxu0 %v2002
    %2646 = vmatprep.subr.bf16.mxu0 %v2011
    %2647 = vmatpush1.bf16.msra.mxu0 %v2010
    %2648 = vmatprep.subr.bf16.mxu0 %v2019
    %2649 = vmatpush1.bf16.msra.mxu0 %v2018
    %2650 = vmatprep.subr.bf16.mxu0 %v2027
    %2651 = vmatpush1.bf16.msra.mxu0 %v2026
    %2652 = vmatprep.subr.bf16.mxu0 %v2035
    %2653 = vmatpush1.bf16.msra.mxu0 %v2034
    %2654 = vmatprep.subr.bf16.mxu0 %v2043
    %2655 = vmatpush1.bf16.msra.mxu0 %v2042
    %2656 = vmatprep.subr.bf16.mxu0 %v2051
    %2657 = vmatpush1.bf16.msra.mxu0 %v2050
    %2658 = vmatprep.subr.bf16.mxu0 %v2059
    %2659 = vmatpush1.bf16.msra.mxu0 %v2058
    %2660 = vmatprep.subr.bf16.mxu0 %v2067
    %2661 = vmatpush1.bf16.msra.mxu0 %v2066
    %2662 = vmatprep.subr.bf16.mxu0 %v2075
    %2663 = vmatpush1.bf16.msra.mxu0 %v2074
    %2664 = vmatprep.subr.bf16.mxu0 %v2083
    %2665 = vmatpush1.bf16.msra.mxu0 %v2082
    %2666 = vmatprep.mubr.bf16.mxu0 %v889
    %2667 = vmatmul.mubr.bf16.gmra.mrb[0].mxu0 %v888
    %v2668 = vpop.f32.mrb[0].mxu0
    %v2669 = vadd.f32 %v1169, %v2668
    %v2670 = vpop.f32.mrb[0].mxu0
    %v2671 = vadd.f32 %v1173, %v2670
    %v2672 = vpop.f32.mrb[0].mxu0
    %v2673 = vpop.f32.mrb[0].mxu0
    %2674 = vdwg.mxu0
    %2675 = vmatprep.subr.bf16.mxu0 %v2091
    %2676 = vmatpush1.bf16.msra.mxu0 %v2090
    %2677 = vmatprep.subr.bf16.mxu0 %v2099
    %2678 = vmatpush1.bf16.msra.mxu0 %v2098
    %2679 = vmatprep.subr.bf16.mxu0 %v2107
    %2680 = vmatpush1.bf16.msra.mxu0 %v2106
    %2681 = vmatprep.subr.bf16.mxu0 %v2115
    %2682 = vmatpush1.bf16.msra.mxu0 %v2114
    %2683 = vmatprep.subr.bf16.mxu0 %v2123
    %2684 = vmatpush1.bf16.msra.mxu0 %v2122
    %2685 = vmatprep.subr.bf16.mxu0 %v2131
    %2686 = vmatpush1.bf16.msra.mxu0 %v2130
    %2687 = vmatprep.subr.bf16.mxu0 %v2139
    %2688 = vmatpush1.bf16.msra.mxu0 %v2138
    %2689 = vmatprep.subr.bf16.mxu0 %v2147
    %2690 = vmatpush1.bf16.msra.mxu0 %v2146
    %2691 = vmatprep.subr.bf16.mxu0 %v2155
    %2692 = vmatpush1.bf16.msra.mxu0 %v2154
    %2693 = vmatprep.subr.bf16.mxu0 %v2163
    %2694 = vmatpush1.bf16.msra.mxu0 %v2162
    %2695 = vmatprep.subr.bf16.mxu0 %v2171
    %2696 = vmatpush1.bf16.msra.mxu0 %v2170
    %2697 = vmatprep.subr.bf16.mxu0 %v2179
    %2698 = vmatpush1.bf16.msra.mxu0 %v2178
    %2699 = vmatprep.subr.bf16.mxu0 %v2187
    %2700 = vmatpush1.bf16.msra.mxu0 %v2186
    %2701 = vmatprep.subr.bf16.mxu0 %v2195
    %2702 = vmatpush1.bf16.msra.mxu0 %v2194
    %2703 = vmatprep.subr.bf16.mxu0 %v2203
    %2704 = vmatpush1.bf16.msra.mxu0 %v2202
    %2705 = vmatprep.subr.bf16.mxu0 %v2211
    %2706 = vmatpush1.bf16.msra.mxu0 %v2210
    %2707 = vmatprep.mubr.bf16.mxu0 %v891
    %2708 = vmatmul.mubr.bf16.gmra.mrb[0].mxu0 %v890
    %v2709 = vpop.f32.mrb[0].mxu0
    %v2710 = vadd.f32 %v2669, %v2709
    %v2711 = vpop.f32.mrb[0].mxu0
    %v2712 = vadd.f32 %v2671, %v2711
    %v2713 = vpop.f32.mrb[0].mxu0
    %v2714 = vpop.f32.mrb[0].mxu0
    %2715 = vdwg.mxu0
    %2716 = vmatprep.subr.bf16.mxu0 %v1965
    %2717 = vmatpush1.bf16.msra.mxu0 %v1964
    %2718 = vmatprep.subr.bf16.mxu0 %v1973
    %2719 = vmatpush1.bf16.msra.mxu0 %v1972
    %2720 = vmatprep.subr.bf16.mxu0 %v1981
    %2721 = vmatpush1.bf16.msra.mxu0 %v1980
    %2722 = vmatprep.subr.bf16.mxu0 %v1989
    %2723 = vmatpush1.bf16.msra.mxu0 %v1988
    %2724 = vmatprep.subr.bf16.mxu0 %v1997
    %2725 = vmatpush1.bf16.msra.mxu0 %v1996
    %2726 = vmatprep.subr.bf16.mxu0 %v2005
    %2727 = vmatpush1.bf16.msra.mxu0 %v2004
    %2728 = vmatprep.subr.bf16.mxu0 %v2013
    %2729 = vmatpush1.bf16.msra.mxu0 %v2012
    %2730 = vmatprep.subr.bf16.mxu0 %v2021
    %2731 = vmatpush1.bf16.msra.mxu0 %v2020
    %2732 = vmatprep.subr.bf16.mxu0 %v2029
    %2733 = vmatpush1.bf16.msra.mxu0 %v2028
    %2734 = vmatprep.subr.bf16.mxu0 %v2037
    %2735 = vmatpush1.bf16.msra.mxu0 %v2036
    %2736 = vmatprep.subr.bf16.mxu0 %v2045
    %2737 = vmatpush1.bf16.msra.mxu0 %v2044
    %2738 = vmatprep.subr.bf16.mxu0 %v2053
    %2739 = vmatpush1.bf16.msra.mxu0 %v2052
    %2740 = vmatprep.subr.bf16.mxu0 %v2061
    %2741 = vmatpush1.bf16.msra.mxu0 %v2060
    %2742 = vmatprep.subr.bf16.mxu0 %v2069
    %2743 = vmatpush1.bf16.msra.mxu0 %v2068
    %2744 = vmatprep.subr.bf16.mxu0 %v2077
    %2745 = vmatpush1.bf16.msra.mxu0 %v2076
    %2746 = vmatprep.subr.bf16.mxu0 %v2085
    %2747 = vmatpush1.bf16.msra.mxu0 %v2084
    %2748 = vmatprep.mubr.bf16.mxu0 %v889
    %2749 = vmatmul.mubr.bf16.gmra.mrb[0].mxu0 %v888
    %v2750 = vpop.f32.mrb[0].mxu0
    %v2751 = vadd.f32 %v1177, %v2750
    %v2752 = vpop.f32.mrb[0].mxu0
    %v2753 = vadd.f32 %v1181, %v2752
    %v2754 = vpop.f32.mrb[0].mxu0
    %v2755 = vpop.f32.mrb[0].mxu0
    %2756 = vdwg.mxu0
    %2757 = vmatprep.subr.bf16.mxu0 %v2093
    %2758 = vmatpush1.bf16.msra.mxu0 %v2092
    %2759 = vmatprep.subr.bf16.mxu0 %v2101
    %2760 = vmatpush1.bf16.msra.mxu0 %v2100
    %2761 = vmatprep.subr.bf16.mxu0 %v2109
    %2762 = vmatpush1.bf16.msra.mxu0 %v2108
    %2763 = vmatprep.subr.bf16.mxu0 %v2117
    %2764 = vmatpush1.bf16.msra.mxu0 %v2116
    %2765 = vmatprep.subr.bf16.mxu0 %v2125
    %2766 = vmatpush1.bf16.msra.mxu0 %v2124
    %2767 = vmatprep.subr.bf16.mxu0 %v2133
    %2768 = vmatpush1.bf16.msra.mxu0 %v2132
    %2769 = vmatprep.subr.bf16.mxu0 %v2141
    %2770 = vmatpush1.bf16.msra.mxu0 %v2140
    %2771 = vmatprep.subr.bf16.mxu0 %v2149
    %2772 = vmatpush1.bf16.msra.mxu0 %v2148
    %2773 = vmatprep.subr.bf16.mxu0 %v2157
    %2774 = vmatpush1.bf16.msra.mxu0 %v2156
    %2775 = vmatprep.subr.bf16.mxu0 %v2165
    %2776 = vmatpush1.bf16.msra.mxu0 %v2164
    %2777 = vmatprep.subr.bf16.mxu0 %v2173
    %2778 = vmatpush1.bf16.msra.mxu0 %v2172
    %2779 = vmatprep.subr.bf16.mxu0 %v2181
    %2780 = vmatpush1.bf16.msra.mxu0 %v2180
    %2781 = vmatprep.subr.bf16.mxu0 %v2189
    %2782 = vmatpush1.bf16.msra.mxu0 %v2188
    %2783 = vmatprep.subr.bf16.mxu0 %v2197
    %2784 = vmatpush1.bf16.msra.mxu0 %v2196
    %2785 = vmatprep.subr.bf16.mxu0 %v2205
    %2786 = vmatpush1.bf16.msra.mxu0 %v2204
    %2787 = vmatprep.subr.bf16.mxu0 %v2213
    %2788 = vmatpush1.bf16.msra.mxu0 %v2212
    %2789 = vmatprep.mubr.bf16.mxu0 %v891
    %2790 = vmatmul.mubr.bf16.gmra.mrb[0].mxu0 %v890
    %v2791 = vpop.f32.mrb[0].mxu0
    %v2792 = vadd.f32 %v2751, %v2791
    %v2793 = vpop.f32.mrb[0].mxu0
    %v2794 = vadd.f32 %v2753, %v2793
    %v2795 = vpop.f32.mrb[0].mxu0
    %v2796 = vpop.f32.mrb[0].mxu0
    %2797 = vdwg.mxu0
    %v2806 = vcombine.low %v2546, %v2548
    %v2807 = vcombine.high %v2546, %v2548
    %v2808 = vcombine.low %v2628, %v2630
    %v2809 = vcombine.high %v2628, %v2630
    %v2810 = vcombine.low %v2710, %v2712
    %v2811 = vcombine.high %v2710, %v2712
    %v2812 = vcombine.low %v2792, %v2794
    %v2813 = vcombine.high %v2792, %v2794
    %v2822 = vcombine.high %v2806, %v2806
    %v2823 = vcombine.high %v2808, %v2808
    %v2824 = vcombine.high %v2810, %v2810
    %v2825 = vcombine.high %v2812, %v2812
    %v2826 = vcombine.high %v2807, %v2807
    %v2827 = vcombine.high %v2809, %v2809
    %v2828 = vcombine.high %v2811, %v2811
    %v2829 = vcombine.high %v2813, %v2813
    %vm2838 = vcmask 1043456
    %v2839 = vsel %vm2838, %v2806, -inf
    %v2840 = vrot.slane %v2839, 4
    %v2841 = vmax.f32 %v2839, %v2840
    %v2842 = vrot.slane %v2841, 2
    %v2843 = vmax.f32 %v2841, %v2842
    %v2844 = vrot.slane %v2843, 1
    %v2845 = vmax.f32 %v2843, %v2844
    %v2846 = vsel %vm2838, %v2822, -inf
    %v2847 = vrot.slane %v2846, 4
    %v2848 = vmax.f32 %v2846, %v2847
    %v2849 = vrot.slane %v2848, 2
    %v2850 = vmax.f32 %v2848, %v2849
    %v2851 = vrot.slane %v2850, 1
    %v2852 = vmax.f32 %v2850, %v2851
    %v2853 = vsel %vm2838, %v2808, -inf
    %v2854 = vrot.slane %v2853, 4
    %v2855 = vmax.f32 %v2853, %v2854
    %v2856 = vrot.slane %v2855, 2
    %v2857 = vmax.f32 %v2855, %v2856
    %v2858 = vrot.slane %v2857, 1
    %v2859 = vmax.f32 %v2857, %v2858
    %v2860 = vsel %vm2838, %v2823, -inf
    %v2861 = vrot.slane %v2860, 4
    %v2862 = vmax.f32 %v2860, %v2861
    %v2863 = vrot.slane %v2862, 2
    %v2864 = vmax.f32 %v2862, %v2863
    %v2865 = vrot.slane %v2864, 1
    %v2866 = vmax.f32 %v2864, %v2865
    %v2867 = vsel %vm2838, %v2810, -inf
    %v2868 = vrot.slane %v2867, 4
    %v2869 = vmax.f32 %v2867, %v2868
    %v2870 = vrot.slane %v2869, 2
    %v2871 = vmax.f32 %v2869, %v2870
    %v2872 = vrot.slane %v2871, 1
    %v2873 = vmax.f32 %v2871, %v2872
    %v2874 = vsel %vm2838, %v2824, -inf
    %v2875 = vrot.slane %v2874, 4
    %v2876 = vmax.f32 %v2874, %v2875
    %v2877 = vrot.slane %v2876, 2
    %v2878 = vmax.f32 %v2876, %v2877
    %v2879 = vrot.slane %v2878, 1
    %v2880 = vmax.f32 %v2878, %v2879
    %v2881 = vsel %vm2838, %v2812, -inf
    %v2882 = vrot.slane %v2881, 4
    %v2883 = vmax.f32 %v2881, %v2882
    %v2884 = vrot.slane %v2883, 2
    %v2885 = vmax.f32 %v2883, %v2884
    %v2886 = vrot.slane %v2885, 1
    %v2887 = vmax.f32 %v2885, %v2886
    %v2888 = vsel %vm2838, %v2825, -inf
    %v2889 = vrot.slane %v2888, 4
    %v2890 = vmax.f32 %v2888, %v2889
    %v2891 = vrot.slane %v2890, 2
    %v2892 = vmax.f32 %v2890, %v2891
    %v2893 = vrot.slane %v2892, 1
    %v2894 = vmax.f32 %v2892, %v2893
    %v2895 = vsel %vm2838, %v2807, -inf
    %v2896 = vrot.slane %v2895, 4
    %v2897 = vmax.f32 %v2895, %v2896
    %v2898 = vrot.slane %v2897, 2
    %v2899 = vmax.f32 %v2897, %v2898
    %v2900 = vrot.slane %v2899, 1
    %v2901 = vmax.f32 %v2899, %v2900
    %v2902 = vsel %vm2838, %v2826, -inf
    %v2903 = vrot.slane %v2902, 4
    %v2904 = vmax.f32 %v2902, %v2903
    %v2905 = vrot.slane %v2904, 2
    %v2906 = vmax.f32 %v2904, %v2905
    %v2907 = vrot.slane %v2906, 1
    %v2908 = vmax.f32 %v2906, %v2907
    %v2909 = vsel %vm2838, %v2809, -inf
    %v2910 = vrot.slane %v2909, 4
    %v2911 = vmax.f32 %v2909, %v2910
    %v2912 = vrot.slane %v2911, 2
    %v2913 = vmax.f32 %v2911, %v2912
    %v2914 = vrot.slane %v2913, 1
    %v2915 = vmax.f32 %v2913, %v2914
    %v2916 = vsel %vm2838, %v2827, -inf
    %v2917 = vrot.slane %v2916, 4
    %v2918 = vmax.f32 %v2916, %v2917
    %v2919 = vrot.slane %v2918, 2
    %v2920 = vmax.f32 %v2918, %v2919
    %v2921 = vrot.slane %v2920, 1
    %v2922 = vmax.f32 %v2920, %v2921
    %v2923 = vsel %vm2838, %v2811, -inf
    %v2924 = vrot.slane %v2923, 4
    %v2925 = vmax.f32 %v2923, %v2924
    %v2926 = vrot.slane %v2925, 2
    %v2927 = vmax.f32 %v2925, %v2926
    %v2928 = vrot.slane %v2927, 1
    %v2929 = vmax.f32 %v2927, %v2928
    %v2930 = vsel %vm2838, %v2828, -inf
    %v2931 = vrot.slane %v2930, 4
    %v2932 = vmax.f32 %v2930, %v2931
    %v2933 = vrot.slane %v2932, 2
    %v2934 = vmax.f32 %v2932, %v2933
    %v2935 = vrot.slane %v2934, 1
    %v2936 = vmax.f32 %v2934, %v2935
    %v2937 = vsel %vm2838, %v2813, -inf
    %v2938 = vrot.slane %v2937, 4
    %v2939 = vmax.f32 %v2937, %v2938
    %v2940 = vrot.slane %v2939, 2
    %v2941 = vmax.f32 %v2939, %v2940
    %v2942 = vrot.slane %v2941, 1
    %v2943 = vmax.f32 %v2941, %v2942
    %v2944 = vsel %vm2838, %v2829, -inf
    %v2945 = vrot.slane %v2944, 4
    %v2946 = vmax.f32 %v2944, %v2945
    %v2947 = vrot.slane %v2946, 2
    %v2948 = vmax.f32 %v2946, %v2947
    %v2949 = vrot.slane %v2948, 1
    %v2950 = vmax.f32 %v2948, %v2949
    %v2951 = vpack.c.bf16 %v2845, %v2845
    %v2952 = vpack.c.bf16 %v2852, %v2852
    %v2953 = vpack.c.bf16 %v2859, %v2859
    %v2954 = vpack.c.bf16 %v2866, %v2866
    %v2955 = vpack.c.bf16 %v2873, %v2873
    %v2956 = vpack.c.bf16 %v2880, %v2880
    %v2957 = vpack.c.bf16 %v2887, %v2887
    %v2958 = vpack.c.bf16 %v2894, %v2894
    %v2959 = vpack.c.bf16 %v2901, %v2901
    %v2960 = vpack.c.bf16 %v2908, %v2908
    %v2961 = vpack.c.bf16 %v2915, %v2915
    %v2962 = vpack.c.bf16 %v2922, %v2922
    %v2963 = vpack.c.bf16 %v2929, %v2929
    %v2964 = vpack.c.bf16 %v2936, %v2936
    %v2965 = vpack.c.bf16 %v2943, %v2943
    %v2966 = vpack.c.bf16 %v2950, %v2950
    %v2967 = vld [vmem:[%s9] sm:$0xff]
    %v2968 = vld [vmem:[%s9 + $0x8] sm:$0xff]
    %v2969 = vld [vmem:[%s9 + $0x10] sm:$0xff]
    %v2970 = vld [vmem:[%s9 + $0x18] sm:$0xff]
    %v2971 = vld [vmem:[%s9 + $0x20] sm:$0xff]
    %v2972 = vld [vmem:[%s9 + $0x28] sm:$0xff]
    %v2973 = vld [vmem:[%s9 + $0x30] sm:$0xff]
    %v2974 = vld [vmem:[%s9 + $0x38] sm:$0xff]
    %v2975 = vld [vmem:[%s9 + $0x40] sm:$0xff]
    %v2976 = vld [vmem:[%s9 + $0x48] sm:$0xff]
    %v2977 = vld [vmem:[%s9 + $0x50] sm:$0xff]
    %v2978 = vld [vmem:[%s9 + $0x58] sm:$0xff]
    %v2979 = vld [vmem:[%s9 + $0x60] sm:$0xff]
    %v2980 = vld [vmem:[%s9 + $0x68] sm:$0xff]
    %v2981 = vld [vmem:[%s9 + $0x70] sm:$0xff]
    %v2982 = vld [vmem:[%s9 + $0x78] sm:$0xff]
    %v2983 = vld [vmem:[%s9 + $0x80] sm:$0xff]
    %v2984 = vld [vmem:[%s9 + $0x88] sm:$0xff]
    %v2985 = vld [vmem:[%s9 + $0x90] sm:$0xff]
    %v2986 = vld [vmem:[%s9 + $0x98] sm:$0xff]
    %v2987 = vld [vmem:[%s9 + $0xa0] sm:$0xff]
    %v2988 = vld [vmem:[%s9 + $0xa8] sm:$0xff]
    %v2989 = vld [vmem:[%s9 + $0xb0] sm:$0xff]
    %v2990 = vld [vmem:[%s9 + $0xb8] sm:$0xff]
    %v2991 = vld [vmem:[%s9 + $0xc0] sm:$0xff]
    %v2992 = vld [vmem:[%s9 + $0xc8] sm:$0xff]
    %v2993 = vld [vmem:[%s9 + $0xd0] sm:$0xff]
    %v2994 = vld [vmem:[%s9 + $0xd8] sm:$0xff]
    %v2995 = vld [vmem:[%s9 + $0xe0] sm:$0xff]
    %v2996 = vld [vmem:[%s9 + $0xe8] sm:$0xff]
    %v2997 = vld [vmem:[%s9 + $0xf0] sm:$0xff]
    %v2998 = vld [vmem:[%s9 + $0xf8] sm:$0xff]
    %v2999 = vld [vmem:[%s9 + $0x100] sm:$0xff]
    %v3000 = vld [vmem:[%s9 + $0x108] sm:$0xff]
    %v3001 = vld [vmem:[%s9 + $0x110] sm:$0xff]
    %v3002 = vld [vmem:[%s9 + $0x118] sm:$0xff]
    %v3003 = vld [vmem:[%s9 + $0x120] sm:$0xff]
    %v3004 = vld [vmem:[%s9 + $0x128] sm:$0xff]
    %v3005 = vld [vmem:[%s9 + $0x130] sm:$0xff]
    %v3006 = vld [vmem:[%s9 + $0x138] sm:$0xff]
    %v3007 = vld [vmem:[%s9 + $0x140] sm:$0xff]
    %v3008 = vld [vmem:[%s9 + $0x148] sm:$0xff]
    %v3009 = vld [vmem:[%s9 + $0x150] sm:$0xff]
    %v3010 = vld [vmem:[%s9 + $0x158] sm:$0xff]
    %v3011 = vld [vmem:[%s9 + $0x160] sm:$0xff]
    %v3012 = vld [vmem:[%s9 + $0x168] sm:$0xff]
    %v3013 = vld [vmem:[%s9 + $0x170] sm:$0xff]
    %v3014 = vld [vmem:[%s9 + $0x178] sm:$0xff]
    %v3015 = vld [vmem:[%s9 + $0x180] sm:$0xff]
    %v3016 = vld [vmem:[%s9 + $0x188] sm:$0xff]
    %v3017 = vld [vmem:[%s9 + $0x190] sm:$0xff]
    %v3018 = vld [vmem:[%s9 + $0x198] sm:$0xff]
    %v3019 = vld [vmem:[%s9 + $0x1a0] sm:$0xff]
    %v3020 = vld [vmem:[%s9 + $0x1a8] sm:$0xff]
    %v3021 = vld [vmem:[%s9 + $0x1b0] sm:$0xff]
    %v3022 = vld [vmem:[%s9 + $0x1b8] sm:$0xff]
    %v3023 = vld [vmem:[%s9 + $0x1c0] sm:$0xff]
    %v3024 = vld [vmem:[%s9 + $0x1c8] sm:$0xff]
    %v3025 = vld [vmem:[%s9 + $0x1d0] sm:$0xff]
    %v3026 = vld [vmem:[%s9 + $0x1d8] sm:$0xff]
    %v3027 = vld [vmem:[%s9 + $0x1e0] sm:$0xff]
    %v3028 = vld [vmem:[%s9 + $0x1e8] sm:$0xff]
    %v3029 = vld [vmem:[%s9 + $0x1f0] sm:$0xff]
    %v3030 = vld [vmem:[%s9 + $0x1f8] sm:$0xff]
    %v3031 = vld [vmem:[%s9 + $0x200] sm:$0xff]
    %v3032 = vld [vmem:[%s9 + $0x208] sm:$0xff]
    %v3033 = vld [vmem:[%s9 + $0x210] sm:$0xff]
    %v3034 = vld [vmem:[%s9 + $0x218] sm:$0xff]
    %v3035 = vld [vmem:[%s9 + $0x220] sm:$0xff]
    %v3036 = vld [vmem:[%s9 + $0x228] sm:$0xff]
    %v3037 = vld [vmem:[%s9 + $0x230] sm:$0xff]
    %v3038 = vld [vmem:[%s9 + $0x238] sm:$0xff]
    %v3039 = vld [vmem:[%s9 + $0x240] sm:$0xff]
    %v3040 = vld [vmem:[%s9 + $0x248] sm:$0xff]
    %v3041 = vld [vmem:[%s9 + $0x250] sm:$0xff]
    %v3042 = vld [vmem:[%s9 + $0x258] sm:$0xff]
    %v3043 = vld [vmem:[%s9 + $0x260] sm:$0xff]
    %v3044 = vld [vmem:[%s9 + $0x268] sm:$0xff]
    %v3045 = vld [vmem:[%s9 + $0x270] sm:$0xff]
    %v3046 = vld [vmem:[%s9 + $0x278] sm:$0xff]
    %v3047 = vld [vmem:[%s9 + $0x280] sm:$0xff]
    %v3048 = vld [vmem:[%s9 + $0x288] sm:$0xff]
    %v3049 = vld [vmem:[%s9 + $0x290] sm:$0xff]
    %v3050 = vld [vmem:[%s9 + $0x298] sm:$0xff]
    %v3051 = vld [vmem:[%s9 + $0x2a0] sm:$0xff]
    %v3052 = vld [vmem:[%s9 + $0x2a8] sm:$0xff]
    %v3053 = vld [vmem:[%s9 + $0x2b0] sm:$0xff]
    %v3054 = vld [vmem:[%s9 + $0x2b8] sm:$0xff]
    %v3055 = vld [vmem:[%s9 + $0x2c0] sm:$0xff]
    %v3056 = vld [vmem:[%s9 + $0x2c8] sm:$0xff]
    %v3057 = vld [vmem:[%s9 + $0x2d0] sm:$0xff]
    %v3058 = vld [vmem:[%s9 + $0x2d8] sm:$0xff]
    %v3059 = vld [vmem:[%s9 + $0x2e0] sm:$0xff]
    %v3060 = vld [vmem:[%s9 + $0x2e8] sm:$0xff]
    %v3061 = vld [vmem:[%s9 + $0x2f0] sm:$0xff]
    %v3062 = vld [vmem:[%s9 + $0x2f8] sm:$0xff]
    %v3063 = vld [vmem:[%s9 + $0x300] sm:$0xff]
    %v3064 = vld [vmem:[%s9 + $0x308] sm:$0xff]
    %v3065 = vld [vmem:[%s9 + $0x310] sm:$0xff]
    %v3066 = vld [vmem:[%s9 + $0x318] sm:$0xff]
    %v3067 = vld [vmem:[%s9 + $0x320] sm:$0xff]
    %v3068 = vld [vmem:[%s9 + $0x328] sm:$0xff]
    %v3069 = vld [vmem:[%s9 + $0x330] sm:$0xff]
    %v3070 = vld [vmem:[%s9 + $0x338] sm:$0xff]
    %v3071 = vld [vmem:[%s9 + $0x340] sm:$0xff]
    %v3072 = vld [vmem:[%s9 + $0x348] sm:$0xff]
    %v3073 = vld [vmem:[%s9 + $0x350] sm:$0xff]
    %v3074 = vld [vmem:[%s9 + $0x358] sm:$0xff]
    %v3075 = vld [vmem:[%s9 + $0x360] sm:$0xff]
    %v3076 = vld [vmem:[%s9 + $0x368] sm:$0xff]
    %v3077 = vld [vmem:[%s9 + $0x370] sm:$0xff]
    %v3078 = vld [vmem:[%s9 + $0x378] sm:$0xff]
    %v3079 = vld [vmem:[%s9 + $0x380] sm:$0xff]
    %v3080 = vld [vmem:[%s9 + $0x388] sm:$0xff]
    %v3081 = vld [vmem:[%s9 + $0x390] sm:$0xff]
    %v3082 = vld [vmem:[%s9 + $0x398] sm:$0xff]
    %v3083 = vld [vmem:[%s9 + $0x3a0] sm:$0xff]
    %v3084 = vld [vmem:[%s9 + $0x3a8] sm:$0xff]
    %v3085 = vld [vmem:[%s9 + $0x3b0] sm:$0xff]
    %v3086 = vld [vmem:[%s9 + $0x3b8] sm:$0xff]
    %v3087 = vld [vmem:[%s9 + $0x3c0] sm:$0xff]
    %v3088 = vld [vmem:[%s9 + $0x3c8] sm:$0xff]
    %v3089 = vld [vmem:[%s9 + $0x3d0] sm:$0xff]
    %v3090 = vld [vmem:[%s9 + $0x3d8] sm:$0xff]
    %v3091 = vld [vmem:[%s9 + $0x3e0] sm:$0xff]
    %v3092 = vld [vmem:[%s9 + $0x3e8] sm:$0xff]
    %v3093 = vld [vmem:[%s9 + $0x3f0] sm:$0xff]
    %v3094 = vld [vmem:[%s9 + $0x3f8] sm:$0xff]
    %v3095 = vld [vmem:[%s9 + $0x400] sm:$0xff]
    %v3096 = vld [vmem:[%s9 + $0x408] sm:$0xff]
    %v3097 = vld [vmem:[%s9 + $0x410] sm:$0xff]
    %v3098 = vld [vmem:[%s9 + $0x418] sm:$0xff]
    %v3099 = vld [vmem:[%s9 + $0x420] sm:$0xff]
    %v3100 = vld [vmem:[%s9 + $0x428] sm:$0xff]
    %v3101 = vld [vmem:[%s9 + $0x430] sm:$0xff]
    %v3102 = vld [vmem:[%s9 + $0x438] sm:$0xff]
    %v3103 = vld [vmem:[%s9 + $0x440] sm:$0xff]
    %v3104 = vld [vmem:[%s9 + $0x448] sm:$0xff]
    %v3105 = vld [vmem:[%s9 + $0x450] sm:$0xff]
    %v3106 = vld [vmem:[%s9 + $0x458] sm:$0xff]
    %v3107 = vld [vmem:[%s9 + $0x460] sm:$0xff]
    %v3108 = vld [vmem:[%s9 + $0x468] sm:$0xff]
    %v3109 = vld [vmem:[%s9 + $0x470] sm:$0xff]
    %v3110 = vld [vmem:[%s9 + $0x478] sm:$0xff]
    %v3111 = vld [vmem:[%s9 + $0x480] sm:$0xff]
    %v3112 = vld [vmem:[%s9 + $0x488] sm:$0xff]
    %v3113 = vld [vmem:[%s9 + $0x490] sm:$0xff]
    %v3114 = vld [vmem:[%s9 + $0x498] sm:$0xff]
    %v3115 = vld [vmem:[%s9 + $0x4a0] sm:$0xff]
    %v3116 = vld [vmem:[%s9 + $0x4a8] sm:$0xff]
    %v3117 = vld [vmem:[%s9 + $0x4b0] sm:$0xff]
    %v3118 = vld [vmem:[%s9 + $0x4b8] sm:$0xff]
    %v3119 = vld [vmem:[%s9 + $0x4c0] sm:$0xff]
    %v3120 = vld [vmem:[%s9 + $0x4c8] sm:$0xff]
    %v3121 = vld [vmem:[%s9 + $0x4d0] sm:$0xff]
    %v3122 = vld [vmem:[%s9 + $0x4d8] sm:$0xff]
    %v3123 = vld [vmem:[%s9 + $0x4e0] sm:$0xff]
    %v3124 = vld [vmem:[%s9 + $0x4e8] sm:$0xff]
    %v3125 = vld [vmem:[%s9 + $0x4f0] sm:$0xff]
    %v3126 = vld [vmem:[%s9 + $0x4f8] sm:$0xff]
    %v3127 = vld [vmem:[%s9 + $0x500] sm:$0xff]
    %v3128 = vld [vmem:[%s9 + $0x508] sm:$0xff]
    %v3129 = vld [vmem:[%s9 + $0x510] sm:$0xff]
    %v3130 = vld [vmem:[%s9 + $0x518] sm:$0xff]
    %v3131 = vld [vmem:[%s9 + $0x520] sm:$0xff]
    %v3132 = vld [vmem:[%s9 + $0x528] sm:$0xff]
    %v3133 = vld [vmem:[%s9 + $0x530] sm:$0xff]
    %v3134 = vld [vmem:[%s9 + $0x538] sm:$0xff]
    %v3135 = vld [vmem:[%s9 + $0x540] sm:$0xff]
    %v3136 = vld [vmem:[%s9 + $0x548] sm:$0xff]
    %v3137 = vld [vmem:[%s9 + $0x550] sm:$0xff]
    %v3138 = vld [vmem:[%s9 + $0x558] sm:$0xff]
    %v3139 = vld [vmem:[%s9 + $0x560] sm:$0xff]
    %v3140 = vld [vmem:[%s9 + $0x568] sm:$0xff]
    %v3141 = vld [vmem:[%s9 + $0x570] sm:$0xff]
    %v3142 = vld [vmem:[%s9 + $0x578] sm:$0xff]
    %v3143 = vld [vmem:[%s9 + $0x580] sm:$0xff]
    %v3144 = vld [vmem:[%s9 + $0x588] sm:$0xff]
    %v3145 = vld [vmem:[%s9 + $0x590] sm:$0xff]
    %v3146 = vld [vmem:[%s9 + $0x598] sm:$0xff]
    %v3147 = vld [vmem:[%s9 + $0x5a0] sm:$0xff]
    %v3148 = vld [vmem:[%s9 + $0x5a8] sm:$0xff]
    %v3149 = vld [vmem:[%s9 + $0x5b0] sm:$0xff]
    %v3150 = vld [vmem:[%s9 + $0x5b8] sm:$0xff]
    %v3151 = vld [vmem:[%s9 + $0x5c0] sm:$0xff]
    %v3152 = vld [vmem:[%s9 + $0x5c8] sm:$0xff]
    %v3153 = vld [vmem:[%s9 + $0x5d0] sm:$0xff]
    %v3154 = vld [vmem:[%s9 + $0x5d8] sm:$0xff]
    %v3155 = vld [vmem:[%s9 + $0x5e0] sm:$0xff]
    %v3156 = vld [vmem:[%s9 + $0x5e8] sm:$0xff]
    %v3157 = vld [vmem:[%s9 + $0x5f0] sm:$0xff]
    %v3158 = vld [vmem:[%s9 + $0x5f8] sm:$0xff]
    %v3159 = vld [vmem:[%s9 + $0x600] sm:$0xff]
    %v3160 = vld [vmem:[%s9 + $0x608] sm:$0xff]
    %v3161 = vld [vmem:[%s9 + $0x610] sm:$0xff]
    %v3162 = vld [vmem:[%s9 + $0x618] sm:$0xff]
    %v3163 = vld [vmem:[%s9 + $0x620] sm:$0xff]
    %v3164 = vld [vmem:[%s9 + $0x628] sm:$0xff]
    %v3165 = vld [vmem:[%s9 + $0x630] sm:$0xff]
    %v3166 = vld [vmem:[%s9 + $0x638] sm:$0xff]
    %v3167 = vld [vmem:[%s9 + $0x640] sm:$0xff]
    %v3168 = vld [vmem:[%s9 + $0x648] sm:$0xff]
    %v3169 = vld [vmem:[%s9 + $0x650] sm:$0xff]
    %v3170 = vld [vmem:[%s9 + $0x658] sm:$0xff]
    %v3171 = vld [vmem:[%s9 + $0x660] sm:$0xff]
    %v3172 = vld [vmem:[%s9 + $0x668] sm:$0xff]
    %v3173 = vld [vmem:[%s9 + $0x670] sm:$0xff]
    %v3174 = vld [vmem:[%s9 + $0x678] sm:$0xff]
    %v3175 = vld [vmem:[%s9 + $0x680] sm:$0xff]
    %v3176 = vld [vmem:[%s9 + $0x688] sm:$0xff]
    %v3177 = vld [vmem:[%s9 + $0x690] sm:$0xff]
    %v3178 = vld [vmem:[%s9 + $0x698] sm:$0xff]
    %v3179 = vld [vmem:[%s9 + $0x6a0] sm:$0xff]
    %v3180 = vld [vmem:[%s9 + $0x6a8] sm:$0xff]
    %v3181 = vld [vmem:[%s9 + $0x6b0] sm:$0xff]
    %v3182 = vld [vmem:[%s9 + $0x6b8] sm:$0xff]
    %v3183 = vld [vmem:[%s9 + $0x6c0] sm:$0xff]
    %v3184 = vld [vmem:[%s9 + $0x6c8] sm:$0xff]
    %v3185 = vld [vmem:[%s9 + $0x6d0] sm:$0xff]
    %v3186 = vld [vmem:[%s9 + $0x6d8] sm:$0xff]
    %v3187 = vld [vmem:[%s9 + $0x6e0] sm:$0xff]
    %v3188 = vld [vmem:[%s9 + $0x6e8] sm:$0xff]
    %v3189 = vld [vmem:[%s9 + $0x6f0] sm:$0xff]
    %v3190 = vld [vmem:[%s9 + $0x6f8] sm:$0xff]
    %v3191 = vld [vmem:[%s9 + $0x700] sm:$0xff]
    %v3192 = vld [vmem:[%s9 + $0x708] sm:$0xff]
    %v3193 = vld [vmem:[%s9 + $0x710] sm:$0xff]
    %v3194 = vld [vmem:[%s9 + $0x718] sm:$0xff]
    %v3195 = vld [vmem:[%s9 + $0x720] sm:$0xff]
    %v3196 = vld [vmem:[%s9 + $0x728] sm:$0xff]
    %v3197 = vld [vmem:[%s9 + $0x730] sm:$0xff]
    %v3198 = vld [vmem:[%s9 + $0x738] sm:$0xff]
    %v3199 = vld [vmem:[%s9 + $0x740] sm:$0xff]
    %v3200 = vld [vmem:[%s9 + $0x748] sm:$0xff]
    %v3201 = vld [vmem:[%s9 + $0x750] sm:$0xff]
    %v3202 = vld [vmem:[%s9 + $0x758] sm:$0xff]
    %v3203 = vld [vmem:[%s9 + $0x760] sm:$0xff]
    %v3204 = vld [vmem:[%s9 + $0x768] sm:$0xff]
    %v3205 = vld [vmem:[%s9 + $0x770] sm:$0xff]
    %v3206 = vld [vmem:[%s9 + $0x778] sm:$0xff]
    %v3207 = vld [vmem:[%s9 + $0x780] sm:$0xff]
    %v3208 = vld [vmem:[%s9 + $0x788] sm:$0xff]
    %v3209 = vld [vmem:[%s9 + $0x790] sm:$0xff]
    %v3210 = vld [vmem:[%s9 + $0x798] sm:$0xff]
    %v3211 = vld [vmem:[%s9 + $0x7a0] sm:$0xff]
    %v3212 = vld [vmem:[%s9 + $0x7a8] sm:$0xff]
    %v3213 = vld [vmem:[%s9 + $0x7b0] sm:$0xff]
    %v3214 = vld [vmem:[%s9 + $0x7b8] sm:$0xff]
    %v3215 = vld [vmem:[%s9 + $0x7c0] sm:$0xff]
    %v3216 = vld [vmem:[%s9 + $0x7c8] sm:$0xff]
    %v3217 = vld [vmem:[%s9 + $0x7d0] sm:$0xff]
    %v3218 = vld [vmem:[%s9 + $0x7d8] sm:$0xff]
    %v3219 = vld [vmem:[%s9 + $0x7e0] sm:$0xff]
    %v3220 = vld [vmem:[%s9 + $0x7e8] sm:$0xff]
    %v3221 = vld [vmem:[%s9 + $0x7f0] sm:$0xff]
    %v3222 = vld [vmem:[%s9 + $0x7f8] sm:$0xff]
    %v3223 = vld [vmem:[%s10] sm:$0xf]
    %v3225 = vlaneseq
    %v3226 = vshrl.u32 %v3225, 7
    %v3227 = vsub.s32 0, %v3226
    %v3228 = vrot.slane %v3223, %v3227
    %v3229 = vlaneseq
    %v3230 = vshrl.u32 %v3229, 7
    %v3231 = vsub.s32 1, %v3230
    %v3232 = vrot.slane %v3223, %v3231
    %v3233 = vlaneseq
    %v3234 = vshrl.u32 %v3233, 7
    %v3235 = vsub.s32 2, %v3234
    %v3236 = vrot.slane %v3223, %v3235
    %v3237 = vlaneseq
    %v3238 = vshrl.u32 %v3237, 7
    %v3239 = vsub.s32 3, %v3238
    %v3240 = vrot.slane %v3223, %v3239
    %v3261 = vunpack.c.l.b16 %v2951
    %v3262 = vunpack.c.l.b16 %v2952
    %v3263 = vunpack.c.l.b16 %v2953
    %v3264 = vunpack.c.l.b16 %v2954
    %v3265 = vunpack.c.l.b16 %v2955
    %v3266 = vunpack.c.l.b16 %v2956
    %v3267 = vunpack.c.l.b16 %v2957
    %v3268 = vunpack.c.l.b16 %v2958
    %v3269 = vunpack.c.l.b16 %v2959
    %v3270 = vunpack.c.l.b16 %v2960
    %v3271 = vunpack.c.l.b16 %v2961
    %v3272 = vunpack.c.l.b16 %v2962
    %v3273 = vunpack.c.l.b16 %v2963
    %v3274 = vunpack.c.l.b16 %v2964
    %v3275 = vunpack.c.l.b16 %v2965
    %v3276 = vunpack.c.l.b16 %v2966
    %vm3277 = vcmask 1041409
    %v3278 = vsel %vm3277, %v3269, %v3261
    %v3279 = vsel %vm3277, %v3270, %v3262
    %v3280 = vsel %vm3277, %v3271, %v3263
    %v3281 = vsel %vm3277, %v3272, %v3264
    %v3282 = vsel %vm3277, %v3273, %v3265
    %v3283 = vsel %vm3277, %v3274, %v3266
    %v3284 = vsel %vm3277, %v3275, %v3267
    %v3285 = vsel %vm3277, %v3276, %v3268
    %v3286 = vpack.c.b16 %v3278, %v3278
    %v3287 = vpack.c.b16 %v3279, %v3279
    %v3288 = vpack.c.b16 %v3280, %v3280
    %v3289 = vpack.c.b16 %v3281, %v3281
    %v3290 = vpack.c.b16 %v3282, %v3282
    %v3291 = vpack.c.b16 %v3283, %v3283
    %v3292 = vpack.c.b16 %v3284, %v3284
    %v3293 = vpack.c.b16 %v3285, %v3285
    %v3558 = vunpack.c.l.b16 %v2967
    %v3559 = vunpack.c.h.b16 %v2967
    %v3560 = vunpack.c.l.b16 %v2968
    %v3561 = vunpack.c.h.b16 %v2968
    %v3562 = vunpack.c.l.b16 %v2969
    %v3563 = vunpack.c.h.b16 %v2969
    %v3564 = vunpack.c.l.b16 %v2970
    %v3565 = vunpack.c.h.b16 %v2970
    %v3566 = vunpack.c.l.b16 %v2971
    %v3567 = vunpack.c.h.b16 %v2971
    %v3568 = vunpack.c.l.b16 %v2972
    %v3569 = vunpack.c.h.b16 %v2972
    %v3570 = vunpack.c.l.b16 %v2973
    %v3571 = vunpack.c.h.b16 %v2973
    %v3572 = vunpack.c.l.b16 %v2974
    %v3573 = vunpack.c.h.b16 %v2974
    %v3574 = vunpack.c.l.b16 %v2975
    %v3575 = vunpack.c.h.b16 %v2975
    %v3576 = vunpack.c.l.b16 %v2976
    %v3577 = vunpack.c.h.b16 %v2976
    %v3578 = vunpack.c.l.b16 %v2977
    %v3579 = vunpack.c.h.b16 %v2977
    %v3580 = vunpack.c.l.b16 %v2978
    %v3581 = vunpack.c.h.b16 %v2978
    %v3582 = vunpack.c.l.b16 %v2979
    %v3583 = vunpack.c.h.b16 %v2979
    %v3584 = vunpack.c.l.b16 %v2980
    %v3585 = vunpack.c.h.b16 %v2980
    %v3586 = vunpack.c.l.b16 %v2981
    %v3587 = vunpack.c.h.b16 %v2981
    %v3588 = vunpack.c.l.b16 %v2982
    %v3589 = vunpack.c.h.b16 %v2982
    %v3590 = vunpack.c.l.b16 %v2983
    %v3591 = vunpack.c.h.b16 %v2983
    %v3592 = vunpack.c.l.b16 %v2984
    %v3593 = vunpack.c.h.b16 %v2984
    %v3594 = vunpack.c.l.b16 %v2985
    %v3595 = vunpack.c.h.b16 %v2985
    %v3596 = vunpack.c.l.b16 %v2986
    %v3597 = vunpack.c.h.b16 %v2986
    %v3598 = vunpack.c.l.b16 %v2987
    %v3599 = vunpack.c.h.b16 %v2987
    %v3600 = vunpack.c.l.b16 %v2988
    %v3601 = vunpack.c.h.b16 %v2988
    %v3602 = vunpack.c.l.b16 %v2989
    %v3603 = vunpack.c.h.b16 %v2989
    %v3604 = vunpack.c.l.b16 %v2990
    %v3605 = vunpack.c.h.b16 %v2990
    %v3606 = vunpack.c.l.b16 %v2991
    %v3607 = vunpack.c.h.b16 %v2991
    %v3608 = vunpack.c.l.b16 %v2992
    %v3609 = vunpack.c.h.b16 %v2992
    %v3610 = vunpack.c.l.b16 %v2993
    %v3611 = vunpack.c.h.b16 %v2993
    %v3612 = vunpack.c.l.b16 %v2994
    %v3613 = vunpack.c.h.b16 %v2994
    %v3614 = vunpack.c.l.b16 %v2995
    %v3615 = vunpack.c.h.b16 %v2995
    %v3616 = vunpack.c.l.b16 %v2996
    %v3617 = vunpack.c.h.b16 %v2996
    %v3618 = vunpack.c.l.b16 %v2997
    %v3619 = vunpack.c.h.b16 %v2997
    %v3620 = vunpack.c.l.b16 %v2998
    %v3621 = vunpack.c.h.b16 %v2998
    %v3622 = vunpack.c.l.b16 %v2999
    %v3623 = vunpack.c.h.b16 %v2999
    %v3624 = vunpack.c.l.b16 %v3000
    %v3625 = vunpack.c.h.b16 %v3000
    %v3626 = vunpack.c.l.b16 %v3001
    %v3627 = vunpack.c.h.b16 %v3001
    %v3628 = vunpack.c.l.b16 %v3002
    %v3629 = vunpack.c.h.b16 %v3002
    %v3630 = vunpack.c.l.b16 %v3003
    %v3631 = vunpack.c.h.b16 %v3003
    %v3632 = vunpack.c.l.b16 %v3004
    %v3633 = vunpack.c.h.b16 %v3004
    %v3634 = vunpack.c.l.b16 %v3005
    %v3635 = vunpack.c.h.b16 %v3005
    %v3636 = vunpack.c.l.b16 %v3006
    %v3637 = vunpack.c.h.b16 %v3006
    %v3638 = vunpack.c.l.b16 %v3007
    %v3639 = vunpack.c.h.b16 %v3007
    %v3640 = vunpack.c.l.b16 %v3008
    %v3641 = vunpack.c.h.b16 %v3008
    %v3642 = vunpack.c.l.b16 %v3009
    %v3643 = vunpack.c.h.b16 %v3009
    %v3644 = vunpack.c.l.b16 %v3010
    %v3645 = vunpack.c.h.b16 %v3010
    %v3646 = vunpack.c.l.b16 %v3011
    %v3647 = vunpack.c.h.b16 %v3011
    %v3648 = vunpack.c.l.b16 %v3012
    %v3649 = vunpack.c.h.b16 %v3012
    %v3650 = vunpack.c.l.b16 %v3013
    %v3651 = vunpack.c.h.b16 %v3013
    %v3652 = vunpack.c.l.b16 %v3014
    %v3653 = vunpack.c.h.b16 %v3014
    %v3654 = vunpack.c.l.b16 %v3015
    %v3655 = vunpack.c.h.b16 %v3015
    %v3656 = vunpack.c.l.b16 %v3016
    %v3657 = vunpack.c.h.b16 %v3016
    %v3658 = vunpack.c.l.b16 %v3017
    %v3659 = vunpack.c.h.b16 %v3017
    %v3660 = vunpack.c.l.b16 %v3018
    %v3661 = vunpack.c.h.b16 %v3018
    %v3662 = vunpack.c.l.b16 %v3019
    %v3663 = vunpack.c.h.b16 %v3019
    %v3664 = vunpack.c.l.b16 %v3020
    %v3665 = vunpack.c.h.b16 %v3020
    %v3666 = vunpack.c.l.b16 %v3021
    %v3667 = vunpack.c.h.b16 %v3021
    %v3668 = vunpack.c.l.b16 %v3022
    %v3669 = vunpack.c.h.b16 %v3022
    %v3670 = vunpack.c.l.b16 %v3023
    %v3671 = vunpack.c.h.b16 %v3023
    %v3672 = vunpack.c.l.b16 %v3024
    %v3673 = vunpack.c.h.b16 %v3024
    %v3674 = vunpack.c.l.b16 %v3025
    %v3675 = vunpack.c.h.b16 %v3025
    %v3676 = vunpack.c.l.b16 %v3026
    %v3677 = vunpack.c.h.b16 %v3026
    %v3678 = vunpack.c.l.b16 %v3027
    %v3679 = vunpack.c.h.b16 %v3027
    %v3680 = vunpack.c.l.b16 %v3028
    %v3681 = vunpack.c.h.b16 %v3028
    %v3682 = vunpack.c.l.b16 %v3029
    %v3683 = vunpack.c.h.b16 %v3029
    %v3684 = vunpack.c.l.b16 %v3030
    %v3685 = vunpack.c.h.b16 %v3030
    %v3686 = vunpack.c.l.b16 %v3031
    %v3687 = vunpack.c.h.b16 %v3031
    %v3688 = vunpack.c.l.b16 %v3032
    %v3689 = vunpack.c.h.b16 %v3032
    %v3690 = vunpack.c.l.b16 %v3033
    %v3691 = vunpack.c.h.b16 %v3033
    %v3692 = vunpack.c.l.b16 %v3034
    %v3693 = vunpack.c.h.b16 %v3034
    %v3694 = vunpack.c.l.b16 %v3035
    %v3695 = vunpack.c.h.b16 %v3035
    %v3696 = vunpack.c.l.b16 %v3036
    %v3697 = vunpack.c.h.b16 %v3036
    %v3698 = vunpack.c.l.b16 %v3037
    %v3699 = vunpack.c.h.b16 %v3037
    %v3700 = vunpack.c.l.b16 %v3038
    %v3701 = vunpack.c.h.b16 %v3038
    %v3702 = vunpack.c.l.b16 %v3039
    %v3703 = vunpack.c.h.b16 %v3039
    %v3704 = vunpack.c.l.b16 %v3040
    %v3705 = vunpack.c.h.b16 %v3040
    %v3706 = vunpack.c.l.b16 %v3041
    %v3707 = vunpack.c.h.b16 %v3041
    %v3708 = vunpack.c.l.b16 %v3042
    %v3709 = vunpack.c.h.b16 %v3042
    %v3710 = vunpack.c.l.b16 %v3043
    %v3711 = vunpack.c.h.b16 %v3043
    %v3712 = vunpack.c.l.b16 %v3044
    %v3713 = vunpack.c.h.b16 %v3044
    %v3714 = vunpack.c.l.b16 %v3045
    %v3715 = vunpack.c.h.b16 %v3045
    %v3716 = vunpack.c.l.b16 %v3046
    %v3717 = vunpack.c.h.b16 %v3046
    %v3718 = vunpack.c.l.b16 %v3047
    %v3719 = vunpack.c.h.b16 %v3047
    %v3720 = vunpack.c.l.b16 %v3048
    %v3721 = vunpack.c.h.b16 %v3048
    %v3722 = vunpack.c.l.b16 %v3049
    %v3723 = vunpack.c.h.b16 %v3049
    %v3724 = vunpack.c.l.b16 %v3050
    %v3725 = vunpack.c.h.b16 %v3050
    %v3726 = vunpack.c.l.b16 %v3051
    %v3727 = vunpack.c.h.b16 %v3051
    %v3728 = vunpack.c.l.b16 %v3052
    %v3729 = vunpack.c.h.b16 %v3052
    %v3730 = vunpack.c.l.b16 %v3053
    %v3731 = vunpack.c.h.b16 %v3053
    %v3732 = vunpack.c.l.b16 %v3054
    %v3733 = vunpack.c.h.b16 %v3054
    %v3734 = vunpack.c.l.b16 %v3055
    %v3735 = vunpack.c.h.b16 %v3055
    %v3736 = vunpack.c.l.b16 %v3056
    %v3737 = vunpack.c.h.b16 %v3056
    %v3738 = vunpack.c.l.b16 %v3057
    %v3739 = vunpack.c.h.b16 %v3057
    %v3740 = vunpack.c.l.b16 %v3058
    %v3741 = vunpack.c.h.b16 %v3058
    %v3742 = vunpack.c.l.b16 %v3059
    %v3743 = vunpack.c.h.b16 %v3059
    %v3744 = vunpack.c.l.b16 %v3060
    %v3745 = vunpack.c.h.b16 %v3060
    %v3746 = vunpack.c.l.b16 %v3061
    %v3747 = vunpack.c.h.b16 %v3061
    %v3748 = vunpack.c.l.b16 %v3062
    %v3749 = vunpack.c.h.b16 %v3062
    %v3750 = vunpack.c.l.b16 %v3063
    %v3751 = vunpack.c.h.b16 %v3063
    %v3752 = vunpack.c.l.b16 %v3064
    %v3753 = vunpack.c.h.b16 %v3064
    %v3754 = vunpack.c.l.b16 %v3065
    %v3755 = vunpack.c.h.b16 %v3065
    %v3756 = vunpack.c.l.b16 %v3066
    %v3757 = vunpack.c.h.b16 %v3066
    %v3758 = vunpack.c.l.b16 %v3067
    %v3759 = vunpack.c.h.b16 %v3067
    %v3760 = vunpack.c.l.b16 %v3068
    %v3761 = vunpack.c.h.b16 %v3068
    %v3762 = vunpack.c.l.b16 %v3069
    %v3763 = vunpack.c.h.b16 %v3069
    %v3764 = vunpack.c.l.b16 %v3070
    %v3765 = vunpack.c.h.b16 %v3070
    %v3766 = vunpack.c.l.b16 %v3071
    %v3767 = vunpack.c.h.b16 %v3071
    %v3768 = vunpack.c.l.b16 %v3072
    %v3769 = vunpack.c.h.b16 %v3072
    %v3770 = vunpack.c.l.b16 %v3073
    %v3771 = vunpack.c.h.b16 %v3073
    %v3772 = vunpack.c.l.b16 %v3074
    %v3773 = vunpack.c.h.b16 %v3074
    %v3774 = vunpack.c.l.b16 %v3075
    %v3775 = vunpack.c.h.b16 %v3075
    %v3776 = vunpack.c.l.b16 %v3076
    %v3777 = vunpack.c.h.b16 %v3076
    %v3778 = vunpack.c.l.b16 %v3077
    %v3779 = vunpack.c.h.b16 %v3077
    %v3780 = vunpack.c.l.b16 %v3078
    %v3781 = vunpack.c.h.b16 %v3078
    %v3782 = vunpack.c.l.b16 %v3079
    %v3783 = vunpack.c.h.b16 %v3079
    %v3784 = vunpack.c.l.b16 %v3080
    %v3785 = vunpack.c.h.b16 %v3080
    %v3786 = vunpack.c.l.b16 %v3081
    %v3787 = vunpack.c.h.b16 %v3081
    %v3788 = vunpack.c.l.b16 %v3082
    %v3789 = vunpack.c.h.b16 %v3082
    %v3790 = vunpack.c.l.b16 %v3083
    %v3791 = vunpack.c.h.b16 %v3083
    %v3792 = vunpack.c.l.b16 %v3084
    %v3793 = vunpack.c.h.b16 %v3084
    %v3794 = vunpack.c.l.b16 %v3085
    %v3795 = vunpack.c.h.b16 %v3085
    %v3796 = vunpack.c.l.b16 %v3086
    %v3797 = vunpack.c.h.b16 %v3086
    %v3798 = vunpack.c.l.b16 %v3087
    %v3799 = vunpack.c.h.b16 %v3087
    %v3800 = vunpack.c.l.b16 %v3088
    %v3801 = vunpack.c.h.b16 %v3088
    %v3802 = vunpack.c.l.b16 %v3089
    %v3803 = vunpack.c.h.b16 %v3089
    %v3804 = vunpack.c.l.b16 %v3090
    %v3805 = vunpack.c.h.b16 %v3090
    %v3806 = vunpack.c.l.b16 %v3091
    %v3807 = vunpack.c.h.b16 %v3091
    %v3808 = vunpack.c.l.b16 %v3092
    %v3809 = vunpack.c.h.b16 %v3092
    %v3810 = vunpack.c.l.b16 %v3093
    %v3811 = vunpack.c.h.b16 %v3093
    %v3812 = vunpack.c.l.b16 %v3094
    %v3813 = vunpack.c.h.b16 %v3094
    %v3814 = vunpack.c.l.b16 %v3095
    %v3815 = vunpack.c.h.b16 %v3095
    %v3816 = vunpack.c.l.b16 %v3096
    %v3817 = vunpack.c.h.b16 %v3096
    %v3818 = vunpack.c.l.b16 %v3097
    %v3819 = vunpack.c.h.b16 %v3097
    %v3820 = vunpack.c.l.b16 %v3098
    %v3821 = vunpack.c.h.b16 %v3098
    %v3822 = vunpack.c.l.b16 %v3099
    %v3823 = vunpack.c.h.b16 %v3099
    %v3824 = vunpack.c.l.b16 %v3100
    %v3825 = vunpack.c.h.b16 %v3100
    %v3826 = vunpack.c.l.b16 %v3101
    %v3827 = vunpack.c.h.b16 %v3101
    %v3828 = vunpack.c.l.b16 %v3102
    %v3829 = vunpack.c.h.b16 %v3102
    %v3830 = vunpack.c.l.b16 %v3103
    %v3831 = vunpack.c.h.b16 %v3103
    %v3832 = vunpack.c.l.b16 %v3104
    %v3833 = vunpack.c.h.b16 %v3104
    %v3834 = vunpack.c.l.b16 %v3105
    %v3835 = vunpack.c.h.b16 %v3105
    %v3836 = vunpack.c.l.b16 %v3106
    %v3837 = vunpack.c.h.b16 %v3106
    %v3838 = vunpack.c.l.b16 %v3107
    %v3839 = vunpack.c.h.b16 %v3107
    %v3840 = vunpack.c.l.b16 %v3108
    %v3841 = vunpack.c.h.b16 %v3108
    %v3842 = vunpack.c.l.b16 %v3109
    %v3843 = vunpack.c.h.b16 %v3109
    %v3844 = vunpack.c.l.b16 %v3110
    %v3845 = vunpack.c.h.b16 %v3110
    %v3846 = vunpack.c.l.b16 %v3111
    %v3847 = vunpack.c.h.b16 %v3111
    %v3848 = vunpack.c.l.b16 %v3112
    %v3849 = vunpack.c.h.b16 %v3112
    %v3850 = vunpack.c.l.b16 %v3113
    %v3851 = vunpack.c.h.b16 %v3113
    %v3852 = vunpack.c.l.b16 %v3114
    %v3853 = vunpack.c.h.b16 %v3114
    %v3854 = vunpack.c.l.b16 %v3115
    %v3855 = vunpack.c.h.b16 %v3115
    %v3856 = vunpack.c.l.b16 %v3116
    %v3857 = vunpack.c.h.b16 %v3116
    %v3858 = vunpack.c.l.b16 %v3117
    %v3859 = vunpack.c.h.b16 %v3117
    %v3860 = vunpack.c.l.b16 %v3118
    %v3861 = vunpack.c.h.b16 %v3118
    %v3862 = vunpack.c.l.b16 %v3119
    %v3863 = vunpack.c.h.b16 %v3119
    %v3864 = vunpack.c.l.b16 %v3120
    %v3865 = vunpack.c.h.b16 %v3120
    %v3866 = vunpack.c.l.b16 %v3121
    %v3867 = vunpack.c.h.b16 %v3121
    %v3868 = vunpack.c.l.b16 %v3122
    %v3869 = vunpack.c.h.b16 %v3122
    %v3870 = vunpack.c.l.b16 %v3123
    %v3871 = vunpack.c.h.b16 %v3123
    %v3872 = vunpack.c.l.b16 %v3124
    %v3873 = vunpack.c.h.b16 %v3124
    %v3874 = vunpack.c.l.b16 %v3125
    %v3875 = vunpack.c.h.b16 %v3125
    %v3876 = vunpack.c.l.b16 %v3126
    %v3877 = vunpack.c.h.b16 %v3126
    %v3878 = vunpack.c.l.b16 %v3127
    %v3879 = vunpack.c.h.b16 %v3127
    %v3880 = vunpack.c.l.b16 %v3128
    %v3881 = vunpack.c.h.b16 %v3128
    %v3882 = vunpack.c.l.b16 %v3129
    %v3883 = vunpack.c.h.b16 %v3129
    %v3884 = vunpack.c.l.b16 %v3130
    %v3885 = vunpack.c.h.b16 %v3130
    %v3886 = vunpack.c.l.b16 %v3131
    %v3887 = vunpack.c.h.b16 %v3131
    %v3888 = vunpack.c.l.b16 %v3132
    %v3889 = vunpack.c.h.b16 %v3132
    %v3890 = vunpack.c.l.b16 %v3133
    %v3891 = vunpack.c.h.b16 %v3133
    %v3892 = vunpack.c.l.b16 %v3134
    %v3893 = vunpack.c.h.b16 %v3134
    %v3894 = vunpack.c.l.b16 %v3135
    %v3895 = vunpack.c.h.b16 %v3135
    %v3896 = vunpack.c.l.b16 %v3136
    %v3897 = vunpack.c.h.b16 %v3136
    %v3898 = vunpack.c.l.b16 %v3137
    %v3899 = vunpack.c.h.b16 %v3137
    %v3900 = vunpack.c.l.b16 %v3138
    %v3901 = vunpack.c.h.b16 %v3138
    %v3902 = vunpack.c.l.b16 %v3139
    %v3903 = vunpack.c.h.b16 %v3139
    %v3904 = vunpack.c.l.b16 %v3140
    %v3905 = vunpack.c.h.b16 %v3140
    %v3906 = vunpack.c.l.b16 %v3141
    %v3907 = vunpack.c.h.b16 %v3141
    %v3908 = vunpack.c.l.b16 %v3142
    %v3909 = vunpack.c.h.b16 %v3142
    %v3910 = vunpack.c.l.b16 %v3143
    %v3911 = vunpack.c.h.b16 %v3143
    %v3912 = vunpack.c.l.b16 %v3144
    %v3913 = vunpack.c.h.b16 %v3144
    %v3914 = vunpack.c.l.b16 %v3145
    %v3915 = vunpack.c.h.b16 %v3145
    %v3916 = vunpack.c.l.b16 %v3146
    %v3917 = vunpack.c.h.b16 %v3146
    %v3918 = vunpack.c.l.b16 %v3147
    %v3919 = vunpack.c.h.b16 %v3147
    %v3920 = vunpack.c.l.b16 %v3148
    %v3921 = vunpack.c.h.b16 %v3148
    %v3922 = vunpack.c.l.b16 %v3149
    %v3923 = vunpack.c.h.b16 %v3149
    %v3924 = vunpack.c.l.b16 %v3150
    %v3925 = vunpack.c.h.b16 %v3150
    %v3926 = vunpack.c.l.b16 %v3151
    %v3927 = vunpack.c.h.b16 %v3151
    %v3928 = vunpack.c.l.b16 %v3152
    %v3929 = vunpack.c.h.b16 %v3152
    %v3930 = vunpack.c.l.b16 %v3153
    %v3931 = vunpack.c.h.b16 %v3153
    %v3932 = vunpack.c.l.b16 %v3154
    %v3933 = vunpack.c.h.b16 %v3154
    %v3934 = vunpack.c.l.b16 %v3155
    %v3935 = vunpack.c.h.b16 %v3155
    %v3936 = vunpack.c.l.b16 %v3156
    %v3937 = vunpack.c.h.b16 %v3156
    %v3938 = vunpack.c.l.b16 %v3157
    %v3939 = vunpack.c.h.b16 %v3157
    %v3940 = vunpack.c.l.b16 %v3158
    %v3941 = vunpack.c.h.b16 %v3158
    %v3942 = vunpack.c.l.b16 %v3159
    %v3943 = vunpack.c.h.b16 %v3159
    %v3944 = vunpack.c.l.b16 %v3160
    %v3945 = vunpack.c.h.b16 %v3160
    %v3946 = vunpack.c.l.b16 %v3161
    %v3947 = vunpack.c.h.b16 %v3161
    %v3948 = vunpack.c.l.b16 %v3162
    %v3949 = vunpack.c.h.b16 %v3162
    %v3950 = vunpack.c.l.b16 %v3163
    %v3951 = vunpack.c.h.b16 %v3163
    %v3952 = vunpack.c.l.b16 %v3164
    %v3953 = vunpack.c.h.b16 %v3164
    %v3954 = vunpack.c.l.b16 %v3165
    %v3955 = vunpack.c.h.b16 %v3165
    %v3956 = vunpack.c.l.b16 %v3166
    %v3957 = vunpack.c.h.b16 %v3166
    %v3958 = vunpack.c.l.b16 %v3167
    %v3959 = vunpack.c.h.b16 %v3167
    %v3960 = vunpack.c.l.b16 %v3168
    %v3961 = vunpack.c.h.b16 %v3168
    %v3962 = vunpack.c.l.b16 %v3169
    %v3963 = vunpack.c.h.b16 %v3169
    %v3964 = vunpack.c.l.b16 %v3170
    %v3965 = vunpack.c.h.b16 %v3170
    %v3966 = vunpack.c.l.b16 %v3171
    %v3967 = vunpack.c.h.b16 %v3171
    %v3968 = vunpack.c.l.b16 %v3172
    %v3969 = vunpack.c.h.b16 %v3172
    %v3970 = vunpack.c.l.b16 %v3173
    %v3971 = vunpack.c.h.b16 %v3173
    %v3972 = vunpack.c.l.b16 %v3174
    %v3973 = vunpack.c.h.b16 %v3174
    %v3974 = vunpack.c.l.b16 %v3175
    %v3975 = vunpack.c.h.b16 %v3175
    %v3976 = vunpack.c.l.b16 %v3176
    %v3977 = vunpack.c.h.b16 %v3176
    %v3978 = vunpack.c.l.b16 %v3177
    %v3979 = vunpack.c.h.b16 %v3177
    %v3980 = vunpack.c.l.b16 %v3178
    %v3981 = vunpack.c.h.b16 %v3178
    %v3982 = vunpack.c.l.b16 %v3179
    %v3983 = vunpack.c.h.b16 %v3179
    %v3984 = vunpack.c.l.b16 %v3180
    %v3985 = vunpack.c.h.b16 %v3180
    %v3986 = vunpack.c.l.b16 %v3181
    %v3987 = vunpack.c.h.b16 %v3181
    %v3988 = vunpack.c.l.b16 %v3182
    %v3989 = vunpack.c.h.b16 %v3182
    %v3990 = vunpack.c.l.b16 %v3183
    %v3991 = vunpack.c.h.b16 %v3183
    %v3992 = vunpack.c.l.b16 %v3184
    %v3993 = vunpack.c.h.b16 %v3184
    %v3994 = vunpack.c.l.b16 %v3185
    %v3995 = vunpack.c.h.b16 %v3185
    %v3996 = vunpack.c.l.b16 %v3186
    %v3997 = vunpack.c.h.b16 %v3186
    %v3998 = vunpack.c.l.b16 %v3187
    %v3999 = vunpack.c.h.b16 %v3187
    %v4000 = vunpack.c.l.b16 %v3188
    %v4001 = vunpack.c.h.b16 %v3188
    %v4002 = vunpack.c.l.b16 %v3189
    %v4003 = vunpack.c.h.b16 %v3189
    %v4004 = vunpack.c.l.b16 %v3190
    %v4005 = vunpack.c.h.b16 %v3190
    %v4006 = vunpack.c.l.b16 %v3191
    %v4007 = vunpack.c.h.b16 %v3191
    %v4008 = vunpack.c.l.b16 %v3192
    %v4009 = vunpack.c.h.b16 %v3192
    %v4010 = vunpack.c.l.b16 %v3193
    %v4011 = vunpack.c.h.b16 %v3193
    %v4012 = vunpack.c.l.b16 %v3194
    %v4013 = vunpack.c.h.b16 %v3194
    %v4014 = vunpack.c.l.b16 %v3195
    %v4015 = vunpack.c.h.b16 %v3195
    %v4016 = vunpack.c.l.b16 %v3196
    %v4017 = vunpack.c.h.b16 %v3196
    %v4018 = vunpack.c.l.b16 %v3197
    %v4019 = vunpack.c.h.b16 %v3197
    %v4020 = vunpack.c.l.b16 %v3198
    %v4021 = vunpack.c.h.b16 %v3198
    %v4022 = vunpack.c.l.b16 %v3199
    %v4023 = vunpack.c.h.b16 %v3199
    %v4024 = vunpack.c.l.b16 %v3200
    %v4025 = vunpack.c.h.b16 %v3200
    %v4026 = vunpack.c.l.b16 %v3201
    %v4027 = vunpack.c.h.b16 %v3201
    %v4028 = vunpack.c.l.b16 %v3202
    %v4029 = vunpack.c.h.b16 %v3202
    %v4030 = vunpack.c.l.b16 %v3203
    %v4031 = vunpack.c.h.b16 %v3203
    %v4032 = vunpack.c.l.b16 %v3204
    %v4033 = vunpack.c.h.b16 %v3204
    %v4034 = vunpack.c.l.b16 %v3205
    %v4035 = vunpack.c.h.b16 %v3205
    %v4036 = vunpack.c.l.b16 %v3206
    %v4037 = vunpack.c.h.b16 %v3206
    %v4038 = vunpack.c.l.b16 %v3207
    %v4039 = vunpack.c.h.b16 %v3207
    %v4040 = vunpack.c.l.b16 %v3208
    %v4041 = vunpack.c.h.b16 %v3208
    %v4042 = vunpack.c.l.b16 %v3209
    %v4043 = vunpack.c.h.b16 %v3209
    %v4044 = vunpack.c.l.b16 %v3210
    %v4045 = vunpack.c.h.b16 %v3210
    %v4046 = vunpack.c.l.b16 %v3211
    %v4047 = vunpack.c.h.b16 %v3211
    %v4048 = vunpack.c.l.b16 %v3212
    %v4049 = vunpack.c.h.b16 %v3212
    %v4050 = vunpack.c.l.b16 %v3213
    %v4051 = vunpack.c.h.b16 %v3213
    %v4052 = vunpack.c.l.b16 %v3214
    %v4053 = vunpack.c.h.b16 %v3214
    %v4054 = vunpack.c.l.b16 %v3215
    %v4055 = vunpack.c.h.b16 %v3215
    %v4056 = vunpack.c.l.b16 %v3216
    %v4057 = vunpack.c.h.b16 %v3216
    %v4058 = vunpack.c.l.b16 %v3217
    %v4059 = vunpack.c.h.b16 %v3217
    %v4060 = vunpack.c.l.b16 %v3218
    %v4061 = vunpack.c.h.b16 %v3218
    %v4062 = vunpack.c.l.b16 %v3219
    %v4063 = vunpack.c.h.b16 %v3219
    %v4064 = vunpack.c.l.b16 %v3220
    %v4065 = vunpack.c.h.b16 %v3220
    %v4066 = vunpack.c.l.b16 %v3221
    %v4067 = vunpack.c.h.b16 %v3221
    %v4068 = vunpack.c.l.b16 %v3222
    %v4069 = vunpack.c.h.b16 %v3222
    %v4070 = vpack.c.b16 %v3562, %v3558
    %v4071 = vpack.c.b16 %v3563, %v3559
    %v4072 = vpack.c.b16 %v3564, %v3560
    %v4073 = vpack.c.b16 %v3565, %v3561
    %v4074 = vpack.c.b16 %v3570, %v3566
    %v4075 = vpack.c.b16 %v3571, %v3567
    %v4076 = vpack.c.b16 %v3572, %v3568
    %v4077 = vpack.c.b16 %v3573, %v3569
    %v4078 = vpack.c.b16 %v3578, %v3574
    %v4079 = vpack.c.b16 %v3579, %v3575
    %v4080 = vpack.c.b16 %v3580, %v3576
    %v4081 = vpack.c.b16 %v3581, %v3577
    %v4082 = vpack.c.b16 %v3586, %v3582
    %v4083 = vpack.c.b16 %v3587, %v3583
    %v4084 = vpack.c.b16 %v3588, %v3584
    %v4085 = vpack.c.b16 %v3589, %v3585
    %v4086 = vpack.c.b16 %v3594, %v3590
    %v4087 = vpack.c.b16 %v3595, %v3591
    %v4088 = vpack.c.b16 %v3596, %v3592
    %v4089 = vpack.c.b16 %v3597, %v3593
    %v4090 = vpack.c.b16 %v3602, %v3598
    %v4091 = vpack.c.b16 %v3603, %v3599
    %v4092 = vpack.c.b16 %v3604, %v3600
    %v4093 = vpack.c.b16 %v3605, %v3601
    %v4094 = vpack.c.b16 %v3610, %v3606
    %v4095 = vpack.c.b16 %v3611, %v3607
    %v4096 = vpack.c.b16 %v3612, %v3608
    %v4097 = vpack.c.b16 %v3613, %v3609
    %v4098 = vpack.c.b16 %v3618, %v3614
    %v4099 = vpack.c.b16 %v3619, %v3615
    %v4100 = vpack.c.b16 %v3620, %v3616
    %v4101 = vpack.c.b16 %v3621, %v3617
    %v4102 = vpack.c.b16 %v3626, %v3622
    %v4103 = vpack.c.b16 %v3627, %v3623
    %v4104 = vpack.c.b16 %v3628, %v3624
    %v4105 = vpack.c.b16 %v3629, %v3625
    %v4106 = vpack.c.b16 %v3634, %v3630
    %v4107 = vpack.c.b16 %v3635, %v3631
    %v4108 = vpack.c.b16 %v3636, %v3632
    %v4109 = vpack.c.b16 %v3637, %v3633
    %v4110 = vpack.c.b16 %v3642, %v3638
    %v4111 = vpack.c.b16 %v3643, %v3639
    %v4112 = vpack.c.b16 %v3644, %v3640
    %v4113 = vpack.c.b16 %v3645, %v3641
    %v4114 = vpack.c.b16 %v3650, %v3646
    %v4115 = vpack.c.b16 %v3651, %v3647
    %v4116 = vpack.c.b16 %v3652, %v3648
    %v4117 = vpack.c.b16 %v3653, %v3649
    %v4118 = vpack.c.b16 %v3658, %v3654
    %v4119 = vpack.c.b16 %v3659, %v3655
    %v4120 = vpack.c.b16 %v3660, %v3656
    %v4121 = vpack.c.b16 %v3661, %v3657
    %v4122 = vpack.c.b16 %v3666, %v3662
    %v4123 = vpack.c.b16 %v3667, %v3663
    %v4124 = vpack.c.b16 %v3668, %v3664
    %v4125 = vpack.c.b16 %v3669, %v3665
    %v4126 = vpack.c.b16 %v3674, %v3670
    %v4127 = vpack.c.b16 %v3675, %v3671
    %v4128 = vpack.c.b16 %v3676, %v3672
    %v4129 = vpack.c.b16 %v3677, %v3673
    %v4130 = vpack.c.b16 %v3682, %v3678
    %v4131 = vpack.c.b16 %v3683, %v3679
    %v4132 = vpack.c.b16 %v3684, %v3680
    %v4133 = vpack.c.b16 %v3685, %v3681
    %v4134 = vpack.c.b16 %v3690, %v3686
    %v4135 = vpack.c.b16 %v3691, %v3687
    %v4136 = vpack.c.b16 %v3692, %v3688
    %v4137 = vpack.c.b16 %v3693, %v3689
    %v4138 = vpack.c.b16 %v3698, %v3694
    %v4139 = vpack.c.b16 %v3699, %v3695
    %v4140 = vpack.c.b16 %v3700, %v3696
    %v4141 = vpack.c.b16 %v3701, %v3697
    %v4142 = vpack.c.b16 %v3706, %v3702
    %v4143 = vpack.c.b16 %v3707, %v3703
    %v4144 = vpack.c.b16 %v3708, %v3704
    %v4145 = vpack.c.b16 %v3709, %v3705
    %v4146 = vpack.c.b16 %v3714, %v3710
    %v4147 = vpack.c.b16 %v3715, %v3711
    %v4148 = vpack.c.b16 %v3716, %v3712
    %v4149 = vpack.c.b16 %v3717, %v3713
    %v4150 = vpack.c.b16 %v3722, %v3718
    %v4151 = vpack.c.b16 %v3723, %v3719
    %v4152 = vpack.c.b16 %v3724, %v3720
    %v4153 = vpack.c.b16 %v3725, %v3721
    %v4154 = vpack.c.b16 %v3730, %v3726
    %v4155 = vpack.c.b16 %v3731, %v3727
    %v4156 = vpack.c.b16 %v3732, %v3728
    %v4157 = vpack.c.b16 %v3733, %v3729
    %v4158 = vpack.c.b16 %v3738, %v3734
    %v4159 = vpack.c.b16 %v3739, %v3735
    %v4160 = vpack.c.b16 %v3740, %v3736
    %v4161 = vpack.c.b16 %v3741, %v3737
    %v4162 = vpack.c.b16 %v3746, %v3742
    %v4163 = vpack.c.b16 %v3747, %v3743
    %v4164 = vpack.c.b16 %v3748, %v3744
    %v4165 = vpack.c.b16 %v3749, %v3745
    %v4166 = vpack.c.b16 %v3754, %v3750
    %v4167 = vpack.c.b16 %v3755, %v3751
    %v4168 = vpack.c.b16 %v3756, %v3752
    %v4169 = vpack.c.b16 %v3757, %v3753
    %v4170 = vpack.c.b16 %v3762, %v3758
    %v4171 = vpack.c.b16 %v3763, %v3759
    %v4172 = vpack.c.b16 %v3764, %v3760
    %v4173 = vpack.c.b16 %v3765, %v3761
    %v4174 = vpack.c.b16 %v3770, %v3766
    %v4175 = vpack.c.b16 %v3771, %v3767
    %v4176 = vpack.c.b16 %v3772, %v3768
    %v4177 = vpack.c.b16 %v3773, %v3769
    %v4178 = vpack.c.b16 %v3778, %v3774
    %v4179 = vpack.c.b16 %v3779, %v3775
    %v4180 = vpack.c.b16 %v3780, %v3776
    %v4181 = vpack.c.b16 %v3781, %v3777
    %v4182 = vpack.c.b16 %v3786, %v3782
    %v4183 = vpack.c.b16 %v3787, %v3783
    %v4184 = vpack.c.b16 %v3788, %v3784
    %v4185 = vpack.c.b16 %v3789, %v3785
    %v4186 = vpack.c.b16 %v3794, %v3790
    %v4187 = vpack.c.b16 %v3795, %v3791
    %v4188 = vpack.c.b16 %v3796, %v3792
    %v4189 = vpack.c.b16 %v3797, %v3793
    %v4190 = vpack.c.b16 %v3802, %v3798
    %v4191 = vpack.c.b16 %v3803, %v3799
    %v4192 = vpack.c.b16 %v3804, %v3800
    %v4193 = vpack.c.b16 %v3805, %v3801
    %v4194 = vpack.c.b16 %v3810, %v3806
    %v4195 = vpack.c.b16 %v3811, %v3807
    %v4196 = vpack.c.b16 %v3812, %v3808
    %v4197 = vpack.c.b16 %v3813, %v3809
    %v4198 = vpack.c.b16 %v3818, %v3814
    %v4199 = vpack.c.b16 %v3819, %v3815
    %v4200 = vpack.c.b16 %v3820, %v3816
    %v4201 = vpack.c.b16 %v3821, %v3817
    %v4202 = vpack.c.b16 %v3826, %v3822
    %v4203 = vpack.c.b16 %v3827, %v3823
    %v4204 = vpack.c.b16 %v3828, %v3824
    %v4205 = vpack.c.b16 %v3829, %v3825
    %v4206 = vpack.c.b16 %v3834, %v3830
    %v4207 = vpack.c.b16 %v3835, %v3831
    %v4208 = vpack.c.b16 %v3836, %v3832
    %v4209 = vpack.c.b16 %v3837, %v3833
    %v4210 = vpack.c.b16 %v3842, %v3838
    %v4211 = vpack.c.b16 %v3843, %v3839
    %v4212 = vpack.c.b16 %v3844, %v3840
    %v4213 = vpack.c.b16 %v3845, %v3841
    %v4214 = vpack.c.b16 %v3850, %v3846
    %v4215 = vpack.c.b16 %v3851, %v3847
    %v4216 = vpack.c.b16 %v3852, %v3848
    %v4217 = vpack.c.b16 %v3853, %v3849
    %v4218 = vpack.c.b16 %v3858, %v3854
    %v4219 = vpack.c.b16 %v3859, %v3855
    %v4220 = vpack.c.b16 %v3860, %v3856
    %v4221 = vpack.c.b16 %v3861, %v3857
    %v4222 = vpack.c.b16 %v3866, %v3862
    %v4223 = vpack.c.b16 %v3867, %v3863
    %v4224 = vpack.c.b16 %v3868, %v3864
    %v4225 = vpack.c.b16 %v3869, %v3865
    %v4226 = vpack.c.b16 %v3874, %v3870
    %v4227 = vpack.c.b16 %v3875, %v3871
    %v4228 = vpack.c.b16 %v3876, %v3872
    %v4229 = vpack.c.b16 %v3877, %v3873
    %v4230 = vpack.c.b16 %v3882, %v3878
    %v4231 = vpack.c.b16 %v3883, %v3879
    %v4232 = vpack.c.b16 %v3884, %v3880
    %v4233 = vpack.c.b16 %v3885, %v3881
    %v4234 = vpack.c.b16 %v3890, %v3886
    %v4235 = vpack.c.b16 %v3891, %v3887
    %v4236 = vpack.c.b16 %v3892, %v3888
    %v4237 = vpack.c.b16 %v3893, %v3889
    %v4238 = vpack.c.b16 %v3898, %v3894
    %v4239 = vpack.c.b16 %v3899, %v3895
    %v4240 = vpack.c.b16 %v3900, %v3896
    %v4241 = vpack.c.b16 %v3901, %v3897
    %v4242 = vpack.c.b16 %v3906, %v3902
    %v4243 = vpack.c.b16 %v3907, %v3903
    %v4244 = vpack.c.b16 %v3908, %v3904
    %v4245 = vpack.c.b16 %v3909, %v3905
    %v4246 = vpack.c.b16 %v3914, %v3910
    %v4247 = vpack.c.b16 %v3915, %v3911
    %v4248 = vpack.c.b16 %v3916, %v3912
    %v4249 = vpack.c.b16 %v3917, %v3913
    %v4250 = vpack.c.b16 %v3922, %v3918
    %v4251 = vpack.c.b16 %v3923, %v3919
    %v4252 = vpack.c.b16 %v3924, %v3920
    %v4253 = vpack.c.b16 %v3925, %v3921
    %v4254 = vpack.c.b16 %v3930, %v3926
    %v4255 = vpack.c.b16 %v3931, %v3927
    %v4256 = vpack.c.b16 %v3932, %v3928
    %v4257 = vpack.c.b16 %v3933, %v3929
    %v4258 = vpack.c.b16 %v3938, %v3934
    %v4259 = vpack.c.b16 %v3939, %v3935
    %v4260 = vpack.c.b16 %v3940, %v3936
    %v4261 = vpack.c.b16 %v3941, %v3937
    %v4262 = vpack.c.b16 %v3946, %v3942
    %v4263 = vpack.c.b16 %v3947, %v3943
    %v4264 = vpack.c.b16 %v3948, %v3944
    %v4265 = vpack.c.b16 %v3949, %v3945
    %v4266 = vpack.c.b16 %v3954, %v3950
    %v4267 = vpack.c.b16 %v3955, %v3951
    %v4268 = vpack.c.b16 %v3956, %v3952
    %v4269 = vpack.c.b16 %v3957, %v3953
    %v4270 = vpack.c.b16 %v3962, %v3958
    %v4271 = vpack.c.b16 %v3963, %v3959
    %v4272 = vpack.c.b16 %v3964, %v3960
    %v4273 = vpack.c.b16 %v3965, %v3961
    %v4274 = vpack.c.b16 %v3970, %v3966
    %v4275 = vpack.c.b16 %v3971, %v3967
    %v4276 = vpack.c.b16 %v3972, %v3968
    %v4277 = vpack.c.b16 %v3973, %v3969
    %v4278 = vpack.c.b16 %v3978, %v3974
    %v4279 = vpack.c.b16 %v3979, %v3975
    %v4280 = vpack.c.b16 %v3980, %v3976
    %v4281 = vpack.c.b16 %v3981, %v3977
    %v4282 = vpack.c.b16 %v3986, %v3982
    %v4283 = vpack.c.b16 %v3987, %v3983
    %v4284 = vpack.c.b16 %v3988, %v3984
    %v4285 = vpack.c.b16 %v3989, %v3985
    %v4286 = vpack.c.b16 %v3994, %v3990
    %v4287 = vpack.c.b16 %v3995, %v3991
    %v4288 = vpack.c.b16 %v3996, %v3992
    %v4289 = vpack.c.b16 %v3997, %v3993
    %v4290 = vpack.c.b16 %v4002, %v3998
    %v4291 = vpack.c.b16 %v4003, %v3999
    %v4292 = vpack.c.b16 %v4004, %v4000
    %v4293 = vpack.c.b16 %v4005, %v4001
    %v4294 = vpack.c.b16 %v4010, %v4006
    %v4295 = vpack.c.b16 %v4011, %v4007
    %v4296 = vpack.c.b16 %v4012, %v4008
    %v4297 = vpack.c.b16 %v4013, %v4009
    %v4298 = vpack.c.b16 %v4018, %v4014
    %v4299 = vpack.c.b16 %v4019, %v4015
    %v4300 = vpack.c.b16 %v4020, %v4016
    %v4301 = vpack.c.b16 %v4021, %v4017
    %v4302 = vpack.c.b16 %v4026, %v4022
    %v4303 = vpack.c.b16 %v4027, %v4023
    %v4304 = vpack.c.b16 %v4028, %v4024
    %v4305 = vpack.c.b16 %v4029, %v4025
    %v4306 = vpack.c.b16 %v4034, %v4030
    %v4307 = vpack.c.b16 %v4035, %v4031
    %v4308 = vpack.c.b16 %v4036, %v4032
    %v4309 = vpack.c.b16 %v4037, %v4033
    %v4310 = vpack.c.b16 %v4042, %v4038
    %v4311 = vpack.c.b16 %v4043, %v4039
    %v4312 = vpack.c.b16 %v4044, %v4040
    %v4313 = vpack.c.b16 %v4045, %v4041
    %v4314 = vpack.c.b16 %v4050, %v4046
    %v4315 = vpack.c.b16 %v4051, %v4047
    %v4316 = vpack.c.b16 %v4052, %v4048
    %v4317 = vpack.c.b16 %v4053, %v4049
    %v4318 = vpack.c.b16 %v4058, %v4054
    %v4319 = vpack.c.b16 %v4059, %v4055
    %v4320 = vpack.c.b16 %v4060, %v4056
    %v4321 = vpack.c.b16 %v4061, %v4057
    %v4322 = vpack.c.b16 %v4066, %v4062
    %v4323 = vpack.c.b16 %v4067, %v4063
    %v4324 = vpack.c.b16 %v4068, %v4064
    %v4325 = vpack.c.b16 %v4069, %v4065
    %4582 = vmatprep.subr.bf16.mxu0 %v4071
    %4583 = vmatpush1.bf16.msra.mxu0 %v4070
    %4584 = vmatprep.subr.bf16.mxu0 %v4075
    %4585 = vmatpush1.bf16.msra.mxu0 %v4074
    %4586 = vmatprep.subr.bf16.mxu0 %v4079
    %4587 = vmatpush1.bf16.msra.mxu0 %v4078
    %4588 = vmatprep.subr.bf16.mxu0 %v4083
    %4589 = vmatpush1.bf16.msra.mxu0 %v4082
    %4590 = vmatprep.subr.bf16.mxu0 %v4087
    %4591 = vmatpush1.bf16.msra.mxu0 %v4086
    %4592 = vmatprep.subr.bf16.mxu0 %v4091
    %4593 = vmatpush1.bf16.msra.mxu0 %v4090
    %4594 = vmatprep.subr.bf16.mxu0 %v4095
    %4595 = vmatpush1.bf16.msra.mxu0 %v4094
    %4596 = vmatprep.subr.bf16.mxu0 %v4099
    %4597 = vmatpush1.bf16.msra.mxu0 %v4098
    %4598 = vmatprep.subr.bf16.mxu0 %v4103
    %4599 = vmatpush1.bf16.msra.mxu0 %v4102
    %4600 = vmatprep.subr.bf16.mxu0 %v4107
    %4601 = vmatpush1.bf16.msra.mxu0 %v4106
    %4602 = vmatprep.subr.bf16.mxu0 %v4111
    %4603 = vmatpush1.bf16.msra.mxu0 %v4110
    %4604 = vmatprep.subr.bf16.mxu0 %v4115
    %4605 = vmatpush1.bf16.msra.mxu0 %v4114
    %4606 = vmatprep.subr.bf16.mxu0 %v4119
    %4607 = vmatpush1.bf16.msra.mxu0 %v4118
    %4608 = vmatprep.subr.bf16.mxu0 %v4123
    %4609 = vmatpush1.bf16.msra.mxu0 %v4122
    %4610 = vmatprep.subr.bf16.mxu0 %v4127
    %4611 = vmatpush1.bf16.msra.mxu0 %v4126
    %4612 = vmatprep.subr.bf16.mxu0 %v4131
    %4613 = vmatpush1.bf16.msra.mxu0 %v4130
    %4614 = vmatprep.mubr.bf16.mxu0 %v3287
    %4615 = vmatmul.mubr.bf16.gmra.mrb[0].mxu0 %v3286
    %v4616 = vpop.f32.mrb[0].mxu0
    %v4617 = vadd.f32 %v3228, %v4616
    %v4618 = vpop.f32.mrb[0].mxu0
    %v4619 = vadd.f32 %v3232, %v4618
    %v4620 = vpop.f32.mrb[0].mxu0
    %v4621 = vpop.f32.mrb[0].mxu0
    %4622 = vdwg.mxu0
    %4623 = vmatprep.subr.bf16.mxu0 %v4135
    %4624 = vmatpush1.bf16.msra.mxu0 %v4134
    %4625 = vmatprep.subr.bf16.mxu0 %v4139
    %4626 = vmatpush1.bf16.msra.mxu0 %v4138
    %4627 = vmatprep.subr.bf16.mxu0 %v4143
    %4628 = vmatpush1.bf16.msra.mxu0 %v4142
    %4629 = vmatprep.subr.bf16.mxu0 %v4147
    %4630 = vmatpush1.bf16.msra.mxu0 %v4146
    %4631 = vmatprep.subr.bf16.mxu0 %v4151
    %4632 = vmatpush1.bf16.msra.mxu0 %v4150
    %4633 = vmatprep.subr.bf16.mxu0 %v4155
    %4634 = vmatpush1.bf16.msra.mxu0 %v4154
    %4635 = vmatprep.subr.bf16.mxu0 %v4159
    %4636 = vmatpush1.bf16.msra.mxu0 %v4158
    %4637 = vmatprep.subr.bf16.mxu0 %v4163
    %4638 = vmatpush1.bf16.msra.mxu0 %v4162
    %4639 = vmatprep.subr.bf16.mxu0 %v4167
    %4640 = vmatpush1.bf16.msra.mxu0 %v4166
    %4641 = vmatprep.subr.bf16.mxu0 %v4171
    %4642 = vmatpush1.bf16.msra.mxu0 %v4170
    %4643 = vmatprep.subr.bf16.mxu0 %v4175
    %4644 = vmatpush1.bf16.msra.mxu0 %v4174
    %4645 = vmatprep.subr.bf16.mxu0 %v4179
    %4646 = vmatpush1.bf16.msra.mxu0 %v4178
    %4647 = vmatprep.subr.bf16.mxu0 %v4183
    %4648 = vmatpush1.bf16.msra.mxu0 %v4182
    %4649 = vmatprep.subr.bf16.mxu0 %v4187
    %4650 = vmatpush1.bf16.msra.mxu0 %v4186
    %4651 = vmatprep.subr.bf16.mxu0 %v4191
    %4652 = vmatpush1.bf16.msra.mxu0 %v4190
    %4653 = vmatprep.subr.bf16.mxu0 %v4195
    %4654 = vmatpush1.bf16.msra.mxu0 %v4194
    %4655 = vmatprep.mubr.bf16.mxu0 %v3289
    %4656 = vmatmul.mubr.bf16.gmra.mrb[0].mxu0 %v3288
    %v4657 = vpop.f32.mrb[0].mxu0
    %v4658 = vadd.f32 %v4617, %v4657
    %v4659 = vpop.f32.mrb[0].mxu0
    %v4660 = vadd.f32 %v4619, %v4659
    %v4661 = vpop.f32.mrb[0].mxu0
    %v4662 = vpop.f32.mrb[0].mxu0
    %4663 = vdwg.mxu0
    %4664 = vmatprep.subr.bf16.mxu0 %v4199
    %4665 = vmatpush1.bf16.msra.mxu0 %v4198
    %4666 = vmatprep.subr.bf16.mxu0 %v4203
    %4667 = vmatpush1.bf16.msra.mxu0 %v4202
    %4668 = vmatprep.subr.bf16.mxu0 %v4207
    %4669 = vmatpush1.bf16.msra.mxu0 %v4206
    %4670 = vmatprep.subr.bf16.mxu0 %v4211
    %4671 = vmatpush1.bf16.msra.mxu0 %v4210
    %4672 = vmatprep.subr.bf16.mxu0 %v4215
    %4673 = vmatpush1.bf16.msra.mxu0 %v4214
    %4674 = vmatprep.subr.bf16.mxu0 %v4219
    %4675 = vmatpush1.bf16.msra.mxu0 %v4218
    %4676 = vmatprep.subr.bf16.mxu0 %v4223
    %4677 = vmatpush1.bf16.msra.mxu0 %v4222
    %4678 = vmatprep.subr.bf16.mxu0 %v4227
    %4679 = vmatpush1.bf16.msra.mxu0 %v4226
    %4680 = vmatprep.subr.bf16.mxu0 %v4231
    %4681 = vmatpush1.bf16.msra.mxu0 %v4230
    %4682 = vmatprep.subr.bf16.mxu0 %v4235
    %4683 = vmatpush1.bf16.msra.mxu0 %v4234
    %4684 = vmatprep.subr.bf16.mxu0 %v4239
    %4685 = vmatpush1.bf16.msra.mxu0 %v4238
    %4686 = vmatprep.subr.bf16.mxu0 %v4243
    %4687 = vmatpush1.bf16.msra.mxu0 %v4242
    %4688 = vmatprep.subr.bf16.mxu0 %v4247
    %4689 = vmatpush1.bf16.msra.mxu0 %v4246
    %4690 = vmatprep.subr.bf16.mxu0 %v4251
    %4691 = vmatpush1.bf16.msra.mxu0 %v4250
    %4692 = vmatprep.subr.bf16.mxu0 %v4255
    %4693 = vmatpush1.bf16.msra.mxu0 %v4254
    %4694 = vmatprep.subr.bf16.mxu0 %v4259
    %4695 = vmatpush1.bf16.msra.mxu0 %v4258
    %4696 = vmatprep.mubr.bf16.mxu0 %v3291
    %4697 = vmatmul.mubr.bf16.gmra.mrb[0].mxu0 %v3290
    %v4698 = vpop.f32.mrb[0].mxu0
    %v4699 = vadd.f32 %v4658, %v4698
    %v4700 = vpop.f32.mrb[0].mxu0
    %v4701 = vadd.f32 %v4660, %v4700
    %v4702 = vpop.f32.mrb[0].mxu0
    %v4703 = vpop.f32.mrb[0].mxu0
    %4704 = vdwg.mxu0
    %4705 = vmatprep.subr.bf16.mxu0 %v4263
    %4706 = vmatpush1.bf16.msra.mxu0 %v4262
    %4707 = vmatprep.subr.bf16.mxu0 %v4267
    %4708 = vmatpush1.bf16.msra.mxu0 %v4266
    %4709 = vmatprep.subr.bf16.mxu0 %v4271
    %4710 = vmatpush1.bf16.msra.mxu0 %v4270
    %4711 = vmatprep.subr.bf16.mxu0 %v4275
    %4712 = vmatpush1.bf16.msra.mxu0 %v4274
    %4713 = vmatprep.subr.bf16.mxu0 %v4279
    %4714 = vmatpush1.bf16.msra.mxu0 %v4278
    %4715 = vmatprep.subr.bf16.mxu0 %v4283
    %4716 = vmatpush1.bf16.msra.mxu0 %v4282
    %4717 = vmatprep.subr.bf16.mxu0 %v4287
    %4718 = vmatpush1.bf16.msra.mxu0 %v4286
    %4719 = vmatprep.subr.bf16.mxu0 %v4291
    %4720 = vmatpush1.bf16.msra.mxu0 %v4290
    %4721 = vmatprep.subr.bf16.mxu0 %v4295
    %4722 = vmatpush1.bf16.msra.mxu0 %v4294
    %4723 = vmatprep.subr.bf16.mxu0 %v4299
    %4724 = vmatpush1.bf16.msra.mxu0 %v4298
    %4725 = vmatprep.subr.bf16.mxu0 %v4303
    %4726 = vmatpush1.bf16.msra.mxu0 %v4302
    %4727 = vmatprep.subr.bf16.mxu0 %v4307
    %4728 = vmatpush1.bf16.msra.mxu0 %v4306
    %4729 = vmatprep.subr.bf16.mxu0 %v4311
    %4730 = vmatpush1.bf16.msra.mxu0 %v4310
    %4731 = vmatprep.subr.bf16.mxu0 %v4315
    %4732 = vmatpush1.bf16.msra.mxu0 %v4314
    %4733 = vmatprep.subr.bf16.mxu0 %v4319
    %4734 = vmatpush1.bf16.msra.mxu0 %v4318
    %4735 = vmatprep.subr.bf16.mxu0 %v4323
    %4736 = vmatpush1.bf16.msra.mxu0 %v4322
    %4737 = vmatprep.mubr.bf16.mxu0 %v3293
    %4738 = vmatmul.mubr.bf16.gmra.mrb[0].mxu0 %v3292
    %v4739 = vpop.f32.mrb[0].mxu0
    %v4740 = vadd.f32 %v4699, %v4739
    %v4741 = vpop.f32.mrb[0].mxu0
    %v4742 = vadd.f32 %v4701, %v4741
    %v4743 = vpop.f32.mrb[0].mxu0
    %v4744 = vpop.f32.mrb[0].mxu0
    %4745 = vdwg.mxu0
    %4746 = vmatprep.subr.bf16.mxu0 %v4073
    %4747 = vmatpush1.bf16.msra.mxu0 %v4072
    %4748 = vmatprep.subr.bf16.mxu0 %v4077
    %4749 = vmatpush1.bf16.msra.mxu0 %v4076
    %4750 = vmatprep.subr.bf16.mxu0 %v4081
    %4751 = vmatpush1.bf16.msra.mxu0 %v4080
    %4752 = vmatprep.subr.bf16.mxu0 %v4085
    %4753 = vmatpush1.bf16.msra.mxu0 %v4084
    %4754 = vmatprep.subr.bf16.mxu0 %v4089
    %4755 = vmatpush1.bf16.msra.mxu0 %v4088
    %4756 = vmatprep.subr.bf16.mxu0 %v4093
    %4757 = vmatpush1.bf16.msra.mxu0 %v4092
    %4758 = vmatprep.subr.bf16.mxu0 %v4097
    %4759 = vmatpush1.bf16.msra.mxu0 %v4096
    %4760 = vmatprep.subr.bf16.mxu0 %v4101
    %4761 = vmatpush1.bf16.msra.mxu0 %v4100
    %4762 = vmatprep.subr.bf16.mxu0 %v4105
    %4763 = vmatpush1.bf16.msra.mxu0 %v4104
    %4764 = vmatprep.subr.bf16.mxu0 %v4109
    %4765 = vmatpush1.bf16.msra.mxu0 %v4108
    %4766 = vmatprep.subr.bf16.mxu0 %v4113
    %4767 = vmatpush1.bf16.msra.mxu0 %v4112
    %4768 = vmatprep.subr.bf16.mxu0 %v4117
    %4769 = vmatpush1.bf16.msra.mxu0 %v4116
    %4770 = vmatprep.subr.bf16.mxu0 %v4121
    %4771 = vmatpush1.bf16.msra.mxu0 %v4120
    %4772 = vmatprep.subr.bf16.mxu0 %v4125
    %4773 = vmatpush1.bf16.msra.mxu0 %v4124
    %4774 = vmatprep.subr.bf16.mxu0 %v4129
    %4775 = vmatpush1.bf16.msra.mxu0 %v4128
    %4776 = vmatprep.subr.bf16.mxu0 %v4133
    %4777 = vmatpush1.bf16.msra.mxu0 %v4132
    %4778 = vmatprep.mubr.bf16.mxu0 %v3287
    %4779 = vmatmul.mubr.bf16.gmra.mrb[0].mxu0 %v3286
    %v4780 = vpop.f32.mrb[0].mxu0
    %v4781 = vadd.f32 %v3236, %v4780
    %v4782 = vpop.f32.mrb[0].mxu0
    %v4783 = vadd.f32 %v3240, %v4782
    %v4784 = vpop.f32.mrb[0].mxu0
    %v4785 = vpop.f32.mrb[0].mxu0
    %4786 = vdwg.mxu0
    %4787 = vmatprep.subr.bf16.mxu0 %v4137
    %4788 = vmatpush1.bf16.msra.mxu0 %v4136
    %4789 = vmatprep.subr.bf16.mxu0 %v4141
    %4790 = vmatpush1.bf16.msra.mxu0 %v4140
    %4791 = vmatprep.subr.bf16.mxu0 %v4145
    %4792 = vmatpush1.bf16.msra.mxu0 %v4144
    %4793 = vmatprep.subr.bf16.mxu0 %v4149
    %4794 = vmatpush1.bf16.msra.mxu0 %v4148
    %4795 = vmatprep.subr.bf16.mxu0 %v4153
    %4796 = vmatpush1.bf16.msra.mxu0 %v4152
    %4797 = vmatprep.subr.bf16.mxu0 %v4157
    %4798 = vmatpush1.bf16.msra.mxu0 %v4156
    %4799 = vmatprep.subr.bf16.mxu0 %v4161
    %4800 = vmatpush1.bf16.msra.mxu0 %v4160
    %4801 = vmatprep.subr.bf16.mxu0 %v4165
    %4802 = vmatpush1.bf16.msra.mxu0 %v4164
    %4803 = vmatprep.subr.bf16.mxu0 %v4169
    %4804 = vmatpush1.bf16.msra.mxu0 %v4168
    %4805 = vmatprep.subr.bf16.mxu0 %v4173
    %4806 = vmatpush1.bf16.msra.mxu0 %v4172
    %4807 = vmatprep.subr.bf16.mxu0 %v4177
    %4808 = vmatpush1.bf16.msra.mxu0 %v4176
    %4809 = vmatprep.subr.bf16.mxu0 %v4181
    %4810 = vmatpush1.bf16.msra.mxu0 %v4180
    %4811 = vmatprep.subr.bf16.mxu0 %v4185
    %4812 = vmatpush1.bf16.msra.mxu0 %v4184
    %4813 = vmatprep.subr.bf16.mxu0 %v4189
    %4814 = vmatpush1.bf16.msra.mxu0 %v4188
    %4815 = vmatprep.subr.bf16.mxu0 %v4193
    %4816 = vmatpush1.bf16.msra.mxu0 %v4192
    %4817 = vmatprep.subr.bf16.mxu0 %v4197
    %4818 = vmatpush1.bf16.msra.mxu0 %v4196
    %4819 = vmatprep.mubr.bf16.mxu0 %v3289
    %4820 = vmatmul.mubr.bf16.gmra.mrb[0].mxu0 %v3288
    %v4821 = vpop.f32.mrb[0].mxu0
    %v4822 = vadd.f32 %v4781, %v4821
    %v4823 = vpop.f32.mrb[0].mxu0
    %v4824 = vadd.f32 %v4783, %v4823
    %v4825 = vpop.f32.mrb[0].mxu0
    %v4826 = vpop.f32.mrb[0].mxu0
    %4827 = vdwg.mxu0
    %4828 = vmatprep.subr.bf16.mxu0 %v4201
    %4829 = vmatpush1.bf16.msra.mxu0 %v4200
    %4830 = vmatprep.subr.bf16.mxu0 %v4205
    %4831 = vmatpush1.bf16.msra.mxu0 %v4204
    %4832 = vmatprep.subr.bf16.mxu0 %v4209
    %4833 = vmatpush1.bf16.msra.mxu0 %v4208
    %4834 = vmatprep.subr.bf16.mxu0 %v4213
    %4835 = vmatpush1.bf16.msra.mxu0 %v4212
    %4836 = vmatprep.subr.bf16.mxu0 %v4217
    %4837 = vmatpush1.bf16.msra.mxu0 %v4216
    %4838 = vmatprep.subr.bf16.mxu0 %v4221
    %4839 = vmatpush1.bf16.msra.mxu0 %v4220
    %4840 = vmatprep.subr.bf16.mxu0 %v4225
    %4841 = vmatpush1.bf16.msra.mxu0 %v4224
    %4842 = vmatprep.subr.bf16.mxu0 %v4229
    %4843 = vmatpush1.bf16.msra.mxu0 %v4228
    %4844 = vmatprep.subr.bf16.mxu0 %v4233
    %4845 = vmatpush1.bf16.msra.mxu0 %v4232
    %4846 = vmatprep.subr.bf16.mxu0 %v4237
    %4847 = vmatpush1.bf16.msra.mxu0 %v4236
    %4848 = vmatprep.subr.bf16.mxu0 %v4241
    %4849 = vmatpush1.bf16.msra.mxu0 %v4240
    %4850 = vmatprep.subr.bf16.mxu0 %v4245
    %4851 = vmatpush1.bf16.msra.mxu0 %v4244
    %4852 = vmatprep.subr.bf16.mxu0 %v4249
    %4853 = vmatpush1.bf16.msra.mxu0 %v4248
    %4854 = vmatprep.subr.bf16.mxu0 %v4253
    %4855 = vmatpush1.bf16.msra.mxu0 %v4252
    %4856 = vmatprep.subr.bf16.mxu0 %v4257
    %4857 = vmatpush1.bf16.msra.mxu0 %v4256
    %4858 = vmatprep.subr.bf16.mxu0 %v4261
    %4859 = vmatpush1.bf16.msra.mxu0 %v4260
    %4860 = vmatprep.mubr.bf16.mxu0 %v3291
    %4861 = vmatmul.mubr.bf16.gmra.mrb[0].mxu0 %v3290
    %v4862 = vpop.f32.mrb[0].mxu0
    %v4863 = vadd.f32 %v4822, %v4862
    %v4864 = vpop.f32.mrb[0].mxu0
    %v4865 = vadd.f32 %v4824, %v4864
    %v4866 = vpop.f32.mrb[0].mxu0
    %v4867 = vpop.f32.mrb[0].mxu0
    %4868 = vdwg.mxu0
    %4869 = vmatprep.subr.bf16.mxu0 %v4265
    %4870 = vmatpush1.bf16.msra.mxu0 %v4264
    %4871 = vmatprep.subr.bf16.mxu0 %v4269
    %4872 = vmatpush1.bf16.msra.mxu0 %v4268
    %4873 = vmatprep.subr.bf16.mxu0 %v4273
    %4874 = vmatpush1.bf16.msra.mxu0 %v4272
    %4875 = vmatprep.subr.bf16.mxu0 %v4277
    %4876 = vmatpush1.bf16.msra.mxu0 %v4276
    %4877 = vmatprep.subr.bf16.mxu0 %v4281
    %4878 = vmatpush1.bf16.msra.mxu0 %v4280
    %4879 = vmatprep.subr.bf16.mxu0 %v4285
    %4880 = vmatpush1.bf16.msra.mxu0 %v4284
    %4881 = vmatprep.subr.bf16.mxu0 %v4289
    %4882 = vmatpush1.bf16.msra.mxu0 %v4288
    %4883 = vmatprep.subr.bf16.mxu0 %v4293
    %4884 = vmatpush1.bf16.msra.mxu0 %v4292
    %4885 = vmatprep.subr.bf16.mxu0 %v4297
    %4886 = vmatpush1.bf16.msra.mxu0 %v4296
    %4887 = vmatprep.subr.bf16.mxu0 %v4301
    %4888 = vmatpush1.bf16.msra.mxu0 %v4300
    %4889 = vmatprep.subr.bf16.mxu0 %v4305
    %4890 = vmatpush1.bf16.msra.mxu0 %v4304
    %4891 = vmatprep.subr.bf16.mxu0 %v4309
    %4892 = vmatpush1.bf16.msra.mxu0 %v4308
    %4893 = vmatprep.subr.bf16.mxu0 %v4313
    %4894 = vmatpush1.bf16.msra.mxu0 %v4312
    %4895 = vmatprep.subr.bf16.mxu0 %v4317
    %4896 = vmatpush1.bf16.msra.mxu0 %v4316
    %4897 = vmatprep.subr.bf16.mxu0 %v4321
    %4898 = vmatpush1.bf16.msra.mxu0 %v4320
    %4899 = vmatprep.subr.bf16.mxu0 %v4325
    %4900 = vmatpush1.bf16.msra.mxu0 %v4324
    %4901 = vmatprep.mubr.bf16.mxu0 %v3293
    %4902 = vmatmul.mubr.bf16.gmra.mrb[0].mxu0 %v3292
    %v4903 = vpop.f32.mrb[0].mxu0
    %v4904 = vadd.f32 %v4863, %v4903
    %v4905 = vpop.f32.mrb[0].mxu0
    %v4906 = vadd.f32 %v4865, %v4905
    %v4907 = vpop.f32.mrb[0].mxu0
    %v4908 = vpop.f32.mrb[0].mxu0
    %4909 = vdwg.mxu0
    %v4910 = vmax.f32 %v4740, 0.0
    %v4911 = vmax.f32 %v4742, 0.0
    %v4912 = vmax.f32 %v4904, 0.0
    %v4913 = vmax.f32 %v4906, 0.0
    %v4914 = vpack.c.bf16 %v4910, %v4910
    %v4915 = vpack.c.bf16 %v4911, %v4911
    %v4916 = vpack.c.bf16 %v4912, %v4912
    %v4917 = vpack.c.bf16 %v4913, %v4913
    %v4918 = vld [vmem:[%s11] sm:$0xff]
    %v4919 = vld [vmem:[%s11 + $0x8] sm:$0xff]
    %v4920 = vld [vmem:[%s11 + $0x10] sm:$0xff]
    %v4921 = vld [vmem:[%s11 + $0x18] sm:$0xff]
    %v4922 = vld [vmem:[%s11 + $0x20] sm:$0xff]
    %v4923 = vld [vmem:[%s11 + $0x28] sm:$0xff]
    %v4924 = vld [vmem:[%s11 + $0x30] sm:$0xff]
    %v4925 = vld [vmem:[%s11 + $0x38] sm:$0xff]
    %v4926 = vld [vmem:[%s11 + $0x40] sm:$0xff]
    %v4927 = vld [vmem:[%s11 + $0x48] sm:$0xff]
    %v4928 = vld [vmem:[%s11 + $0x50] sm:$0xff]
    %v4929 = vld [vmem:[%s11 + $0x58] sm:$0xff]
    %v4930 = vld [vmem:[%s11 + $0x60] sm:$0xff]
    %v4931 = vld [vmem:[%s11 + $0x68] sm:$0xff]
    %v4932 = vld [vmem:[%s11 + $0x70] sm:$0xff]
    %v4933 = vld [vmem:[%s11 + $0x78] sm:$0xff]
    %v4934 = vld [vmem:[%s11 + $0x80] sm:$0xff]
    %v4935 = vld [vmem:[%s11 + $0x88] sm:$0xff]
    %v4936 = vld [vmem:[%s11 + $0x90] sm:$0xff]
    %v4937 = vld [vmem:[%s11 + $0x98] sm:$0xff]
    %v4938 = vld [vmem:[%s11 + $0xa0] sm:$0xff]
    %v4939 = vld [vmem:[%s11 + $0xa8] sm:$0xff]
    %v4940 = vld [vmem:[%s11 + $0xb0] sm:$0xff]
    %v4941 = vld [vmem:[%s11 + $0xb8] sm:$0xff]
    %v4942 = vld [vmem:[%s11 + $0xc0] sm:$0xff]
    %v4943 = vld [vmem:[%s11 + $0xc8] sm:$0xff]
    %v4944 = vld [vmem:[%s11 + $0xd0] sm:$0xff]
    %v4945 = vld [vmem:[%s11 + $0xd8] sm:$0xff]
    %v4946 = vld [vmem:[%s11 + $0xe0] sm:$0xff]
    %v4947 = vld [vmem:[%s11 + $0xe8] sm:$0xff]
    %v4948 = vld [vmem:[%s11 + $0xf0] sm:$0xff]
    %v4949 = vld [vmem:[%s11 + $0xf8] sm:$0xff]
    %v4950 = vld [vmem:[%s11 + $0x100] sm:$0xff]
    %v4951 = vld [vmem:[%s11 + $0x108] sm:$0xff]
    %v4952 = vld [vmem:[%s11 + $0x110] sm:$0xff]
    %v4953 = vld [vmem:[%s11 + $0x118] sm:$0xff]
    %v4954 = vld [vmem:[%s11 + $0x120] sm:$0xff]
    %v4955 = vld [vmem:[%s11 + $0x128] sm:$0xff]
    %v4956 = vld [vmem:[%s11 + $0x130] sm:$0xff]
    %v4957 = vld [vmem:[%s11 + $0x138] sm:$0xff]
    %v4958 = vld [vmem:[%s11 + $0x140] sm:$0xff]
    %v4959 = vld [vmem:[%s11 + $0x148] sm:$0xff]
    %v4960 = vld [vmem:[%s11 + $0x150] sm:$0xff]
    %v4961 = vld [vmem:[%s11 + $0x158] sm:$0xff]
    %v4962 = vld [vmem:[%s11 + $0x160] sm:$0xff]
    %v4963 = vld [vmem:[%s11 + $0x168] sm:$0xff]
    %v4964 = vld [vmem:[%s11 + $0x170] sm:$0xff]
    %v4965 = vld [vmem:[%s11 + $0x178] sm:$0xff]
    %v4966 = vld [vmem:[%s11 + $0x180] sm:$0xff]
    %v4967 = vld [vmem:[%s11 + $0x188] sm:$0xff]
    %v4968 = vld [vmem:[%s11 + $0x190] sm:$0xff]
    %v4969 = vld [vmem:[%s11 + $0x198] sm:$0xff]
    %v4970 = vld [vmem:[%s11 + $0x1a0] sm:$0xff]
    %v4971 = vld [vmem:[%s11 + $0x1a8] sm:$0xff]
    %v4972 = vld [vmem:[%s11 + $0x1b0] sm:$0xff]
    %v4973 = vld [vmem:[%s11 + $0x1b8] sm:$0xff]
    %v4974 = vld [vmem:[%s11 + $0x1c0] sm:$0xff]
    %v4975 = vld [vmem:[%s11 + $0x1c8] sm:$0xff]
    %v4976 = vld [vmem:[%s11 + $0x1d0] sm:$0xff]
    %v4977 = vld [vmem:[%s11 + $0x1d8] sm:$0xff]
    %v4978 = vld [vmem:[%s11 + $0x1e0] sm:$0xff]
    %v4979 = vld [vmem:[%s11 + $0x1e8] sm:$0xff]
    %v4980 = vld [vmem:[%s11 + $0x1f0] sm:$0xff]
    %v4981 = vld [vmem:[%s11 + $0x1f8] sm:$0xff]
    %v4982 = vld [vmem:[%s12] sm:$0x3]
    %v4984 = vlaneseq
    %v4985 = vshrl.u32 %v4984, 7
    %v4986 = vsub.s32 0, %v4985
    %v4987 = vrot.slane %v4982, %v4986
    %v4988 = vlaneseq
    %v4989 = vshrl.u32 %v4988, 7
    %v4990 = vsub.s32 1, %v4989
    %v4991 = vrot.slane %v4982, %v4990
    %v5058 = vunpack.c.l.b16 %v4918
    %v5059 = vunpack.c.h.b16 %v4918
    %v5060 = vunpack.c.l.b16 %v4919
    %v5061 = vunpack.c.h.b16 %v4919
    %v5062 = vunpack.c.l.b16 %v4920
    %v5063 = vunpack.c.h.b16 %v4920
    %v5064 = vunpack.c.l.b16 %v4921
    %v5065 = vunpack.c.h.b16 %v4921
    %v5066 = vunpack.c.l.b16 %v4922
    %v5067 = vunpack.c.h.b16 %v4922
    %v5068 = vunpack.c.l.b16 %v4923
    %v5069 = vunpack.c.h.b16 %v4923
    %v5070 = vunpack.c.l.b16 %v4924
    %v5071 = vunpack.c.h.b16 %v4924
    %v5072 = vunpack.c.l.b16 %v4925
    %v5073 = vunpack.c.h.b16 %v4925
    %v5074 = vunpack.c.l.b16 %v4926
    %v5075 = vunpack.c.h.b16 %v4926
    %v5076 = vunpack.c.l.b16 %v4927
    %v5077 = vunpack.c.h.b16 %v4927
    %v5078 = vunpack.c.l.b16 %v4928
    %v5079 = vunpack.c.h.b16 %v4928
    %v5080 = vunpack.c.l.b16 %v4929
    %v5081 = vunpack.c.h.b16 %v4929
    %v5082 = vunpack.c.l.b16 %v4930
    %v5083 = vunpack.c.h.b16 %v4930
    %v5084 = vunpack.c.l.b16 %v4931
    %v5085 = vunpack.c.h.b16 %v4931
    %v5086 = vunpack.c.l.b16 %v4932
    %v5087 = vunpack.c.h.b16 %v4932
    %v5088 = vunpack.c.l.b16 %v4933
    %v5089 = vunpack.c.h.b16 %v4933
    %v5090 = vunpack.c.l.b16 %v4934
    %v5091 = vunpack.c.h.b16 %v4934
    %v5092 = vunpack.c.l.b16 %v4935
    %v5093 = vunpack.c.h.b16 %v4935
    %v5094 = vunpack.c.l.b16 %v4936
    %v5095 = vunpack.c.h.b16 %v4936
    %v5096 = vunpack.c.l.b16 %v4937
    %v5097 = vunpack.c.h.b16 %v4937
    %v5098 = vunpack.c.l.b16 %v4938
    %v5099 = vunpack.c.h.b16 %v4938
    %v5100 = vunpack.c.l.b16 %v4939
    %v5101 = vunpack.c.h.b16 %v4939
    %v5102 = vunpack.c.l.b16 %v4940
    %v5103 = vunpack.c.h.b16 %v4940
    %v5104 = vunpack.c.l.b16 %v4941
    %v5105 = vunpack.c.h.b16 %v4941
    %v5106 = vunpack.c.l.b16 %v4942
    %v5107 = vunpack.c.h.b16 %v4942
    %v5108 = vunpack.c.l.b16 %v4943
    %v5109 = vunpack.c.h.b16 %v4943
    %v5110 = vunpack.c.l.b16 %v4944
    %v5111 = vunpack.c.h.b16 %v4944
    %v5112 = vunpack.c.l.b16 %v4945
    %v5113 = vunpack.c.h.b16 %v4945
    %v5114 = vunpack.c.l.b16 %v4946
    %v5115 = vunpack.c.h.b16 %v4946
    %v5116 = vunpack.c.l.b16 %v4947
    %v5117 = vunpack.c.h.b16 %v4947
    %v5118 = vunpack.c.l.b16 %v4948
    %v5119 = vunpack.c.h.b16 %v4948
    %v5120 = vunpack.c.l.b16 %v4949
    %v5121 = vunpack.c.h.b16 %v4949
    %v5122 = vunpack.c.l.b16 %v4950
    %v5123 = vunpack.c.h.b16 %v4950
    %v5124 = vunpack.c.l.b16 %v4951
    %v5125 = vunpack.c.h.b16 %v4951
    %v5126 = vunpack.c.l.b16 %v4952
    %v5127 = vunpack.c.h.b16 %v4952
    %v5128 = vunpack.c.l.b16 %v4953
    %v5129 = vunpack.c.h.b16 %v4953
    %v5130 = vunpack.c.l.b16 %v4954
    %v5131 = vunpack.c.h.b16 %v4954
    %v5132 = vunpack.c.l.b16 %v4955
    %v5133 = vunpack.c.h.b16 %v4955
    %v5134 = vunpack.c.l.b16 %v4956
    %v5135 = vunpack.c.h.b16 %v4956
    %v5136 = vunpack.c.l.b16 %v4957
    %v5137 = vunpack.c.h.b16 %v4957
    %v5138 = vunpack.c.l.b16 %v4958
    %v5139 = vunpack.c.h.b16 %v4958
    %v5140 = vunpack.c.l.b16 %v4959
    %v5141 = vunpack.c.h.b16 %v4959
    %v5142 = vunpack.c.l.b16 %v4960
    %v5143 = vunpack.c.h.b16 %v4960
    %v5144 = vunpack.c.l.b16 %v4961
    %v5145 = vunpack.c.h.b16 %v4961
    %v5146 = vunpack.c.l.b16 %v4962
    %v5147 = vunpack.c.h.b16 %v4962
    %v5148 = vunpack.c.l.b16 %v4963
    %v5149 = vunpack.c.h.b16 %v4963
    %v5150 = vunpack.c.l.b16 %v4964
    %v5151 = vunpack.c.h.b16 %v4964
    %v5152 = vunpack.c.l.b16 %v4965
    %v5153 = vunpack.c.h.b16 %v4965
    %v5154 = vunpack.c.l.b16 %v4966
    %v5155 = vunpack.c.h.b16 %v4966
    %v5156 = vunpack.c.l.b16 %v4967
    %v5157 = vunpack.c.h.b16 %v4967
    %v5158 = vunpack.c.l.b16 %v4968
    %v5159 = vunpack.c.h.b16 %v4968
    %v5160 = vunpack.c.l.b16 %v4969
    %v5161 = vunpack.c.h.b16 %v4969
    %v5162 = vunpack.c.l.b16 %v4970
    %v5163 = vunpack.c.h.b16 %v4970
    %v5164 = vunpack.c.l.b16 %v4971
    %v5165 = vunpack.c.h.b16 %v4971
    %v5166 = vunpack.c.l.b16 %v4972
    %v5167 = vunpack.c.h.b16 %v4972
    %v5168 = vunpack.c.l.b16 %v4973
    %v5169 = vunpack.c.h.b16 %v4973
    %v5170 = vunpack.c.l.b16 %v4974
    %v5171 = vunpack.c.h.b16 %v4974
    %v5172 = vunpack.c.l.b16 %v4975
    %v5173 = vunpack.c.h.b16 %v4975
    %v5174 = vunpack.c.l.b16 %v4976
    %v5175 = vunpack.c.h.b16 %v4976
    %v5176 = vunpack.c.l.b16 %v4977
    %v5177 = vunpack.c.h.b16 %v4977
    %v5178 = vunpack.c.l.b16 %v4978
    %v5179 = vunpack.c.h.b16 %v4978
    %v5180 = vunpack.c.l.b16 %v4979
    %v5181 = vunpack.c.h.b16 %v4979
    %v5182 = vunpack.c.l.b16 %v4980
    %v5183 = vunpack.c.h.b16 %v4980
    %v5184 = vunpack.c.l.b16 %v4981
    %v5185 = vunpack.c.h.b16 %v4981
    %v5186 = vpack.c.b16 %v5060, %v5058
    %v5187 = vpack.c.b16 %v5061, %v5059
    %v5188 = vpack.c.b16 %v5064, %v5062
    %v5189 = vpack.c.b16 %v5065, %v5063
    %v5190 = vpack.c.b16 %v5068, %v5066
    %v5191 = vpack.c.b16 %v5069, %v5067
    %v5192 = vpack.c.b16 %v5072, %v5070
    %v5193 = vpack.c.b16 %v5073, %v5071
    %v5194 = vpack.c.b16 %v5076, %v5074
    %v5195 = vpack.c.b16 %v5077, %v5075
    %v5196 = vpack.c.b16 %v5080, %v5078
    %v5197 = vpack.c.b16 %v5081, %v5079
    %v5198 = vpack.c.b16 %v5084, %v5082
    %v5199 = vpack.c.b16 %v5085, %v5083
    %v5200 = vpack.c.b16 %v5088, %v5086
    %v5201 = vpack.c.b16 %v5089, %v5087
    %v5202 = vpack.c.b16 %v5092, %v5090
    %v5203 = vpack.c.b16 %v5093, %v5091
    %v5204 = vpack.c.b16 %v5096, %v5094
    %v5205 = vpack.c.b16 %v5097, %v5095
    %v5206 = vpack.c.b16 %v5100, %v5098
    %v5207 = vpack.c.b16 %v5101, %v5099
    %v5208 = vpack.c.b16 %v5104, %v5102
    %v5209 = vpack.c.b16 %v5105, %v5103
    %v5210 = vpack.c.b16 %v5108, %v5106
    %v5211 = vpack.c.b16 %v5109, %v5107
    %v5212 = vpack.c.b16 %v5112, %v5110
    %v5213 = vpack.c.b16 %v5113, %v5111
    %v5214 = vpack.c.b16 %v5116, %v5114
    %v5215 = vpack.c.b16 %v5117, %v5115
    %v5216 = vpack.c.b16 %v5120, %v5118
    %v5217 = vpack.c.b16 %v5121, %v5119
    %v5218 = vpack.c.b16 %v5124, %v5122
    %v5219 = vpack.c.b16 %v5125, %v5123
    %v5220 = vpack.c.b16 %v5128, %v5126
    %v5221 = vpack.c.b16 %v5129, %v5127
    %v5222 = vpack.c.b16 %v5132, %v5130
    %v5223 = vpack.c.b16 %v5133, %v5131
    %v5224 = vpack.c.b16 %v5136, %v5134
    %v5225 = vpack.c.b16 %v5137, %v5135
    %v5226 = vpack.c.b16 %v5140, %v5138
    %v5227 = vpack.c.b16 %v5141, %v5139
    %v5228 = vpack.c.b16 %v5144, %v5142
    %v5229 = vpack.c.b16 %v5145, %v5143
    %v5230 = vpack.c.b16 %v5148, %v5146
    %v5231 = vpack.c.b16 %v5149, %v5147
    %v5232 = vpack.c.b16 %v5152, %v5150
    %v5233 = vpack.c.b16 %v5153, %v5151
    %v5234 = vpack.c.b16 %v5156, %v5154
    %v5235 = vpack.c.b16 %v5157, %v5155
    %v5236 = vpack.c.b16 %v5160, %v5158
    %v5237 = vpack.c.b16 %v5161, %v5159
    %v5238 = vpack.c.b16 %v5164, %v5162
    %v5239 = vpack.c.b16 %v5165, %v5163
    %v5240 = vpack.c.b16 %v5168, %v5166
    %v5241 = vpack.c.b16 %v5169, %v5167
    %v5242 = vpack.c.b16 %v5172, %v5170
    %v5243 = vpack.c.b16 %v5173, %v5171
    %v5244 = vpack.c.b16 %v5176, %v5174
    %v5245 = vpack.c.b16 %v5177, %v5175
    %v5246 = vpack.c.b16 %v5180, %v5178
    %v5247 = vpack.c.b16 %v5181, %v5179
    %v5248 = vpack.c.b16 %v5184, %v5182
    %v5249 = vpack.c.b16 %v5185, %v5183
    %5314 = vmatprep.subr.bf16.mxu0 %v5187
    %5315 = vmatpush1.bf16.msra.mxu0 %v5186
    %5316 = vmatprep.subr.bf16.mxu0 %v5189
    %5317 = vmatpush1.bf16.msra.mxu0 %v5188
    %5318 = vmatprep.subr.bf16.mxu0 %v5191
    %5319 = vmatpush1.bf16.msra.mxu0 %v5190
    %5320 = vmatprep.subr.bf16.mxu0 %v5193
    %5321 = vmatpush1.bf16.msra.mxu0 %v5192
    %5322 = vmatprep.subr.bf16.mxu0 %v5195
    %5323 = vmatpush1.bf16.msra.mxu0 %v5194
    %5324 = vmatprep.subr.bf16.mxu0 %v5197
    %5325 = vmatpush1.bf16.msra.mxu0 %v5196
    %5326 = vmatprep.subr.bf16.mxu0 %v5199
    %5327 = vmatpush1.bf16.msra.mxu0 %v5198
    %5328 = vmatprep.subr.bf16.mxu0 %v5201
    %5329 = vmatpush1.bf16.msra.mxu0 %v5200
    %5330 = vmatprep.subr.bf16.mxu0 %v5203
    %5331 = vmatpush1.bf16.msra.mxu0 %v5202
    %5332 = vmatprep.subr.bf16.mxu0 %v5205
    %5333 = vmatpush1.bf16.msra.mxu0 %v5204
    %5334 = vmatprep.subr.bf16.mxu0 %v5207
    %5335 = vmatpush1.bf16.msra.mxu0 %v5206
    %5336 = vmatprep.subr.bf16.mxu0 %v5209
    %5337 = vmatpush1.bf16.msra.mxu0 %v5208
    %5338 = vmatprep.subr.bf16.mxu0 %v5211
    %5339 = vmatpush1.bf16.msra.mxu0 %v5210
    %5340 = vmatprep.subr.bf16.mxu0 %v5213
    %5341 = vmatpush1.bf16.msra.mxu0 %v5212
    %5342 = vmatprep.subr.bf16.mxu0 %v5215
    %5343 = vmatpush1.bf16.msra.mxu0 %v5214
    %5344 = vmatprep.subr.bf16.mxu0 %v5217
    %5345 = vmatpush1.bf16.msra.mxu0 %v5216
    %5346 = vmatprep.mubr.bf16.mxu0 %v4915
    %5347 = vmatmul.mubr.bf16.gmra.mrb[0].mxu0 %v4914
    %v5348 = vpop.f32.mrb[0].mxu0
    %v5349 = vadd.f32 %v4987, %v5348
    %v5350 = vpop.f32.mrb[0].mxu0
    %v5351 = vadd.f32 %v4991, %v5350
    %v5352 = vpop.f32.mrb[0].mxu0
    %v5353 = vpop.f32.mrb[0].mxu0
    %5354 = vdwg.mxu0
    %5355 = vmatprep.subr.bf16.mxu0 %v5219
    %5356 = vmatpush1.bf16.msra.mxu0 %v5218
    %5357 = vmatprep.subr.bf16.mxu0 %v5221
    %5358 = vmatpush1.bf16.msra.mxu0 %v5220
    %5359 = vmatprep.subr.bf16.mxu0 %v5223
    %5360 = vmatpush1.bf16.msra.mxu0 %v5222
    %5361 = vmatprep.subr.bf16.mxu0 %v5225
    %5362 = vmatpush1.bf16.msra.mxu0 %v5224
    %5363 = vmatprep.subr.bf16.mxu0 %v5227
    %5364 = vmatpush1.bf16.msra.mxu0 %v5226
    %5365 = vmatprep.subr.bf16.mxu0 %v5229
    %5366 = vmatpush1.bf16.msra.mxu0 %v5228
    %5367 = vmatprep.subr.bf16.mxu0 %v5231
    %5368 = vmatpush1.bf16.msra.mxu0 %v5230
    %5369 = vmatprep.subr.bf16.mxu0 %v5233
    %5370 = vmatpush1.bf16.msra.mxu0 %v5232
    %5371 = vmatprep.subr.bf16.mxu0 %v5235
    %5372 = vmatpush1.bf16.msra.mxu0 %v5234
    %5373 = vmatprep.subr.bf16.mxu0 %v5237
    %5374 = vmatpush1.bf16.msra.mxu0 %v5236
    %5375 = vmatprep.subr.bf16.mxu0 %v5239
    %5376 = vmatpush1.bf16.msra.mxu0 %v5238
    %5377 = vmatprep.subr.bf16.mxu0 %v5241
    %5378 = vmatpush1.bf16.msra.mxu0 %v5240
    %5379 = vmatprep.subr.bf16.mxu0 %v5243
    %5380 = vmatpush1.bf16.msra.mxu0 %v5242
    %5381 = vmatprep.subr.bf16.mxu0 %v5245
    %5382 = vmatpush1.bf16.msra.mxu0 %v5244
    %5383 = vmatprep.subr.bf16.mxu0 %v5247
    %5384 = vmatpush1.bf16.msra.mxu0 %v5246
    %5385 = vmatprep.subr.bf16.mxu0 %v5249
    %5386 = vmatpush1.bf16.msra.mxu0 %v5248
    %5387 = vmatprep.mubr.bf16.mxu0 %v4917
    %5388 = vmatmul.mubr.bf16.gmra.mrb[0].mxu0 %v4916
    %v5389 = vpop.f32.mrb[0].mxu0
    %v5390 = vadd.f32 %v5349, %v5389
    %v5391 = vpop.f32.mrb[0].mxu0
    %v5392 = vadd.f32 %v5351, %v5391
    %v5393 = vpop.f32.mrb[0].mxu0
    %v5394 = vpop.f32.mrb[0].mxu0
    %5395 = vdwg.mxu0
    %v5396 = vmax.f32 %v5390, 0.0
    %v5397 = vmax.f32 %v5392, 0.0
    %v5398 = vpack.c.bf16 %v5396, %v5396
    %v5399 = vpack.c.bf16 %v5397, %v5397
    %v5400 = vld [vmem:[%s13] sm:$0xf]
    %v5401 = vld [vmem:[%s13 + $0x4] sm:$0xf]
    %v5402 = vld [vmem:[%s13 + $0x8] sm:$0xf]
    %v5403 = vld [vmem:[%s13 + $0xc] sm:$0xf]
    %v5404 = vld [vmem:[%s13 + $0x10] sm:$0xf]
    %v5405 = vld [vmem:[%s13 + $0x14] sm:$0xf]
    %v5406 = vld [vmem:[%s13 + $0x18] sm:$0xf]
    %v5407 = vld [vmem:[%s13 + $0x1c] sm:$0xf]
    %v5408 = vld [vmem:[%s13 + $0x20] sm:$0xf]
    %v5409 = vld [vmem:[%s13 + $0x24] sm:$0xf]
    %v5410 = vld [vmem:[%s13 + $0x28] sm:$0xf]
    %v5411 = vld [vmem:[%s13 + $0x2c] sm:$0xf]
    %v5412 = vld [vmem:[%s13 + $0x30] sm:$0xf]
    %v5413 = vld [vmem:[%s13 + $0x34] sm:$0xf]
    %v5414 = vld [vmem:[%s13 + $0x38] sm:$0xf]
    %v5415 = vld [vmem:[%s13 + $0x3c] sm:$0xf]
    %v5416 = vld [vmem:[%s13 + $0x40] sm:$0xf]
    %v5417 = vld [vmem:[%s13 + $0x44] sm:$0xf]
    %v5418 = vld [vmem:[%s13 + $0x48] sm:$0xf]
    %v5419 = vld [vmem:[%s13 + $0x4c] sm:$0xf]
    %v5420 = vld [vmem:[%s13 + $0x50] sm:$0xf]
    %v5421 = vld [vmem:[%s13 + $0x54] sm:$0xf]
    %v5422 = vld [vmem:[%s13 + $0x58] sm:$0xf]
    %v5423 = vld [vmem:[%s13 + $0x5c] sm:$0xf]
    %v5424 = vld [vmem:[%s13 + $0x60] sm:$0xf]
    %v5425 = vld [vmem:[%s13 + $0x64] sm:$0xf]
    %v5426 = vld [vmem:[%s13 + $0x68] sm:$0xf]
    %v5427 = vld [vmem:[%s13 + $0x6c] sm:$0xf]
    %v5428 = vld [vmem:[%s13 + $0x70] sm:$0xf]
    %v5429 = vld [vmem:[%s13 + $0x74] sm:$0xf]
    %v5430 = vld [vmem:[%s13 + $0x78] sm:$0xf]
    %v5431 = vld [vmem:[%s13 + $0x7c] sm:$0xf]
    %v5432 = vld [vmem:[%s14] sm:$0x1]
    %v5434 = vlaneseq
    %v5435 = vshrl.u32 %v5434, 7
    %v5436 = vsub.s32 0, %v5435
    %v5437 = vrot.slane %v5432, %v5436
    %v5471 = vunpack.c.l.b16 %v5400
    %v5472 = vunpack.c.l.b16 %v5401
    %v5473 = vunpack.c.l.b16 %v5402
    %v5474 = vunpack.c.l.b16 %v5403
    %v5475 = vunpack.c.l.b16 %v5404
    %v5476 = vunpack.c.l.b16 %v5405
    %v5477 = vunpack.c.l.b16 %v5406
    %v5478 = vunpack.c.l.b16 %v5407
    %v5479 = vunpack.c.l.b16 %v5408
    %v5480 = vunpack.c.l.b16 %v5409
    %v5481 = vunpack.c.l.b16 %v5410
    %v5482 = vunpack.c.l.b16 %v5411
    %v5483 = vunpack.c.l.b16 %v5412
    %v5484 = vunpack.c.l.b16 %v5413
    %v5485 = vunpack.c.l.b16 %v5414
    %v5486 = vunpack.c.l.b16 %v5415
    %v5487 = vunpack.c.l.b16 %v5416
    %v5488 = vunpack.c.l.b16 %v5417
    %v5489 = vunpack.c.l.b16 %v5418
    %v5490 = vunpack.c.l.b16 %v5419
    %v5491 = vunpack.c.l.b16 %v5420
    %v5492 = vunpack.c.l.b16 %v5421
    %v5493 = vunpack.c.l.b16 %v5422
    %v5494 = vunpack.c.l.b16 %v5423
    %v5495 = vunpack.c.l.b16 %v5424
    %v5496 = vunpack.c.l.b16 %v5425
    %v5497 = vunpack.c.l.b16 %v5426
    %v5498 = vunpack.c.l.b16 %v5427
    %v5499 = vunpack.c.l.b16 %v5428
    %v5500 = vunpack.c.l.b16 %v5429
    %v5501 = vunpack.c.l.b16 %v5430
    %v5502 = vunpack.c.l.b16 %v5431
    %v5503 = vpack.c.b16 %v5472, %v5471
    %v5504 = vpack.c.b16 %v5474, %v5473
    %v5505 = vpack.c.b16 %v5476, %v5475
    %v5506 = vpack.c.b16 %v5478, %v5477
    %v5507 = vpack.c.b16 %v5480, %v5479
    %v5508 = vpack.c.b16 %v5482, %v5481
    %v5509 = vpack.c.b16 %v5484, %v5483
    %v5510 = vpack.c.b16 %v5486, %v5485
    %v5511 = vpack.c.b16 %v5488, %v5487
    %v5512 = vpack.c.b16 %v5490, %v5489
    %v5513 = vpack.c.b16 %v5492, %v5491
    %v5514 = vpack.c.b16 %v5494, %v5493
    %v5515 = vpack.c.b16 %v5496, %v5495
    %v5516 = vpack.c.b16 %v5498, %v5497
    %v5517 = vpack.c.b16 %v5500, %v5499
    %v5518 = vpack.c.b16 %v5502, %v5501
    %5535 = vmatprep.subr.bf16.mxu0 0
    %5536 = vmatpush1.bf16.msra.mxu0 %v5503
    %5537 = vmatprep.subr.bf16.mxu0 0
    %5538 = vmatpush1.bf16.msra.mxu0 %v5504
    %5539 = vmatprep.subr.bf16.mxu0 0
    %5540 = vmatpush1.bf16.msra.mxu0 %v5505
    %5541 = vmatprep.subr.bf16.mxu0 0
    %5542 = vmatpush1.bf16.msra.mxu0 %v5506
    %5543 = vmatprep.subr.bf16.mxu0 0
    %5544 = vmatpush1.bf16.msra.mxu0 %v5507
    %5545 = vmatprep.subr.bf16.mxu0 0
    %5546 = vmatpush1.bf16.msra.mxu0 %v5508
    %5547 = vmatprep.subr.bf16.mxu0 0
    %5548 = vmatpush1.bf16.msra.mxu0 %v5509
    %5549 = vmatprep.subr.bf16.mxu0 0
    %5550 = vmatpush1.bf16.msra.mxu0 %v5510
    %5551 = vmatprep.subr.bf16.mxu0 0
    %5552 = vmatpush1.bf16.msra.mxu0 %v5511
    %5553 = vmatprep.subr.bf16.mxu0 0
    %5554 = vmatpush1.bf16.msra.mxu0 %v5512
    %5555 = vmatprep.subr.bf16.mxu0 0
    %5556 = vmatpush1.bf16.msra.mxu0 %v5513
    %5557 = vmatprep.subr.bf16.mxu0 0
    %5558 = vmatpush1.bf16.msra.mxu0 %v5514
    %5559 = vmatprep.subr.bf16.mxu0 0
    %5560 = vmatpush1.bf16.msra.mxu0 %v5515
    %5561 = vmatprep.subr.bf16.mxu0 0
    %5562 = vmatpush1.bf16.msra.mxu0 %v5516
    %5563 = vmatprep.subr.bf16.mxu0 0
    %5564 = vmatpush1.bf16.msra.mxu0 %v5517
    %5565 = vmatprep.subr.bf16.mxu0 0
    %5566 = vmatpush1.bf16.msra.mxu0 %v5518
    %5567 = vmatprep.mubr.bf16.mxu0 %v5399
    %5568 = vmatmul.mubr.bf16.gmra.mrb[0].mxu0 %v5398
    %v5569 = vpop.f32.mrb[0].mxu0
    %v5570 = vadd.f32 %v5437, %v5569
    %v5571 = vpop.f32.mrb[0].mxu0
    %v5572 = vpop.f32.mrb[0].mxu0
    %v5573 = vpop.f32.mrb[0].mxu0
    %5574 = vdwg.mxu0
    %v5575 = vsel %vm108, %v5570, -inf
    %5576 = vmax.xlane.f32.xlu0 %v5575
    %v5577 = vpop.xlane.xlu0 %5576
    %v5578 = vsub.f32 %v5570, %v5577
    %v5579 = vmul.f32 %v5578, 1.442695
    %v5580 = vpow.pop %v5579
    %v5581 = vsel %vm108, %v5580, 0.0
    %5582 = vadd.xlane.f32.xlu0 %v5581
    %v5583 = vpop.xlane.xlu0 %5582
    %v5584 = vlog2.pop %v5583
    %v5585 = vmul.f32 %v5584, 0.6931472
    %v5586 = vadd.f32 %v5585, %v5577
    %v5587 = vsub.f32 %v5570, %v5586
    %5588 = vst [vmem:[#allocation2] sm:$0x3] %v5587
    // Predicated region
    $region62: #{net_forward.5} parent=1 // pred_check
      _
    $region63: #{net_forward.5} parent=1 // pred_check_branch
      %5590 = sbr.rel (0) target = $region65
    $region64: #{net_forward.5} parent=1 // pred_region
      %s5592 = ssub.s32 32, 32
      %5593 = vsyncadd [#allocation3], %s5592
      %s5595 = sshll.u32 [#allocation2], 4
      %s5596 = int_to_ptr.vmem [resolvable:$true] %s5595
      %5598 = dma.vmem_to_hbm [thread:$0]  %s5596, 32, %s15, [#allocation3]
    $region65: #{net_forward.5} parent=1 // pred_fallthru
      _
    // Predicated region
    $region66: #{net_forward.5} parent=1 // pred_check
      _
    $region67: #{net_forward.5} parent=1 // pred_check_branch
      %5600 = sbr.rel (0) target = $region69
    $region68: #{net_forward.5} parent=1 // pred_region
      %5601 = dma.done [#allocation3], 32
    $region69: #{net_forward.5} parent=1 // pred_fallthru
      _
    %5602 = vsyncpa [#allocation3], 1

</llo_original>
